<compile_context>
chip_gen: v6e
topology: v6e:2x2x1
jax: 0.10.0
libtpu: 0.0.40
codegen_flags: <defaults>
</compile_context>

<pallas_src>
import jax
import jax.numpy as jnp
from jax.experimental import pallas as pl
from jax.experimental.pallas import tpu as pltpu

LN_EPS = 1e-5
_GROUP = 8  # rows per gather/store group == sublane count of an f32 vreg


def embedding_kernel(ids_ref,                                 # SMEM (B, S_pad) int32 (scalar prefetch)
                     tok_ref, pos_ref, gamma_ref, beta_ref,   # VMEM blocks
                     out_ref):                                # VMEM (Tb, Ts, D)
    Tb, Ts, D = out_ref.shape
    G = _GROUP
    n_groups = Ts // G

    b0 = pl.program_id(0) * Tb
    s0 = pl.program_id(1) * Ts

    gamma = gamma_ref[...]   # (1, D) — hoisted out of the loops
    beta = beta_ref[...]     # (1, D)

    for b in range(Tb):      # static: Tb is small by construction
        def group_body(g, carry, b=b):
            t0 = pl.multiple_of(g * G, G)
            # Gather G token-embedding rows (scalar-indexed dynamic row loads)
            # and pack them into one dense (G, D) tile.
            rows = [tok_ref[pl.ds(ids_ref[b0 + b, s0 + t0 + u], 1), :]
                    for u in range(G)]
            e = jnp.concatenate(rows, axis=0)
            # Positional rows come from the pipelined (Ts, D) BlockSpec block.
            e = e + pos_ref[pl.ds(t0, G), :]
            # LayerNorm over the feature dim, fused before the single store.
            mean = jnp.mean(e, axis=-1, keepdims=True)
            c = e - mean
            var = jnp.mean(c * c, axis=-1, keepdims=True)
            y = c * jax.lax.rsqrt(var + LN_EPS) * gamma + beta
            # One aligned (G, D) store per group: fills the (8, 128) sublane
            # tile (lane-dense when D is a multiple of 128).
            out_ref[b, pl.ds(t0, G), :] = y
            return carry

        jax.lax.fori_loop(0, n_groups, group_body, 0,
                          unroll=True if n_groups <= 8 else 2)


def _round_up(x, m):
    return ((x + m - 1) // m) * m


def _pick_seq_tile(s_pad, max_tokens):
    """Largest multiple of 8 that divides s_pad and is <= max_tokens."""
    t = min(s_pad, max(_GROUP, (max_tokens // _GROUP) * _GROUP))
    while t > _GROUP:
        if s_pad % t == 0:
            return t
        t -= _GROUP
    return _GROUP


def _pick_batch_tile(batch, max_rows):
    """Largest divisor of `batch` that is <= max_rows (at least 1)."""
    for t in range(min(batch, max(1, max_rows)), 0, -1):
        if batch % t == 0:
            return t
    return 1


def embedding_forward(x, tok_w, pos_w, gamma, beta, *, max_tokens_per_step=512):
    """x: [B, S] integer token ids. Returns [B, S, D] = LayerNorm(tok[x] + pos)."""
    B, S = x.shape
    V, D = tok_w.shape
    L = pos_w.shape[0]
    if S > L:
        raise ValueError(f"seq_len={S} exceeds max_len={L}")

    S_pad = _round_up(S, _GROUP)
    Ts = _pick_seq_tile(S_pad, max_tokens_per_step)
    Tb = _pick_batch_tile(B, max_tokens_per_step // Ts)
    grid = (B // Tb, S_pad // Ts)

    # Clamp once, vectorized, in the wrapper.  (PyTorch nn.Embedding would
    # raise on out-of-range ids; clamping guarantees in-bounds table reads.)
    ids = jnp.clip(x.astype(jnp.int32), 0, V - 1)
    if S_pad != S:
        ids = jnp.pad(ids, ((0, 0), (0, S_pad - S)))

    # Positional rows are delivered by BlockSpec: pad the used slice of the
    # positional table to exactly S_pad rows so blocks tile it evenly.
    pos_used = pos_w[:S].astype(jnp.float32)
    if S_pad != S:
        pos_used = jnp.pad(pos_used, ((0, S_pad - S), (0, 0)))

    tok_w = tok_w.astype(jnp.float32)
    gamma2 = gamma.reshape(1, D).astype(jnp.float32)
    beta2 = beta.reshape(1, D).astype(jnp.float32)

    out = pl.pallas_call(
        embedding_kernel,
        out_shape=jax.ShapeDtypeStruct((B, S_pad, D), jnp.float32),
        grid_spec=pltpu.PrefetchScalarGridSpec(
            num_scalar_prefetch=1,               # ids -> SMEM (control data)
            grid=grid,
            in_specs=[
                # Token table stays VMEM-resident (tiny demo vocabulary).
                pl.BlockSpec((V, D), lambda b, s, ids: (0, 0)),    # token table
                pl.BlockSpec((Ts, D), lambda b, s, ids: (s, 0)),   # pos rows
                pl.BlockSpec((1, D), lambda b, s, ids: (0, 0)),    # gamma
                pl.BlockSpec((1, D), lambda b, s, ids: (0, 0)),    # beta
            ],
            out_specs=pl.BlockSpec((Tb, Ts, D), lambda b, s, ids: (b, s, 0)),
        ),
        compiler_params=pltpu.CompilerParams(
            dimension_semantics=("parallel", "parallel"),
            vmem_limit_bytes=32 * 1024 * 1024,   # fits v7x's smaller VMEM too
        ),
    )(ids, tok_w, pos_used, gamma2, beta2)

    if S_pad != S:
        out = out[:, :S, :]
    return out


def embedding_reference(x, tok_w, pos_w, gamma, beta):
    B, S = x.shape
    tok = tok_w[x]                                   # (B, S, D)
    pos = pos_w[jnp.arange(S)][None, :, :]           # (1, S, D)
    e = tok + pos
    mean = e.mean(-1, keepdims=True)
    var = ((e - mean) ** 2).mean(-1, keepdims=True)
    return (e - mean) / jnp.sqrt(var + LN_EPS) * gamma + beta


if __name__ == "__main__":
    # Small transformer-ish config.  d_model is a multiple of 128 (lane-dense
    # stores); B*S = 256 tokens -> a single grid step covers the whole problem.
    vocab_size, d_model, max_len = 48, 128, 64
    B, S = 4, 64

    key = jax.random.PRNGKey(0)
    k_tok, k_pos, k_ids = jax.random.split(key, 3)

    # nn.Embedding init ~ N(0, 1); nn.LayerNorm init: weight=1, bias=0.
    tok_w = jax.random.normal(k_tok, (vocab_size, d_model), jnp.float32)
    pos_w = jax.random.normal(k_pos, (max_len, d_model), jnp.float32)
    gamma = jnp.ones((d_model,), jnp.float32)
    beta = jnp.zeros((d_model,), jnp.float32)

    x = jax.random.randint(k_ids, (B, S), 0, vocab_size, dtype=jnp.int32)

    out = embedding_forward(x, tok_w, pos_w, gamma, beta)
    out = jax.block_until_ready(out)

    ref = embedding_reference(x, tok_w, pos_w, gamma, beta)
    assert out.shape == (B, S, d_model)
    assert jnp.allclose(out, ref, atol=1e-4, rtol=1e-5), float(
        jnp.max(jnp.abs(out - ref)))

    print("KERNEL_OK")
</pallas_src>

<mosaic_0001>
module attributes {stable_mosaic.version = 11 : i64} {
  func.func @embedding_kernel(%arg0: i32, %arg1: i32, %arg2: memref<4x64xi32, #tpu.memory_space<smem>>, %arg3: memref<48x128xf32, #tpu.memory_space<vmem>>, %arg4: memref<64x128xf32, #tpu.memory_space<vmem>>, %arg5: memref<1x128xf32, #tpu.memory_space<vmem>>, %arg6: memref<1x128xf32, #tpu.memory_space<vmem>>, %arg7: memref<4x64x128xf32, #tpu.memory_space<vmem>>) attributes {dimension_semantics = [#tpu.dimension_semantics<parallel>, #tpu.dimension_semantics<parallel>], iteration_bounds = array<i64: 1, 1>, scalar_prefetch = 1 : i64, scratch_operands = 0 : i64, tpu.core_type = #tpu.core_type<tc>, window_params = [{pipeline_mode = #tpu.pipeline_mode<synchronous>, transform_indices = @transform_0, window_bounds = array<i64: 48, 128>}, {transform_indices = @transform_1, window_bounds = array<i64: 64, 128>}, {pipeline_mode = #tpu.pipeline_mode<synchronous>, transform_indices = @transform_2, window_bounds = array<i64: 1, 128>}, {pipeline_mode = #tpu.pipeline_mode<synchronous>, transform_indices = @transform_3, window_bounds = array<i64: 1, 128>}, {transform_indices = @transform_4, window_bounds = array<i64: 4, 64, 128>}]} {
    %c4_i32 = arith.constant 4 : i32
    %0 = arith.muli %arg0, %c4_i32 : i32
    %c64_i32 = arith.constant 64 : i32
    %1 = arith.muli %arg1, %c64_i32 : i32
    %c0 = arith.constant 0 : index
    %c0_0 = arith.constant 0 : index
    %2 = vector.load %arg5[%c0, %c0_0] : memref<1x128xf32, #tpu.memory_space<vmem>>, vector<1x128xf32>
    %c0_1 = arith.constant 0 : index
    %c0_2 = arith.constant 0 : index
    %3 = vector.load %arg6[%c0_1, %c0_2] : memref<1x128xf32, #tpu.memory_space<vmem>>, vector<1x128xf32>
    %c0_i32 = arith.constant 0 : i32
    %c8_i32 = arith.constant 8 : i32
    %4 = arith.muli %c0_i32, %c8_i32 : i32
    %5 = tpu.assume_multiple %4, 8 : i32
    %c0_i32_3 = arith.constant 0 : i32
    %6 = arith.addi %0, %c0_i32_3 : i32
    %7 = arith.addi %1, %5 : i32
    %c0_i32_4 = arith.constant 0 : i32
    %8 = arith.addi %7, %c0_i32_4 : i32
    %9 = arith.index_cast %6 : i32 to index
    %10 = arith.index_cast %8 : i32 to index
    %11 = memref.load %arg2[%9, %10] : memref<4x64xi32, #tpu.memory_space<smem>>
    %12 = arith.index_cast %11 : i32 to index
    %c0_5 = arith.constant 0 : index
    %13 = vector.load %arg3[%12, %c0_5] : memref<48x128xf32, #tpu.memory_space<vmem>>, vector<1x128xf32>
    %c0_i32_6 = arith.constant 0 : i32
    %14 = arith.addi %0, %c0_i32_6 : i32
    %15 = arith.addi %1, %5 : i32
    %c1_i32 = arith.constant 1 : i32
    %16 = arith.addi %15, %c1_i32 : i32
    %17 = arith.index_cast %14 : i32 to index
    %18 = arith.index_cast %16 : i32 to index
    %19 = memref.load %arg2[%17, %18] : memref<4x64xi32, #tpu.memory_space<smem>>
    %20 = arith.index_cast %19 : i32 to index
    %c0_7 = arith.constant 0 : index
    %21 = vector.load %arg3[%20, %c0_7] : memref<48x128xf32, #tpu.memory_space<vmem>>, vector<1x128xf32>
    %c0_i32_8 = arith.constant 0 : i32
    %22 = arith.addi %0, %c0_i32_8 : i32
    %23 = arith.addi %1, %5 : i32
    %c2_i32 = arith.constant 2 : i32
    %24 = arith.addi %23, %c2_i32 : i32
    %25 = arith.index_cast %22 : i32 to index
    %26 = arith.index_cast %24 : i32 to index
    %27 = memref.load %arg2[%25, %26] : memref<4x64xi32, #tpu.memory_space<smem>>
    %28 = arith.index_cast %27 : i32 to index
    %c0_9 = arith.constant 0 : index
    %29 = vector.load %arg3[%28, %c0_9] : memref<48x128xf32, #tpu.memory_space<vmem>>, vector<1x128xf32>
    %c0_i32_10 = arith.constant 0 : i32
    %30 = arith.addi %0, %c0_i32_10 : i32
    %31 = arith.addi %1, %5 : i32
    %c3_i32 = arith.constant 3 : i32
    %32 = arith.addi %31, %c3_i32 : i32
    %33 = arith.index_cast %30 : i32 to index
    %34 = arith.index_cast %32 : i32 to index
    %35 = memref.load %arg2[%33, %34] : memref<4x64xi32, #tpu.memory_space<smem>>
    %36 = arith.index_cast %35 : i32 to index
    %c0_11 = arith.constant 0 : index
    %37 = vector.load %arg3[%36, %c0_11] : memref<48x128xf32, #tpu.memory_space<vmem>>, vector<1x128xf32>
    %c0_i32_12 = arith.constant 0 : i32
    %38 = arith.addi %0, %c0_i32_12 : i32
    %39 = arith.addi %1, %5 : i32
    %c4_i32_13 = arith.constant 4 : i32
    %40 = arith.addi %39, %c4_i32_13 : i32
    %41 = arith.index_cast %38 : i32 to index
    %42 = arith.index_cast %40 : i32 to index
    %43 = memref.load %arg2[%41, %42] : memref<4x64xi32, #tpu.memory_space<smem>>
    %44 = arith.index_cast %43 : i32 to index
    %c0_14 = arith.constant 0 : index
    %45 = vector.load %arg3[%44, %c0_14] : memref<48x128xf32, #tpu.memory_space<vmem>>, vector<1x128xf32>
    %c0_i32_15 = arith.constant 0 : i32
    %46 = arith.addi %0, %c0_i32_15 : i32
    %47 = arith.addi %1, %5 : i32
    %c5_i32 = arith.constant 5 : i32
    %48 = arith.addi %47, %c5_i32 : i32
    %49 = arith.index_cast %46 : i32 to index
    %50 = arith.index_cast %48 : i32 to index
    %51 = memref.load %arg2[%49, %50] : memref<4x64xi32, #tpu.memory_space<smem>>
    %52 = arith.index_cast %51 : i32 to index
    %c0_16 = arith.constant 0 : index
    %53 = vector.load %arg3[%52, %c0_16] : memref<48x128xf32, #tpu.memory_space<vmem>>, vector<1x128xf32>
    %c0_i32_17 = arith.constant 0 : i32
    %54 = arith.addi %0, %c0_i32_17 : i32
    %55 = arith.addi %1, %5 : i32
    %c6_i32 = arith.constant 6 : i32
    %56 = arith.addi %55, %c6_i32 : i32
    %57 = arith.index_cast %54 : i32 to index
    %58 = arith.index_cast %56 : i32 to index
    %59 = memref.load %arg2[%57, %58] : memref<4x64xi32, #tpu.memory_space<smem>>
    %60 = arith.index_cast %59 : i32 to index
    %c0_18 = arith.constant 0 : index
    %61 = vector.load %arg3[%60, %c0_18] : memref<48x128xf32, #tpu.memory_space<vmem>>, vector<1x128xf32>
    %c0_i32_19 = arith.constant 0 : i32
    %62 = arith.addi %0, %c0_i32_19 : i32
    %63 = arith.addi %1, %5 : i32
    %c7_i32 = arith.constant 7 : i32
    %64 = arith.addi %63, %c7_i32 : i32
    %65 = arith.index_cast %62 : i32 to index
    %66 = arith.index_cast %64 : i32 to index
    %67 = memref.load %arg2[%65, %66] : memref<4x64xi32, #tpu.memory_space<smem>>
    %68 = arith.index_cast %67 : i32 to index
    %c0_20 = arith.constant 0 : index
    %69 = vector.load %arg3[%68, %c0_20] : memref<48x128xf32, #tpu.memory_space<vmem>>, vector<1x128xf32>
    %70 = tpu.concatenate %13, %21, %29, %37, %45, %53, %61, %69 in 0 : vector<1x128xf32>, vector<1x128xf32>, vector<1x128xf32>, vector<1x128xf32>, vector<1x128xf32>, vector<1x128xf32>, vector<1x128xf32>, vector<1x128xf32> -> vector<8x128xf32>
    %71 = arith.index_cast %5 : i32 to index
    %c0_21 = arith.constant 0 : index
    %72 = vector.load %arg4[%71, %c0_21] : memref<64x128xf32, #tpu.memory_space<vmem>>, vector<8x128xf32>
    %73 = arith.addf %70, %72 : vector<8x128xf32>
    %cst = arith.constant dense<0.000000e+00> : vector<8xf32>
    %74 = vector.multi_reduction <add>, %73, %cst [1] : vector<8x128xf32> to vector<8xf32>
    %75 = vector.shape_cast %74 : vector<8xf32> to vector<8x1xf32>
    %cst_22 = arith.constant 1.280000e+02 : f32
    %76 = vector.broadcast %cst_22 : f32 to vector<8x1xf32>
    %77 = arith.divf %75, %76 : vector<8x1xf32>
    %78 = vector.broadcast %77 : vector<8x1xf32> to vector<8x128xf32>
    %79 = arith.subf %73, %78 : vector<8x128xf32>
    %80 = arith.mulf %79, %79 : vector<8x128xf32>
    %cst_23 = arith.constant dense<0.000000e+00> : vector<8xf32>
    %81 = vector.multi_reduction <add>, %80, %cst_23 [1] : vector<8x128xf32> to vector<8xf32>
    %82 = vector.shape_cast %81 : vector<8xf32> to vector<8x1xf32>
    %cst_24 = arith.constant 1.280000e+02 : f32
    %83 = vector.broadcast %cst_24 : f32 to vector<8x1xf32>
    %84 = arith.divf %82, %83 : vector<8x1xf32>
    %cst_25 = arith.constant 9.99999974E-6 : f32
    %85 = vector.broadcast %cst_25 : f32 to vector<8x1xf32>
    %86 = arith.addf %84, %85 : vector<8x1xf32>
    %87 = math.rsqrt %86 : vector<8x1xf32>
    %88 = vector.broadcast %87 : vector<8x1xf32> to vector<8x128xf32>
    %89 = arith.mulf %79, %88 : vector<8x128xf32>
    %90 = vector.broadcast %2 : vector<1x128xf32> to vector<8x128xf32>
    %91 = arith.mulf %89, %90 : vector<8x128xf32>
    %92 = vector.broadcast %3 : vector<1x128xf32> to vector<8x128xf32>
    %93 = arith.addf %91, %92 : vector<8x128xf32>
    %c0_26 = arith.constant 0 : index
    %94 = arith.index_cast %5 : i32 to index
    %c0_27 = arith.constant 0 : index
    %95 = vector.load %arg7[%c0_26, %94, %c0_27] : memref<4x64x128xf32, #tpu.memory_space<vmem>>, vector<1x8x128xf32>
    %96 = vector.shape_cast %95 : vector<1x8x128xf32> to vector<8x128xf32>
    %97 = vector.shape_cast %93 : vector<8x128xf32> to vector<1x8x128xf32>
    tpu.vector_store %arg7[%c0_26, %94, %c0_27], %97 {strides = array<i32>} : memref<4x64x128xf32, #tpu.memory_space<vmem>>, vector<1x8x128xf32>,
    %c1_i32_28 = arith.constant 1 : i32
    %c8_i32_29 = arith.constant 8 : i32
    %98 = arith.muli %c1_i32_28, %c8_i32_29 : i32
    %99 = tpu.assume_multiple %98, 8 : i32
    %c0_i32_30 = arith.constant 0 : i32
    %100 = arith.addi %0, %c0_i32_30 : i32
    %101 = arith.addi %1, %99 : i32
    %c0_i32_31 = arith.constant 0 : i32
    %102 = arith.addi %101, %c0_i32_31 : i32
    %103 = arith.index_cast %100 : i32 to index
    %104 = arith.index_cast %102 : i32 to index
    %105 = memref.load %arg2[%103, %104] : memref<4x64xi32, #tpu.memory_space<smem>>
    %106 = arith.index_cast %105 : i32 to index
    %c0_32 = arith.constant 0 : index
    %107 = vector.load %arg3[%106, %c0_32] : memref<48x128xf32, #tpu.memory_space<vmem>>, vector<1x128xf32>
    %c0_i32_33 = arith.constant 0 : i32
    %108 = arith.addi %0, %c0_i32_33 : i32
    %109 = arith.addi %1, %99 : i32
    %c1_i32_34 = arith.constant 1 : i32
    %110 = arith.addi %109, %c1_i32_34 : i32
    %111 = arith.index_cast %108 : i32 to index
    %112 = arith.index_cast %110 : i32 to index
    %113 = memref.load %arg2[%111, %112] : memref<4x64xi32, #tpu.memory_space<smem>>
    %114 = arith.index_cast %113 : i32 to index
    %c0_35 = arith.constant 0 : index
    %115 = vector.load %arg3[%114, %c0_35] : memref<48x128xf32, #tpu.memory_space<vmem>>, vector<1x128xf32>
    %c0_i32_36 = arith.constant 0 : i32
    %116 = arith.addi %0, %c0_i32_36 : i32
    %117 = arith.addi %1, %99 : i32
    %c2_i32_37 = arith.constant 2 : i32
    %118 = arith.addi %117, %c2_i32_37 : i32
    %119 = arith.index_cast %116 : i32 to index
    %120 = arith.index_cast %118 : i32 to index
    %121 = memref.load %arg2[%119, %120] : memref<4x64xi32, #tpu.memory_space<smem>>
    %122 = arith.index_cast %121 : i32 to index
    %c0_38 = arith.constant 0 : index
    %123 = vector.load %arg3[%122, %c0_38] : memref<48x128xf32, #tpu.memory_space<vmem>>, vector<1x128xf32>
    %c0_i32_39 = arith.constant 0 : i32
    %124 = arith.addi %0, %c0_i32_39 : i32
    %125 = arith.addi %1, %99 : i32
    %c3_i32_40 = arith.constant 3 : i32
    %126 = arith.addi %125, %c3_i32_40 : i32
    %127 = arith.index_cast %124 : i32 to index
    %128 = arith.index_cast %126 : i32 to index
    %129 = memref.load %arg2[%127, %128] : memref<4x64xi32, #tpu.memory_space<smem>>
    %130 = arith.index_cast %129 : i32 to index
    %c0_41 = arith.constant 0 : index
    %131 = vector.load %arg3[%130, %c0_41] : memref<48x128xf32, #tpu.memory_space<vmem>>, vector<1x128xf32>
    %c0_i32_42 = arith.constant 0 : i32
    %132 = arith.addi %0, %c0_i32_42 : i32
    %133 = arith.addi %1, %99 : i32
    %c4_i32_43 = arith.constant 4 : i32
    %134 = arith.addi %133, %c4_i32_43 : i32
    %135 = arith.index_cast %132 : i32 to index
    %136 = arith.index_cast %134 : i32 to index
    %137 = memref.load %arg2[%135, %136] : memref<4x64xi32, #tpu.memory_space<smem>>
    %138 = arith.index_cast %137 : i32 to index
    %c0_44 = arith.constant 0 : index
    %139 = vector.load %arg3[%138, %c0_44] : memref<48x128xf32, #tpu.memory_space<vmem>>, vector<1x128xf32>
    %c0_i32_45 = arith.constant 0 : i32
    %140 = arith.addi %0, %c0_i32_45 : i32
    %141 = arith.addi %1, %99 : i32
    %c5_i32_46 = arith.constant 5 : i32
    %142 = arith.addi %141, %c5_i32_46 : i32
    %143 = arith.index_cast %140 : i32 to index
    %144 = arith.index_cast %142 : i32 to index
    %145 = memref.load %arg2[%143, %144] : memref<4x64xi32, #tpu.memory_space<smem>>
    %146 = arith.index_cast %145 : i32 to index
    %c0_47 = arith.constant 0 : index
    %147 = vector.load %arg3[%146, %c0_47] : memref<48x128xf32, #tpu.memory_space<vmem>>, vector<1x128xf32>
    %c0_i32_48 = arith.constant 0 : i32
    %148 = arith.addi %0, %c0_i32_48 : i32
    %149 = arith.addi %1, %99 : i32
    %c6_i32_49 = arith.constant 6 : i32
    %150 = arith.addi %149, %c6_i32_49 : i32
    %151 = arith.index_cast %148 : i32 to index
    %152 = arith.index_cast %150 : i32 to index
    %153 = memref.load %arg2[%151, %152] : memref<4x64xi32, #tpu.memory_space<smem>>
    %154 = arith.index_cast %153 : i32 to index
    %c0_50 = arith.constant 0 : index
    %155 = vector.load %arg3[%154, %c0_50] : memref<48x128xf32, #tpu.memory_space<vmem>>, vector<1x128xf32>
    %c0_i32_51 = arith.constant 0 : i32
    %156 = arith.addi %0, %c0_i32_51 : i32
    %157 = arith.addi %1, %99 : i32
    %c7_i32_52 = arith.constant 7 : i32
    %158 = arith.addi %157, %c7_i32_52 : i32
    %159 = arith.index_cast %156 : i32 to index
    %160 = arith.index_cast %158 : i32 to index
    %161 = memref.load %arg2[%159, %160] : memref<4x64xi32, #tpu.memory_space<smem>>
    %162 = arith.index_cast %161 : i32 to index
    %c0_53 = arith.constant 0 : index
    %163 = vector.load %arg3[%162, %c0_53] : memref<48x128xf32, #tpu.memory_space<vmem>>, vector<1x128xf32>
    %164 = tpu.concatenate %107, %115, %123, %131, %139, %147, %155, %163 in 0 : vector<1x128xf32>, vector<1x128xf32>, vector<1x128xf32>, vector<1x128xf32>, vector<1x128xf32>, vector<1x128xf32>, vector<1x128xf32>, vector<1x128xf32> -> vector<8x128xf32>
    %165 = arith.index_cast %99 : i32 to index
    %c0_54 = arith.constant 0 : index
    %166 = vector.load %arg4[%165, %c0_54] : memref<64x128xf32, #tpu.memory_space<vmem>>, vector<8x128xf32>
    %167 = arith.addf %164, %166 : vector<8x128xf32>
    %cst_55 = arith.constant dense<0.000000e+00> : vector<8xf32>
    %168 = vector.multi_reduction <add>, %167, %cst_55 [1] : vector<8x128xf32> to vector<8xf32>
    %169 = vector.shape_cast %168 : vector<8xf32> to vector<8x1xf32>
    %cst_56 = arith.constant 1.280000e+02 : f32
    %170 = vector.broadcast %cst_56 : f32 to vector<8x1xf32>
    %171 = arith.divf %169, %170 : vector<8x1xf32>
    %172 = vector.broadcast %171 : vector<8x1xf32> to vector<8x128xf32>
    %173 = arith.subf %167, %172 : vector<8x128xf32>
    %174 = arith.mulf %173, %173 : vector<8x128xf32>
    %cst_57 = arith.constant dense<0.000000e+00> : vector<8xf32>
    %175 = vector.multi_reduction <add>, %174, %cst_57 [1] : vector<8x128xf32> to vector<8xf32>
    %176 = vector.shape_cast %175 : vector<8xf32> to vector<8x1xf32>
    %cst_58 = arith.constant 1.280000e+02 : f32
    %177 = vector.broadcast %cst_58 : f32 to vector<8x1xf32>
    %178 = arith.divf %176, %177 : vector<8x1xf32>
    %cst_59 = arith.constant 9.99999974E-6 : f32
    %179 = vector.broadcast %cst_59 : f32 to vector<8x1xf32>
    %180 = arith.addf %178, %179 : vector<8x1xf32>
    %181 = math.rsqrt %180 : vector<8x1xf32>
    %182 = vector.broadcast %181 : vector<8x1xf32> to vector<8x128xf32>
    %183 = arith.mulf %173, %182 : vector<8x128xf32>
    %184 = vector.broadcast %2 : vector<1x128xf32> to vector<8x128xf32>
    %185 = arith.mulf %183, %184 : vector<8x128xf32>
    %186 = vector.broadcast %3 : vector<1x128xf32> to vector<8x128xf32>
    %187 = arith.addf %185, %186 : vector<8x128xf32>
    %c0_60 = arith.constant 0 : index
    %188 = arith.index_cast %99 : i32 to index
    %c0_61 = arith.constant 0 : index
    %189 = vector.load %arg7[%c0_60, %188, %c0_61] : memref<4x64x128xf32, #tpu.memory_space<vmem>>, vector<1x8x128xf32>
    %190 = vector.shape_cast %189 : vector<1x8x128xf32> to vector<8x128xf32>
    %191 = vector.shape_cast %187 : vector<8x128xf32> to vector<1x8x128xf32>
    tpu.vector_store %arg7[%c0_60, %188, %c0_61], %191 {strides = array<i32>} : memref<4x64x128xf32, #tpu.memory_space<vmem>>, vector<1x8x128xf32>,
    %c2_i32_62 = arith.constant 2 : i32
    %c8_i32_63 = arith.constant 8 : i32
    %192 = arith.muli %c2_i32_62, %c8_i32_63 : i32
    %193 = tpu.assume_multiple %192, 8 : i32
    %c0_i32_64 = arith.constant 0 : i32
    %194 = arith.addi %0, %c0_i32_64 : i32
    %195 = arith.addi %1, %193 : i32
    %c0_i32_65 = arith.constant 0 : i32
    %196 = arith.addi %195, %c0_i32_65 : i32
    %197 = arith.index_cast %194 : i32 to index
    %198 = arith.index_cast %196 : i32 to index
    %199 = memref.load %arg2[%197, %198] : memref<4x64xi32, #tpu.memory_space<smem>>
    %200 = arith.index_cast %199 : i32 to index
    %c0_66 = arith.constant 0 : index
    %201 = vector.load %arg3[%200, %c0_66] : memref<48x128xf32, #tpu.memory_space<vmem>>, vector<1x128xf32>
    %c0_i32_67 = arith.constant 0 : i32
    %202 = arith.addi %0, %c0_i32_67 : i32
    %203 = arith.addi %1, %193 : i32
    %c1_i32_68 = arith.constant 1 : i32
    %204 = arith.addi %203, %c1_i32_68 : i32
    %205 = arith.index_cast %202 : i32 to index
    %206 = arith.index_cast %204 : i32 to index
    %207 = memref.load %arg2[%205, %206] : memref<4x64xi32, #tpu.memory_space<smem>>
    %208 = arith.index_cast %207 : i32 to index
    %c0_69 = arith.constant 0 : index
    %209 = vector.load %arg3[%208, %c0_69] : memref<48x128xf32, #tpu.memory_space<vmem>>, vector<1x128xf32>
    %c0_i32_70 = arith.constant 0 : i32
    %210 = arith.addi %0, %c0_i32_70 : i32
    %211 = arith.addi %1, %193 : i32
    %c2_i32_71 = arith.constant 2 : i32
    %212 = arith.addi %211, %c2_i32_71 : i32
    %213 = arith.index_cast %210 : i32 to index
    %214 = arith.index_cast %212 : i32 to index
    %215 = memref.load %arg2[%213, %214] : memref<4x64xi32, #tpu.memory_space<smem>>
    %216 = arith.index_cast %215 : i32 to index
    %c0_72 = arith.constant 0 : index
    %217 = vector.load %arg3[%216, %c0_72] : memref<48x128xf32, #tpu.memory_space<vmem>>, vector<1x128xf32>
    %c0_i32_73 = arith.constant 0 : i32
    %218 = arith.addi %0, %c0_i32_73 : i32
    %219 = arith.addi %1, %193 : i32
    %c3_i32_74 = arith.constant 3 : i32
    %220 = arith.addi %219, %c3_i32_74 : i32
    %221 = arith.index_cast %218 : i32 to index
    %222 = arith.index_cast %220 : i32 to index
    %223 = memref.load %arg2[%221, %222] : memref<4x64xi32, #tpu.memory_space<smem>>
    %224 = arith.index_cast %223 : i32 to index
    %c0_75 = arith.constant 0 : index
    %225 = vector.load %arg3[%224, %c0_75] : memref<48x128xf32, #tpu.memory_space<vmem>>, vector<1x128xf32>
    %c0_i32_76 = arith.constant 0 : i32
    %226 = arith.addi %0, %c0_i32_76 : i32
    %227 = arith.addi %1, %193 : i32
    %c4_i32_77 = arith.constant 4 : i32
    %228 = arith.addi %227, %c4_i32_77 : i32
    %229 = arith.index_cast %226 : i32 to index
    %230 = arith.index_cast %228 : i32 to index
    %231 = memref.load %arg2[%229, %230] : memref<4x64xi32, #tpu.memory_space<smem>>
    %232 = arith.index_cast %231 : i32 to index
    %c0_78 = arith.constant 0 : index
    %233 = vector.load %arg3[%232, %c0_78] : memref<48x128xf32, #tpu.memory_space<vmem>>, vector<1x128xf32>
    %c0_i32_79 = arith.constant 0 : i32
    %234 = arith.addi %0, %c0_i32_79 : i32
    %235 = arith.addi %1, %193 : i32
    %c5_i32_80 = arith.constant 5 : i32
    %236 = arith.addi %235, %c5_i32_80 : i32
    %237 = arith.index_cast %234 : i32 to index
    %238 = arith.index_cast %236 : i32 to index
    %239 = memref.load %arg2[%237, %238] : memref<4x64xi32, #tpu.memory_space<smem>>
    %240 = arith.index_cast %239 : i32 to index
    %c0_81 = arith.constant 0 : index
    %241 = vector.load %arg3[%240, %c0_81] : memref<48x128xf32, #tpu.memory_space<vmem>>, vector<1x128xf32>
    %c0_i32_82 = arith.constant 0 : i32
    %242 = arith.addi %0, %c0_i32_82 : i32
    %243 = arith.addi %1, %193 : i32
    %c6_i32_83 = arith.constant 6 : i32
    %244 = arith.addi %243, %c6_i32_83 : i32
    %245 = arith.index_cast %242 : i32 to index
    %246 = arith.index_cast %244 : i32 to index
    %247 = memref.load %arg2[%245, %246] : memref<4x64xi32, #tpu.memory_space<smem>>
    %248 = arith.index_cast %247 : i32 to index
    %c0_84 = arith.constant 0 : index
    %249 = vector.load %arg3[%248, %c0_84] : memref<48x128xf32, #tpu.memory_space<vmem>>, vector<1x128xf32>
    %c0_i32_85 = arith.constant 0 : i32
    %250 = arith.addi %0, %c0_i32_85 : i32
    %251 = arith.addi %1, %193 : i32
    %c7_i32_86 = arith.constant 7 : i32
    %252 = arith.addi %251, %c7_i32_86 : i32
    %253 = arith.index_cast %250 : i32 to index
    %254 = arith.index_cast %252 : i32 to index
    %255 = memref.load %arg2[%253, %254] : memref<4x64xi32, #tpu.memory_space<smem>>
    %256 = arith.index_cast %255 : i32 to index
    %c0_87 = arith.constant 0 : index
    %257 = vector.load %arg3[%256, %c0_87] : memref<48x128xf32, #tpu.memory_space<vmem>>, vector<1x128xf32>
    %258 = tpu.concatenate %201, %209, %217, %225, %233, %241, %249, %257 in 0 : vector<1x128xf32>, vector<1x128xf32>, vector<1x128xf32>, vector<1x128xf32>, vector<1x128xf32>, vector<1x128xf32>, vector<1x128xf32>, vector<1x128xf32> -> vector<8x128xf32>
    %259 = arith.index_cast %193 : i32 to index
    %c0_88 = arith.constant 0 : index
    %260 = vector.load %arg4[%259, %c0_88] : memref<64x128xf32, #tpu.memory_space<vmem>>, vector<8x128xf32>
    %261 = arith.addf %258, %260 : vector<8x128xf32>
    %cst_89 = arith.constant dense<0.000000e+00> : vector<8xf32>
    %262 = vector.multi_reduction <add>, %261, %cst_89 [1] : vector<8x128xf32> to vector<8xf32>
    %263 = vector.shape_cast %262 : vector<8xf32> to vector<8x1xf32>
    %cst_90 = arith.constant 1.280000e+02 : f32
    %264 = vector.broadcast %cst_90 : f32 to vector<8x1xf32>
    %265 = arith.divf %263, %264 : vector<8x1xf32>
    %266 = vector.broadcast %265 : vector<8x1xf32> to vector<8x128xf32>
    %267 = arith.subf %261, %266 : vector<8x128xf32>
    %268 = arith.mulf %267, %267 : vector<8x128xf32>
    %cst_91 = arith.constant dense<0.000000e+00> : vector<8xf32>
    %269 = vector.multi_reduction <add>, %268, %cst_91 [1] : vector<8x128xf32> to vector<8xf32>
    %270 = vector.shape_cast %269 : vector<8xf32> to vector<8x1xf32>
    %cst_92 = arith.constant 1.280000e+02 : f32
    %271 = vector.broadcast %cst_92 : f32 to vector<8x1xf32>
    %272 = arith.divf %270, %271 : vector<8x1xf32>
    %cst_93 = arith.constant 9.99999974E-6 : f32
    %273 = vector.broadcast %cst_93 : f32 to vector<8x1xf32>
    %274 = arith.addf %272, %273 : vector<8x1xf32>
    %275 = math.rsqrt %274 : vector<8x1xf32>
    %276 = vector.broadcast %275 : vector<8x1xf32> to vector<8x128xf32>
    %277 = arith.mulf %267, %276 : vector<8x128xf32>
    %278 = vector.broadcast %2 : vector<1x128xf32> to vector<8x128xf32>
    %279 = arith.mulf %277, %278 : vector<8x128xf32>
    %280 = vector.broadcast %3 : vector<1x128xf32> to vector<8x128xf32>
    %281 = arith.addf %279, %280 : vector<8x128xf32>
    %c0_94 = arith.constant 0 : index
    %282 = arith.index_cast %193 : i32 to index
    %c0_95 = arith.constant 0 : index
    %283 = vector.load %arg7[%c0_94, %282, %c0_95] : memref<4x64x128xf32, #tpu.memory_space<vmem>>, vector<1x8x128xf32>
    %284 = vector.shape_cast %283 : vector<1x8x128xf32> to vector<8x128xf32>
    %285 = vector.shape_cast %281 : vector<8x128xf32> to vector<1x8x128xf32>
    tpu.vector_store %arg7[%c0_94, %282, %c0_95], %285 {strides = array<i32>} : memref<4x64x128xf32, #tpu.memory_space<vmem>>, vector<1x8x128xf32>,
    %c3_i32_96 = arith.constant 3 : i32
    %c8_i32_97 = arith.constant 8 : i32
    %286 = arith.muli %c3_i32_96, %c8_i32_97 : i32
    %287 = tpu.assume_multiple %286, 8 : i32
    %c0_i32_98 = arith.constant 0 : i32
    %288 = arith.addi %0, %c0_i32_98 : i32
    %289 = arith.addi %1, %287 : i32
    %c0_i32_99 = arith.constant 0 : i32
    %290 = arith.addi %289, %c0_i32_99 : i32
    %291 = arith.index_cast %288 : i32 to index
    %292 = arith.index_cast %290 : i32 to index
    %293 = memref.load %arg2[%291, %292] : memref<4x64xi32, #tpu.memory_space<smem>>
    %294 = arith.index_cast %293 : i32 to index
    %c0_100 = arith.constant 0 : index
    %295 = vector.load %arg3[%294, %c0_100] : memref<48x128xf32, #tpu.memory_space<vmem>>, vector<1x128xf32>
    %c0_i32_101 = arith.constant 0 : i32
    %296 = arith.addi %0, %c0_i32_101 : i32
    %297 = arith.addi %1, %287 : i32
    %c1_i32_102 = arith.constant 1 : i32
    %298 = arith.addi %297, %c1_i32_102 : i32
    %299 = arith.index_cast %296 : i32 to index
    %300 = arith.index_cast %298 : i32 to index
    %301 = memref.load %arg2[%299, %300] : memref<4x64xi32, #tpu.memory_space<smem>>
    %302 = arith.index_cast %301 : i32 to index
    %c0_103 = arith.constant 0 : index
    %303 = vector.load %arg3[%302, %c0_103] : memref<48x128xf32, #tpu.memory_space<vmem>>, vector<1x128xf32>
    %c0_i32_104 = arith.constant 0 : i32
    %304 = arith.addi %0, %c0_i32_104 : i32
    %305 = arith.addi %1, %287 : i32
    %c2_i32_105 = arith.constant 2 : i32
    %306 = arith.addi %305, %c2_i32_105 : i32
    %307 = arith.index_cast %304 : i32 to index
    %308 = arith.index_cast %306 : i32 to index
    %309 = memref.load %arg2[%307, %308] : memref<4x64xi32, #tpu.memory_space<smem>>
    %310 = arith.index_cast %309 : i32 to index
    %c0_106 = arith.constant 0 : index
    %311 = vector.load %arg3[%310, %c0_106] : memref<48x128xf32, #tpu.memory_space<vmem>>, vector<1x128xf32>
    %c0_i32_107 = arith.constant 0 : i32
    %312 = arith.addi %0, %c0_i32_107 : i32
    %313 = arith.addi %1, %287 : i32
    %c3_i32_108 = arith.constant 3 : i32
    %314 = arith.addi %313, %c3_i32_108 : i32
    %315 = arith.index_cast %312 : i32 to index
    %316 = arith.index_cast %314 : i32 to index
    %317 = memref.load %arg2[%315, %316] : memref<4x64xi32, #tpu.memory_space<smem>>
    %318 = arith.index_cast %317 : i32 to index
    %c0_109 = arith.constant 0 : index
    %319 = vector.load %arg3[%318, %c0_109] : memref<48x128xf32, #tpu.memory_space<vmem>>, vector<1x128xf32>
    %c0_i32_110 = arith.constant 0 : i32
    %320 = arith.addi %0, %c0_i32_110 : i32
    %321 = arith.addi %1, %287 : i32
    %c4_i32_111 = arith.constant 4 : i32
    %322 = arith.addi %321, %c4_i32_111 : i32
    %323 = arith.index_cast %320 : i32 to index
    %324 = arith.index_cast %322 : i32 to index
    %325 = memref.load %arg2[%323, %324] : memref<4x64xi32, #tpu.memory_space<smem>>
    %326 = arith.index_cast %325 : i32 to index
    %c0_112 = arith.constant 0 : index
    %327 = vector.load %arg3[%326, %c0_112] : memref<48x128xf32, #tpu.memory_space<vmem>>, vector<1x128xf32>
    %c0_i32_113 = arith.constant 0 : i32
    %328 = arith.addi %0, %c0_i32_113 : i32
    %329 = arith.addi %1, %287 : i32
    %c5_i32_114 = arith.constant 5 : i32
    %330 = arith.addi %329, %c5_i32_114 : i32
    %331 = arith.index_cast %328 : i32 to index
    %332 = arith.index_cast %330 : i32 to index
    %333 = memref.load %arg2[%331, %332] : memref<4x64xi32, #tpu.memory_space<smem>>
    %334 = arith.index_cast %333 : i32 to index
    %c0_115 = arith.constant 0 : index
    %335 = vector.load %arg3[%334, %c0_115] : memref<48x128xf32, #tpu.memory_space<vmem>>, vector<1x128xf32>
    %c0_i32_116 = arith.constant 0 : i32
    %336 = arith.addi %0, %c0_i32_116 : i32
    %337 = arith.addi %1, %287 : i32
    %c6_i32_117 = arith.constant 6 : i32
    %338 = arith.addi %337, %c6_i32_117 : i32
    %339 = arith.index_cast %336 : i32 to index
    %340 = arith.index_cast %338 : i32 to index
    %341 = memref.load %arg2[%339, %340] : memref<4x64xi32, #tpu.memory_space<smem>>
    %342 = arith.index_cast %341 : i32 to index
    %c0_118 = arith.constant 0 : index
    %343 = vector.load %arg3[%342, %c0_118] : memref<48x128xf32, #tpu.memory_space<vmem>>, vector<1x128xf32>
    %c0_i32_119 = arith.constant 0 : i32
    %344 = arith.addi %0, %c0_i32_119 : i32
    %345 = arith.addi %1, %287 : i32
    %c7_i32_120 = arith.constant 7 : i32
    %346 = arith.addi %345, %c7_i32_120 : i32
    %347 = arith.index_cast %344 : i32 to index
    %348 = arith.index_cast %346 : i32 to index
    %349 = memref.load %arg2[%347, %348] : memref<4x64xi32, #tpu.memory_space<smem>>
    %350 = arith.index_cast %349 : i32 to index
    %c0_121 = arith.constant 0 : index
    %351 = vector.load %arg3[%350, %c0_121] : memref<48x128xf32, #tpu.memory_space<vmem>>, vector<1x128xf32>
    %352 = tpu.concatenate %295, %303, %311, %319, %327, %335, %343, %351 in 0 : vector<1x128xf32>, vector<1x128xf32>, vector<1x128xf32>, vector<1x128xf32>, vector<1x128xf32>, vector<1x128xf32>, vector<1x128xf32>, vector<1x128xf32> -> vector<8x128xf32>
    %353 = arith.index_cast %287 : i32 to index
    %c0_122 = arith.constant 0 : index
    %354 = vector.load %arg4[%353, %c0_122] : memref<64x128xf32, #tpu.memory_space<vmem>>, vector<8x128xf32>
    %355 = arith.addf %352, %354 : vector<8x128xf32>
    %cst_123 = arith.constant dense<0.000000e+00> : vector<8xf32>
    %356 = vector.multi_reduction <add>, %355, %cst_123 [1] : vector<8x128xf32> to vector<8xf32>
    %357 = vector.shape_cast %356 : vector<8xf32> to vector<8x1xf32>
    %cst_124 = arith.constant 1.280000e+02 : f32
    %358 = vector.broadcast %cst_124 : f32 to vector<8x1xf32>
    %359 = arith.divf %357, %358 : vector<8x1xf32>
    %360 = vector.broadcast %359 : vector<8x1xf32> to vector<8x128xf32>
    %361 = arith.subf %355, %360 : vector<8x128xf32>
    %362 = arith.mulf %361, %361 : vector<8x128xf32>
    %cst_125 = arith.constant dense<0.000000e+00> : vector<8xf32>
    %363 = vector.multi_reduction <add>, %362, %cst_125 [1] : vector<8x128xf32> to vector<8xf32>
    %364 = vector.shape_cast %363 : vector<8xf32> to vector<8x1xf32>
    %cst_126 = arith.constant 1.280000e+02 : f32
    %365 = vector.broadcast %cst_126 : f32 to vector<8x1xf32>
    %366 = arith.divf %364, %365 : vector<8x1xf32>
    %cst_127 = arith.constant 9.99999974E-6 : f32
    %367 = vector.broadcast %cst_127 : f32 to vector<8x1xf32>
    %368 = arith.addf %366, %367 : vector<8x1xf32>
    %369 = math.rsqrt %368 : vector<8x1xf32>
    %370 = vector.broadcast %369 : vector<8x1xf32> to vector<8x128xf32>
    %371 = arith.mulf %361, %370 : vector<8x128xf32>
    %372 = vector.broadcast %2 : vector<1x128xf32> to vector<8x128xf32>
    %373 = arith.mulf %371, %372 : vector<8x128xf32>
    %374 = vector.broadcast %3 : vector<1x128xf32> to vector<8x128xf32>
    %375 = arith.addf %373, %374 : vector<8x128xf32>
    %c0_128 = arith.constant 0 : index
    %376 = arith.index_cast %287 : i32 to index
    %c0_129 = arith.constant 0 : index
    %377 = vector.load %arg7[%c0_128, %376, %c0_129] : memref<4x64x128xf32, #tpu.memory_space<vmem>>, vector<1x8x128xf32>
    %378 = vector.shape_cast %377 : vector<1x8x128xf32> to vector<8x128xf32>
    %379 = vector.shape_cast %375 : vector<8x128xf32> to vector<1x8x128xf32>
    tpu.vector_store %arg7[%c0_128, %376, %c0_129], %379 {strides = array<i32>} : memref<4x64x128xf32, #tpu.memory_space<vmem>>, vector<1x8x128xf32>,
    %c4_i32_130 = arith.constant 4 : i32
    %c8_i32_131 = arith.constant 8 : i32
    %380 = arith.muli %c4_i32_130, %c8_i32_131 : i32
    %381 = tpu.assume_multiple %380, 8 : i32
    %c0_i32_132 = arith.constant 0 : i32
    %382 = arith.addi %0, %c0_i32_132 : i32
    %383 = arith.addi %1, %381 : i32
    %c0_i32_133 = arith.constant 0 : i32
    %384 = arith.addi %383, %c0_i32_133 : i32
    %385 = arith.index_cast %382 : i32 to index
    %386 = arith.index_cast %384 : i32 to index
    %387 = memref.load %arg2[%385, %386] : memref<4x64xi32, #tpu.memory_space<smem>>
    %388 = arith.index_cast %387 : i32 to index
    %c0_134 = arith.constant 0 : index
    %389 = vector.load %arg3[%388, %c0_134] : memref<48x128xf32, #tpu.memory_space<vmem>>, vector<1x128xf32>
    %c0_i32_135 = arith.constant 0 : i32
    %390 = arith.addi %0, %c0_i32_135 : i32
    %391 = arith.addi %1, %381 : i32
    %c1_i32_136 = arith.constant 1 : i32
    %392 = arith.addi %391, %c1_i32_136 : i32
    %393 = arith.index_cast %390 : i32 to index
    %394 = arith.index_cast %392 : i32 to index
    %395 = memref.load %arg2[%393, %394] : memref<4x64xi32, #tpu.memory_space<smem>>
    %396 = arith.index_cast %395 : i32 to index
    %c0_137 = arith.constant 0 : index
    %397 = vector.load %arg3[%396, %c0_137] : memref<48x128xf32, #tpu.memory_space<vmem>>, vector<1x128xf32>
    %c0_i32_138 = arith.constant 0 : i32
    %398 = arith.addi %0, %c0_i32_138 : i32
    %399 = arith.addi %1, %381 : i32
    %c2_i32_139 = arith.constant 2 : i32
    %400 = arith.addi %399, %c2_i32_139 : i32
    %401 = arith.index_cast %398 : i32 to index
    %402 = arith.index_cast %400 : i32 to index
    %403 = memref.load %arg2[%401, %402] : memref<4x64xi32, #tpu.memory_space<smem>>
    %404 = arith.index_cast %403 : i32 to index
    %c0_140 = arith.constant 0 : index
    %405 = vector.load %arg3[%404, %c0_140] : memref<48x128xf32, #tpu.memory_space<vmem>>, vector<1x128xf32>
    %c0_i32_141 = arith.constant 0 : i32
    %406 = arith.addi %0, %c0_i32_141 : i32
    %407 = arith.addi %1, %381 : i32
    %c3_i32_142 = arith.constant 3 : i32
    %408 = arith.addi %407, %c3_i32_142 : i32
    %409 = arith.index_cast %406 : i32 to index
    %410 = arith.index_cast %408 : i32 to index
    %411 = memref.load %arg2[%409, %410] : memref<4x64xi32, #tpu.memory_space<smem>>
    %412 = arith.index_cast %411 : i32 to index
    %c0_143 = arith.constant 0 : index
    %413 = vector.load %arg3[%412, %c0_143] : memref<48x128xf32, #tpu.memory_space<vmem>>, vector<1x128xf32>
    %c0_i32_144 = arith.constant 0 : i32
    %414 = arith.addi %0, %c0_i32_144 : i32
    %415 = arith.addi %1, %381 : i32
    %c4_i32_145 = arith.constant 4 : i32
    %416 = arith.addi %415, %c4_i32_145 : i32
    %417 = arith.index_cast %414 : i32 to index
    %418 = arith.index_cast %416 : i32 to index
    %419 = memref.load %arg2[%417, %418] : memref<4x64xi32, #tpu.memory_space<smem>>
    %420 = arith.index_cast %419 : i32 to index
    %c0_146 = arith.constant 0 : index
    %421 = vector.load %arg3[%420, %c0_146] : memref<48x128xf32, #tpu.memory_space<vmem>>, vector<1x128xf32>
    %c0_i32_147 = arith.constant 0 : i32
    %422 = arith.addi %0, %c0_i32_147 : i32
    %423 = arith.addi %1, %381 : i32
    %c5_i32_148 = arith.constant 5 : i32
    %424 = arith.addi %423, %c5_i32_148 : i32
    %425 = arith.index_cast %422 : i32 to index
    %426 = arith.index_cast %424 : i32 to index
    %427 = memref.load %arg2[%425, %426] : memref<4x64xi32, #tpu.memory_space<smem>>
    %428 = arith.index_cast %427 : i32 to index
    %c0_149 = arith.constant 0 : index
    %429 = vector.load %arg3[%428, %c0_149] : memref<48x128xf32, #tpu.memory_space<vmem>>, vector<1x128xf32>
    %c0_i32_150 = arith.constant 0 : i32
    %430 = arith.addi %0, %c0_i32_150 : i32
    %431 = arith.addi %1, %381 : i32
    %c6_i32_151 = arith.constant 6 : i32
    %432 = arith.addi %431, %c6_i32_151 : i32
    %433 = arith.index_cast %430 : i32 to index
    %434 = arith.index_cast %432 : i32 to index
    %435 = memref.load %arg2[%433, %434] : memref<4x64xi32, #tpu.memory_space<smem>>
    %436 = arith.index_cast %435 : i32 to index
    %c0_152 = arith.constant 0 : index
    %437 = vector.load %arg3[%436, %c0_152] : memref<48x128xf32, #tpu.memory_space<vmem>>, vector<1x128xf32>
    %c0_i32_153 = arith.constant 0 : i32
    %438 = arith.addi %0, %c0_i32_153 : i32
    %439 = arith.addi %1, %381 : i32
    %c7_i32_154 = arith.constant 7 : i32
    %440 = arith.addi %439, %c7_i32_154 : i32
    %441 = arith.index_cast %438 : i32 to index
    %442 = arith.index_cast %440 : i32 to index
    %443 = memref.load %arg2[%441, %442] : memref<4x64xi32, #tpu.memory_space<smem>>
    %444 = arith.index_cast %443 : i32 to index
    %c0_155 = arith.constant 0 : index
    %445 = vector.load %arg3[%444, %c0_155] : memref<48x128xf32, #tpu.memory_space<vmem>>, vector<1x128xf32>
    %446 = tpu.concatenate %389, %397, %405, %413, %421, %429, %437, %445 in 0 : vector<1x128xf32>, vector<1x128xf32>, vector<1x128xf32>, vector<1x128xf32>, vector<1x128xf32>, vector<1x128xf32>, vector<1x128xf32>, vector<1x128xf32> -> vector<8x128xf32>
    %447 = arith.index_cast %381 : i32 to index
    %c0_156 = arith.constant 0 : index
    %448 = vector.load %arg4[%447, %c0_156] : memref<64x128xf32, #tpu.memory_space<vmem>>, vector<8x128xf32>
    %449 = arith.addf %446, %448 : vector<8x128xf32>
    %cst_157 = arith.constant dense<0.000000e+00> : vector<8xf32>
    %450 = vector.multi_reduction <add>, %449, %cst_157 [1] : vector<8x128xf32> to vector<8xf32>
    %451 = vector.shape_cast %450 : vector<8xf32> to vector<8x1xf32>
    %cst_158 = arith.constant 1.280000e+02 : f32
    %452 = vector.broadcast %cst_158 : f32 to vector<8x1xf32>
    %453 = arith.divf %451, %452 : vector<8x1xf32>
    %454 = vector.broadcast %453 : vector<8x1xf32> to vector<8x128xf32>
    %455 = arith.subf %449, %454 : vector<8x128xf32>
    %456 = arith.mulf %455, %455 : vector<8x128xf32>
    %cst_159 = arith.constant dense<0.000000e+00> : vector<8xf32>
    %457 = vector.multi_reduction <add>, %456, %cst_159 [1] : vector<8x128xf32> to vector<8xf32>
    %458 = vector.shape_cast %457 : vector<8xf32> to vector<8x1xf32>
    %cst_160 = arith.constant 1.280000e+02 : f32
    %459 = vector.broadcast %cst_160 : f32 to vector<8x1xf32>
    %460 = arith.divf %458, %459 : vector<8x1xf32>
    %cst_161 = arith.constant 9.99999974E-6 : f32
    %461 = vector.broadcast %cst_161 : f32 to vector<8x1xf32>
    %462 = arith.addf %460, %461 : vector<8x1xf32>
    %463 = math.rsqrt %462 : vector<8x1xf32>
    %464 = vector.broadcast %463 : vector<8x1xf32> to vector<8x128xf32>
    %465 = arith.mulf %455, %464 : vector<8x128xf32>
    %466 = vector.broadcast %2 : vector<1x128xf32> to vector<8x128xf32>
    %467 = arith.mulf %465, %466 : vector<8x128xf32>
    %468 = vector.broadcast %3 : vector<1x128xf32> to vector<8x128xf32>
    %469 = arith.addf %467, %468 : vector<8x128xf32>
    %c0_162 = arith.constant 0 : index
    %470 = arith.index_cast %381 : i32 to index
    %c0_163 = arith.constant 0 : index
    %471 = vector.load %arg7[%c0_162, %470, %c0_163] : memref<4x64x128xf32, #tpu.memory_space<vmem>>, vector<1x8x128xf32>
    %472 = vector.shape_cast %471 : vector<1x8x128xf32> to vector<8x128xf32>
    %473 = vector.shape_cast %469 : vector<8x128xf32> to vector<1x8x128xf32>
    tpu.vector_store %arg7[%c0_162, %470, %c0_163], %473 {strides = array<i32>} : memref<4x64x128xf32, #tpu.memory_space<vmem>>, vector<1x8x128xf32>,
    %c5_i32_164 = arith.constant 5 : i32
    %c8_i32_165 = arith.constant 8 : i32
    %474 = arith.muli %c5_i32_164, %c8_i32_165 : i32
    %475 = tpu.assume_multiple %474, 8 : i32
    %c0_i32_166 = arith.constant 0 : i32
    %476 = arith.addi %0, %c0_i32_166 : i32
    %477 = arith.addi %1, %475 : i32
    %c0_i32_167 = arith.constant 0 : i32
    %478 = arith.addi %477, %c0_i32_167 : i32
    %479 = arith.index_cast %476 : i32 to index
    %480 = arith.index_cast %478 : i32 to index
    %481 = memref.load %arg2[%479, %480] : memref<4x64xi32, #tpu.memory_space<smem>>
    %482 = arith.index_cast %481 : i32 to index
    %c0_168 = arith.constant 0 : index
    %483 = vector.load %arg3[%482, %c0_168] : memref<48x128xf32, #tpu.memory_space<vmem>>, vector<1x128xf32>
    %c0_i32_169 = arith.constant 0 : i32
    %484 = arith.addi %0, %c0_i32_169 : i32
    %485 = arith.addi %1, %475 : i32
    %c1_i32_170 = arith.constant 1 : i32
    %486 = arith.addi %485, %c1_i32_170 : i32
    %487 = arith.index_cast %484 : i32 to index
    %488 = arith.index_cast %486 : i32 to index
    %489 = memref.load %arg2[%487, %488] : memref<4x64xi32, #tpu.memory_space<smem>>
    %490 = arith.index_cast %489 : i32 to index
    %c0_171 = arith.constant 0 : index
    %491 = vector.load %arg3[%490, %c0_171] : memref<48x128xf32, #tpu.memory_space<vmem>>, vector<1x128xf32>
    %c0_i32_172 = arith.constant 0 : i32
    %492 = arith.addi %0, %c0_i32_172 : i32
    %493 = arith.addi %1, %475 : i32
    %c2_i32_173 = arith.constant 2 : i32
    %494 = arith.addi %493, %c2_i32_173 : i32
    %495 = arith.index_cast %492 : i32 to index
    %496 = arith.index_cast %494 : i32 to index
    %497 = memref.load %arg2[%495, %496] : memref<4x64xi32, #tpu.memory_space<smem>>
    %498 = arith.index_cast %497 : i32 to index
    %c0_174 = arith.constant 0 : index
    %499 = vector.load %arg3[%498, %c0_174] : memref<48x128xf32, #tpu.memory_space<vmem>>, vector<1x128xf32>
    %c0_i32_175 = arith.constant 0 : i32
    %500 = arith.addi %0, %c0_i32_175 : i32
    %501 = arith.addi %1, %475 : i32
    %c3_i32_176 = arith.constant 3 : i32
    %502 = arith.addi %501, %c3_i32_176 : i32
    %503 = arith.index_cast %500 : i32 to index
    %504 = arith.index_cast %502 : i32 to index
    %505 = memref.load %arg2[%503, %504] : memref<4x64xi32, #tpu.memory_space<smem>>
    %506 = arith.index_cast %505 : i32 to index
    %c0_177 = arith.constant 0 : index
    %507 = vector.load %arg3[%506, %c0_177] : memref<48x128xf32, #tpu.memory_space<vmem>>, vector<1x128xf32>
    %c0_i32_178 = arith.constant 0 : i32
    %508 = arith.addi %0, %c0_i32_178 : i32
    %509 = arith.addi %1, %475 : i32
    %c4_i32_179 = arith.constant 4 : i32
    %510 = arith.addi %509, %c4_i32_179 : i32
    %511 = arith.index_cast %508 : i32 to index
    %512 = arith.index_cast %510 : i32 to index
    %513 = memref.load %arg2[%511, %512] : memref<4x64xi32, #tpu.memory_space<smem>>
    %514 = arith.index_cast %513 : i32 to index
    %c0_180 = arith.constant 0 : index
    %515 = vector.load %arg3[%514, %c0_180] : memref<48x128xf32, #tpu.memory_space<vmem>>, vector<1x128xf32>
    %c0_i32_181 = arith.constant 0 : i32
    %516 = arith.addi %0, %c0_i32_181 : i32
    %517 = arith.addi %1, %475 : i32
    %c5_i32_182 = arith.constant 5 : i32
    %518 = arith.addi %517, %c5_i32_182 : i32
    %519 = arith.index_cast %516 : i32 to index
    %520 = arith.index_cast %518 : i32 to index
    %521 = memref.load %arg2[%519, %520] : memref<4x64xi32, #tpu.memory_space<smem>>
    %522 = arith.index_cast %521 : i32 to index
    %c0_183 = arith.constant 0 : index
    %523 = vector.load %arg3[%522, %c0_183] : memref<48x128xf32, #tpu.memory_space<vmem>>, vector<1x128xf32>
    %c0_i32_184 = arith.constant 0 : i32
    %524 = arith.addi %0, %c0_i32_184 : i32
    %525 = arith.addi %1, %475 : i32
    %c6_i32_185 = arith.constant 6 : i32
    %526 = arith.addi %525, %c6_i32_185 : i32
    %527 = arith.index_cast %524 : i32 to index
    %528 = arith.index_cast %526 : i32 to index
    %529 = memref.load %arg2[%527, %528] : memref<4x64xi32, #tpu.memory_space<smem>>
    %530 = arith.index_cast %529 : i32 to index
    %c0_186 = arith.constant 0 : index
    %531 = vector.load %arg3[%530, %c0_186] : memref<48x128xf32, #tpu.memory_space<vmem>>, vector<1x128xf32>
    %c0_i32_187 = arith.constant 0 : i32
    %532 = arith.addi %0, %c0_i32_187 : i32
    %533 = arith.addi %1, %475 : i32
    %c7_i32_188 = arith.constant 7 : i32
    %534 = arith.addi %533, %c7_i32_188 : i32
    %535 = arith.index_cast %532 : i32 to index
    %536 = arith.index_cast %534 : i32 to index
    %537 = memref.load %arg2[%535, %536] : memref<4x64xi32, #tpu.memory_space<smem>>
    %538 = arith.index_cast %537 : i32 to index
    %c0_189 = arith.constant 0 : index
    %539 = vector.load %arg3[%538, %c0_189] : memref<48x128xf32, #tpu.memory_space<vmem>>, vector<1x128xf32>
    %540 = tpu.concatenate %483, %491, %499, %507, %515, %523, %531, %539 in 0 : vector<1x128xf32>, vector<1x128xf32>, vector<1x128xf32>, vector<1x128xf32>, vector<1x128xf32>, vector<1x128xf32>, vector<1x128xf32>, vector<1x128xf32> -> vector<8x128xf32>
    %541 = arith.index_cast %475 : i32 to index
    %c0_190 = arith.constant 0 : index
    %542 = vector.load %arg4[%541, %c0_190] : memref<64x128xf32, #tpu.memory_space<vmem>>, vector<8x128xf32>
    %543 = arith.addf %540, %542 : vector<8x128xf32>
    %cst_191 = arith.constant dense<0.000000e+00> : vector<8xf32>
    %544 = vector.multi_reduction <add>, %543, %cst_191 [1] : vector<8x128xf32> to vector<8xf32>
    %545 = vector.shape_cast %544 : vector<8xf32> to vector<8x1xf32>
    %cst_192 = arith.constant 1.280000e+02 : f32
    %546 = vector.broadcast %cst_192 : f32 to vector<8x1xf32>
    %547 = arith.divf %545, %546 : vector<8x1xf32>
    %548 = vector.broadcast %547 : vector<8x1xf32> to vector<8x128xf32>
    %549 = arith.subf %543, %548 : vector<8x128xf32>
    %550 = arith.mulf %549, %549 : vector<8x128xf32>
    %cst_193 = arith.constant dense<0.000000e+00> : vector<8xf32>
    %551 = vector.multi_reduction <add>, %550, %cst_193 [1] : vector<8x128xf32> to vector<8xf32>
    %552 = vector.shape_cast %551 : vector<8xf32> to vector<8x1xf32>
    %cst_194 = arith.constant 1.280000e+02 : f32
    %553 = vector.broadcast %cst_194 : f32 to vector<8x1xf32>
    %554 = arith.divf %552, %553 : vector<8x1xf32>
    %cst_195 = arith.constant 9.99999974E-6 : f32
    %555 = vector.broadcast %cst_195 : f32 to vector<8x1xf32>
    %556 = arith.addf %554, %555 : vector<8x1xf32>
    %557 = math.rsqrt %556 : vector<8x1xf32>
    %558 = vector.broadcast %557 : vector<8x1xf32> to vector<8x128xf32>
    %559 = arith.mulf %549, %558 : vector<8x128xf32>
    %560 = vector.broadcast %2 : vector<1x128xf32> to vector<8x128xf32>
    %561 = arith.mulf %559, %560 : vector<8x128xf32>
    %562 = vector.broadcast %3 : vector<1x128xf32> to vector<8x128xf32>
    %563 = arith.addf %561, %562 : vector<8x128xf32>
    %c0_196 = arith.constant 0 : index
    %564 = arith.index_cast %475 : i32 to index
    %c0_197 = arith.constant 0 : index
    %565 = vector.load %arg7[%c0_196, %564, %c0_197] : memref<4x64x128xf32, #tpu.memory_space<vmem>>, vector<1x8x128xf32>
    %566 = vector.shape_cast %565 : vector<1x8x128xf32> to vector<8x128xf32>
    %567 = vector.shape_cast %563 : vector<8x128xf32> to vector<1x8x128xf32>
    tpu.vector_store %arg7[%c0_196, %564, %c0_197], %567 {strides = array<i32>} : memref<4x64x128xf32, #tpu.memory_space<vmem>>, vector<1x8x128xf32>,
    %c6_i32_198 = arith.constant 6 : i32
    %c8_i32_199 = arith.constant 8 : i32
    %568 = arith.muli %c6_i32_198, %c8_i32_199 : i32
    %569 = tpu.assume_multiple %568, 8 : i32
    %c0_i32_200 = arith.constant 0 : i32
    %570 = arith.addi %0, %c0_i32_200 : i32
    %571 = arith.addi %1, %569 : i32
    %c0_i32_201 = arith.constant 0 : i32
    %572 = arith.addi %571, %c0_i32_201 : i32
    %573 = arith.index_cast %570 : i32 to index
    %574 = arith.index_cast %572 : i32 to index
    %575 = memref.load %arg2[%573, %574] : memref<4x64xi32, #tpu.memory_space<smem>>
    %576 = arith.index_cast %575 : i32 to index
    %c0_202 = arith.constant 0 : index
    %577 = vector.load %arg3[%576, %c0_202] : memref<48x128xf32, #tpu.memory_space<vmem>>, vector<1x128xf32>
    %c0_i32_203 = arith.constant 0 : i32
    %578 = arith.addi %0, %c0_i32_203 : i32
    %579 = arith.addi %1, %569 : i32
    %c1_i32_204 = arith.constant 1 : i32
    %580 = arith.addi %579, %c1_i32_204 : i32
    %581 = arith.index_cast %578 : i32 to index
    %582 = arith.index_cast %580 : i32 to index
    %583 = memref.load %arg2[%581, %582] : memref<4x64xi32, #tpu.memory_space<smem>>
    %584 = arith.index_cast %583 : i32 to index
    %c0_205 = arith.constant 0 : index
    %585 = vector.load %arg3[%584, %c0_205] : memref<48x128xf32, #tpu.memory_space<vmem>>, vector<1x128xf32>
    %c0_i32_206 = arith.constant 0 : i32
    %586 = arith.addi %0, %c0_i32_206 : i32
    %587 = arith.addi %1, %569 : i32
    %c2_i32_207 = arith.constant 2 : i32
    %588 = arith.addi %587, %c2_i32_207 : i32
    %589 = arith.index_cast %586 : i32 to index
    %590 = arith.index_cast %588 : i32 to index
    %591 = memref.load %arg2[%589, %590] : memref<4x64xi32, #tpu.memory_space<smem>>
    %592 = arith.index_cast %591 : i32 to index
    %c0_208 = arith.constant 0 : index
    %593 = vector.load %arg3[%592, %c0_208] : memref<48x128xf32, #tpu.memory_space<vmem>>, vector<1x128xf32>
    %c0_i32_209 = arith.constant 0 : i32
    %594 = arith.addi %0, %c0_i32_209 : i32
    %595 = arith.addi %1, %569 : i32
    %c3_i32_210 = arith.constant 3 : i32
    %596 = arith.addi %595, %c3_i32_210 : i32
    %597 = arith.index_cast %594 : i32 to index
    %598 = arith.index_cast %596 : i32 to index
    %599 = memref.load %arg2[%597, %598] : memref<4x64xi32, #tpu.memory_space<smem>>
    %600 = arith.index_cast %599 : i32 to index
    %c0_211 = arith.constant 0 : index
    %601 = vector.load %arg3[%600, %c0_211] : memref<48x128xf32, #tpu.memory_space<vmem>>, vector<1x128xf32>
    %c0_i32_212 = arith.constant 0 : i32
    %602 = arith.addi %0, %c0_i32_212 : i32
    %603 = arith.addi %1, %569 : i32
    %c4_i32_213 = arith.constant 4 : i32
    %604 = arith.addi %603, %c4_i32_213 : i32
    %605 = arith.index_cast %602 : i32 to index
    %606 = arith.index_cast %604 : i32 to index
    %607 = memref.load %arg2[%605, %606] : memref<4x64xi32, #tpu.memory_space<smem>>
    %608 = arith.index_cast %607 : i32 to index
    %c0_214 = arith.constant 0 : index
    %609 = vector.load %arg3[%608, %c0_214] : memref<48x128xf32, #tpu.memory_space<vmem>>, vector<1x128xf32>
    %c0_i32_215 = arith.constant 0 : i32
    %610 = arith.addi %0, %c0_i32_215 : i32
    %611 = arith.addi %1, %569 : i32
    %c5_i32_216 = arith.constant 5 : i32
    %612 = arith.addi %611, %c5_i32_216 : i32
    %613 = arith.index_cast %610 : i32 to index
    %614 = arith.index_cast %612 : i32 to index
    %615 = memref.load %arg2[%613, %614] : memref<4x64xi32, #tpu.memory_space<smem>>
    %616 = arith.index_cast %615 : i32 to index
    %c0_217 = arith.constant 0 : index
    %617 = vector.load %arg3[%616, %c0_217] : memref<48x128xf32, #tpu.memory_space<vmem>>, vector<1x128xf32>
    %c0_i32_218 = arith.constant 0 : i32
    %618 = arith.addi %0, %c0_i32_218 : i32
    %619 = arith.addi %1, %569 : i32
    %c6_i32_219 = arith.constant 6 : i32
    %620 = arith.addi %619, %c6_i32_219 : i32
    %621 = arith.index_cast %618 : i32 to index
    %622 = arith.index_cast %620 : i32 to index
    %623 = memref.load %arg2[%621, %622] : memref<4x64xi32, #tpu.memory_space<smem>>
    %624 = arith.index_cast %623 : i32 to index
    %c0_220 = arith.constant 0 : index
    %625 = vector.load %arg3[%624, %c0_220] : memref<48x128xf32, #tpu.memory_space<vmem>>, vector<1x128xf32>
    %c0_i32_221 = arith.constant 0 : i32
    %626 = arith.addi %0, %c0_i32_221 : i32
    %627 = arith.addi %1, %569 : i32
    %c7_i32_222 = arith.constant 7 : i32
    %628 = arith.addi %627, %c7_i32_222 : i32
    %629 = arith.index_cast %626 : i32 to index
    %630 = arith.index_cast %628 : i32 to index
    %631 = memref.load %arg2[%629, %630] : memref<4x64xi32, #tpu.memory_space<smem>>
    %632 = arith.index_cast %631 : i32 to index
    %c0_223 = arith.constant 0 : index
    %633 = vector.load %arg3[%632, %c0_223] : memref<48x128xf32, #tpu.memory_space<vmem>>, vector<1x128xf32>
    %634 = tpu.concatenate %577, %585, %593, %601, %609, %617, %625, %633 in 0 : vector<1x128xf32>, vector<1x128xf32>, vector<1x128xf32>, vector<1x128xf32>, vector<1x128xf32>, vector<1x128xf32>, vector<1x128xf32>, vector<1x128xf32> -> vector<8x128xf32>
    %635 = arith.index_cast %569 : i32 to index
    %c0_224 = arith.constant 0 : index
    %636 = vector.load %arg4[%635, %c0_224] : memref<64x128xf32, #tpu.memory_space<vmem>>, vector<8x128xf32>
    %637 = arith.addf %634, %636 : vector<8x128xf32>
    %cst_225 = arith.constant dense<0.000000e+00> : vector<8xf32>
    %638 = vector.multi_reduction <add>, %637, %cst_225 [1] : vector<8x128xf32> to vector<8xf32>
    %639 = vector.shape_cast %638 : vector<8xf32> to vector<8x1xf32>
    %cst_226 = arith.constant 1.280000e+02 : f32
    %640 = vector.broadcast %cst_226 : f32 to vector<8x1xf32>
    %641 = arith.divf %639, %640 : vector<8x1xf32>
    %642 = vector.broadcast %641 : vector<8x1xf32> to vector<8x128xf32>
    %643 = arith.subf %637, %642 : vector<8x128xf32>
    %644 = arith.mulf %643, %643 : vector<8x128xf32>
    %cst_227 = arith.constant dense<0.000000e+00> : vector<8xf32>
    %645 = vector.multi_reduction <add>, %644, %cst_227 [1] : vector<8x128xf32> to vector<8xf32>
    %646 = vector.shape_cast %645 : vector<8xf32> to vector<8x1xf32>
    %cst_228 = arith.constant 1.280000e+02 : f32
    %647 = vector.broadcast %cst_228 : f32 to vector<8x1xf32>
    %648 = arith.divf %646, %647 : vector<8x1xf32>
    %cst_229 = arith.constant 9.99999974E-6 : f32
    %649 = vector.broadcast %cst_229 : f32 to vector<8x1xf32>
    %650 = arith.addf %648, %649 : vector<8x1xf32>
    %651 = math.rsqrt %650 : vector<8x1xf32>
    %652 = vector.broadcast %651 : vector<8x1xf32> to vector<8x128xf32>
    %653 = arith.mulf %643, %652 : vector<8x128xf32>
    %654 = vector.broadcast %2 : vector<1x128xf32> to vector<8x128xf32>
    %655 = arith.mulf %653, %654 : vector<8x128xf32>
    %656 = vector.broadcast %3 : vector<1x128xf32> to vector<8x128xf32>
    %657 = arith.addf %655, %656 : vector<8x128xf32>
    %c0_230 = arith.constant 0 : index
    %658 = arith.index_cast %569 : i32 to index
    %c0_231 = arith.constant 0 : index
    %659 = vector.load %arg7[%c0_230, %658, %c0_231] : memref<4x64x128xf32, #tpu.memory_space<vmem>>, vector<1x8x128xf32>
    %660 = vector.shape_cast %659 : vector<1x8x128xf32> to vector<8x128xf32>
    %661 = vector.shape_cast %657 : vector<8x128xf32> to vector<1x8x128xf32>
    tpu.vector_store %arg7[%c0_230, %658, %c0_231], %661 {strides = array<i32>} : memref<4x64x128xf32, #tpu.memory_space<vmem>>, vector<1x8x128xf32>,
    %c7_i32_232 = arith.constant 7 : i32
    %c8_i32_233 = arith.constant 8 : i32
    %662 = arith.muli %c7_i32_232, %c8_i32_233 : i32
    %663 = tpu.assume_multiple %662, 8 : i32
    %c0_i32_234 = arith.constant 0 : i32
    %664 = arith.addi %0, %c0_i32_234 : i32
    %665 = arith.addi %1, %663 : i32
    %c0_i32_235 = arith.constant 0 : i32
    %666 = arith.addi %665, %c0_i32_235 : i32
    %667 = arith.index_cast %664 : i32 to index
    %668 = arith.index_cast %666 : i32 to index
    %669 = memref.load %arg2[%667, %668] : memref<4x64xi32, #tpu.memory_space<smem>>
    %670 = arith.index_cast %669 : i32 to index
    %c0_236 = arith.constant 0 : index
    %671 = vector.load %arg3[%670, %c0_236] : memref<48x128xf32, #tpu.memory_space<vmem>>, vector<1x128xf32>
    %c0_i32_237 = arith.constant 0 : i32
    %672 = arith.addi %0, %c0_i32_237 : i32
    %673 = arith.addi %1, %663 : i32
    %c1_i32_238 = arith.constant 1 : i32
    %674 = arith.addi %673, %c1_i32_238 : i32
    %675 = arith.index_cast %672 : i32 to index
    %676 = arith.index_cast %674 : i32 to index
    %677 = memref.load %arg2[%675, %676] : memref<4x64xi32, #tpu.memory_space<smem>>
    %678 = arith.index_cast %677 : i32 to index
    %c0_239 = arith.constant 0 : index
    %679 = vector.load %arg3[%678, %c0_239] : memref<48x128xf32, #tpu.memory_space<vmem>>, vector<1x128xf32>
    %c0_i32_240 = arith.constant 0 : i32
    %680 = arith.addi %0, %c0_i32_240 : i32
    %681 = arith.addi %1, %663 : i32
    %c2_i32_241 = arith.constant 2 : i32
    %682 = arith.addi %681, %c2_i32_241 : i32
    %683 = arith.index_cast %680 : i32 to index
    %684 = arith.index_cast %682 : i32 to index
    %685 = memref.load %arg2[%683, %684] : memref<4x64xi32, #tpu.memory_space<smem>>
    %686 = arith.index_cast %685 : i32 to index
    %c0_242 = arith.constant 0 : index
    %687 = vector.load %arg3[%686, %c0_242] : memref<48x128xf32, #tpu.memory_space<vmem>>, vector<1x128xf32>
    %c0_i32_243 = arith.constant 0 : i32
    %688 = arith.addi %0, %c0_i32_243 : i32
    %689 = arith.addi %1, %663 : i32
    %c3_i32_244 = arith.constant 3 : i32
    %690 = arith.addi %689, %c3_i32_244 : i32
    %691 = arith.index_cast %688 : i32 to index
    %692 = arith.index_cast %690 : i32 to index
    %693 = memref.load %arg2[%691, %692] : memref<4x64xi32, #tpu.memory_space<smem>>
    %694 = arith.index_cast %693 : i32 to index
    %c0_245 = arith.constant 0 : index
    %695 = vector.load %arg3[%694, %c0_245] : memref<48x128xf32, #tpu.memory_space<vmem>>, vector<1x128xf32>
    %c0_i32_246 = arith.constant 0 : i32
    %696 = arith.addi %0, %c0_i32_246 : i32
    %697 = arith.addi %1, %663 : i32
    %c4_i32_247 = arith.constant 4 : i32
    %698 = arith.addi %697, %c4_i32_247 : i32
    %699 = arith.index_cast %696 : i32 to index
    %700 = arith.index_cast %698 : i32 to index
    %701 = memref.load %arg2[%699, %700] : memref<4x64xi32, #tpu.memory_space<smem>>
    %702 = arith.index_cast %701 : i32 to index
    %c0_248 = arith.constant 0 : index
    %703 = vector.load %arg3[%702, %c0_248] : memref<48x128xf32, #tpu.memory_space<vmem>>, vector<1x128xf32>
    %c0_i32_249 = arith.constant 0 : i32
    %704 = arith.addi %0, %c0_i32_249 : i32
    %705 = arith.addi %1, %663 : i32
    %c5_i32_250 = arith.constant 5 : i32
    %706 = arith.addi %705, %c5_i32_250 : i32
    %707 = arith.index_cast %704 : i32 to index
    %708 = arith.index_cast %706 : i32 to index
    %709 = memref.load %arg2[%707, %708] : memref<4x64xi32, #tpu.memory_space<smem>>
    %710 = arith.index_cast %709 : i32 to index
    %c0_251 = arith.constant 0 : index
    %711 = vector.load %arg3[%710, %c0_251] : memref<48x128xf32, #tpu.memory_space<vmem>>, vector<1x128xf32>
    %c0_i32_252 = arith.constant 0 : i32
    %712 = arith.addi %0, %c0_i32_252 : i32
    %713 = arith.addi %1, %663 : i32
    %c6_i32_253 = arith.constant 6 : i32
    %714 = arith.addi %713, %c6_i32_253 : i32
    %715 = arith.index_cast %712 : i32 to index
    %716 = arith.index_cast %714 : i32 to index
    %717 = memref.load %arg2[%715, %716] : memref<4x64xi32, #tpu.memory_space<smem>>
    %718 = arith.index_cast %717 : i32 to index
    %c0_254 = arith.constant 0 : index
    %719 = vector.load %arg3[%718, %c0_254] : memref<48x128xf32, #tpu.memory_space<vmem>>, vector<1x128xf32>
    %c0_i32_255 = arith.constant 0 : i32
    %720 = arith.addi %0, %c0_i32_255 : i32
    %721 = arith.addi %1, %663 : i32
    %c7_i32_256 = arith.constant 7 : i32
    %722 = arith.addi %721, %c7_i32_256 : i32
    %723 = arith.index_cast %720 : i32 to index
    %724 = arith.index_cast %722 : i32 to index
    %725 = memref.load %arg2[%723, %724] : memref<4x64xi32, #tpu.memory_space<smem>>
    %726 = arith.index_cast %725 : i32 to index
    %c0_257 = arith.constant 0 : index
    %727 = vector.load %arg3[%726, %c0_257] : memref<48x128xf32, #tpu.memory_space<vmem>>, vector<1x128xf32>
    %728 = tpu.concatenate %671, %679, %687, %695, %703, %711, %719, %727 in 0 : vector<1x128xf32>, vector<1x128xf32>, vector<1x128xf32>, vector<1x128xf32>, vector<1x128xf32>, vector<1x128xf32>, vector<1x128xf32>, vector<1x128xf32> -> vector<8x128xf32>
    %729 = arith.index_cast %663 : i32 to index
    %c0_258 = arith.constant 0 : index
    %730 = vector.load %arg4[%729, %c0_258] : memref<64x128xf32, #tpu.memory_space<vmem>>, vector<8x128xf32>
    %731 = arith.addf %728, %730 : vector<8x128xf32>
    %cst_259 = arith.constant dense<0.000000e+00> : vector<8xf32>
    %732 = vector.multi_reduction <add>, %731, %cst_259 [1] : vector<8x128xf32> to vector<8xf32>
    %733 = vector.shape_cast %732 : vector<8xf32> to vector<8x1xf32>
    %cst_260 = arith.constant 1.280000e+02 : f32
    %734 = vector.broadcast %cst_260 : f32 to vector<8x1xf32>
    %735 = arith.divf %733, %734 : vector<8x1xf32>
    %736 = vector.broadcast %735 : vector<8x1xf32> to vector<8x128xf32>
    %737 = arith.subf %731, %736 : vector<8x128xf32>
    %738 = arith.mulf %737, %737 : vector<8x128xf32>
    %cst_261 = arith.constant dense<0.000000e+00> : vector<8xf32>
    %739 = vector.multi_reduction <add>, %738, %cst_261 [1] : vector<8x128xf32> to vector<8xf32>
    %740 = vector.shape_cast %739 : vector<8xf32> to vector<8x1xf32>
    %cst_262 = arith.constant 1.280000e+02 : f32
    %741 = vector.broadcast %cst_262 : f32 to vector<8x1xf32>
    %742 = arith.divf %740, %741 : vector<8x1xf32>
    %cst_263 = arith.constant 9.99999974E-6 : f32
    %743 = vector.broadcast %cst_263 : f32 to vector<8x1xf32>
    %744 = arith.addf %742, %743 : vector<8x1xf32>
    %745 = math.rsqrt %744 : vector<8x1xf32>
    %746 = vector.broadcast %745 : vector<8x1xf32> to vector<8x128xf32>
    %747 = arith.mulf %737, %746 : vector<8x128xf32>
    %748 = vector.broadcast %2 : vector<1x128xf32> to vector<8x128xf32>
    %749 = arith.mulf %747, %748 : vector<8x128xf32>
    %750 = vector.broadcast %3 : vector<1x128xf32> to vector<8x128xf32>
    %751 = arith.addf %749, %750 : vector<8x128xf32>
    %c0_264 = arith.constant 0 : index
    %752 = arith.index_cast %663 : i32 to index
    %c0_265 = arith.constant 0 : index
    %753 = vector.load %arg7[%c0_264, %752, %c0_265] : memref<4x64x128xf32, #tpu.memory_space<vmem>>, vector<1x8x128xf32>
    %754 = vector.shape_cast %753 : vector<1x8x128xf32> to vector<8x128xf32>
    %755 = vector.shape_cast %751 : vector<8x128xf32> to vector<1x8x128xf32>
    tpu.vector_store %arg7[%c0_264, %752, %c0_265], %755 {strides = array<i32>} : memref<4x64x128xf32, #tpu.memory_space<vmem>>, vector<1x8x128xf32>,
    %c8_i32_266 = arith.constant 8 : i32
    %c0_i32_267 = arith.constant 0 : i32
    %c8_i32_268 = arith.constant 8 : i32
    %756 = arith.muli %c0_i32_267, %c8_i32_268 : i32
    %757 = tpu.assume_multiple %756, 8 : i32
    %c1_i32_269 = arith.constant 1 : i32
    %758 = arith.addi %0, %c1_i32_269 : i32
    %759 = arith.addi %1, %757 : i32
    %c0_i32_270 = arith.constant 0 : i32
    %760 = arith.addi %759, %c0_i32_270 : i32
    %761 = arith.index_cast %758 : i32 to index
    %762 = arith.index_cast %760 : i32 to index
    %763 = memref.load %arg2[%761, %762] : memref<4x64xi32, #tpu.memory_space<smem>>
    %764 = arith.index_cast %763 : i32 to index
    %c0_271 = arith.constant 0 : index
    %765 = vector.load %arg3[%764, %c0_271] : memref<48x128xf32, #tpu.memory_space<vmem>>, vector<1x128xf32>
    %c1_i32_272 = arith.constant 1 : i32
    %766 = arith.addi %0, %c1_i32_272 : i32
    %767 = arith.addi %1, %757 : i32
    %c1_i32_273 = arith.constant 1 : i32
    %768 = arith.addi %767, %c1_i32_273 : i32
    %769 = arith.index_cast %766 : i32 to index
    %770 = arith.index_cast %768 : i32 to index
    %771 = memref.load %arg2[%769, %770] : memref<4x64xi32, #tpu.memory_space<smem>>
    %772 = arith.index_cast %771 : i32 to index
    %c0_274 = arith.constant 0 : index
    %773 = vector.load %arg3[%772, %c0_274] : memref<48x128xf32, #tpu.memory_space<vmem>>, vector<1x128xf32>
    %c1_i32_275 = arith.constant 1 : i32
    %774 = arith.addi %0, %c1_i32_275 : i32
    %775 = arith.addi %1, %757 : i32
    %c2_i32_276 = arith.constant 2 : i32
    %776 = arith.addi %775, %c2_i32_276 : i32
    %777 = arith.index_cast %774 : i32 to index
    %778 = arith.index_cast %776 : i32 to index
    %779 = memref.load %arg2[%777, %778] : memref<4x64xi32, #tpu.memory_space<smem>>
    %780 = arith.index_cast %779 : i32 to index
    %c0_277 = arith.constant 0 : index
    %781 = vector.load %arg3[%780, %c0_277] : memref<48x128xf32, #tpu.memory_space<vmem>>, vector<1x128xf32>
    %c1_i32_278 = arith.constant 1 : i32
    %782 = arith.addi %0, %c1_i32_278 : i32
    %783 = arith.addi %1, %757 : i32
    %c3_i32_279 = arith.constant 3 : i32
    %784 = arith.addi %783, %c3_i32_279 : i32
    %785 = arith.index_cast %782 : i32 to index
    %786 = arith.index_cast %784 : i32 to index
    %787 = memref.load %arg2[%785, %786] : memref<4x64xi32, #tpu.memory_space<smem>>
    %788 = arith.index_cast %787 : i32 to index
    %c0_280 = arith.constant 0 : index
    %789 = vector.load %arg3[%788, %c0_280] : memref<48x128xf32, #tpu.memory_space<vmem>>, vector<1x128xf32>
    %c1_i32_281 = arith.constant 1 : i32
    %790 = arith.addi %0, %c1_i32_281 : i32
    %791 = arith.addi %1, %757 : i32
    %c4_i32_282 = arith.constant 4 : i32
    %792 = arith.addi %791, %c4_i32_282 : i32
    %793 = arith.index_cast %790 : i32 to index
    %794 = arith.index_cast %792 : i32 to index
    %795 = memref.load %arg2[%793, %794] : memref<4x64xi32, #tpu.memory_space<smem>>
    %796 = arith.index_cast %795 : i32 to index
    %c0_283 = arith.constant 0 : index
    %797 = vector.load %arg3[%796, %c0_283] : memref<48x128xf32, #tpu.memory_space<vmem>>, vector<1x128xf32>
    %c1_i32_284 = arith.constant 1 : i32
    %798 = arith.addi %0, %c1_i32_284 : i32
    %799 = arith.addi %1, %757 : i32
    %c5_i32_285 = arith.constant 5 : i32
    %800 = arith.addi %799, %c5_i32_285 : i32
    %801 = arith.index_cast %798 : i32 to index
    %802 = arith.index_cast %800 : i32 to index
    %803 = memref.load %arg2[%801, %802] : memref<4x64xi32, #tpu.memory_space<smem>>
    %804 = arith.index_cast %803 : i32 to index
    %c0_286 = arith.constant 0 : index
    %805 = vector.load %arg3[%804, %c0_286] : memref<48x128xf32, #tpu.memory_space<vmem>>, vector<1x128xf32>
    %c1_i32_287 = arith.constant 1 : i32
    %806 = arith.addi %0, %c1_i32_287 : i32
    %807 = arith.addi %1, %757 : i32
    %c6_i32_288 = arith.constant 6 : i32
    %808 = arith.addi %807, %c6_i32_288 : i32
    %809 = arith.index_cast %806 : i32 to index
    %810 = arith.index_cast %808 : i32 to index
    %811 = memref.load %arg2[%809, %810] : memref<4x64xi32, #tpu.memory_space<smem>>
    %812 = arith.index_cast %811 : i32 to index
    %c0_289 = arith.constant 0 : index
    %813 = vector.load %arg3[%812, %c0_289] : memref<48x128xf32, #tpu.memory_space<vmem>>, vector<1x128xf32>
    %c1_i32_290 = arith.constant 1 : i32
    %814 = arith.addi %0, %c1_i32_290 : i32
    %815 = arith.addi %1, %757 : i32
    %c7_i32_291 = arith.constant 7 : i32
    %816 = arith.addi %815, %c7_i32_291 : i32
    %817 = arith.index_cast %814 : i32 to index
    %818 = arith.index_cast %816 : i32 to index
    %819 = memref.load %arg2[%817, %818] : memref<4x64xi32, #tpu.memory_space<smem>>
    %820 = arith.index_cast %819 : i32 to index
    %c0_292 = arith.constant 0 : index
    %821 = vector.load %arg3[%820, %c0_292] : memref<48x128xf32, #tpu.memory_space<vmem>>, vector<1x128xf32>
    %822 = tpu.concatenate %765, %773, %781, %789, %797, %805, %813, %821 in 0 : vector<1x128xf32>, vector<1x128xf32>, vector<1x128xf32>, vector<1x128xf32>, vector<1x128xf32>, vector<1x128xf32>, vector<1x128xf32>, vector<1x128xf32> -> vector<8x128xf32>
    %823 = arith.index_cast %757 : i32 to index
    %c0_293 = arith.constant 0 : index
    %824 = vector.load %arg4[%823, %c0_293] : memref<64x128xf32, #tpu.memory_space<vmem>>, vector<8x128xf32>
    %825 = arith.addf %822, %824 : vector<8x128xf32>
    %cst_294 = arith.constant dense<0.000000e+00> : vector<8xf32>
    %826 = vector.multi_reduction <add>, %825, %cst_294 [1] : vector<8x128xf32> to vector<8xf32>
    %827 = vector.shape_cast %826 : vector<8xf32> to vector<8x1xf32>
    %cst_295 = arith.constant 1.280000e+02 : f32
    %828 = vector.broadcast %cst_295 : f32 to vector<8x1xf32>
    %829 = arith.divf %827, %828 : vector<8x1xf32>
    %830 = vector.broadcast %829 : vector<8x1xf32> to vector<8x128xf32>
    %831 = arith.subf %825, %830 : vector<8x128xf32>
    %832 = arith.mulf %831, %831 : vector<8x128xf32>
    %cst_296 = arith.constant dense<0.000000e+00> : vector<8xf32>
    %833 = vector.multi_reduction <add>, %832, %cst_296 [1] : vector<8x128xf32> to vector<8xf32>
    %834 = vector.shape_cast %833 : vector<8xf32> to vector<8x1xf32>
    %cst_297 = arith.constant 1.280000e+02 : f32
    %835 = vector.broadcast %cst_297 : f32 to vector<8x1xf32>
    %836 = arith.divf %834, %835 : vector<8x1xf32>
    %cst_298 = arith.constant 9.99999974E-6 : f32
    %837 = vector.broadcast %cst_298 : f32 to vector<8x1xf32>
    %838 = arith.addf %836, %837 : vector<8x1xf32>
    %839 = math.rsqrt %838 : vector<8x1xf32>
    %840 = vector.broadcast %839 : vector<8x1xf32> to vector<8x128xf32>
    %841 = arith.mulf %831, %840 : vector<8x128xf32>
    %842 = vector.broadcast %2 : vector<1x128xf32> to vector<8x128xf32>
    %843 = arith.mulf %841, %842 : vector<8x128xf32>
    %844 = vector.broadcast %3 : vector<1x128xf32> to vector<8x128xf32>
    %845 = arith.addf %843, %844 : vector<8x128xf32>
    %c1 = arith.constant 1 : index
    %846 = arith.index_cast %757 : i32 to index
    %c0_299 = arith.constant 0 : index
    %847 = vector.load %arg7[%c1, %846, %c0_299] : memref<4x64x128xf32, #tpu.memory_space<vmem>>, vector<1x8x128xf32>
    %848 = vector.shape_cast %847 : vector<1x8x128xf32> to vector<8x128xf32>
    %849 = vector.shape_cast %845 : vector<8x128xf32> to vector<1x8x128xf32>
    tpu.vector_store %arg7[%c1, %846, %c0_299], %849 {strides = array<i32>} : memref<4x64x128xf32, #tpu.memory_space<vmem>>, vector<1x8x128xf32>,
    %c1_i32_300 = arith.constant 1 : i32
    %c8_i32_301 = arith.constant 8 : i32
    %850 = arith.muli %c1_i32_300, %c8_i32_301 : i32
    %851 = tpu.assume_multiple %850, 8 : i32
    %c1_i32_302 = arith.constant 1 : i32
    %852 = arith.addi %0, %c1_i32_302 : i32
    %853 = arith.addi %1, %851 : i32
    %c0_i32_303 = arith.constant 0 : i32
    %854 = arith.addi %853, %c0_i32_303 : i32
    %855 = arith.index_cast %852 : i32 to index
    %856 = arith.index_cast %854 : i32 to index
    %857 = memref.load %arg2[%855, %856] : memref<4x64xi32, #tpu.memory_space<smem>>
    %858 = arith.index_cast %857 : i32 to index
    %c0_304 = arith.constant 0 : index
    %859 = vector.load %arg3[%858, %c0_304] : memref<48x128xf32, #tpu.memory_space<vmem>>, vector<1x128xf32>
    %c1_i32_305 = arith.constant 1 : i32
    %860 = arith.addi %0, %c1_i32_305 : i32
    %861 = arith.addi %1, %851 : i32
    %c1_i32_306 = arith.constant 1 : i32
    %862 = arith.addi %861, %c1_i32_306 : i32
    %863 = arith.index_cast %860 : i32 to index
    %864 = arith.index_cast %862 : i32 to index
    %865 = memref.load %arg2[%863, %864] : memref<4x64xi32, #tpu.memory_space<smem>>
    %866 = arith.index_cast %865 : i32 to index
    %c0_307 = arith.constant 0 : index
    %867 = vector.load %arg3[%866, %c0_307] : memref<48x128xf32, #tpu.memory_space<vmem>>, vector<1x128xf32>
    %c1_i32_308 = arith.constant 1 : i32
    %868 = arith.addi %0, %c1_i32_308 : i32
    %869 = arith.addi %1, %851 : i32
    %c2_i32_309 = arith.constant 2 : i32
    %870 = arith.addi %869, %c2_i32_309 : i32
    %871 = arith.index_cast %868 : i32 to index
    %872 = arith.index_cast %870 : i32 to index
    %873 = memref.load %arg2[%871, %872] : memref<4x64xi32, #tpu.memory_space<smem>>
    %874 = arith.index_cast %873 : i32 to index
    %c0_310 = arith.constant 0 : index
    %875 = vector.load %arg3[%874, %c0_310] : memref<48x128xf32, #tpu.memory_space<vmem>>, vector<1x128xf32>
    %c1_i32_311 = arith.constant 1 : i32
    %876 = arith.addi %0, %c1_i32_311 : i32
    %877 = arith.addi %1, %851 : i32
    %c3_i32_312 = arith.constant 3 : i32
    %878 = arith.addi %877, %c3_i32_312 : i32
    %879 = arith.index_cast %876 : i32 to index
    %880 = arith.index_cast %878 : i32 to index
    %881 = memref.load %arg2[%879, %880] : memref<4x64xi32, #tpu.memory_space<smem>>
    %882 = arith.index_cast %881 : i32 to index
    %c0_313 = arith.constant 0 : index
    %883 = vector.load %arg3[%882, %c0_313] : memref<48x128xf32, #tpu.memory_space<vmem>>, vector<1x128xf32>
    %c1_i32_314 = arith.constant 1 : i32
    %884 = arith.addi %0, %c1_i32_314 : i32
    %885 = arith.addi %1, %851 : i32
    %c4_i32_315 = arith.constant 4 : i32
    %886 = arith.addi %885, %c4_i32_315 : i32
    %887 = arith.index_cast %884 : i32 to index
    %888 = arith.index_cast %886 : i32 to index
    %889 = memref.load %arg2[%887, %888] : memref<4x64xi32, #tpu.memory_space<smem>>
    %890 = arith.index_cast %889 : i32 to index
    %c0_316 = arith.constant 0 : index
    %891 = vector.load %arg3[%890, %c0_316] : memref<48x128xf32, #tpu.memory_space<vmem>>, vector<1x128xf32>
    %c1_i32_317 = arith.constant 1 : i32
    %892 = arith.addi %0, %c1_i32_317 : i32
    %893 = arith.addi %1, %851 : i32
    %c5_i32_318 = arith.constant 5 : i32
    %894 = arith.addi %893, %c5_i32_318 : i32
    %895 = arith.index_cast %892 : i32 to index
    %896 = arith.index_cast %894 : i32 to index
    %897 = memref.load %arg2[%895, %896] : memref<4x64xi32, #tpu.memory_space<smem>>
    %898 = arith.index_cast %897 : i32 to index
    %c0_319 = arith.constant 0 : index
    %899 = vector.load %arg3[%898, %c0_319] : memref<48x128xf32, #tpu.memory_space<vmem>>, vector<1x128xf32>
    %c1_i32_320 = arith.constant 1 : i32
    %900 = arith.addi %0, %c1_i32_320 : i32
    %901 = arith.addi %1, %851 : i32
    %c6_i32_321 = arith.constant 6 : i32
    %902 = arith.addi %901, %c6_i32_321 : i32
    %903 = arith.index_cast %900 : i32 to index
    %904 = arith.index_cast %902 : i32 to index
    %905 = memref.load %arg2[%903, %904] : memref<4x64xi32, #tpu.memory_space<smem>>
    %906 = arith.index_cast %905 : i32 to index
    %c0_322 = arith.constant 0 : index
    %907 = vector.load %arg3[%906, %c0_322] : memref<48x128xf32, #tpu.memory_space<vmem>>, vector<1x128xf32>
    %c1_i32_323 = arith.constant 1 : i32
    %908 = arith.addi %0, %c1_i32_323 : i32
    %909 = arith.addi %1, %851 : i32
    %c7_i32_324 = arith.constant 7 : i32
    %910 = arith.addi %909, %c7_i32_324 : i32
    %911 = arith.index_cast %908 : i32 to index
    %912 = arith.index_cast %910 : i32 to index
    %913 = memref.load %arg2[%911, %912] : memref<4x64xi32, #tpu.memory_space<smem>>
    %914 = arith.index_cast %913 : i32 to index
    %c0_325 = arith.constant 0 : index
    %915 = vector.load %arg3[%914, %c0_325] : memref<48x128xf32, #tpu.memory_space<vmem>>, vector<1x128xf32>
    %916 = tpu.concatenate %859, %867, %875, %883, %891, %899, %907, %915 in 0 : vector<1x128xf32>, vector<1x128xf32>, vector<1x128xf32>, vector<1x128xf32>, vector<1x128xf32>, vector<1x128xf32>, vector<1x128xf32>, vector<1x128xf32> -> vector<8x128xf32>
    %917 = arith.index_cast %851 : i32 to index
    %c0_326 = arith.constant 0 : index
    %918 = vector.load %arg4[%917, %c0_326] : memref<64x128xf32, #tpu.memory_space<vmem>>, vector<8x128xf32>
    %919 = arith.addf %916, %918 : vector<8x128xf32>
    %cst_327 = arith.constant dense<0.000000e+00> : vector<8xf32>
    %920 = vector.multi_reduction <add>, %919, %cst_327 [1] : vector<8x128xf32> to vector<8xf32>
    %921 = vector.shape_cast %920 : vector<8xf32> to vector<8x1xf32>
    %cst_328 = arith.constant 1.280000e+02 : f32
    %922 = vector.broadcast %cst_328 : f32 to vector<8x1xf32>
    %923 = arith.divf %921, %922 : vector<8x1xf32>
    %924 = vector.broadcast %923 : vector<8x1xf32> to vector<8x128xf32>
    %925 = arith.subf %919, %924 : vector<8x128xf32>
    %926 = arith.mulf %925, %925 : vector<8x128xf32>
    %cst_329 = arith.constant dense<0.000000e+00> : vector<8xf32>
    %927 = vector.multi_reduction <add>, %926, %cst_329 [1] : vector<8x128xf32> to vector<8xf32>
    %928 = vector.shape_cast %927 : vector<8xf32> to vector<8x1xf32>
    %cst_330 = arith.constant 1.280000e+02 : f32
    %929 = vector.broadcast %cst_330 : f32 to vector<8x1xf32>
    %930 = arith.divf %928, %929 : vector<8x1xf32>
    %cst_331 = arith.constant 9.99999974E-6 : f32
    %931 = vector.broadcast %cst_331 : f32 to vector<8x1xf32>
    %932 = arith.addf %930, %931 : vector<8x1xf32>
    %933 = math.rsqrt %932 : vector<8x1xf32>
    %934 = vector.broadcast %933 : vector<8x1xf32> to vector<8x128xf32>
    %935 = arith.mulf %925, %934 : vector<8x128xf32>
    %936 = vector.broadcast %2 : vector<1x128xf32> to vector<8x128xf32>
    %937 = arith.mulf %935, %936 : vector<8x128xf32>
    %938 = vector.broadcast %3 : vector<1x128xf32> to vector<8x128xf32>
    %939 = arith.addf %937, %938 : vector<8x128xf32>
    %c1_332 = arith.constant 1 : index
    %940 = arith.index_cast %851 : i32 to index
    %c0_333 = arith.constant 0 : index
    %941 = vector.load %arg7[%c1_332, %940, %c0_333] : memref<4x64x128xf32, #tpu.memory_space<vmem>>, vector<1x8x128xf32>
    %942 = vector.shape_cast %941 : vector<1x8x128xf32> to vector<8x128xf32>
    %943 = vector.shape_cast %939 : vector<8x128xf32> to vector<1x8x128xf32>
    tpu.vector_store %arg7[%c1_332, %940, %c0_333], %943 {strides = array<i32>} : memref<4x64x128xf32, #tpu.memory_space<vmem>>, vector<1x8x128xf32>,
    %c2_i32_334 = arith.constant 2 : i32
    %c8_i32_335 = arith.constant 8 : i32
    %944 = arith.muli %c2_i32_334, %c8_i32_335 : i32
    %945 = tpu.assume_multiple %944, 8 : i32
    %c1_i32_336 = arith.constant 1 : i32
    %946 = arith.addi %0, %c1_i32_336 : i32
    %947 = arith.addi %1, %945 : i32
    %c0_i32_337 = arith.constant 0 : i32
    %948 = arith.addi %947, %c0_i32_337 : i32
    %949 = arith.index_cast %946 : i32 to index
    %950 = arith.index_cast %948 : i32 to index
    %951 = memref.load %arg2[%949, %950] : memref<4x64xi32, #tpu.memory_space<smem>>
    %952 = arith.index_cast %951 : i32 to index
    %c0_338 = arith.constant 0 : index
    %953 = vector.load %arg3[%952, %c0_338] : memref<48x128xf32, #tpu.memory_space<vmem>>, vector<1x128xf32>
    %c1_i32_339 = arith.constant 1 : i32
    %954 = arith.addi %0, %c1_i32_339 : i32
    %955 = arith.addi %1, %945 : i32
    %c1_i32_340 = arith.constant 1 : i32
    %956 = arith.addi %955, %c1_i32_340 : i32
    %957 = arith.index_cast %954 : i32 to index
    %958 = arith.index_cast %956 : i32 to index
    %959 = memref.load %arg2[%957, %958] : memref<4x64xi32, #tpu.memory_space<smem>>
    %960 = arith.index_cast %959 : i32 to index
    %c0_341 = arith.constant 0 : index
    %961 = vector.load %arg3[%960, %c0_341] : memref<48x128xf32, #tpu.memory_space<vmem>>, vector<1x128xf32>
    %c1_i32_342 = arith.constant 1 : i32
    %962 = arith.addi %0, %c1_i32_342 : i32
    %963 = arith.addi %1, %945 : i32
    %c2_i32_343 = arith.constant 2 : i32
    %964 = arith.addi %963, %c2_i32_343 : i32
    %965 = arith.index_cast %962 : i32 to index
    %966 = arith.index_cast %964 : i32 to index
    %967 = memref.load %arg2[%965, %966] : memref<4x64xi32, #tpu.memory_space<smem>>
    %968 = arith.index_cast %967 : i32 to index
    %c0_344 = arith.constant 0 : index
    %969 = vector.load %arg3[%968, %c0_344] : memref<48x128xf32, #tpu.memory_space<vmem>>, vector<1x128xf32>
    %c1_i32_345 = arith.constant 1 : i32
    %970 = arith.addi %0, %c1_i32_345 : i32
    %971 = arith.addi %1, %945 : i32
    %c3_i32_346 = arith.constant 3 : i32
    %972 = arith.addi %971, %c3_i32_346 : i32
    %973 = arith.index_cast %970 : i32 to index
    %974 = arith.index_cast %972 : i32 to index
    %975 = memref.load %arg2[%973, %974] : memref<4x64xi32, #tpu.memory_space<smem>>
    %976 = arith.index_cast %975 : i32 to index
    %c0_347 = arith.constant 0 : index
    %977 = vector.load %arg3[%976, %c0_347] : memref<48x128xf32, #tpu.memory_space<vmem>>, vector<1x128xf32>
    %c1_i32_348 = arith.constant 1 : i32
    %978 = arith.addi %0, %c1_i32_348 : i32
    %979 = arith.addi %1, %945 : i32
    %c4_i32_349 = arith.constant 4 : i32
    %980 = arith.addi %979, %c4_i32_349 : i32
    %981 = arith.index_cast %978 : i32 to index
    %982 = arith.index_cast %980 : i32 to index
    %983 = memref.load %arg2[%981, %982] : memref<4x64xi32, #tpu.memory_space<smem>>
    %984 = arith.index_cast %983 : i32 to index
    %c0_350 = arith.constant 0 : index
    %985 = vector.load %arg3[%984, %c0_350] : memref<48x128xf32, #tpu.memory_space<vmem>>, vector<1x128xf32>
    %c1_i32_351 = arith.constant 1 : i32
    %986 = arith.addi %0, %c1_i32_351 : i32
    %987 = arith.addi %1, %945 : i32
    %c5_i32_352 = arith.constant 5 : i32
    %988 = arith.addi %987, %c5_i32_352 : i32
    %989 = arith.index_cast %986 : i32 to index
    %990 = arith.index_cast %988 : i32 to index
    %991 = memref.load %arg2[%989, %990] : memref<4x64xi32, #tpu.memory_space<smem>>
    %992 = arith.index_cast %991 : i32 to index
    %c0_353 = arith.constant 0 : index
    %993 = vector.load %arg3[%992, %c0_353] : memref<48x128xf32, #tpu.memory_space<vmem>>, vector<1x128xf32>
    %c1_i32_354 = arith.constant 1 : i32
    %994 = arith.addi %0, %c1_i32_354 : i32
    %995 = arith.addi %1, %945 : i32
    %c6_i32_355 = arith.constant 6 : i32
    %996 = arith.addi %995, %c6_i32_355 : i32
    %997 = arith.index_cast %994 : i32 to index
    %998 = arith.index_cast %996 : i32 to index
    %999 = memref.load %arg2[%997, %998] : memref<4x64xi32, #tpu.memory_space<smem>>
    %1000 = arith.index_cast %999 : i32 to index
    %c0_356 = arith.constant 0 : index
    %1001 = vector.load %arg3[%1000, %c0_356] : memref<48x128xf32, #tpu.memory_space<vmem>>, vector<1x128xf32>
    %c1_i32_357 = arith.constant 1 : i32
    %1002 = arith.addi %0, %c1_i32_357 : i32
    %1003 = arith.addi %1, %945 : i32
    %c7_i32_358 = arith.constant 7 : i32
    %1004 = arith.addi %1003, %c7_i32_358 : i32
    %1005 = arith.index_cast %1002 : i32 to index
    %1006 = arith.index_cast %1004 : i32 to index
    %1007 = memref.load %arg2[%1005, %1006] : memref<4x64xi32, #tpu.memory_space<smem>>
    %1008 = arith.index_cast %1007 : i32 to index
    %c0_359 = arith.constant 0 : index
    %1009 = vector.load %arg3[%1008, %c0_359] : memref<48x128xf32, #tpu.memory_space<vmem>>, vector<1x128xf32>
    %1010 = tpu.concatenate %953, %961, %969, %977, %985, %993, %1001, %1009 in 0 : vector<1x128xf32>, vector<1x128xf32>, vector<1x128xf32>, vector<1x128xf32>, vector<1x128xf32>, vector<1x128xf32>, vector<1x128xf32>, vector<1x128xf32> -> vector<8x128xf32>
    %1011 = arith.index_cast %945 : i32 to index
    %c0_360 = arith.constant 0 : index
    %1012 = vector.load %arg4[%1011, %c0_360] : memref<64x128xf32, #tpu.memory_space<vmem>>, vector<8x128xf32>
    %1013 = arith.addf %1010, %1012 : vector<8x128xf32>
    %cst_361 = arith.constant dense<0.000000e+00> : vector<8xf32>
    %1014 = vector.multi_reduction <add>, %1013, %cst_361 [1] : vector<8x128xf32> to vector<8xf32>
    %1015 = vector.shape_cast %1014 : vector<8xf32> to vector<8x1xf32>
    %cst_362 = arith.constant 1.280000e+02 : f32
    %1016 = vector.broadcast %cst_362 : f32 to vector<8x1xf32>
    %1017 = arith.divf %1015, %1016 : vector<8x1xf32>
    %1018 = vector.broadcast %1017 : vector<8x1xf32> to vector<8x128xf32>
    %1019 = arith.subf %1013, %1018 : vector<8x128xf32>
    %1020 = arith.mulf %1019, %1019 : vector<8x128xf32>
    %cst_363 = arith.constant dense<0.000000e+00> : vector<8xf32>
    %1021 = vector.multi_reduction <add>, %1020, %cst_363 [1] : vector<8x128xf32> to vector<8xf32>
    %1022 = vector.shape_cast %1021 : vector<8xf32> to vector<8x1xf32>
    %cst_364 = arith.constant 1.280000e+02 : f32
    %1023 = vector.broadcast %cst_364 : f32 to vector<8x1xf32>
    %1024 = arith.divf %1022, %1023 : vector<8x1xf32>
    %cst_365 = arith.constant 9.99999974E-6 : f32
    %1025 = vector.broadcast %cst_365 : f32 to vector<8x1xf32>
    %1026 = arith.addf %1024, %1025 : vector<8x1xf32>
    %1027 = math.rsqrt %1026 : vector<8x1xf32>
    %1028 = vector.broadcast %1027 : vector<8x1xf32> to vector<8x128xf32>
    %1029 = arith.mulf %1019, %1028 : vector<8x128xf32>
    %1030 = vector.broadcast %2 : vector<1x128xf32> to vector<8x128xf32>
    %1031 = arith.mulf %1029, %1030 : vector<8x128xf32>
    %1032 = vector.broadcast %3 : vector<1x128xf32> to vector<8x128xf32>
    %1033 = arith.addf %1031, %1032 : vector<8x128xf32>
    %c1_366 = arith.constant 1 : index
    %1034 = arith.index_cast %945 : i32 to index
    %c0_367 = arith.constant 0 : index
    %1035 = vector.load %arg7[%c1_366, %1034, %c0_367] : memref<4x64x128xf32, #tpu.memory_space<vmem>>, vector<1x8x128xf32>
    %1036 = vector.shape_cast %1035 : vector<1x8x128xf32> to vector<8x128xf32>
    %1037 = vector.shape_cast %1033 : vector<8x128xf32> to vector<1x8x128xf32>
    tpu.vector_store %arg7[%c1_366, %1034, %c0_367], %1037 {strides = array<i32>} : memref<4x64x128xf32, #tpu.memory_space<vmem>>, vector<1x8x128xf32>,
    %c3_i32_368 = arith.constant 3 : i32
    %c8_i32_369 = arith.constant 8 : i32
    %1038 = arith.muli %c3_i32_368, %c8_i32_369 : i32
    %1039 = tpu.assume_multiple %1038, 8 : i32
    %c1_i32_370 = arith.constant 1 : i32
    %1040 = arith.addi %0, %c1_i32_370 : i32
    %1041 = arith.addi %1, %1039 : i32
    %c0_i32_371 = arith.constant 0 : i32
    %1042 = arith.addi %1041, %c0_i32_371 : i32
    %1043 = arith.index_cast %1040 : i32 to index
    %1044 = arith.index_cast %1042 : i32 to index
    %1045 = memref.load %arg2[%1043, %1044] : memref<4x64xi32, #tpu.memory_space<smem>>
    %1046 = arith.index_cast %1045 : i32 to index
    %c0_372 = arith.constant 0 : index
    %1047 = vector.load %arg3[%1046, %c0_372] : memref<48x128xf32, #tpu.memory_space<vmem>>, vector<1x128xf32>
    %c1_i32_373 = arith.constant 1 : i32
    %1048 = arith.addi %0, %c1_i32_373 : i32
    %1049 = arith.addi %1, %1039 : i32
    %c1_i32_374 = arith.constant 1 : i32
    %1050 = arith.addi %1049, %c1_i32_374 : i32
    %1051 = arith.index_cast %1048 : i32 to index
    %1052 = arith.index_cast %1050 : i32 to index
    %1053 = memref.load %arg2[%1051, %1052] : memref<4x64xi32, #tpu.memory_space<smem>>
    %1054 = arith.index_cast %1053 : i32 to index
    %c0_375 = arith.constant 0 : index
    %1055 = vector.load %arg3[%1054, %c0_375] : memref<48x128xf32, #tpu.memory_space<vmem>>, vector<1x128xf32>
    %c1_i32_376 = arith.constant 1 : i32
    %1056 = arith.addi %0, %c1_i32_376 : i32
    %1057 = arith.addi %1, %1039 : i32
    %c2_i32_377 = arith.constant 2 : i32
    %1058 = arith.addi %1057, %c2_i32_377 : i32
    %1059 = arith.index_cast %1056 : i32 to index
    %1060 = arith.index_cast %1058 : i32 to index
    %1061 = memref.load %arg2[%1059, %1060] : memref<4x64xi32, #tpu.memory_space<smem>>
    %1062 = arith.index_cast %1061 : i32 to index
    %c0_378 = arith.constant 0 : index
    %1063 = vector.load %arg3[%1062, %c0_378] : memref<48x128xf32, #tpu.memory_space<vmem>>, vector<1x128xf32>
    %c1_i32_379 = arith.constant 1 : i32
    %1064 = arith.addi %0, %c1_i32_379 : i32
    %1065 = arith.addi %1, %1039 : i32
    %c3_i32_380 = arith.constant 3 : i32
    %1066 = arith.addi %1065, %c3_i32_380 : i32
    %1067 = arith.index_cast %1064 : i32 to index
    %1068 = arith.index_cast %1066 : i32 to index
    %1069 = memref.load %arg2[%1067, %1068] : memref<4x64xi32, #tpu.memory_space<smem>>
    %1070 = arith.index_cast %1069 : i32 to index
    %c0_381 = arith.constant 0 : index
    %1071 = vector.load %arg3[%1070, %c0_381] : memref<48x128xf32, #tpu.memory_space<vmem>>, vector<1x128xf32>
    %c1_i32_382 = arith.constant 1 : i32
    %1072 = arith.addi %0, %c1_i32_382 : i32
    %1073 = arith.addi %1, %1039 : i32
    %c4_i32_383 = arith.constant 4 : i32
    %1074 = arith.addi %1073, %c4_i32_383 : i32
    %1075 = arith.index_cast %1072 : i32 to index
    %1076 = arith.index_cast %1074 : i32 to index
    %1077 = memref.load %arg2[%1075, %1076] : memref<4x64xi32, #tpu.memory_space<smem>>
    %1078 = arith.index_cast %1077 : i32 to index
    %c0_384 = arith.constant 0 : index
    %1079 = vector.load %arg3[%1078, %c0_384] : memref<48x128xf32, #tpu.memory_space<vmem>>, vector<1x128xf32>
    %c1_i32_385 = arith.constant 1 : i32
    %1080 = arith.addi %0, %c1_i32_385 : i32
    %1081 = arith.addi %1, %1039 : i32
    %c5_i32_386 = arith.constant 5 : i32
    %1082 = arith.addi %1081, %c5_i32_386 : i32
    %1083 = arith.index_cast %1080 : i32 to index
    %1084 = arith.index_cast %1082 : i32 to index
    %1085 = memref.load %arg2[%1083, %1084] : memref<4x64xi32, #tpu.memory_space<smem>>
    %1086 = arith.index_cast %1085 : i32 to index
    %c0_387 = arith.constant 0 : index
    %1087 = vector.load %arg3[%1086, %c0_387] : memref<48x128xf32, #tpu.memory_space<vmem>>, vector<1x128xf32>
    %c1_i32_388 = arith.constant 1 : i32
    %1088 = arith.addi %0, %c1_i32_388 : i32
    %1089 = arith.addi %1, %1039 : i32
    %c6_i32_389 = arith.constant 6 : i32
    %1090 = arith.addi %1089, %c6_i32_389 : i32
    %1091 = arith.index_cast %1088 : i32 to index
    %1092 = arith.index_cast %1090 : i32 to index
    %1093 = memref.load %arg2[%1091, %1092] : memref<4x64xi32, #tpu.memory_space<smem>>
    %1094 = arith.index_cast %1093 : i32 to index
    %c0_390 = arith.constant 0 : index
    %1095 = vector.load %arg3[%1094, %c0_390] : memref<48x128xf32, #tpu.memory_space<vmem>>, vector<1x128xf32>
    %c1_i32_391 = arith.constant 1 : i32
    %1096 = arith.addi %0, %c1_i32_391 : i32
    %1097 = arith.addi %1, %1039 : i32
    %c7_i32_392 = arith.constant 7 : i32
    %1098 = arith.addi %1097, %c7_i32_392 : i32
    %1099 = arith.index_cast %1096 : i32 to index
    %1100 = arith.index_cast %1098 : i32 to index
    %1101 = memref.load %arg2[%1099, %1100] : memref<4x64xi32, #tpu.memory_space<smem>>
    %1102 = arith.index_cast %1101 : i32 to index
    %c0_393 = arith.constant 0 : index
    %1103 = vector.load %arg3[%1102, %c0_393] : memref<48x128xf32, #tpu.memory_space<vmem>>, vector<1x128xf32>
    %1104 = tpu.concatenate %1047, %1055, %1063, %1071, %1079, %1087, %1095, %1103 in 0 : vector<1x128xf32>, vector<1x128xf32>, vector<1x128xf32>, vector<1x128xf32>, vector<1x128xf32>, vector<1x128xf32>, vector<1x128xf32>, vector<1x128xf32> -> vector<8x128xf32>
    %1105 = arith.index_cast %1039 : i32 to index
    %c0_394 = arith.constant 0 : index
    %1106 = vector.load %arg4[%1105, %c0_394] : memref<64x128xf32, #tpu.memory_space<vmem>>, vector<8x128xf32>
    %1107 = arith.addf %1104, %1106 : vector<8x128xf32>
    %cst_395 = arith.constant dense<0.000000e+00> : vector<8xf32>
    %1108 = vector.multi_reduction <add>, %1107, %cst_395 [1] : vector<8x128xf32> to vector<8xf32>
    %1109 = vector.shape_cast %1108 : vector<8xf32> to vector<8x1xf32>
    %cst_396 = arith.constant 1.280000e+02 : f32
    %1110 = vector.broadcast %cst_396 : f32 to vector<8x1xf32>
    %1111 = arith.divf %1109, %1110 : vector<8x1xf32>
    %1112 = vector.broadcast %1111 : vector<8x1xf32> to vector<8x128xf32>
    %1113 = arith.subf %1107, %1112 : vector<8x128xf32>
    %1114 = arith.mulf %1113, %1113 : vector<8x128xf32>
    %cst_397 = arith.constant dense<0.000000e+00> : vector<8xf32>
    %1115 = vector.multi_reduction <add>, %1114, %cst_397 [1] : vector<8x128xf32> to vector<8xf32>
    %1116 = vector.shape_cast %1115 : vector<8xf32> to vector<8x1xf32>
    %cst_398 = arith.constant 1.280000e+02 : f32
    %1117 = vector.broadcast %cst_398 : f32 to vector<8x1xf32>
    %1118 = arith.divf %1116, %1117 : vector<8x1xf32>
    %cst_399 = arith.constant 9.99999974E-6 : f32
    %1119 = vector.broadcast %cst_399 : f32 to vector<8x1xf32>
    %1120 = arith.addf %1118, %1119 : vector<8x1xf32>
    %1121 = math.rsqrt %1120 : vector<8x1xf32>
    %1122 = vector.broadcast %1121 : vector<8x1xf32> to vector<8x128xf32>
    %1123 = arith.mulf %1113, %1122 : vector<8x128xf32>
    %1124 = vector.broadcast %2 : vector<1x128xf32> to vector<8x128xf32>
    %1125 = arith.mulf %1123, %1124 : vector<8x128xf32>
    %1126 = vector.broadcast %3 : vector<1x128xf32> to vector<8x128xf32>
    %1127 = arith.addf %1125, %1126 : vector<8x128xf32>
    %c1_400 = arith.constant 1 : index
    %1128 = arith.index_cast %1039 : i32 to index
    %c0_401 = arith.constant 0 : index
    %1129 = vector.load %arg7[%c1_400, %1128, %c0_401] : memref<4x64x128xf32, #tpu.memory_space<vmem>>, vector<1x8x128xf32>
    %1130 = vector.shape_cast %1129 : vector<1x8x128xf32> to vector<8x128xf32>
    %1131 = vector.shape_cast %1127 : vector<8x128xf32> to vector<1x8x128xf32>
    tpu.vector_store %arg7[%c1_400, %1128, %c0_401], %1131 {strides = array<i32>} : memref<4x64x128xf32, #tpu.memory_space<vmem>>, vector<1x8x128xf32>,
    %c4_i32_402 = arith.constant 4 : i32
    %c8_i32_403 = arith.constant 8 : i32
    %1132 = arith.muli %c4_i32_402, %c8_i32_403 : i32
    %1133 = tpu.assume_multiple %1132, 8 : i32
    %c1_i32_404 = arith.constant 1 : i32
    %1134 = arith.addi %0, %c1_i32_404 : i32
    %1135 = arith.addi %1, %1133 : i32
    %c0_i32_405 = arith.constant 0 : i32
    %1136 = arith.addi %1135, %c0_i32_405 : i32
    %1137 = arith.index_cast %1134 : i32 to index
    %1138 = arith.index_cast %1136 : i32 to index
    %1139 = memref.load %arg2[%1137, %1138] : memref<4x64xi32, #tpu.memory_space<smem>>
    %1140 = arith.index_cast %1139 : i32 to index
    %c0_406 = arith.constant 0 : index
    %1141 = vector.load %arg3[%1140, %c0_406] : memref<48x128xf32, #tpu.memory_space<vmem>>, vector<1x128xf32>
    %c1_i32_407 = arith.constant 1 : i32
    %1142 = arith.addi %0, %c1_i32_407 : i32
    %1143 = arith.addi %1, %1133 : i32
    %c1_i32_408 = arith.constant 1 : i32
    %1144 = arith.addi %1143, %c1_i32_408 : i32
    %1145 = arith.index_cast %1142 : i32 to index
    %1146 = arith.index_cast %1144 : i32 to index
    %1147 = memref.load %arg2[%1145, %1146] : memref<4x64xi32, #tpu.memory_space<smem>>
    %1148 = arith.index_cast %1147 : i32 to index
    %c0_409 = arith.constant 0 : index
    %1149 = vector.load %arg3[%1148, %c0_409] : memref<48x128xf32, #tpu.memory_space<vmem>>, vector<1x128xf32>
    %c1_i32_410 = arith.constant 1 : i32
    %1150 = arith.addi %0, %c1_i32_410 : i32
    %1151 = arith.addi %1, %1133 : i32
    %c2_i32_411 = arith.constant 2 : i32
    %1152 = arith.addi %1151, %c2_i32_411 : i32
    %1153 = arith.index_cast %1150 : i32 to index
    %1154 = arith.index_cast %1152 : i32 to index
    %1155 = memref.load %arg2[%1153, %1154] : memref<4x64xi32, #tpu.memory_space<smem>>
    %1156 = arith.index_cast %1155 : i32 to index
    %c0_412 = arith.constant 0 : index
    %1157 = vector.load %arg3[%1156, %c0_412] : memref<48x128xf32, #tpu.memory_space<vmem>>, vector<1x128xf32>
    %c1_i32_413 = arith.constant 1 : i32
    %1158 = arith.addi %0, %c1_i32_413 : i32
    %1159 = arith.addi %1, %1133 : i32
    %c3_i32_414 = arith.constant 3 : i32
    %1160 = arith.addi %1159, %c3_i32_414 : i32
    %1161 = arith.index_cast %1158 : i32 to index
    %1162 = arith.index_cast %1160 : i32 to index
    %1163 = memref.load %arg2[%1161, %1162] : memref<4x64xi32, #tpu.memory_space<smem>>
    %1164 = arith.index_cast %1163 : i32 to index
    %c0_415 = arith.constant 0 : index
    %1165 = vector.load %arg3[%1164, %c0_415] : memref<48x128xf32, #tpu.memory_space<vmem>>, vector<1x128xf32>
    %c1_i32_416 = arith.constant 1 : i32
    %1166 = arith.addi %0, %c1_i32_416 : i32
    %1167 = arith.addi %1, %1133 : i32
    %c4_i32_417 = arith.constant 4 : i32
    %1168 = arith.addi %1167, %c4_i32_417 : i32
    %1169 = arith.index_cast %1166 : i32 to index
    %1170 = arith.index_cast %1168 : i32 to index
    %1171 = memref.load %arg2[%1169, %1170] : memref<4x64xi32, #tpu.memory_space<smem>>
    %1172 = arith.index_cast %1171 : i32 to index
    %c0_418 = arith.constant 0 : index
    %1173 = vector.load %arg3[%1172, %c0_418] : memref<48x128xf32, #tpu.memory_space<vmem>>, vector<1x128xf32>
    %c1_i32_419 = arith.constant 1 : i32
    %1174 = arith.addi %0, %c1_i32_419 : i32
    %1175 = arith.addi %1, %1133 : i32
    %c5_i32_420 = arith.constant 5 : i32
    %1176 = arith.addi %1175, %c5_i32_420 : i32
    %1177 = arith.index_cast %1174 : i32 to index
    %1178 = arith.index_cast %1176 : i32 to index
    %1179 = memref.load %arg2[%1177, %1178] : memref<4x64xi32, #tpu.memory_space<smem>>
    %1180 = arith.index_cast %1179 : i32 to index
    %c0_421 = arith.constant 0 : index
    %1181 = vector.load %arg3[%1180, %c0_421] : memref<48x128xf32, #tpu.memory_space<vmem>>, vector<1x128xf32>
    %c1_i32_422 = arith.constant 1 : i32
    %1182 = arith.addi %0, %c1_i32_422 : i32
    %1183 = arith.addi %1, %1133 : i32
    %c6_i32_423 = arith.constant 6 : i32
    %1184 = arith.addi %1183, %c6_i32_423 : i32
    %1185 = arith.index_cast %1182 : i32 to index
    %1186 = arith.index_cast %1184 : i32 to index
    %1187 = memref.load %arg2[%1185, %1186] : memref<4x64xi32, #tpu.memory_space<smem>>
    %1188 = arith.index_cast %1187 : i32 to index
    %c0_424 = arith.constant 0 : index
    %1189 = vector.load %arg3[%1188, %c0_424] : memref<48x128xf32, #tpu.memory_space<vmem>>, vector<1x128xf32>
    %c1_i32_425 = arith.constant 1 : i32
    %1190 = arith.addi %0, %c1_i32_425 : i32
    %1191 = arith.addi %1, %1133 : i32
    %c7_i32_426 = arith.constant 7 : i32
    %1192 = arith.addi %1191, %c7_i32_426 : i32
    %1193 = arith.index_cast %1190 : i32 to index
    %1194 = arith.index_cast %1192 : i32 to index
    %1195 = memref.load %arg2[%1193, %1194] : memref<4x64xi32, #tpu.memory_space<smem>>
    %1196 = arith.index_cast %1195 : i32 to index
    %c0_427 = arith.constant 0 : index
    %1197 = vector.load %arg3[%1196, %c0_427] : memref<48x128xf32, #tpu.memory_space<vmem>>, vector<1x128xf32>
    %1198 = tpu.concatenate %1141, %1149, %1157, %1165, %1173, %1181, %1189, %1197 in 0 : vector<1x128xf32>, vector<1x128xf32>, vector<1x128xf32>, vector<1x128xf32>, vector<1x128xf32>, vector<1x128xf32>, vector<1x128xf32>, vector<1x128xf32> -> vector<8x128xf32>
    %1199 = arith.index_cast %1133 : i32 to index
    %c0_428 = arith.constant 0 : index
    %1200 = vector.load %arg4[%1199, %c0_428] : memref<64x128xf32, #tpu.memory_space<vmem>>, vector<8x128xf32>
    %1201 = arith.addf %1198, %1200 : vector<8x128xf32>
    %cst_429 = arith.constant dense<0.000000e+00> : vector<8xf32>
    %1202 = vector.multi_reduction <add>, %1201, %cst_429 [1] : vector<8x128xf32> to vector<8xf32>
    %1203 = vector.shape_cast %1202 : vector<8xf32> to vector<8x1xf32>
    %cst_430 = arith.constant 1.280000e+02 : f32
    %1204 = vector.broadcast %cst_430 : f32 to vector<8x1xf32>
    %1205 = arith.divf %1203, %1204 : vector<8x1xf32>
    %1206 = vector.broadcast %1205 : vector<8x1xf32> to vector<8x128xf32>
    %1207 = arith.subf %1201, %1206 : vector<8x128xf32>
    %1208 = arith.mulf %1207, %1207 : vector<8x128xf32>
    %cst_431 = arith.constant dense<0.000000e+00> : vector<8xf32>
    %1209 = vector.multi_reduction <add>, %1208, %cst_431 [1] : vector<8x128xf32> to vector<8xf32>
    %1210 = vector.shape_cast %1209 : vector<8xf32> to vector<8x1xf32>
    %cst_432 = arith.constant 1.280000e+02 : f32
    %1211 = vector.broadcast %cst_432 : f32 to vector<8x1xf32>
    %1212 = arith.divf %1210, %1211 : vector<8x1xf32>
    %cst_433 = arith.constant 9.99999974E-6 : f32
    %1213 = vector.broadcast %cst_433 : f32 to vector<8x1xf32>
    %1214 = arith.addf %1212, %1213 : vector<8x1xf32>
    %1215 = math.rsqrt %1214 : vector<8x1xf32>
    %1216 = vector.broadcast %1215 : vector<8x1xf32> to vector<8x128xf32>
    %1217 = arith.mulf %1207, %1216 : vector<8x128xf32>
    %1218 = vector.broadcast %2 : vector<1x128xf32> to vector<8x128xf32>
    %1219 = arith.mulf %1217, %1218 : vector<8x128xf32>
    %1220 = vector.broadcast %3 : vector<1x128xf32> to vector<8x128xf32>
    %1221 = arith.addf %1219, %1220 : vector<8x128xf32>
    %c1_434 = arith.constant 1 : index
    %1222 = arith.index_cast %1133 : i32 to index
    %c0_435 = arith.constant 0 : index
    %1223 = vector.load %arg7[%c1_434, %1222, %c0_435] : memref<4x64x128xf32, #tpu.memory_space<vmem>>, vector<1x8x128xf32>
    %1224 = vector.shape_cast %1223 : vector<1x8x128xf32> to vector<8x128xf32>
    %1225 = vector.shape_cast %1221 : vector<8x128xf32> to vector<1x8x128xf32>
    tpu.vector_store %arg7[%c1_434, %1222, %c0_435], %1225 {strides = array<i32>} : memref<4x64x128xf32, #tpu.memory_space<vmem>>, vector<1x8x128xf32>,
    %c5_i32_436 = arith.constant 5 : i32
    %c8_i32_437 = arith.constant 8 : i32
    %1226 = arith.muli %c5_i32_436, %c8_i32_437 : i32
    %1227 = tpu.assume_multiple %1226, 8 : i32
    %c1_i32_438 = arith.constant 1 : i32
    %1228 = arith.addi %0, %c1_i32_438 : i32
    %1229 = arith.addi %1, %1227 : i32
    %c0_i32_439 = arith.constant 0 : i32
    %1230 = arith.addi %1229, %c0_i32_439 : i32
    %1231 = arith.index_cast %1228 : i32 to index
    %1232 = arith.index_cast %1230 : i32 to index
    %1233 = memref.load %arg2[%1231, %1232] : memref<4x64xi32, #tpu.memory_space<smem>>
    %1234 = arith.index_cast %1233 : i32 to index
    %c0_440 = arith.constant 0 : index
    %1235 = vector.load %arg3[%1234, %c0_440] : memref<48x128xf32, #tpu.memory_space<vmem>>, vector<1x128xf32>
    %c1_i32_441 = arith.constant 1 : i32
    %1236 = arith.addi %0, %c1_i32_441 : i32
    %1237 = arith.addi %1, %1227 : i32
    %c1_i32_442 = arith.constant 1 : i32
    %1238 = arith.addi %1237, %c1_i32_442 : i32
    %1239 = arith.index_cast %1236 : i32 to index
    %1240 = arith.index_cast %1238 : i32 to index
    %1241 = memref.load %arg2[%1239, %1240] : memref<4x64xi32, #tpu.memory_space<smem>>
    %1242 = arith.index_cast %1241 : i32 to index
    %c0_443 = arith.constant 0 : index
    %1243 = vector.load %arg3[%1242, %c0_443] : memref<48x128xf32, #tpu.memory_space<vmem>>, vector<1x128xf32>
    %c1_i32_444 = arith.constant 1 : i32
    %1244 = arith.addi %0, %c1_i32_444 : i32
    %1245 = arith.addi %1, %1227 : i32
    %c2_i32_445 = arith.constant 2 : i32
    %1246 = arith.addi %1245, %c2_i32_445 : i32
    %1247 = arith.index_cast %1244 : i32 to index
    %1248 = arith.index_cast %1246 : i32 to index
    %1249 = memref.load %arg2[%1247, %1248] : memref<4x64xi32, #tpu.memory_space<smem>>
    %1250 = arith.index_cast %1249 : i32 to index
    %c0_446 = arith.constant 0 : index
    %1251 = vector.load %arg3[%1250, %c0_446] : memref<48x128xf32, #tpu.memory_space<vmem>>, vector<1x128xf32>
    %c1_i32_447 = arith.constant 1 : i32
    %1252 = arith.addi %0, %c1_i32_447 : i32
    %1253 = arith.addi %1, %1227 : i32
    %c3_i32_448 = arith.constant 3 : i32
    %1254 = arith.addi %1253, %c3_i32_448 : i32
    %1255 = arith.index_cast %1252 : i32 to index
    %1256 = arith.index_cast %1254 : i32 to index
    %1257 = memref.load %arg2[%1255, %1256] : memref<4x64xi32, #tpu.memory_space<smem>>
    %1258 = arith.index_cast %1257 : i32 to index
    %c0_449 = arith.constant 0 : index
    %1259 = vector.load %arg3[%1258, %c0_449] : memref<48x128xf32, #tpu.memory_space<vmem>>, vector<1x128xf32>
    %c1_i32_450 = arith.constant 1 : i32
    %1260 = arith.addi %0, %c1_i32_450 : i32
    %1261 = arith.addi %1, %1227 : i32
    %c4_i32_451 = arith.constant 4 : i32
    %1262 = arith.addi %1261, %c4_i32_451 : i32
    %1263 = arith.index_cast %1260 : i32 to index
    %1264 = arith.index_cast %1262 : i32 to index
    %1265 = memref.load %arg2[%1263, %1264] : memref<4x64xi32, #tpu.memory_space<smem>>
    %1266 = arith.index_cast %1265 : i32 to index
    %c0_452 = arith.constant 0 : index
    %1267 = vector.load %arg3[%1266, %c0_452] : memref<48x128xf32, #tpu.memory_space<vmem>>, vector<1x128xf32>
    %c1_i32_453 = arith.constant 1 : i32
    %1268 = arith.addi %0, %c1_i32_453 : i32
    %1269 = arith.addi %1, %1227 : i32
    %c5_i32_454 = arith.constant 5 : i32
    %1270 = arith.addi %1269, %c5_i32_454 : i32
    %1271 = arith.index_cast %1268 : i32 to index
    %1272 = arith.index_cast %1270 : i32 to index
    %1273 = memref.load %arg2[%1271, %1272] : memref<4x64xi32, #tpu.memory_space<smem>>
    %1274 = arith.index_cast %1273 : i32 to index
    %c0_455 = arith.constant 0 : index
    %1275 = vector.load %arg3[%1274, %c0_455] : memref<48x128xf32, #tpu.memory_space<vmem>>, vector<1x128xf32>
    %c1_i32_456 = arith.constant 1 : i32
    %1276 = arith.addi %0, %c1_i32_456 : i32
    %1277 = arith.addi %1, %1227 : i32
    %c6_i32_457 = arith.constant 6 : i32
    %1278 = arith.addi %1277, %c6_i32_457 : i32
    %1279 = arith.index_cast %1276 : i32 to index
    %1280 = arith.index_cast %1278 : i32 to index
    %1281 = memref.load %arg2[%1279, %1280] : memref<4x64xi32, #tpu.memory_space<smem>>
    %1282 = arith.index_cast %1281 : i32 to index
    %c0_458 = arith.constant 0 : index
    %1283 = vector.load %arg3[%1282, %c0_458] : memref<48x128xf32, #tpu.memory_space<vmem>>, vector<1x128xf32>
    %c1_i32_459 = arith.constant 1 : i32
    %1284 = arith.addi %0, %c1_i32_459 : i32
    %1285 = arith.addi %1, %1227 : i32
    %c7_i32_460 = arith.constant 7 : i32
    %1286 = arith.addi %1285, %c7_i32_460 : i32
    %1287 = arith.index_cast %1284 : i32 to index
    %1288 = arith.index_cast %1286 : i32 to index
    %1289 = memref.load %arg2[%1287, %1288] : memref<4x64xi32, #tpu.memory_space<smem>>
    %1290 = arith.index_cast %1289 : i32 to index
    %c0_461 = arith.constant 0 : index
    %1291 = vector.load %arg3[%1290, %c0_461] : memref<48x128xf32, #tpu.memory_space<vmem>>, vector<1x128xf32>
    %1292 = tpu.concatenate %1235, %1243, %1251, %1259, %1267, %1275, %1283, %1291 in 0 : vector<1x128xf32>, vector<1x128xf32>, vector<1x128xf32>, vector<1x128xf32>, vector<1x128xf32>, vector<1x128xf32>, vector<1x128xf32>, vector<1x128xf32> -> vector<8x128xf32>
    %1293 = arith.index_cast %1227 : i32 to index
    %c0_462 = arith.constant 0 : index
    %1294 = vector.load %arg4[%1293, %c0_462] : memref<64x128xf32, #tpu.memory_space<vmem>>, vector<8x128xf32>
    %1295 = arith.addf %1292, %1294 : vector<8x128xf32>
    %cst_463 = arith.constant dense<0.000000e+00> : vector<8xf32>
    %1296 = vector.multi_reduction <add>, %1295, %cst_463 [1] : vector<8x128xf32> to vector<8xf32>
    %1297 = vector.shape_cast %1296 : vector<8xf32> to vector<8x1xf32>
    %cst_464 = arith.constant 1.280000e+02 : f32
    %1298 = vector.broadcast %cst_464 : f32 to vector<8x1xf32>
    %1299 = arith.divf %1297, %1298 : vector<8x1xf32>
    %1300 = vector.broadcast %1299 : vector<8x1xf32> to vector<8x128xf32>
    %1301 = arith.subf %1295, %1300 : vector<8x128xf32>
    %1302 = arith.mulf %1301, %1301 : vector<8x128xf32>
    %cst_465 = arith.constant dense<0.000000e+00> : vector<8xf32>
    %1303 = vector.multi_reduction <add>, %1302, %cst_465 [1] : vector<8x128xf32> to vector<8xf32>
    %1304 = vector.shape_cast %1303 : vector<8xf32> to vector<8x1xf32>
    %cst_466 = arith.constant 1.280000e+02 : f32
    %1305 = vector.broadcast %cst_466 : f32 to vector<8x1xf32>
    %1306 = arith.divf %1304, %1305 : vector<8x1xf32>
    %cst_467 = arith.constant 9.99999974E-6 : f32
    %1307 = vector.broadcast %cst_467 : f32 to vector<8x1xf32>
    %1308 = arith.addf %1306, %1307 : vector<8x1xf32>
    %1309 = math.rsqrt %1308 : vector<8x1xf32>
    %1310 = vector.broadcast %1309 : vector<8x1xf32> to vector<8x128xf32>
    %1311 = arith.mulf %1301, %1310 : vector<8x128xf32>
    %1312 = vector.broadcast %2 : vector<1x128xf32> to vector<8x128xf32>
    %1313 = arith.mulf %1311, %1312 : vector<8x128xf32>
    %1314 = vector.broadcast %3 : vector<1x128xf32> to vector<8x128xf32>
    %1315 = arith.addf %1313, %1314 : vector<8x128xf32>
    %c1_468 = arith.constant 1 : index
    %1316 = arith.index_cast %1227 : i32 to index
    %c0_469 = arith.constant 0 : index
    %1317 = vector.load %arg7[%c1_468, %1316, %c0_469] : memref<4x64x128xf32, #tpu.memory_space<vmem>>, vector<1x8x128xf32>
    %1318 = vector.shape_cast %1317 : vector<1x8x128xf32> to vector<8x128xf32>
    %1319 = vector.shape_cast %1315 : vector<8x128xf32> to vector<1x8x128xf32>
    tpu.vector_store %arg7[%c1_468, %1316, %c0_469], %1319 {strides = array<i32>} : memref<4x64x128xf32, #tpu.memory_space<vmem>>, vector<1x8x128xf32>,
    %c6_i32_470 = arith.constant 6 : i32
    %c8_i32_471 = arith.constant 8 : i32
    %1320 = arith.muli %c6_i32_470, %c8_i32_471 : i32
    %1321 = tpu.assume_multiple %1320, 8 : i32
    %c1_i32_472 = arith.constant 1 : i32
    %1322 = arith.addi %0, %c1_i32_472 : i32
    %1323 = arith.addi %1, %1321 : i32
    %c0_i32_473 = arith.constant 0 : i32
    %1324 = arith.addi %1323, %c0_i32_473 : i32
    %1325 = arith.index_cast %1322 : i32 to index
    %1326 = arith.index_cast %1324 : i32 to index
    %1327 = memref.load %arg2[%1325, %1326] : memref<4x64xi32, #tpu.memory_space<smem>>
    %1328 = arith.index_cast %1327 : i32 to index
    %c0_474 = arith.constant 0 : index
    %1329 = vector.load %arg3[%1328, %c0_474] : memref<48x128xf32, #tpu.memory_space<vmem>>, vector<1x128xf32>
    %c1_i32_475 = arith.constant 1 : i32
    %1330 = arith.addi %0, %c1_i32_475 : i32
    %1331 = arith.addi %1, %1321 : i32
    %c1_i32_476 = arith.constant 1 : i32
    %1332 = arith.addi %1331, %c1_i32_476 : i32
    %1333 = arith.index_cast %1330 : i32 to index
    %1334 = arith.index_cast %1332 : i32 to index
    %1335 = memref.load %arg2[%1333, %1334] : memref<4x64xi32, #tpu.memory_space<smem>>
    %1336 = arith.index_cast %1335 : i32 to index
    %c0_477 = arith.constant 0 : index
    %1337 = vector.load %arg3[%1336, %c0_477] : memref<48x128xf32, #tpu.memory_space<vmem>>, vector<1x128xf32>
    %c1_i32_478 = arith.constant 1 : i32
    %1338 = arith.addi %0, %c1_i32_478 : i32
    %1339 = arith.addi %1, %1321 : i32
    %c2_i32_479 = arith.constant 2 : i32
    %1340 = arith.addi %1339, %c2_i32_479 : i32
    %1341 = arith.index_cast %1338 : i32 to index
    %1342 = arith.index_cast %1340 : i32 to index
    %1343 = memref.load %arg2[%1341, %1342] : memref<4x64xi32, #tpu.memory_space<smem>>
    %1344 = arith.index_cast %1343 : i32 to index
    %c0_480 = arith.constant 0 : index
    %1345 = vector.load %arg3[%1344, %c0_480] : memref<48x128xf32, #tpu.memory_space<vmem>>, vector<1x128xf32>
    %c1_i32_481 = arith.constant 1 : i32
    %1346 = arith.addi %0, %c1_i32_481 : i32
    %1347 = arith.addi %1, %1321 : i32
    %c3_i32_482 = arith.constant 3 : i32
    %1348 = arith.addi %1347, %c3_i32_482 : i32
    %1349 = arith.index_cast %1346 : i32 to index
    %1350 = arith.index_cast %1348 : i32 to index
    %1351 = memref.load %arg2[%1349, %1350] : memref<4x64xi32, #tpu.memory_space<smem>>
    %1352 = arith.index_cast %1351 : i32 to index
    %c0_483 = arith.constant 0 : index
    %1353 = vector.load %arg3[%1352, %c0_483] : memref<48x128xf32, #tpu.memory_space<vmem>>, vector<1x128xf32>
    %c1_i32_484 = arith.constant 1 : i32
    %1354 = arith.addi %0, %c1_i32_484 : i32
    %1355 = arith.addi %1, %1321 : i32
    %c4_i32_485 = arith.constant 4 : i32
    %1356 = arith.addi %1355, %c4_i32_485 : i32
    %1357 = arith.index_cast %1354 : i32 to index
    %1358 = arith.index_cast %1356 : i32 to index
    %1359 = memref.load %arg2[%1357, %1358] : memref<4x64xi32, #tpu.memory_space<smem>>
    %1360 = arith.index_cast %1359 : i32 to index
    %c0_486 = arith.constant 0 : index
    %1361 = vector.load %arg3[%1360, %c0_486] : memref<48x128xf32, #tpu.memory_space<vmem>>, vector<1x128xf32>
    %c1_i32_487 = arith.constant 1 : i32
    %1362 = arith.addi %0, %c1_i32_487 : i32
    %1363 = arith.addi %1, %1321 : i32
    %c5_i32_488 = arith.constant 5 : i32
    %1364 = arith.addi %1363, %c5_i32_488 : i32
    %1365 = arith.index_cast %1362 : i32 to index
    %1366 = arith.index_cast %1364 : i32 to index
    %1367 = memref.load %arg2[%1365, %1366] : memref<4x64xi32, #tpu.memory_space<smem>>
    %1368 = arith.index_cast %1367 : i32 to index
    %c0_489 = arith.constant 0 : index
    %1369 = vector.load %arg3[%1368, %c0_489] : memref<48x128xf32, #tpu.memory_space<vmem>>, vector<1x128xf32>
    %c1_i32_490 = arith.constant 1 : i32
    %1370 = arith.addi %0, %c1_i32_490 : i32
    %1371 = arith.addi %1, %1321 : i32
    %c6_i32_491 = arith.constant 6 : i32
    %1372 = arith.addi %1371, %c6_i32_491 : i32
    %1373 = arith.index_cast %1370 : i32 to index
    %1374 = arith.index_cast %1372 : i32 to index
    %1375 = memref.load %arg2[%1373, %1374] : memref<4x64xi32, #tpu.memory_space<smem>>
    %1376 = arith.index_cast %1375 : i32 to index
    %c0_492 = arith.constant 0 : index
    %1377 = vector.load %arg3[%1376, %c0_492] : memref<48x128xf32, #tpu.memory_space<vmem>>, vector<1x128xf32>
    %c1_i32_493 = arith.constant 1 : i32
    %1378 = arith.addi %0, %c1_i32_493 : i32
    %1379 = arith.addi %1, %1321 : i32
    %c7_i32_494 = arith.constant 7 : i32
    %1380 = arith.addi %1379, %c7_i32_494 : i32
    %1381 = arith.index_cast %1378 : i32 to index
    %1382 = arith.index_cast %1380 : i32 to index
    %1383 = memref.load %arg2[%1381, %1382] : memref<4x64xi32, #tpu.memory_space<smem>>
    %1384 = arith.index_cast %1383 : i32 to index
    %c0_495 = arith.constant 0 : index
    %1385 = vector.load %arg3[%1384, %c0_495] : memref<48x128xf32, #tpu.memory_space<vmem>>, vector<1x128xf32>
    %1386 = tpu.concatenate %1329, %1337, %1345, %1353, %1361, %1369, %1377, %1385 in 0 : vector<1x128xf32>, vector<1x128xf32>, vector<1x128xf32>, vector<1x128xf32>, vector<1x128xf32>, vector<1x128xf32>, vector<1x128xf32>, vector<1x128xf32> -> vector<8x128xf32>
    %1387 = arith.index_cast %1321 : i32 to index
    %c0_496 = arith.constant 0 : index
    %1388 = vector.load %arg4[%1387, %c0_496] : memref<64x128xf32, #tpu.memory_space<vmem>>, vector<8x128xf32>
    %1389 = arith.addf %1386, %1388 : vector<8x128xf32>
    %cst_497 = arith.constant dense<0.000000e+00> : vector<8xf32>
    %1390 = vector.multi_reduction <add>, %1389, %cst_497 [1] : vector<8x128xf32> to vector<8xf32>
    %1391 = vector.shape_cast %1390 : vector<8xf32> to vector<8x1xf32>
    %cst_498 = arith.constant 1.280000e+02 : f32
    %1392 = vector.broadcast %cst_498 : f32 to vector<8x1xf32>
    %1393 = arith.divf %1391, %1392 : vector<8x1xf32>
    %1394 = vector.broadcast %1393 : vector<8x1xf32> to vector<8x128xf32>
    %1395 = arith.subf %1389, %1394 : vector<8x128xf32>
    %1396 = arith.mulf %1395, %1395 : vector<8x128xf32>
    %cst_499 = arith.constant dense<0.000000e+00> : vector<8xf32>
    %1397 = vector.multi_reduction <add>, %1396, %cst_499 [1] : vector<8x128xf32> to vector<8xf32>
    %1398 = vector.shape_cast %1397 : vector<8xf32> to vector<8x1xf32>
    %cst_500 = arith.constant 1.280000e+02 : f32
    %1399 = vector.broadcast %cst_500 : f32 to vector<8x1xf32>
    %1400 = arith.divf %1398, %1399 : vector<8x1xf32>
    %cst_501 = arith.constant 9.99999974E-6 : f32
    %1401 = vector.broadcast %cst_501 : f32 to vector<8x1xf32>
    %1402 = arith.addf %1400, %1401 : vector<8x1xf32>
    %1403 = math.rsqrt %1402 : vector<8x1xf32>
    %1404 = vector.broadcast %1403 : vector<8x1xf32> to vector<8x128xf32>
    %1405 = arith.mulf %1395, %1404 : vector<8x128xf32>
    %1406 = vector.broadcast %2 : vector<1x128xf32> to vector<8x128xf32>
    %1407 = arith.mulf %1405, %1406 : vector<8x128xf32>
    %1408 = vector.broadcast %3 : vector<1x128xf32> to vector<8x128xf32>
    %1409 = arith.addf %1407, %1408 : vector<8x128xf32>
    %c1_502 = arith.constant 1 : index
    %1410 = arith.index_cast %1321 : i32 to index
    %c0_503 = arith.constant 0 : index
    %1411 = vector.load %arg7[%c1_502, %1410, %c0_503] : memref<4x64x128xf32, #tpu.memory_space<vmem>>, vector<1x8x128xf32>
    %1412 = vector.shape_cast %1411 : vector<1x8x128xf32> to vector<8x128xf32>
    %1413 = vector.shape_cast %1409 : vector<8x128xf32> to vector<1x8x128xf32>
    tpu.vector_store %arg7[%c1_502, %1410, %c0_503], %1413 {strides = array<i32>} : memref<4x64x128xf32, #tpu.memory_space<vmem>>, vector<1x8x128xf32>,
    %c7_i32_504 = arith.constant 7 : i32
    %c8_i32_505 = arith.constant 8 : i32
    %1414 = arith.muli %c7_i32_504, %c8_i32_505 : i32
    %1415 = tpu.assume_multiple %1414, 8 : i32
    %c1_i32_506 = arith.constant 1 : i32
    %1416 = arith.addi %0, %c1_i32_506 : i32
    %1417 = arith.addi %1, %1415 : i32
    %c0_i32_507 = arith.constant 0 : i32
    %1418 = arith.addi %1417, %c0_i32_507 : i32
    %1419 = arith.index_cast %1416 : i32 to index
    %1420 = arith.index_cast %1418 : i32 to index
    %1421 = memref.load %arg2[%1419, %1420] : memref<4x64xi32, #tpu.memory_space<smem>>
    %1422 = arith.index_cast %1421 : i32 to index
    %c0_508 = arith.constant 0 : index
    %1423 = vector.load %arg3[%1422, %c0_508] : memref<48x128xf32, #tpu.memory_space<vmem>>, vector<1x128xf32>
    %c1_i32_509 = arith.constant 1 : i32
    %1424 = arith.addi %0, %c1_i32_509 : i32
    %1425 = arith.addi %1, %1415 : i32
    %c1_i32_510 = arith.constant 1 : i32
    %1426 = arith.addi %1425, %c1_i32_510 : i32
    %1427 = arith.index_cast %1424 : i32 to index
    %1428 = arith.index_cast %1426 : i32 to index
    %1429 = memref.load %arg2[%1427, %1428] : memref<4x64xi32, #tpu.memory_space<smem>>
    %1430 = arith.index_cast %1429 : i32 to index
    %c0_511 = arith.constant 0 : index
    %1431 = vector.load %arg3[%1430, %c0_511] : memref<48x128xf32, #tpu.memory_space<vmem>>, vector<1x128xf32>
    %c1_i32_512 = arith.constant 1 : i32
    %1432 = arith.addi %0, %c1_i32_512 : i32
    %1433 = arith.addi %1, %1415 : i32
    %c2_i32_513 = arith.constant 2 : i32
    %1434 = arith.addi %1433, %c2_i32_513 : i32
    %1435 = arith.index_cast %1432 : i32 to index
    %1436 = arith.index_cast %1434 : i32 to index
    %1437 = memref.load %arg2[%1435, %1436] : memref<4x64xi32, #tpu.memory_space<smem>>
    %1438 = arith.index_cast %1437 : i32 to index
    %c0_514 = arith.constant 0 : index
    %1439 = vector.load %arg3[%1438, %c0_514] : memref<48x128xf32, #tpu.memory_space<vmem>>, vector<1x128xf32>
    %c1_i32_515 = arith.constant 1 : i32
    %1440 = arith.addi %0, %c1_i32_515 : i32
    %1441 = arith.addi %1, %1415 : i32
    %c3_i32_516 = arith.constant 3 : i32
    %1442 = arith.addi %1441, %c3_i32_516 : i32
    %1443 = arith.index_cast %1440 : i32 to index
    %1444 = arith.index_cast %1442 : i32 to index
    %1445 = memref.load %arg2[%1443, %1444] : memref<4x64xi32, #tpu.memory_space<smem>>
    %1446 = arith.index_cast %1445 : i32 to index
    %c0_517 = arith.constant 0 : index
    %1447 = vector.load %arg3[%1446, %c0_517] : memref<48x128xf32, #tpu.memory_space<vmem>>, vector<1x128xf32>
    %c1_i32_518 = arith.constant 1 : i32
    %1448 = arith.addi %0, %c1_i32_518 : i32
    %1449 = arith.addi %1, %1415 : i32
    %c4_i32_519 = arith.constant 4 : i32
    %1450 = arith.addi %1449, %c4_i32_519 : i32
    %1451 = arith.index_cast %1448 : i32 to index
    %1452 = arith.index_cast %1450 : i32 to index
    %1453 = memref.load %arg2[%1451, %1452] : memref<4x64xi32, #tpu.memory_space<smem>>
    %1454 = arith.index_cast %1453 : i32 to index
    %c0_520 = arith.constant 0 : index
    %1455 = vector.load %arg3[%1454, %c0_520] : memref<48x128xf32, #tpu.memory_space<vmem>>, vector<1x128xf32>
    %c1_i32_521 = arith.constant 1 : i32
    %1456 = arith.addi %0, %c1_i32_521 : i32
    %1457 = arith.addi %1, %1415 : i32
    %c5_i32_522 = arith.constant 5 : i32
    %1458 = arith.addi %1457, %c5_i32_522 : i32
    %1459 = arith.index_cast %1456 : i32 to index
    %1460 = arith.index_cast %1458 : i32 to index
    %1461 = memref.load %arg2[%1459, %1460] : memref<4x64xi32, #tpu.memory_space<smem>>
    %1462 = arith.index_cast %1461 : i32 to index
    %c0_523 = arith.constant 0 : index
    %1463 = vector.load %arg3[%1462, %c0_523] : memref<48x128xf32, #tpu.memory_space<vmem>>, vector<1x128xf32>
    %c1_i32_524 = arith.constant 1 : i32
    %1464 = arith.addi %0, %c1_i32_524 : i32
    %1465 = arith.addi %1, %1415 : i32
    %c6_i32_525 = arith.constant 6 : i32
    %1466 = arith.addi %1465, %c6_i32_525 : i32
    %1467 = arith.index_cast %1464 : i32 to index
    %1468 = arith.index_cast %1466 : i32 to index
    %1469 = memref.load %arg2[%1467, %1468] : memref<4x64xi32, #tpu.memory_space<smem>>
    %1470 = arith.index_cast %1469 : i32 to index
    %c0_526 = arith.constant 0 : index
    %1471 = vector.load %arg3[%1470, %c0_526] : memref<48x128xf32, #tpu.memory_space<vmem>>, vector<1x128xf32>
    %c1_i32_527 = arith.constant 1 : i32
    %1472 = arith.addi %0, %c1_i32_527 : i32
    %1473 = arith.addi %1, %1415 : i32
    %c7_i32_528 = arith.constant 7 : i32
    %1474 = arith.addi %1473, %c7_i32_528 : i32
    %1475 = arith.index_cast %1472 : i32 to index
    %1476 = arith.index_cast %1474 : i32 to index
    %1477 = memref.load %arg2[%1475, %1476] : memref<4x64xi32, #tpu.memory_space<smem>>
    %1478 = arith.index_cast %1477 : i32 to index
    %c0_529 = arith.constant 0 : index
    %1479 = vector.load %arg3[%1478, %c0_529] : memref<48x128xf32, #tpu.memory_space<vmem>>, vector<1x128xf32>
    %1480 = tpu.concatenate %1423, %1431, %1439, %1447, %1455, %1463, %1471, %1479 in 0 : vector<1x128xf32>, vector<1x128xf32>, vector<1x128xf32>, vector<1x128xf32>, vector<1x128xf32>, vector<1x128xf32>, vector<1x128xf32>, vector<1x128xf32> -> vector<8x128xf32>
    %1481 = arith.index_cast %1415 : i32 to index
    %c0_530 = arith.constant 0 : index
    %1482 = vector.load %arg4[%1481, %c0_530] : memref<64x128xf32, #tpu.memory_space<vmem>>, vector<8x128xf32>
    %1483 = arith.addf %1480, %1482 : vector<8x128xf32>
    %cst_531 = arith.constant dense<0.000000e+00> : vector<8xf32>
    %1484 = vector.multi_reduction <add>, %1483, %cst_531 [1] : vector<8x128xf32> to vector<8xf32>
    %1485 = vector.shape_cast %1484 : vector<8xf32> to vector<8x1xf32>
    %cst_532 = arith.constant 1.280000e+02 : f32
    %1486 = vector.broadcast %cst_532 : f32 to vector<8x1xf32>
    %1487 = arith.divf %1485, %1486 : vector<8x1xf32>
    %1488 = vector.broadcast %1487 : vector<8x1xf32> to vector<8x128xf32>
    %1489 = arith.subf %1483, %1488 : vector<8x128xf32>
    %1490 = arith.mulf %1489, %1489 : vector<8x128xf32>
    %cst_533 = arith.constant dense<0.000000e+00> : vector<8xf32>
    %1491 = vector.multi_reduction <add>, %1490, %cst_533 [1] : vector<8x128xf32> to vector<8xf32>
    %1492 = vector.shape_cast %1491 : vector<8xf32> to vector<8x1xf32>
    %cst_534 = arith.constant 1.280000e+02 : f32
    %1493 = vector.broadcast %cst_534 : f32 to vector<8x1xf32>
    %1494 = arith.divf %1492, %1493 : vector<8x1xf32>
    %cst_535 = arith.constant 9.99999974E-6 : f32
    %1495 = vector.broadcast %cst_535 : f32 to vector<8x1xf32>
    %1496 = arith.addf %1494, %1495 : vector<8x1xf32>
    %1497 = math.rsqrt %1496 : vector<8x1xf32>
    %1498 = vector.broadcast %1497 : vector<8x1xf32> to vector<8x128xf32>
    %1499 = arith.mulf %1489, %1498 : vector<8x128xf32>
    %1500 = vector.broadcast %2 : vector<1x128xf32> to vector<8x128xf32>
    %1501 = arith.mulf %1499, %1500 : vector<8x128xf32>
    %1502 = vector.broadcast %3 : vector<1x128xf32> to vector<8x128xf32>
    %1503 = arith.addf %1501, %1502 : vector<8x128xf32>
    %c1_536 = arith.constant 1 : index
    %1504 = arith.index_cast %1415 : i32 to index
    %c0_537 = arith.constant 0 : index
    %1505 = vector.load %arg7[%c1_536, %1504, %c0_537] : memref<4x64x128xf32, #tpu.memory_space<vmem>>, vector<1x8x128xf32>
    %1506 = vector.shape_cast %1505 : vector<1x8x128xf32> to vector<8x128xf32>
    %1507 = vector.shape_cast %1503 : vector<8x128xf32> to vector<1x8x128xf32>
    tpu.vector_store %arg7[%c1_536, %1504, %c0_537], %1507 {strides = array<i32>} : memref<4x64x128xf32, #tpu.memory_space<vmem>>, vector<1x8x128xf32>,
    %c8_i32_538 = arith.constant 8 : i32
    %c0_i32_539 = arith.constant 0 : i32
    %c8_i32_540 = arith.constant 8 : i32
    %1508 = arith.muli %c0_i32_539, %c8_i32_540 : i32
    %1509 = tpu.assume_multiple %1508, 8 : i32
    %c2_i32_541 = arith.constant 2 : i32
    %1510 = arith.addi %0, %c2_i32_541 : i32
    %1511 = arith.addi %1, %1509 : i32
    %c0_i32_542 = arith.constant 0 : i32
    %1512 = arith.addi %1511, %c0_i32_542 : i32
    %1513 = arith.index_cast %1510 : i32 to index
    %1514 = arith.index_cast %1512 : i32 to index
    %1515 = memref.load %arg2[%1513, %1514] : memref<4x64xi32, #tpu.memory_space<smem>>
    %1516 = arith.index_cast %1515 : i32 to index
    %c0_543 = arith.constant 0 : index
    %1517 = vector.load %arg3[%1516, %c0_543] : memref<48x128xf32, #tpu.memory_space<vmem>>, vector<1x128xf32>
    %c2_i32_544 = arith.constant 2 : i32
    %1518 = arith.addi %0, %c2_i32_544 : i32
    %1519 = arith.addi %1, %1509 : i32
    %c1_i32_545 = arith.constant 1 : i32
    %1520 = arith.addi %1519, %c1_i32_545 : i32
    %1521 = arith.index_cast %1518 : i32 to index
    %1522 = arith.index_cast %1520 : i32 to index
    %1523 = memref.load %arg2[%1521, %1522] : memref<4x64xi32, #tpu.memory_space<smem>>
    %1524 = arith.index_cast %1523 : i32 to index
    %c0_546 = arith.constant 0 : index
    %1525 = vector.load %arg3[%1524, %c0_546] : memref<48x128xf32, #tpu.memory_space<vmem>>, vector<1x128xf32>
    %c2_i32_547 = arith.constant 2 : i32
    %1526 = arith.addi %0, %c2_i32_547 : i32
    %1527 = arith.addi %1, %1509 : i32
    %c2_i32_548 = arith.constant 2 : i32
    %1528 = arith.addi %1527, %c2_i32_548 : i32
    %1529 = arith.index_cast %1526 : i32 to index
    %1530 = arith.index_cast %1528 : i32 to index
    %1531 = memref.load %arg2[%1529, %1530] : memref<4x64xi32, #tpu.memory_space<smem>>
    %1532 = arith.index_cast %1531 : i32 to index
    %c0_549 = arith.constant 0 : index
    %1533 = vector.load %arg3[%1532, %c0_549] : memref<48x128xf32, #tpu.memory_space<vmem>>, vector<1x128xf32>
    %c2_i32_550 = arith.constant 2 : i32
    %1534 = arith.addi %0, %c2_i32_550 : i32
    %1535 = arith.addi %1, %1509 : i32
    %c3_i32_551 = arith.constant 3 : i32
    %1536 = arith.addi %1535, %c3_i32_551 : i32
    %1537 = arith.index_cast %1534 : i32 to index
    %1538 = arith.index_cast %1536 : i32 to index
    %1539 = memref.load %arg2[%1537, %1538] : memref<4x64xi32, #tpu.memory_space<smem>>
    %1540 = arith.index_cast %1539 : i32 to index
    %c0_552 = arith.constant 0 : index
    %1541 = vector.load %arg3[%1540, %c0_552] : memref<48x128xf32, #tpu.memory_space<vmem>>, vector<1x128xf32>
    %c2_i32_553 = arith.constant 2 : i32
    %1542 = arith.addi %0, %c2_i32_553 : i32
    %1543 = arith.addi %1, %1509 : i32
    %c4_i32_554 = arith.constant 4 : i32
    %1544 = arith.addi %1543, %c4_i32_554 : i32
    %1545 = arith.index_cast %1542 : i32 to index
    %1546 = arith.index_cast %1544 : i32 to index
    %1547 = memref.load %arg2[%1545, %1546] : memref<4x64xi32, #tpu.memory_space<smem>>
    %1548 = arith.index_cast %1547 : i32 to index
    %c0_555 = arith.constant 0 : index
    %1549 = vector.load %arg3[%1548, %c0_555] : memref<48x128xf32, #tpu.memory_space<vmem>>, vector<1x128xf32>
    %c2_i32_556 = arith.constant 2 : i32
    %1550 = arith.addi %0, %c2_i32_556 : i32
    %1551 = arith.addi %1, %1509 : i32
    %c5_i32_557 = arith.constant 5 : i32
    %1552 = arith.addi %1551, %c5_i32_557 : i32
    %1553 = arith.index_cast %1550 : i32 to index
    %1554 = arith.index_cast %1552 : i32 to index
    %1555 = memref.load %arg2[%1553, %1554] : memref<4x64xi32, #tpu.memory_space<smem>>
    %1556 = arith.index_cast %1555 : i32 to index
    %c0_558 = arith.constant 0 : index
    %1557 = vector.load %arg3[%1556, %c0_558] : memref<48x128xf32, #tpu.memory_space<vmem>>, vector<1x128xf32>
    %c2_i32_559 = arith.constant 2 : i32
    %1558 = arith.addi %0, %c2_i32_559 : i32
    %1559 = arith.addi %1, %1509 : i32
    %c6_i32_560 = arith.constant 6 : i32
    %1560 = arith.addi %1559, %c6_i32_560 : i32
    %1561 = arith.index_cast %1558 : i32 to index
    %1562 = arith.index_cast %1560 : i32 to index
    %1563 = memref.load %arg2[%1561, %1562] : memref<4x64xi32, #tpu.memory_space<smem>>
    %1564 = arith.index_cast %1563 : i32 to index
    %c0_561 = arith.constant 0 : index
    %1565 = vector.load %arg3[%1564, %c0_561] : memref<48x128xf32, #tpu.memory_space<vmem>>, vector<1x128xf32>
    %c2_i32_562 = arith.constant 2 : i32
    %1566 = arith.addi %0, %c2_i32_562 : i32
    %1567 = arith.addi %1, %1509 : i32
    %c7_i32_563 = arith.constant 7 : i32
    %1568 = arith.addi %1567, %c7_i32_563 : i32
    %1569 = arith.index_cast %1566 : i32 to index
    %1570 = arith.index_cast %1568 : i32 to index
    %1571 = memref.load %arg2[%1569, %1570] : memref<4x64xi32, #tpu.memory_space<smem>>
    %1572 = arith.index_cast %1571 : i32 to index
    %c0_564 = arith.constant 0 : index
    %1573 = vector.load %arg3[%1572, %c0_564] : memref<48x128xf32, #tpu.memory_space<vmem>>, vector<1x128xf32>
    %1574 = tpu.concatenate %1517, %1525, %1533, %1541, %1549, %1557, %1565, %1573 in 0 : vector<1x128xf32>, vector<1x128xf32>, vector<1x128xf32>, vector<1x128xf32>, vector<1x128xf32>, vector<1x128xf32>, vector<1x128xf32>, vector<1x128xf32> -> vector<8x128xf32>
    %1575 = arith.index_cast %1509 : i32 to index
    %c0_565 = arith.constant 0 : index
    %1576 = vector.load %arg4[%1575, %c0_565] : memref<64x128xf32, #tpu.memory_space<vmem>>, vector<8x128xf32>
    %1577 = arith.addf %1574, %1576 : vector<8x128xf32>
    %cst_566 = arith.constant dense<0.000000e+00> : vector<8xf32>
    %1578 = vector.multi_reduction <add>, %1577, %cst_566 [1] : vector<8x128xf32> to vector<8xf32>
    %1579 = vector.shape_cast %1578 : vector<8xf32> to vector<8x1xf32>
    %cst_567 = arith.constant 1.280000e+02 : f32
    %1580 = vector.broadcast %cst_567 : f32 to vector<8x1xf32>
    %1581 = arith.divf %1579, %1580 : vector<8x1xf32>
    %1582 = vector.broadcast %1581 : vector<8x1xf32> to vector<8x128xf32>
    %1583 = arith.subf %1577, %1582 : vector<8x128xf32>
    %1584 = arith.mulf %1583, %1583 : vector<8x128xf32>
    %cst_568 = arith.constant dense<0.000000e+00> : vector<8xf32>
    %1585 = vector.multi_reduction <add>, %1584, %cst_568 [1] : vector<8x128xf32> to vector<8xf32>
    %1586 = vector.shape_cast %1585 : vector<8xf32> to vector<8x1xf32>
    %cst_569 = arith.constant 1.280000e+02 : f32
    %1587 = vector.broadcast %cst_569 : f32 to vector<8x1xf32>
    %1588 = arith.divf %1586, %1587 : vector<8x1xf32>
    %cst_570 = arith.constant 9.99999974E-6 : f32
    %1589 = vector.broadcast %cst_570 : f32 to vector<8x1xf32>
    %1590 = arith.addf %1588, %1589 : vector<8x1xf32>
    %1591 = math.rsqrt %1590 : vector<8x1xf32>
    %1592 = vector.broadcast %1591 : vector<8x1xf32> to vector<8x128xf32>
    %1593 = arith.mulf %1583, %1592 : vector<8x128xf32>
    %1594 = vector.broadcast %2 : vector<1x128xf32> to vector<8x128xf32>
    %1595 = arith.mulf %1593, %1594 : vector<8x128xf32>
    %1596 = vector.broadcast %3 : vector<1x128xf32> to vector<8x128xf32>
    %1597 = arith.addf %1595, %1596 : vector<8x128xf32>
    %c2 = arith.constant 2 : index
    %1598 = arith.index_cast %1509 : i32 to index
    %c0_571 = arith.constant 0 : index
    %1599 = vector.load %arg7[%c2, %1598, %c0_571] : memref<4x64x128xf32, #tpu.memory_space<vmem>>, vector<1x8x128xf32>
    %1600 = vector.shape_cast %1599 : vector<1x8x128xf32> to vector<8x128xf32>
    %1601 = vector.shape_cast %1597 : vector<8x128xf32> to vector<1x8x128xf32>
    tpu.vector_store %arg7[%c2, %1598, %c0_571], %1601 {strides = array<i32>} : memref<4x64x128xf32, #tpu.memory_space<vmem>>, vector<1x8x128xf32>,
    %c1_i32_572 = arith.constant 1 : i32
    %c8_i32_573 = arith.constant 8 : i32
    %1602 = arith.muli %c1_i32_572, %c8_i32_573 : i32
    %1603 = tpu.assume_multiple %1602, 8 : i32
    %c2_i32_574 = arith.constant 2 : i32
    %1604 = arith.addi %0, %c2_i32_574 : i32
    %1605 = arith.addi %1, %1603 : i32
    %c0_i32_575 = arith.constant 0 : i32
    %1606 = arith.addi %1605, %c0_i32_575 : i32
    %1607 = arith.index_cast %1604 : i32 to index
    %1608 = arith.index_cast %1606 : i32 to index
    %1609 = memref.load %arg2[%1607, %1608] : memref<4x64xi32, #tpu.memory_space<smem>>
    %1610 = arith.index_cast %1609 : i32 to index
    %c0_576 = arith.constant 0 : index
    %1611 = vector.load %arg3[%1610, %c0_576] : memref<48x128xf32, #tpu.memory_space<vmem>>, vector<1x128xf32>
    %c2_i32_577 = arith.constant 2 : i32
    %1612 = arith.addi %0, %c2_i32_577 : i32
    %1613 = arith.addi %1, %1603 : i32
    %c1_i32_578 = arith.constant 1 : i32
    %1614 = arith.addi %1613, %c1_i32_578 : i32
    %1615 = arith.index_cast %1612 : i32 to index
    %1616 = arith.index_cast %1614 : i32 to index
    %1617 = memref.load %arg2[%1615, %1616] : memref<4x64xi32, #tpu.memory_space<smem>>
    %1618 = arith.index_cast %1617 : i32 to index
    %c0_579 = arith.constant 0 : index
    %1619 = vector.load %arg3[%1618, %c0_579] : memref<48x128xf32, #tpu.memory_space<vmem>>, vector<1x128xf32>
    %c2_i32_580 = arith.constant 2 : i32
    %1620 = arith.addi %0, %c2_i32_580 : i32
    %1621 = arith.addi %1, %1603 : i32
    %c2_i32_581 = arith.constant 2 : i32
    %1622 = arith.addi %1621, %c2_i32_581 : i32
    %1623 = arith.index_cast %1620 : i32 to index
    %1624 = arith.index_cast %1622 : i32 to index
    %1625 = memref.load %arg2[%1623, %1624] : memref<4x64xi32, #tpu.memory_space<smem>>
    %1626 = arith.index_cast %1625 : i32 to index
    %c0_582 = arith.constant 0 : index
    %1627 = vector.load %arg3[%1626, %c0_582] : memref<48x128xf32, #tpu.memory_space<vmem>>, vector<1x128xf32>
    %c2_i32_583 = arith.constant 2 : i32
    %1628 = arith.addi %0, %c2_i32_583 : i32
    %1629 = arith.addi %1, %1603 : i32
    %c3_i32_584 = arith.constant 3 : i32
    %1630 = arith.addi %1629, %c3_i32_584 : i32
    %1631 = arith.index_cast %1628 : i32 to index
    %1632 = arith.index_cast %1630 : i32 to index
    %1633 = memref.load %arg2[%1631, %1632] : memref<4x64xi32, #tpu.memory_space<smem>>
    %1634 = arith.index_cast %1633 : i32 to index
    %c0_585 = arith.constant 0 : index
    %1635 = vector.load %arg3[%1634, %c0_585] : memref<48x128xf32, #tpu.memory_space<vmem>>, vector<1x128xf32>
    %c2_i32_586 = arith.constant 2 : i32
    %1636 = arith.addi %0, %c2_i32_586 : i32
    %1637 = arith.addi %1, %1603 : i32
    %c4_i32_587 = arith.constant 4 : i32
    %1638 = arith.addi %1637, %c4_i32_587 : i32
    %1639 = arith.index_cast %1636 : i32 to index
    %1640 = arith.index_cast %1638 : i32 to index
    %1641 = memref.load %arg2[%1639, %1640] : memref<4x64xi32, #tpu.memory_space<smem>>
    %1642 = arith.index_cast %1641 : i32 to index
    %c0_588 = arith.constant 0 : index
    %1643 = vector.load %arg3[%1642, %c0_588] : memref<48x128xf32, #tpu.memory_space<vmem>>, vector<1x128xf32>
    %c2_i32_589 = arith.constant 2 : i32
    %1644 = arith.addi %0, %c2_i32_589 : i32
    %1645 = arith.addi %1, %1603 : i32
    %c5_i32_590 = arith.constant 5 : i32
    %1646 = arith.addi %1645, %c5_i32_590 : i32
    %1647 = arith.index_cast %1644 : i32 to index
    %1648 = arith.index_cast %1646 : i32 to index
    %1649 = memref.load %arg2[%1647, %1648] : memref<4x64xi32, #tpu.memory_space<smem>>
    %1650 = arith.index_cast %1649 : i32 to index
    %c0_591 = arith.constant 0 : index
    %1651 = vector.load %arg3[%1650, %c0_591] : memref<48x128xf32, #tpu.memory_space<vmem>>, vector<1x128xf32>
    %c2_i32_592 = arith.constant 2 : i32
    %1652 = arith.addi %0, %c2_i32_592 : i32
    %1653 = arith.addi %1, %1603 : i32
    %c6_i32_593 = arith.constant 6 : i32
    %1654 = arith.addi %1653, %c6_i32_593 : i32
    %1655 = arith.index_cast %1652 : i32 to index
    %1656 = arith.index_cast %1654 : i32 to index
    %1657 = memref.load %arg2[%1655, %1656] : memref<4x64xi32, #tpu.memory_space<smem>>
    %1658 = arith.index_cast %1657 : i32 to index
    %c0_594 = arith.constant 0 : index
    %1659 = vector.load %arg3[%1658, %c0_594] : memref<48x128xf32, #tpu.memory_space<vmem>>, vector<1x128xf32>
    %c2_i32_595 = arith.constant 2 : i32
    %1660 = arith.addi %0, %c2_i32_595 : i32
    %1661 = arith.addi %1, %1603 : i32
    %c7_i32_596 = arith.constant 7 : i32
    %1662 = arith.addi %1661, %c7_i32_596 : i32
    %1663 = arith.index_cast %1660 : i32 to index
    %1664 = arith.index_cast %1662 : i32 to index
    %1665 = memref.load %arg2[%1663, %1664] : memref<4x64xi32, #tpu.memory_space<smem>>
    %1666 = arith.index_cast %1665 : i32 to index
    %c0_597 = arith.constant 0 : index
    %1667 = vector.load %arg3[%1666, %c0_597] : memref<48x128xf32, #tpu.memory_space<vmem>>, vector<1x128xf32>
    %1668 = tpu.concatenate %1611, %1619, %1627, %1635, %1643, %1651, %1659, %1667 in 0 : vector<1x128xf32>, vector<1x128xf32>, vector<1x128xf32>, vector<1x128xf32>, vector<1x128xf32>, vector<1x128xf32>, vector<1x128xf32>, vector<1x128xf32> -> vector<8x128xf32>
    %1669 = arith.index_cast %1603 : i32 to index
    %c0_598 = arith.constant 0 : index
    %1670 = vector.load %arg4[%1669, %c0_598] : memref<64x128xf32, #tpu.memory_space<vmem>>, vector<8x128xf32>
    %1671 = arith.addf %1668, %1670 : vector<8x128xf32>
    %cst_599 = arith.constant dense<0.000000e+00> : vector<8xf32>
    %1672 = vector.multi_reduction <add>, %1671, %cst_599 [1] : vector<8x128xf32> to vector<8xf32>
    %1673 = vector.shape_cast %1672 : vector<8xf32> to vector<8x1xf32>
    %cst_600 = arith.constant 1.280000e+02 : f32
    %1674 = vector.broadcast %cst_600 : f32 to vector<8x1xf32>
    %1675 = arith.divf %1673, %1674 : vector<8x1xf32>
    %1676 = vector.broadcast %1675 : vector<8x1xf32> to vector<8x128xf32>
    %1677 = arith.subf %1671, %1676 : vector<8x128xf32>
    %1678 = arith.mulf %1677, %1677 : vector<8x128xf32>
    %cst_601 = arith.constant dense<0.000000e+00> : vector<8xf32>
    %1679 = vector.multi_reduction <add>, %1678, %cst_601 [1] : vector<8x128xf32> to vector<8xf32>
    %1680 = vector.shape_cast %1679 : vector<8xf32> to vector<8x1xf32>
    %cst_602 = arith.constant 1.280000e+02 : f32
    %1681 = vector.broadcast %cst_602 : f32 to vector<8x1xf32>
    %1682 = arith.divf %1680, %1681 : vector<8x1xf32>
    %cst_603 = arith.constant 9.99999974E-6 : f32
    %1683 = vector.broadcast %cst_603 : f32 to vector<8x1xf32>
    %1684 = arith.addf %1682, %1683 : vector<8x1xf32>
    %1685 = math.rsqrt %1684 : vector<8x1xf32>
    %1686 = vector.broadcast %1685 : vector<8x1xf32> to vector<8x128xf32>
    %1687 = arith.mulf %1677, %1686 : vector<8x128xf32>
    %1688 = vector.broadcast %2 : vector<1x128xf32> to vector<8x128xf32>
    %1689 = arith.mulf %1687, %1688 : vector<8x128xf32>
    %1690 = vector.broadcast %3 : vector<1x128xf32> to vector<8x128xf32>
    %1691 = arith.addf %1689, %1690 : vector<8x128xf32>
    %c2_604 = arith.constant 2 : index
    %1692 = arith.index_cast %1603 : i32 to index
    %c0_605 = arith.constant 0 : index
    %1693 = vector.load %arg7[%c2_604, %1692, %c0_605] : memref<4x64x128xf32, #tpu.memory_space<vmem>>, vector<1x8x128xf32>
    %1694 = vector.shape_cast %1693 : vector<1x8x128xf32> to vector<8x128xf32>
    %1695 = vector.shape_cast %1691 : vector<8x128xf32> to vector<1x8x128xf32>
    tpu.vector_store %arg7[%c2_604, %1692, %c0_605], %1695 {strides = array<i32>} : memref<4x64x128xf32, #tpu.memory_space<vmem>>, vector<1x8x128xf32>,
    %c2_i32_606 = arith.constant 2 : i32
    %c8_i32_607 = arith.constant 8 : i32
    %1696 = arith.muli %c2_i32_606, %c8_i32_607 : i32
    %1697 = tpu.assume_multiple %1696, 8 : i32
    %c2_i32_608 = arith.constant 2 : i32
    %1698 = arith.addi %0, %c2_i32_608 : i32
    %1699 = arith.addi %1, %1697 : i32
    %c0_i32_609 = arith.constant 0 : i32
    %1700 = arith.addi %1699, %c0_i32_609 : i32
    %1701 = arith.index_cast %1698 : i32 to index
    %1702 = arith.index_cast %1700 : i32 to index
    %1703 = memref.load %arg2[%1701, %1702] : memref<4x64xi32, #tpu.memory_space<smem>>
    %1704 = arith.index_cast %1703 : i32 to index
    %c0_610 = arith.constant 0 : index
    %1705 = vector.load %arg3[%1704, %c0_610] : memref<48x128xf32, #tpu.memory_space<vmem>>, vector<1x128xf32>
    %c2_i32_611 = arith.constant 2 : i32
    %1706 = arith.addi %0, %c2_i32_611 : i32
    %1707 = arith.addi %1, %1697 : i32
    %c1_i32_612 = arith.constant 1 : i32
    %1708 = arith.addi %1707, %c1_i32_612 : i32
    %1709 = arith.index_cast %1706 : i32 to index
    %1710 = arith.index_cast %1708 : i32 to index
    %1711 = memref.load %arg2[%1709, %1710] : memref<4x64xi32, #tpu.memory_space<smem>>
    %1712 = arith.index_cast %1711 : i32 to index
    %c0_613 = arith.constant 0 : index
    %1713 = vector.load %arg3[%1712, %c0_613] : memref<48x128xf32, #tpu.memory_space<vmem>>, vector<1x128xf32>
    %c2_i32_614 = arith.constant 2 : i32
    %1714 = arith.addi %0, %c2_i32_614 : i32
    %1715 = arith.addi %1, %1697 : i32
    %c2_i32_615 = arith.constant 2 : i32
    %1716 = arith.addi %1715, %c2_i32_615 : i32
    %1717 = arith.index_cast %1714 : i32 to index
    %1718 = arith.index_cast %1716 : i32 to index
    %1719 = memref.load %arg2[%1717, %1718] : memref<4x64xi32, #tpu.memory_space<smem>>
    %1720 = arith.index_cast %1719 : i32 to index
    %c0_616 = arith.constant 0 : index
    %1721 = vector.load %arg3[%1720, %c0_616] : memref<48x128xf32, #tpu.memory_space<vmem>>, vector<1x128xf32>
    %c2_i32_617 = arith.constant 2 : i32
    %1722 = arith.addi %0, %c2_i32_617 : i32
    %1723 = arith.addi %1, %1697 : i32
    %c3_i32_618 = arith.constant 3 : i32
    %1724 = arith.addi %1723, %c3_i32_618 : i32
    %1725 = arith.index_cast %1722 : i32 to index
    %1726 = arith.index_cast %1724 : i32 to index
    %1727 = memref.load %arg2[%1725, %1726] : memref<4x64xi32, #tpu.memory_space<smem>>
    %1728 = arith.index_cast %1727 : i32 to index
    %c0_619 = arith.constant 0 : index
    %1729 = vector.load %arg3[%1728, %c0_619] : memref<48x128xf32, #tpu.memory_space<vmem>>, vector<1x128xf32>
    %c2_i32_620 = arith.constant 2 : i32
    %1730 = arith.addi %0, %c2_i32_620 : i32
    %1731 = arith.addi %1, %1697 : i32
    %c4_i32_621 = arith.constant 4 : i32
    %1732 = arith.addi %1731, %c4_i32_621 : i32
    %1733 = arith.index_cast %1730 : i32 to index
    %1734 = arith.index_cast %1732 : i32 to index
    %1735 = memref.load %arg2[%1733, %1734] : memref<4x64xi32, #tpu.memory_space<smem>>
    %1736 = arith.index_cast %1735 : i32 to index
    %c0_622 = arith.constant 0 : index
    %1737 = vector.load %arg3[%1736, %c0_622] : memref<48x128xf32, #tpu.memory_space<vmem>>, vector<1x128xf32>
    %c2_i32_623 = arith.constant 2 : i32
    %1738 = arith.addi %0, %c2_i32_623 : i32
    %1739 = arith.addi %1, %1697 : i32
    %c5_i32_624 = arith.constant 5 : i32
    %1740 = arith.addi %1739, %c5_i32_624 : i32
    %1741 = arith.index_cast %1738 : i32 to index
    %1742 = arith.index_cast %1740 : i32 to index
    %1743 = memref.load %arg2[%1741, %1742] : memref<4x64xi32, #tpu.memory_space<smem>>
    %1744 = arith.index_cast %1743 : i32 to index
    %c0_625 = arith.constant 0 : index
    %1745 = vector.load %arg3[%1744, %c0_625] : memref<48x128xf32, #tpu.memory_space<vmem>>, vector<1x128xf32>
    %c2_i32_626 = arith.constant 2 : i32
    %1746 = arith.addi %0, %c2_i32_626 : i32
    %1747 = arith.addi %1, %1697 : i32
    %c6_i32_627 = arith.constant 6 : i32
    %1748 = arith.addi %1747, %c6_i32_627 : i32
    %1749 = arith.index_cast %1746 : i32 to index
    %1750 = arith.index_cast %1748 : i32 to index
    %1751 = memref.load %arg2[%1749, %1750] : memref<4x64xi32, #tpu.memory_space<smem>>
    %1752 = arith.index_cast %1751 : i32 to index
    %c0_628 = arith.constant 0 : index
    %1753 = vector.load %arg3[%1752, %c0_628] : memref<48x128xf32, #tpu.memory_space<vmem>>, vector<1x128xf32>
    %c2_i32_629 = arith.constant 2 : i32
    %1754 = arith.addi %0, %c2_i32_629 : i32
    %1755 = arith.addi %1, %1697 : i32
    %c7_i32_630 = arith.constant 7 : i32
    %1756 = arith.addi %1755, %c7_i32_630 : i32
    %1757 = arith.index_cast %1754 : i32 to index
    %1758 = arith.index_cast %1756 : i32 to index
    %1759 = memref.load %arg2[%1757, %1758] : memref<4x64xi32, #tpu.memory_space<smem>>
    %1760 = arith.index_cast %1759 : i32 to index
    %c0_631 = arith.constant 0 : index
    %1761 = vector.load %arg3[%1760, %c0_631] : memref<48x128xf32, #tpu.memory_space<vmem>>, vector<1x128xf32>
    %1762 = tpu.concatenate %1705, %1713, %1721, %1729, %1737, %1745, %1753, %1761 in 0 : vector<1x128xf32>, vector<1x128xf32>, vector<1x128xf32>, vector<1x128xf32>, vector<1x128xf32>, vector<1x128xf32>, vector<1x128xf32>, vector<1x128xf32> -> vector<8x128xf32>
    %1763 = arith.index_cast %1697 : i32 to index
    %c0_632 = arith.constant 0 : index
    %1764 = vector.load %arg4[%1763, %c0_632] : memref<64x128xf32, #tpu.memory_space<vmem>>, vector<8x128xf32>
    %1765 = arith.addf %1762, %1764 : vector<8x128xf32>
    %cst_633 = arith.constant dense<0.000000e+00> : vector<8xf32>
    %1766 = vector.multi_reduction <add>, %1765, %cst_633 [1] : vector<8x128xf32> to vector<8xf32>
    %1767 = vector.shape_cast %1766 : vector<8xf32> to vector<8x1xf32>
    %cst_634 = arith.constant 1.280000e+02 : f32
    %1768 = vector.broadcast %cst_634 : f32 to vector<8x1xf32>
    %1769 = arith.divf %1767, %1768 : vector<8x1xf32>
    %1770 = vector.broadcast %1769 : vector<8x1xf32> to vector<8x128xf32>
    %1771 = arith.subf %1765, %1770 : vector<8x128xf32>
    %1772 = arith.mulf %1771, %1771 : vector<8x128xf32>
    %cst_635 = arith.constant dense<0.000000e+00> : vector<8xf32>
    %1773 = vector.multi_reduction <add>, %1772, %cst_635 [1] : vector<8x128xf32> to vector<8xf32>
    %1774 = vector.shape_cast %1773 : vector<8xf32> to vector<8x1xf32>
    %cst_636 = arith.constant 1.280000e+02 : f32
    %1775 = vector.broadcast %cst_636 : f32 to vector<8x1xf32>
    %1776 = arith.divf %1774, %1775 : vector<8x1xf32>
    %cst_637 = arith.constant 9.99999974E-6 : f32
    %1777 = vector.broadcast %cst_637 : f32 to vector<8x1xf32>
    %1778 = arith.addf %1776, %1777 : vector<8x1xf32>
    %1779 = math.rsqrt %1778 : vector<8x1xf32>
    %1780 = vector.broadcast %1779 : vector<8x1xf32> to vector<8x128xf32>
    %1781 = arith.mulf %1771, %1780 : vector<8x128xf32>
    %1782 = vector.broadcast %2 : vector<1x128xf32> to vector<8x128xf32>
    %1783 = arith.mulf %1781, %1782 : vector<8x128xf32>
    %1784 = vector.broadcast %3 : vector<1x128xf32> to vector<8x128xf32>
    %1785 = arith.addf %1783, %1784 : vector<8x128xf32>
    %c2_638 = arith.constant 2 : index
    %1786 = arith.index_cast %1697 : i32 to index
    %c0_639 = arith.constant 0 : index
    %1787 = vector.load %arg7[%c2_638, %1786, %c0_639] : memref<4x64x128xf32, #tpu.memory_space<vmem>>, vector<1x8x128xf32>
    %1788 = vector.shape_cast %1787 : vector<1x8x128xf32> to vector<8x128xf32>
    %1789 = vector.shape_cast %1785 : vector<8x128xf32> to vector<1x8x128xf32>
    tpu.vector_store %arg7[%c2_638, %1786, %c0_639], %1789 {strides = array<i32>} : memref<4x64x128xf32, #tpu.memory_space<vmem>>, vector<1x8x128xf32>,
    %c3_i32_640 = arith.constant 3 : i32
    %c8_i32_641 = arith.constant 8 : i32
    %1790 = arith.muli %c3_i32_640, %c8_i32_641 : i32
    %1791 = tpu.assume_multiple %1790, 8 : i32
    %c2_i32_642 = arith.constant 2 : i32
    %1792 = arith.addi %0, %c2_i32_642 : i32
    %1793 = arith.addi %1, %1791 : i32
    %c0_i32_643 = arith.constant 0 : i32
    %1794 = arith.addi %1793, %c0_i32_643 : i32
    %1795 = arith.index_cast %1792 : i32 to index
    %1796 = arith.index_cast %1794 : i32 to index
    %1797 = memref.load %arg2[%1795, %1796] : memref<4x64xi32, #tpu.memory_space<smem>>
    %1798 = arith.index_cast %1797 : i32 to index
    %c0_644 = arith.constant 0 : index
    %1799 = vector.load %arg3[%1798, %c0_644] : memref<48x128xf32, #tpu.memory_space<vmem>>, vector<1x128xf32>
    %c2_i32_645 = arith.constant 2 : i32
    %1800 = arith.addi %0, %c2_i32_645 : i32
    %1801 = arith.addi %1, %1791 : i32
    %c1_i32_646 = arith.constant 1 : i32
    %1802 = arith.addi %1801, %c1_i32_646 : i32
    %1803 = arith.index_cast %1800 : i32 to index
    %1804 = arith.index_cast %1802 : i32 to index
    %1805 = memref.load %arg2[%1803, %1804] : memref<4x64xi32, #tpu.memory_space<smem>>
    %1806 = arith.index_cast %1805 : i32 to index
    %c0_647 = arith.constant 0 : index
    %1807 = vector.load %arg3[%1806, %c0_647] : memref<48x128xf32, #tpu.memory_space<vmem>>, vector<1x128xf32>
    %c2_i32_648 = arith.constant 2 : i32
    %1808 = arith.addi %0, %c2_i32_648 : i32
    %1809 = arith.addi %1, %1791 : i32
    %c2_i32_649 = arith.constant 2 : i32
    %1810 = arith.addi %1809, %c2_i32_649 : i32
    %1811 = arith.index_cast %1808 : i32 to index
    %1812 = arith.index_cast %1810 : i32 to index
    %1813 = memref.load %arg2[%1811, %1812] : memref<4x64xi32, #tpu.memory_space<smem>>
    %1814 = arith.index_cast %1813 : i32 to index
    %c0_650 = arith.constant 0 : index
    %1815 = vector.load %arg3[%1814, %c0_650] : memref<48x128xf32, #tpu.memory_space<vmem>>, vector<1x128xf32>
    %c2_i32_651 = arith.constant 2 : i32
    %1816 = arith.addi %0, %c2_i32_651 : i32
    %1817 = arith.addi %1, %1791 : i32
    %c3_i32_652 = arith.constant 3 : i32
    %1818 = arith.addi %1817, %c3_i32_652 : i32
    %1819 = arith.index_cast %1816 : i32 to index
    %1820 = arith.index_cast %1818 : i32 to index
    %1821 = memref.load %arg2[%1819, %1820] : memref<4x64xi32, #tpu.memory_space<smem>>
    %1822 = arith.index_cast %1821 : i32 to index
    %c0_653 = arith.constant 0 : index
    %1823 = vector.load %arg3[%1822, %c0_653] : memref<48x128xf32, #tpu.memory_space<vmem>>, vector<1x128xf32>
    %c2_i32_654 = arith.constant 2 : i32
    %1824 = arith.addi %0, %c2_i32_654 : i32
    %1825 = arith.addi %1, %1791 : i32
    %c4_i32_655 = arith.constant 4 : i32
    %1826 = arith.addi %1825, %c4_i32_655 : i32
    %1827 = arith.index_cast %1824 : i32 to index
    %1828 = arith.index_cast %1826 : i32 to index
    %1829 = memref.load %arg2[%1827, %1828] : memref<4x64xi32, #tpu.memory_space<smem>>
    %1830 = arith.index_cast %1829 : i32 to index
    %c0_656 = arith.constant 0 : index
    %1831 = vector.load %arg3[%1830, %c0_656] : memref<48x128xf32, #tpu.memory_space<vmem>>, vector<1x128xf32>
    %c2_i32_657 = arith.constant 2 : i32
    %1832 = arith.addi %0, %c2_i32_657 : i32
    %1833 = arith.addi %1, %1791 : i32
    %c5_i32_658 = arith.constant 5 : i32
    %1834 = arith.addi %1833, %c5_i32_658 : i32
    %1835 = arith.index_cast %1832 : i32 to index
    %1836 = arith.index_cast %1834 : i32 to index
    %1837 = memref.load %arg2[%1835, %1836] : memref<4x64xi32, #tpu.memory_space<smem>>
    %1838 = arith.index_cast %1837 : i32 to index
    %c0_659 = arith.constant 0 : index
    %1839 = vector.load %arg3[%1838, %c0_659] : memref<48x128xf32, #tpu.memory_space<vmem>>, vector<1x128xf32>
    %c2_i32_660 = arith.constant 2 : i32
    %1840 = arith.addi %0, %c2_i32_660 : i32
    %1841 = arith.addi %1, %1791 : i32
    %c6_i32_661 = arith.constant 6 : i32
    %1842 = arith.addi %1841, %c6_i32_661 : i32
    %1843 = arith.index_cast %1840 : i32 to index
    %1844 = arith.index_cast %1842 : i32 to index
    %1845 = memref.load %arg2[%1843, %1844] : memref<4x64xi32, #tpu.memory_space<smem>>
    %1846 = arith.index_cast %1845 : i32 to index
    %c0_662 = arith.constant 0 : index
    %1847 = vector.load %arg3[%1846, %c0_662] : memref<48x128xf32, #tpu.memory_space<vmem>>, vector<1x128xf32>
    %c2_i32_663 = arith.constant 2 : i32
    %1848 = arith.addi %0, %c2_i32_663 : i32
    %1849 = arith.addi %1, %1791 : i32
    %c7_i32_664 = arith.constant 7 : i32
    %1850 = arith.addi %1849, %c7_i32_664 : i32
    %1851 = arith.index_cast %1848 : i32 to index
    %1852 = arith.index_cast %1850 : i32 to index
    %1853 = memref.load %arg2[%1851, %1852] : memref<4x64xi32, #tpu.memory_space<smem>>
    %1854 = arith.index_cast %1853 : i32 to index
    %c0_665 = arith.constant 0 : index
    %1855 = vector.load %arg3[%1854, %c0_665] : memref<48x128xf32, #tpu.memory_space<vmem>>, vector<1x128xf32>
    %1856 = tpu.concatenate %1799, %1807, %1815, %1823, %1831, %1839, %1847, %1855 in 0 : vector<1x128xf32>, vector<1x128xf32>, vector<1x128xf32>, vector<1x128xf32>, vector<1x128xf32>, vector<1x128xf32>, vector<1x128xf32>, vector<1x128xf32> -> vector<8x128xf32>
    %1857 = arith.index_cast %1791 : i32 to index
    %c0_666 = arith.constant 0 : index
    %1858 = vector.load %arg4[%1857, %c0_666] : memref<64x128xf32, #tpu.memory_space<vmem>>, vector<8x128xf32>
    %1859 = arith.addf %1856, %1858 : vector<8x128xf32>
    %cst_667 = arith.constant dense<0.000000e+00> : vector<8xf32>
    %1860 = vector.multi_reduction <add>, %1859, %cst_667 [1] : vector<8x128xf32> to vector<8xf32>
    %1861 = vector.shape_cast %1860 : vector<8xf32> to vector<8x1xf32>
    %cst_668 = arith.constant 1.280000e+02 : f32
    %1862 = vector.broadcast %cst_668 : f32 to vector<8x1xf32>
    %1863 = arith.divf %1861, %1862 : vector<8x1xf32>
    %1864 = vector.broadcast %1863 : vector<8x1xf32> to vector<8x128xf32>
    %1865 = arith.subf %1859, %1864 : vector<8x128xf32>
    %1866 = arith.mulf %1865, %1865 : vector<8x128xf32>
    %cst_669 = arith.constant dense<0.000000e+00> : vector<8xf32>
    %1867 = vector.multi_reduction <add>, %1866, %cst_669 [1] : vector<8x128xf32> to vector<8xf32>
    %1868 = vector.shape_cast %1867 : vector<8xf32> to vector<8x1xf32>
    %cst_670 = arith.constant 1.280000e+02 : f32
    %1869 = vector.broadcast %cst_670 : f32 to vector<8x1xf32>
    %1870 = arith.divf %1868, %1869 : vector<8x1xf32>
    %cst_671 = arith.constant 9.99999974E-6 : f32
    %1871 = vector.broadcast %cst_671 : f32 to vector<8x1xf32>
    %1872 = arith.addf %1870, %1871 : vector<8x1xf32>
    %1873 = math.rsqrt %1872 : vector<8x1xf32>
    %1874 = vector.broadcast %1873 : vector<8x1xf32> to vector<8x128xf32>
    %1875 = arith.mulf %1865, %1874 : vector<8x128xf32>
    %1876 = vector.broadcast %2 : vector<1x128xf32> to vector<8x128xf32>
    %1877 = arith.mulf %1875, %1876 : vector<8x128xf32>
    %1878 = vector.broadcast %3 : vector<1x128xf32> to vector<8x128xf32>
    %1879 = arith.addf %1877, %1878 : vector<8x128xf32>
    %c2_672 = arith.constant 2 : index
    %1880 = arith.index_cast %1791 : i32 to index
    %c0_673 = arith.constant 0 : index
    %1881 = vector.load %arg7[%c2_672, %1880, %c0_673] : memref<4x64x128xf32, #tpu.memory_space<vmem>>, vector<1x8x128xf32>
    %1882 = vector.shape_cast %1881 : vector<1x8x128xf32> to vector<8x128xf32>
    %1883 = vector.shape_cast %1879 : vector<8x128xf32> to vector<1x8x128xf32>
    tpu.vector_store %arg7[%c2_672, %1880, %c0_673], %1883 {strides = array<i32>} : memref<4x64x128xf32, #tpu.memory_space<vmem>>, vector<1x8x128xf32>,
    %c4_i32_674 = arith.constant 4 : i32
    %c8_i32_675 = arith.constant 8 : i32
    %1884 = arith.muli %c4_i32_674, %c8_i32_675 : i32
    %1885 = tpu.assume_multiple %1884, 8 : i32
    %c2_i32_676 = arith.constant 2 : i32
    %1886 = arith.addi %0, %c2_i32_676 : i32
    %1887 = arith.addi %1, %1885 : i32
    %c0_i32_677 = arith.constant 0 : i32
    %1888 = arith.addi %1887, %c0_i32_677 : i32
    %1889 = arith.index_cast %1886 : i32 to index
    %1890 = arith.index_cast %1888 : i32 to index
    %1891 = memref.load %arg2[%1889, %1890] : memref<4x64xi32, #tpu.memory_space<smem>>
    %1892 = arith.index_cast %1891 : i32 to index
    %c0_678 = arith.constant 0 : index
    %1893 = vector.load %arg3[%1892, %c0_678] : memref<48x128xf32, #tpu.memory_space<vmem>>, vector<1x128xf32>
    %c2_i32_679 = arith.constant 2 : i32
    %1894 = arith.addi %0, %c2_i32_679 : i32
    %1895 = arith.addi %1, %1885 : i32
    %c1_i32_680 = arith.constant 1 : i32
    %1896 = arith.addi %1895, %c1_i32_680 : i32
    %1897 = arith.index_cast %1894 : i32 to index
    %1898 = arith.index_cast %1896 : i32 to index
    %1899 = memref.load %arg2[%1897, %1898] : memref<4x64xi32, #tpu.memory_space<smem>>
    %1900 = arith.index_cast %1899 : i32 to index
    %c0_681 = arith.constant 0 : index
    %1901 = vector.load %arg3[%1900, %c0_681] : memref<48x128xf32, #tpu.memory_space<vmem>>, vector<1x128xf32>
    %c2_i32_682 = arith.constant 2 : i32
    %1902 = arith.addi %0, %c2_i32_682 : i32
    %1903 = arith.addi %1, %1885 : i32
    %c2_i32_683 = arith.constant 2 : i32
    %1904 = arith.addi %1903, %c2_i32_683 : i32
    %1905 = arith.index_cast %1902 : i32 to index
    %1906 = arith.index_cast %1904 : i32 to index
    %1907 = memref.load %arg2[%1905, %1906] : memref<4x64xi32, #tpu.memory_space<smem>>
    %1908 = arith.index_cast %1907 : i32 to index
    %c0_684 = arith.constant 0 : index
    %1909 = vector.load %arg3[%1908, %c0_684] : memref<48x128xf32, #tpu.memory_space<vmem>>, vector<1x128xf32>
    %c2_i32_685 = arith.constant 2 : i32
    %1910 = arith.addi %0, %c2_i32_685 : i32
    %1911 = arith.addi %1, %1885 : i32
    %c3_i32_686 = arith.constant 3 : i32
    %1912 = arith.addi %1911, %c3_i32_686 : i32
    %1913 = arith.index_cast %1910 : i32 to index
    %1914 = arith.index_cast %1912 : i32 to index
    %1915 = memref.load %arg2[%1913, %1914] : memref<4x64xi32, #tpu.memory_space<smem>>
    %1916 = arith.index_cast %1915 : i32 to index
    %c0_687 = arith.constant 0 : index
    %1917 = vector.load %arg3[%1916, %c0_687] : memref<48x128xf32, #tpu.memory_space<vmem>>, vector<1x128xf32>
    %c2_i32_688 = arith.constant 2 : i32
    %1918 = arith.addi %0, %c2_i32_688 : i32
    %1919 = arith.addi %1, %1885 : i32
    %c4_i32_689 = arith.constant 4 : i32
    %1920 = arith.addi %1919, %c4_i32_689 : i32
    %1921 = arith.index_cast %1918 : i32 to index
    %1922 = arith.index_cast %1920 : i32 to index
    %1923 = memref.load %arg2[%1921, %1922] : memref<4x64xi32, #tpu.memory_space<smem>>
    %1924 = arith.index_cast %1923 : i32 to index
    %c0_690 = arith.constant 0 : index
    %1925 = vector.load %arg3[%1924, %c0_690] : memref<48x128xf32, #tpu.memory_space<vmem>>, vector<1x128xf32>
    %c2_i32_691 = arith.constant 2 : i32
    %1926 = arith.addi %0, %c2_i32_691 : i32
    %1927 = arith.addi %1, %1885 : i32
    %c5_i32_692 = arith.constant 5 : i32
    %1928 = arith.addi %1927, %c5_i32_692 : i32
    %1929 = arith.index_cast %1926 : i32 to index
    %1930 = arith.index_cast %1928 : i32 to index
    %1931 = memref.load %arg2[%1929, %1930] : memref<4x64xi32, #tpu.memory_space<smem>>
    %1932 = arith.index_cast %1931 : i32 to index
    %c0_693 = arith.constant 0 : index
    %1933 = vector.load %arg3[%1932, %c0_693] : memref<48x128xf32, #tpu.memory_space<vmem>>, vector<1x128xf32>
    %c2_i32_694 = arith.constant 2 : i32
    %1934 = arith.addi %0, %c2_i32_694 : i32
    %1935 = arith.addi %1, %1885 : i32
    %c6_i32_695 = arith.constant 6 : i32
    %1936 = arith.addi %1935, %c6_i32_695 : i32
    %1937 = arith.index_cast %1934 : i32 to index
    %1938 = arith.index_cast %1936 : i32 to index
    %1939 = memref.load %arg2[%1937, %1938] : memref<4x64xi32, #tpu.memory_space<smem>>
    %1940 = arith.index_cast %1939 : i32 to index
    %c0_696 = arith.constant 0 : index
    %1941 = vector.load %arg3[%1940, %c0_696] : memref<48x128xf32, #tpu.memory_space<vmem>>, vector<1x128xf32>
    %c2_i32_697 = arith.constant 2 : i32
    %1942 = arith.addi %0, %c2_i32_697 : i32
    %1943 = arith.addi %1, %1885 : i32
    %c7_i32_698 = arith.constant 7 : i32
    %1944 = arith.addi %1943, %c7_i32_698 : i32
    %1945 = arith.index_cast %1942 : i32 to index
    %1946 = arith.index_cast %1944 : i32 to index
    %1947 = memref.load %arg2[%1945, %1946] : memref<4x64xi32, #tpu.memory_space<smem>>
    %1948 = arith.index_cast %1947 : i32 to index
    %c0_699 = arith.constant 0 : index
    %1949 = vector.load %arg3[%1948, %c0_699] : memref<48x128xf32, #tpu.memory_space<vmem>>, vector<1x128xf32>
    %1950 = tpu.concatenate %1893, %1901, %1909, %1917, %1925, %1933, %1941, %1949 in 0 : vector<1x128xf32>, vector<1x128xf32>, vector<1x128xf32>, vector<1x128xf32>, vector<1x128xf32>, vector<1x128xf32>, vector<1x128xf32>, vector<1x128xf32> -> vector<8x128xf32>
    %1951 = arith.index_cast %1885 : i32 to index
    %c0_700 = arith.constant 0 : index
    %1952 = vector.load %arg4[%1951, %c0_700] : memref<64x128xf32, #tpu.memory_space<vmem>>, vector<8x128xf32>
    %1953 = arith.addf %1950, %1952 : vector<8x128xf32>
    %cst_701 = arith.constant dense<0.000000e+00> : vector<8xf32>
    %1954 = vector.multi_reduction <add>, %1953, %cst_701 [1] : vector<8x128xf32> to vector<8xf32>
    %1955 = vector.shape_cast %1954 : vector<8xf32> to vector<8x1xf32>
    %cst_702 = arith.constant 1.280000e+02 : f32
    %1956 = vector.broadcast %cst_702 : f32 to vector<8x1xf32>
    %1957 = arith.divf %1955, %1956 : vector<8x1xf32>
    %1958 = vector.broadcast %1957 : vector<8x1xf32> to vector<8x128xf32>
    %1959 = arith.subf %1953, %1958 : vector<8x128xf32>
    %1960 = arith.mulf %1959, %1959 : vector<8x128xf32>
    %cst_703 = arith.constant dense<0.000000e+00> : vector<8xf32>
    %1961 = vector.multi_reduction <add>, %1960, %cst_703 [1] : vector<8x128xf32> to vector<8xf32>
    %1962 = vector.shape_cast %1961 : vector<8xf32> to vector<8x1xf32>
    %cst_704 = arith.constant 1.280000e+02 : f32
    %1963 = vector.broadcast %cst_704 : f32 to vector<8x1xf32>
    %1964 = arith.divf %1962, %1963 : vector<8x1xf32>
    %cst_705 = arith.constant 9.99999974E-6 : f32
    %1965 = vector.broadcast %cst_705 : f32 to vector<8x1xf32>
    %1966 = arith.addf %1964, %1965 : vector<8x1xf32>
    %1967 = math.rsqrt %1966 : vector<8x1xf32>
    %1968 = vector.broadcast %1967 : vector<8x1xf32> to vector<8x128xf32>
    %1969 = arith.mulf %1959, %1968 : vector<8x128xf32>
    %1970 = vector.broadcast %2 : vector<1x128xf32> to vector<8x128xf32>
    %1971 = arith.mulf %1969, %1970 : vector<8x128xf32>
    %1972 = vector.broadcast %3 : vector<1x128xf32> to vector<8x128xf32>
    %1973 = arith.addf %1971, %1972 : vector<8x128xf32>
    %c2_706 = arith.constant 2 : index
    %1974 = arith.index_cast %1885 : i32 to index
    %c0_707 = arith.constant 0 : index
    %1975 = vector.load %arg7[%c2_706, %1974, %c0_707] : memref<4x64x128xf32, #tpu.memory_space<vmem>>, vector<1x8x128xf32>
    %1976 = vector.shape_cast %1975 : vector<1x8x128xf32> to vector<8x128xf32>
    %1977 = vector.shape_cast %1973 : vector<8x128xf32> to vector<1x8x128xf32>
    tpu.vector_store %arg7[%c2_706, %1974, %c0_707], %1977 {strides = array<i32>} : memref<4x64x128xf32, #tpu.memory_space<vmem>>, vector<1x8x128xf32>,
    %c5_i32_708 = arith.constant 5 : i32
    %c8_i32_709 = arith.constant 8 : i32
    %1978 = arith.muli %c5_i32_708, %c8_i32_709 : i32
    %1979 = tpu.assume_multiple %1978, 8 : i32
    %c2_i32_710 = arith.constant 2 : i32
    %1980 = arith.addi %0, %c2_i32_710 : i32
    %1981 = arith.addi %1, %1979 : i32
    %c0_i32_711 = arith.constant 0 : i32
    %1982 = arith.addi %1981, %c0_i32_711 : i32
    %1983 = arith.index_cast %1980 : i32 to index
    %1984 = arith.index_cast %1982 : i32 to index
    %1985 = memref.load %arg2[%1983, %1984] : memref<4x64xi32, #tpu.memory_space<smem>>
    %1986 = arith.index_cast %1985 : i32 to index
    %c0_712 = arith.constant 0 : index
    %1987 = vector.load %arg3[%1986, %c0_712] : memref<48x128xf32, #tpu.memory_space<vmem>>, vector<1x128xf32>
    %c2_i32_713 = arith.constant 2 : i32
    %1988 = arith.addi %0, %c2_i32_713 : i32
    %1989 = arith.addi %1, %1979 : i32
    %c1_i32_714 = arith.constant 1 : i32
    %1990 = arith.addi %1989, %c1_i32_714 : i32
    %1991 = arith.index_cast %1988 : i32 to index
    %1992 = arith.index_cast %1990 : i32 to index
    %1993 = memref.load %arg2[%1991, %1992] : memref<4x64xi32, #tpu.memory_space<smem>>
    %1994 = arith.index_cast %1993 : i32 to index
    %c0_715 = arith.constant 0 : index
    %1995 = vector.load %arg3[%1994, %c0_715] : memref<48x128xf32, #tpu.memory_space<vmem>>, vector<1x128xf32>
    %c2_i32_716 = arith.constant 2 : i32
    %1996 = arith.addi %0, %c2_i32_716 : i32
    %1997 = arith.addi %1, %1979 : i32
    %c2_i32_717 = arith.constant 2 : i32
    %1998 = arith.addi %1997, %c2_i32_717 : i32
    %1999 = arith.index_cast %1996 : i32 to index
    %2000 = arith.index_cast %1998 : i32 to index
    %2001 = memref.load %arg2[%1999, %2000] : memref<4x64xi32, #tpu.memory_space<smem>>
    %2002 = arith.index_cast %2001 : i32 to index
    %c0_718 = arith.constant 0 : index
    %2003 = vector.load %arg3[%2002, %c0_718] : memref<48x128xf32, #tpu.memory_space<vmem>>, vector<1x128xf32>
    %c2_i32_719 = arith.constant 2 : i32
    %2004 = arith.addi %0, %c2_i32_719 : i32
    %2005 = arith.addi %1, %1979 : i32
    %c3_i32_720 = arith.constant 3 : i32
    %2006 = arith.addi %2005, %c3_i32_720 : i32
    %2007 = arith.index_cast %2004 : i32 to index
    %2008 = arith.index_cast %2006 : i32 to index
    %2009 = memref.load %arg2[%2007, %2008] : memref<4x64xi32, #tpu.memory_space<smem>>
    %2010 = arith.index_cast %2009 : i32 to index
    %c0_721 = arith.constant 0 : index
    %2011 = vector.load %arg3[%2010, %c0_721] : memref<48x128xf32, #tpu.memory_space<vmem>>, vector<1x128xf32>
    %c2_i32_722 = arith.constant 2 : i32
    %2012 = arith.addi %0, %c2_i32_722 : i32
    %2013 = arith.addi %1, %1979 : i32
    %c4_i32_723 = arith.constant 4 : i32
    %2014 = arith.addi %2013, %c4_i32_723 : i32
    %2015 = arith.index_cast %2012 : i32 to index
    %2016 = arith.index_cast %2014 : i32 to index
    %2017 = memref.load %arg2[%2015, %2016] : memref<4x64xi32, #tpu.memory_space<smem>>
    %2018 = arith.index_cast %2017 : i32 to index
    %c0_724 = arith.constant 0 : index
    %2019 = vector.load %arg3[%2018, %c0_724] : memref<48x128xf32, #tpu.memory_space<vmem>>, vector<1x128xf32>
    %c2_i32_725 = arith.constant 2 : i32
    %2020 = arith.addi %0, %c2_i32_725 : i32
    %2021 = arith.addi %1, %1979 : i32
    %c5_i32_726 = arith.constant 5 : i32
    %2022 = arith.addi %2021, %c5_i32_726 : i32
    %2023 = arith.index_cast %2020 : i32 to index
    %2024 = arith.index_cast %2022 : i32 to index
    %2025 = memref.load %arg2[%2023, %2024] : memref<4x64xi32, #tpu.memory_space<smem>>
    %2026 = arith.index_cast %2025 : i32 to index
    %c0_727 = arith.constant 0 : index
    %2027 = vector.load %arg3[%2026, %c0_727] : memref<48x128xf32, #tpu.memory_space<vmem>>, vector<1x128xf32>
    %c2_i32_728 = arith.constant 2 : i32
    %2028 = arith.addi %0, %c2_i32_728 : i32
    %2029 = arith.addi %1, %1979 : i32
    %c6_i32_729 = arith.constant 6 : i32
    %2030 = arith.addi %2029, %c6_i32_729 : i32
    %2031 = arith.index_cast %2028 : i32 to index
    %2032 = arith.index_cast %2030 : i32 to index
    %2033 = memref.load %arg2[%2031, %2032] : memref<4x64xi32, #tpu.memory_space<smem>>
    %2034 = arith.index_cast %2033 : i32 to index
    %c0_730 = arith.constant 0 : index
    %2035 = vector.load %arg3[%2034, %c0_730] : memref<48x128xf32, #tpu.memory_space<vmem>>, vector<1x128xf32>
    %c2_i32_731 = arith.constant 2 : i32
    %2036 = arith.addi %0, %c2_i32_731 : i32
    %2037 = arith.addi %1, %1979 : i32
    %c7_i32_732 = arith.constant 7 : i32
    %2038 = arith.addi %2037, %c7_i32_732 : i32
    %2039 = arith.index_cast %2036 : i32 to index
    %2040 = arith.index_cast %2038 : i32 to index
    %2041 = memref.load %arg2[%2039, %2040] : memref<4x64xi32, #tpu.memory_space<smem>>
    %2042 = arith.index_cast %2041 : i32 to index
    %c0_733 = arith.constant 0 : index
    %2043 = vector.load %arg3[%2042, %c0_733] : memref<48x128xf32, #tpu.memory_space<vmem>>, vector<1x128xf32>
    %2044 = tpu.concatenate %1987, %1995, %2003, %2011, %2019, %2027, %2035, %2043 in 0 : vector<1x128xf32>, vector<1x128xf32>, vector<1x128xf32>, vector<1x128xf32>, vector<1x128xf32>, vector<1x128xf32>, vector<1x128xf32>, vector<1x128xf32> -> vector<8x128xf32>
    %2045 = arith.index_cast %1979 : i32 to index
    %c0_734 = arith.constant 0 : index
    %2046 = vector.load %arg4[%2045, %c0_734] : memref<64x128xf32, #tpu.memory_space<vmem>>, vector<8x128xf32>
    %2047 = arith.addf %2044, %2046 : vector<8x128xf32>
    %cst_735 = arith.constant dense<0.000000e+00> : vector<8xf32>
    %2048 = vector.multi_reduction <add>, %2047, %cst_735 [1] : vector<8x128xf32> to vector<8xf32>
    %2049 = vector.shape_cast %2048 : vector<8xf32> to vector<8x1xf32>
    %cst_736 = arith.constant 1.280000e+02 : f32
    %2050 = vector.broadcast %cst_736 : f32 to vector<8x1xf32>
    %2051 = arith.divf %2049, %2050 : vector<8x1xf32>
    %2052 = vector.broadcast %2051 : vector<8x1xf32> to vector<8x128xf32>
    %2053 = arith.subf %2047, %2052 : vector<8x128xf32>
    %2054 = arith.mulf %2053, %2053 : vector<8x128xf32>
    %cst_737 = arith.constant dense<0.000000e+00> : vector<8xf32>
    %2055 = vector.multi_reduction <add>, %2054, %cst_737 [1] : vector<8x128xf32> to vector<8xf32>
    %2056 = vector.shape_cast %2055 : vector<8xf32> to vector<8x1xf32>
    %cst_738 = arith.constant 1.280000e+02 : f32
    %2057 = vector.broadcast %cst_738 : f32 to vector<8x1xf32>
    %2058 = arith.divf %2056, %2057 : vector<8x1xf32>
    %cst_739 = arith.constant 9.99999974E-6 : f32
    %2059 = vector.broadcast %cst_739 : f32 to vector<8x1xf32>
    %2060 = arith.addf %2058, %2059 : vector<8x1xf32>
    %2061 = math.rsqrt %2060 : vector<8x1xf32>
    %2062 = vector.broadcast %2061 : vector<8x1xf32> to vector<8x128xf32>
    %2063 = arith.mulf %2053, %2062 : vector<8x128xf32>
    %2064 = vector.broadcast %2 : vector<1x128xf32> to vector<8x128xf32>
    %2065 = arith.mulf %2063, %2064 : vector<8x128xf32>
    %2066 = vector.broadcast %3 : vector<1x128xf32> to vector<8x128xf32>
    %2067 = arith.addf %2065, %2066 : vector<8x128xf32>
    %c2_740 = arith.constant 2 : index
    %2068 = arith.index_cast %1979 : i32 to index
    %c0_741 = arith.constant 0 : index
    %2069 = vector.load %arg7[%c2_740, %2068, %c0_741] : memref<4x64x128xf32, #tpu.memory_space<vmem>>, vector<1x8x128xf32>
    %2070 = vector.shape_cast %2069 : vector<1x8x128xf32> to vector<8x128xf32>
    %2071 = vector.shape_cast %2067 : vector<8x128xf32> to vector<1x8x128xf32>
    tpu.vector_store %arg7[%c2_740, %2068, %c0_741], %2071 {strides = array<i32>} : memref<4x64x128xf32, #tpu.memory_space<vmem>>, vector<1x8x128xf32>,
    %c6_i32_742 = arith.constant 6 : i32
    %c8_i32_743 = arith.constant 8 : i32
    %2072 = arith.muli %c6_i32_742, %c8_i32_743 : i32
    %2073 = tpu.assume_multiple %2072, 8 : i32
    %c2_i32_744 = arith.constant 2 : i32
    %2074 = arith.addi %0, %c2_i32_744 : i32
    %2075 = arith.addi %1, %2073 : i32
    %c0_i32_745 = arith.constant 0 : i32
    %2076 = arith.addi %2075, %c0_i32_745 : i32
    %2077 = arith.index_cast %2074 : i32 to index
    %2078 = arith.index_cast %2076 : i32 to index
    %2079 = memref.load %arg2[%2077, %2078] : memref<4x64xi32, #tpu.memory_space<smem>>
    %2080 = arith.index_cast %2079 : i32 to index
    %c0_746 = arith.constant 0 : index
    %2081 = vector.load %arg3[%2080, %c0_746] : memref<48x128xf32, #tpu.memory_space<vmem>>, vector<1x128xf32>
    %c2_i32_747 = arith.constant 2 : i32
    %2082 = arith.addi %0, %c2_i32_747 : i32
    %2083 = arith.addi %1, %2073 : i32
    %c1_i32_748 = arith.constant 1 : i32
    %2084 = arith.addi %2083, %c1_i32_748 : i32
    %2085 = arith.index_cast %2082 : i32 to index
    %2086 = arith.index_cast %2084 : i32 to index
    %2087 = memref.load %arg2[%2085, %2086] : memref<4x64xi32, #tpu.memory_space<smem>>
    %2088 = arith.index_cast %2087 : i32 to index
    %c0_749 = arith.constant 0 : index
    %2089 = vector.load %arg3[%2088, %c0_749] : memref<48x128xf32, #tpu.memory_space<vmem>>, vector<1x128xf32>
    %c2_i32_750 = arith.constant 2 : i32
    %2090 = arith.addi %0, %c2_i32_750 : i32
    %2091 = arith.addi %1, %2073 : i32
    %c2_i32_751 = arith.constant 2 : i32
    %2092 = arith.addi %2091, %c2_i32_751 : i32
    %2093 = arith.index_cast %2090 : i32 to index
    %2094 = arith.index_cast %2092 : i32 to index
    %2095 = memref.load %arg2[%2093, %2094] : memref<4x64xi32, #tpu.memory_space<smem>>
    %2096 = arith.index_cast %2095 : i32 to index
    %c0_752 = arith.constant 0 : index
    %2097 = vector.load %arg3[%2096, %c0_752] : memref<48x128xf32, #tpu.memory_space<vmem>>, vector<1x128xf32>
    %c2_i32_753 = arith.constant 2 : i32
    %2098 = arith.addi %0, %c2_i32_753 : i32
    %2099 = arith.addi %1, %2073 : i32
    %c3_i32_754 = arith.constant 3 : i32
    %2100 = arith.addi %2099, %c3_i32_754 : i32
    %2101 = arith.index_cast %2098 : i32 to index
    %2102 = arith.index_cast %2100 : i32 to index
    %2103 = memref.load %arg2[%2101, %2102] : memref<4x64xi32, #tpu.memory_space<smem>>
    %2104 = arith.index_cast %2103 : i32 to index
    %c0_755 = arith.constant 0 : index
    %2105 = vector.load %arg3[%2104, %c0_755] : memref<48x128xf32, #tpu.memory_space<vmem>>, vector<1x128xf32>
    %c2_i32_756 = arith.constant 2 : i32
    %2106 = arith.addi %0, %c2_i32_756 : i32
    %2107 = arith.addi %1, %2073 : i32
    %c4_i32_757 = arith.constant 4 : i32
    %2108 = arith.addi %2107, %c4_i32_757 : i32
    %2109 = arith.index_cast %2106 : i32 to index
    %2110 = arith.index_cast %2108 : i32 to index
    %2111 = memref.load %arg2[%2109, %2110] : memref<4x64xi32, #tpu.memory_space<smem>>
    %2112 = arith.index_cast %2111 : i32 to index
    %c0_758 = arith.constant 0 : index
    %2113 = vector.load %arg3[%2112, %c0_758] : memref<48x128xf32, #tpu.memory_space<vmem>>, vector<1x128xf32>
    %c2_i32_759 = arith.constant 2 : i32
    %2114 = arith.addi %0, %c2_i32_759 : i32
    %2115 = arith.addi %1, %2073 : i32
    %c5_i32_760 = arith.constant 5 : i32
    %2116 = arith.addi %2115, %c5_i32_760 : i32
    %2117 = arith.index_cast %2114 : i32 to index
    %2118 = arith.index_cast %2116 : i32 to index
    %2119 = memref.load %arg2[%2117, %2118] : memref<4x64xi32, #tpu.memory_space<smem>>
    %2120 = arith.index_cast %2119 : i32 to index
    %c0_761 = arith.constant 0 : index
    %2121 = vector.load %arg3[%2120, %c0_761] : memref<48x128xf32, #tpu.memory_space<vmem>>, vector<1x128xf32>
    %c2_i32_762 = arith.constant 2 : i32
    %2122 = arith.addi %0, %c2_i32_762 : i32
    %2123 = arith.addi %1, %2073 : i32
    %c6_i32_763 = arith.constant 6 : i32
    %2124 = arith.addi %2123, %c6_i32_763 : i32
    %2125 = arith.index_cast %2122 : i32 to index
    %2126 = arith.index_cast %2124 : i32 to index
    %2127 = memref.load %arg2[%2125, %2126] : memref<4x64xi32, #tpu.memory_space<smem>>
    %2128 = arith.index_cast %2127 : i32 to index
    %c0_764 = arith.constant 0 : index
    %2129 = vector.load %arg3[%2128, %c0_764] : memref<48x128xf32, #tpu.memory_space<vmem>>, vector<1x128xf32>
    %c2_i32_765 = arith.constant 2 : i32
    %2130 = arith.addi %0, %c2_i32_765 : i32
    %2131 = arith.addi %1, %2073 : i32
    %c7_i32_766 = arith.constant 7 : i32
    %2132 = arith.addi %2131, %c7_i32_766 : i32
    %2133 = arith.index_cast %2130 : i32 to index
    %2134 = arith.index_cast %2132 : i32 to index
    %2135 = memref.load %arg2[%2133, %2134] : memref<4x64xi32, #tpu.memory_space<smem>>
    %2136 = arith.index_cast %2135 : i32 to index
    %c0_767 = arith.constant 0 : index
    %2137 = vector.load %arg3[%2136, %c0_767] : memref<48x128xf32, #tpu.memory_space<vmem>>, vector<1x128xf32>
    %2138 = tpu.concatenate %2081, %2089, %2097, %2105, %2113, %2121, %2129, %2137 in 0 : vector<1x128xf32>, vector<1x128xf32>, vector<1x128xf32>, vector<1x128xf32>, vector<1x128xf32>, vector<1x128xf32>, vector<1x128xf32>, vector<1x128xf32> -> vector<8x128xf32>
    %2139 = arith.index_cast %2073 : i32 to index
    %c0_768 = arith.constant 0 : index
    %2140 = vector.load %arg4[%2139, %c0_768] : memref<64x128xf32, #tpu.memory_space<vmem>>, vector<8x128xf32>
    %2141 = arith.addf %2138, %2140 : vector<8x128xf32>
    %cst_769 = arith.constant dense<0.000000e+00> : vector<8xf32>
    %2142 = vector.multi_reduction <add>, %2141, %cst_769 [1] : vector<8x128xf32> to vector<8xf32>
    %2143 = vector.shape_cast %2142 : vector<8xf32> to vector<8x1xf32>
    %cst_770 = arith.constant 1.280000e+02 : f32
    %2144 = vector.broadcast %cst_770 : f32 to vector<8x1xf32>
    %2145 = arith.divf %2143, %2144 : vector<8x1xf32>
    %2146 = vector.broadcast %2145 : vector<8x1xf32> to vector<8x128xf32>
    %2147 = arith.subf %2141, %2146 : vector<8x128xf32>
    %2148 = arith.mulf %2147, %2147 : vector<8x128xf32>
    %cst_771 = arith.constant dense<0.000000e+00> : vector<8xf32>
    %2149 = vector.multi_reduction <add>, %2148, %cst_771 [1] : vector<8x128xf32> to vector<8xf32>
    %2150 = vector.shape_cast %2149 : vector<8xf32> to vector<8x1xf32>
    %cst_772 = arith.constant 1.280000e+02 : f32
    %2151 = vector.broadcast %cst_772 : f32 to vector<8x1xf32>
    %2152 = arith.divf %2150, %2151 : vector<8x1xf32>
    %cst_773 = arith.constant 9.99999974E-6 : f32
    %2153 = vector.broadcast %cst_773 : f32 to vector<8x1xf32>
    %2154 = arith.addf %2152, %2153 : vector<8x1xf32>
    %2155 = math.rsqrt %2154 : vector<8x1xf32>
    %2156 = vector.broadcast %2155 : vector<8x1xf32> to vector<8x128xf32>
    %2157 = arith.mulf %2147, %2156 : vector<8x128xf32>
    %2158 = vector.broadcast %2 : vector<1x128xf32> to vector<8x128xf32>
    %2159 = arith.mulf %2157, %2158 : vector<8x128xf32>
    %2160 = vector.broadcast %3 : vector<1x128xf32> to vector<8x128xf32>
    %2161 = arith.addf %2159, %2160 : vector<8x128xf32>
    %c2_774 = arith.constant 2 : index
    %2162 = arith.index_cast %2073 : i32 to index
    %c0_775 = arith.constant 0 : index
    %2163 = vector.load %arg7[%c2_774, %2162, %c0_775] : memref<4x64x128xf32, #tpu.memory_space<vmem>>, vector<1x8x128xf32>
    %2164 = vector.shape_cast %2163 : vector<1x8x128xf32> to vector<8x128xf32>
    %2165 = vector.shape_cast %2161 : vector<8x128xf32> to vector<1x8x128xf32>
    tpu.vector_store %arg7[%c2_774, %2162, %c0_775], %2165 {strides = array<i32>} : memref<4x64x128xf32, #tpu.memory_space<vmem>>, vector<1x8x128xf32>,
    %c7_i32_776 = arith.constant 7 : i32
    %c8_i32_777 = arith.constant 8 : i32
    %2166 = arith.muli %c7_i32_776, %c8_i32_777 : i32
    %2167 = tpu.assume_multiple %2166, 8 : i32
    %c2_i32_778 = arith.constant 2 : i32
    %2168 = arith.addi %0, %c2_i32_778 : i32
    %2169 = arith.addi %1, %2167 : i32
    %c0_i32_779 = arith.constant 0 : i32
    %2170 = arith.addi %2169, %c0_i32_779 : i32
    %2171 = arith.index_cast %2168 : i32 to index
    %2172 = arith.index_cast %2170 : i32 to index
    %2173 = memref.load %arg2[%2171, %2172] : memref<4x64xi32, #tpu.memory_space<smem>>
    %2174 = arith.index_cast %2173 : i32 to index
    %c0_780 = arith.constant 0 : index
    %2175 = vector.load %arg3[%2174, %c0_780] : memref<48x128xf32, #tpu.memory_space<vmem>>, vector<1x128xf32>
    %c2_i32_781 = arith.constant 2 : i32
    %2176 = arith.addi %0, %c2_i32_781 : i32
    %2177 = arith.addi %1, %2167 : i32
    %c1_i32_782 = arith.constant 1 : i32
    %2178 = arith.addi %2177, %c1_i32_782 : i32
    %2179 = arith.index_cast %2176 : i32 to index
    %2180 = arith.index_cast %2178 : i32 to index
    %2181 = memref.load %arg2[%2179, %2180] : memref<4x64xi32, #tpu.memory_space<smem>>
    %2182 = arith.index_cast %2181 : i32 to index
    %c0_783 = arith.constant 0 : index
    %2183 = vector.load %arg3[%2182, %c0_783] : memref<48x128xf32, #tpu.memory_space<vmem>>, vector<1x128xf32>
    %c2_i32_784 = arith.constant 2 : i32
    %2184 = arith.addi %0, %c2_i32_784 : i32
    %2185 = arith.addi %1, %2167 : i32
    %c2_i32_785 = arith.constant 2 : i32
    %2186 = arith.addi %2185, %c2_i32_785 : i32
    %2187 = arith.index_cast %2184 : i32 to index
    %2188 = arith.index_cast %2186 : i32 to index
    %2189 = memref.load %arg2[%2187, %2188] : memref<4x64xi32, #tpu.memory_space<smem>>
    %2190 = arith.index_cast %2189 : i32 to index
    %c0_786 = arith.constant 0 : index
    %2191 = vector.load %arg3[%2190, %c0_786] : memref<48x128xf32, #tpu.memory_space<vmem>>, vector<1x128xf32>
    %c2_i32_787 = arith.constant 2 : i32
    %2192 = arith.addi %0, %c2_i32_787 : i32
    %2193 = arith.addi %1, %2167 : i32
    %c3_i32_788 = arith.constant 3 : i32
    %2194 = arith.addi %2193, %c3_i32_788 : i32
    %2195 = arith.index_cast %2192 : i32 to index
    %2196 = arith.index_cast %2194 : i32 to index
    %2197 = memref.load %arg2[%2195, %2196] : memref<4x64xi32, #tpu.memory_space<smem>>
    %2198 = arith.index_cast %2197 : i32 to index
    %c0_789 = arith.constant 0 : index
    %2199 = vector.load %arg3[%2198, %c0_789] : memref<48x128xf32, #tpu.memory_space<vmem>>, vector<1x128xf32>
    %c2_i32_790 = arith.constant 2 : i32
    %2200 = arith.addi %0, %c2_i32_790 : i32
    %2201 = arith.addi %1, %2167 : i32
    %c4_i32_791 = arith.constant 4 : i32
    %2202 = arith.addi %2201, %c4_i32_791 : i32
    %2203 = arith.index_cast %2200 : i32 to index
    %2204 = arith.index_cast %2202 : i32 to index
    %2205 = memref.load %arg2[%2203, %2204] : memref<4x64xi32, #tpu.memory_space<smem>>
    %2206 = arith.index_cast %2205 : i32 to index
    %c0_792 = arith.constant 0 : index
    %2207 = vector.load %arg3[%2206, %c0_792] : memref<48x128xf32, #tpu.memory_space<vmem>>, vector<1x128xf32>
    %c2_i32_793 = arith.constant 2 : i32
    %2208 = arith.addi %0, %c2_i32_793 : i32
    %2209 = arith.addi %1, %2167 : i32
    %c5_i32_794 = arith.constant 5 : i32
    %2210 = arith.addi %2209, %c5_i32_794 : i32
    %2211 = arith.index_cast %2208 : i32 to index
    %2212 = arith.index_cast %2210 : i32 to index
    %2213 = memref.load %arg2[%2211, %2212] : memref<4x64xi32, #tpu.memory_space<smem>>
    %2214 = arith.index_cast %2213 : i32 to index
    %c0_795 = arith.constant 0 : index
    %2215 = vector.load %arg3[%2214, %c0_795] : memref<48x128xf32, #tpu.memory_space<vmem>>, vector<1x128xf32>
    %c2_i32_796 = arith.constant 2 : i32
    %2216 = arith.addi %0, %c2_i32_796 : i32
    %2217 = arith.addi %1, %2167 : i32
    %c6_i32_797 = arith.constant 6 : i32
    %2218 = arith.addi %2217, %c6_i32_797 : i32
    %2219 = arith.index_cast %2216 : i32 to index
    %2220 = arith.index_cast %2218 : i32 to index
    %2221 = memref.load %arg2[%2219, %2220] : memref<4x64xi32, #tpu.memory_space<smem>>
    %2222 = arith.index_cast %2221 : i32 to index
    %c0_798 = arith.constant 0 : index
    %2223 = vector.load %arg3[%2222, %c0_798] : memref<48x128xf32, #tpu.memory_space<vmem>>, vector<1x128xf32>
    %c2_i32_799 = arith.constant 2 : i32
    %2224 = arith.addi %0, %c2_i32_799 : i32
    %2225 = arith.addi %1, %2167 : i32
    %c7_i32_800 = arith.constant 7 : i32
    %2226 = arith.addi %2225, %c7_i32_800 : i32
    %2227 = arith.index_cast %2224 : i32 to index
    %2228 = arith.index_cast %2226 : i32 to index
    %2229 = memref.load %arg2[%2227, %2228] : memref<4x64xi32, #tpu.memory_space<smem>>
    %2230 = arith.index_cast %2229 : i32 to index
    %c0_801 = arith.constant 0 : index
    %2231 = vector.load %arg3[%2230, %c0_801] : memref<48x128xf32, #tpu.memory_space<vmem>>, vector<1x128xf32>
    %2232 = tpu.concatenate %2175, %2183, %2191, %2199, %2207, %2215, %2223, %2231 in 0 : vector<1x128xf32>, vector<1x128xf32>, vector<1x128xf32>, vector<1x128xf32>, vector<1x128xf32>, vector<1x128xf32>, vector<1x128xf32>, vector<1x128xf32> -> vector<8x128xf32>
    %2233 = arith.index_cast %2167 : i32 to index
    %c0_802 = arith.constant 0 : index
    %2234 = vector.load %arg4[%2233, %c0_802] : memref<64x128xf32, #tpu.memory_space<vmem>>, vector<8x128xf32>
    %2235 = arith.addf %2232, %2234 : vector<8x128xf32>
    %cst_803 = arith.constant dense<0.000000e+00> : vector<8xf32>
    %2236 = vector.multi_reduction <add>, %2235, %cst_803 [1] : vector<8x128xf32> to vector<8xf32>
    %2237 = vector.shape_cast %2236 : vector<8xf32> to vector<8x1xf32>
    %cst_804 = arith.constant 1.280000e+02 : f32
    %2238 = vector.broadcast %cst_804 : f32 to vector<8x1xf32>
    %2239 = arith.divf %2237, %2238 : vector<8x1xf32>
    %2240 = vector.broadcast %2239 : vector<8x1xf32> to vector<8x128xf32>
    %2241 = arith.subf %2235, %2240 : vector<8x128xf32>
    %2242 = arith.mulf %2241, %2241 : vector<8x128xf32>
    %cst_805 = arith.constant dense<0.000000e+00> : vector<8xf32>
    %2243 = vector.multi_reduction <add>, %2242, %cst_805 [1] : vector<8x128xf32> to vector<8xf32>
    %2244 = vector.shape_cast %2243 : vector<8xf32> to vector<8x1xf32>
    %cst_806 = arith.constant 1.280000e+02 : f32
    %2245 = vector.broadcast %cst_806 : f32 to vector<8x1xf32>
    %2246 = arith.divf %2244, %2245 : vector<8x1xf32>
    %cst_807 = arith.constant 9.99999974E-6 : f32
    %2247 = vector.broadcast %cst_807 : f32 to vector<8x1xf32>
    %2248 = arith.addf %2246, %2247 : vector<8x1xf32>
    %2249 = math.rsqrt %2248 : vector<8x1xf32>
    %2250 = vector.broadcast %2249 : vector<8x1xf32> to vector<8x128xf32>
    %2251 = arith.mulf %2241, %2250 : vector<8x128xf32>
    %2252 = vector.broadcast %2 : vector<1x128xf32> to vector<8x128xf32>
    %2253 = arith.mulf %2251, %2252 : vector<8x128xf32>
    %2254 = vector.broadcast %3 : vector<1x128xf32> to vector<8x128xf32>
    %2255 = arith.addf %2253, %2254 : vector<8x128xf32>
    %c2_808 = arith.constant 2 : index
    %2256 = arith.index_cast %2167 : i32 to index
    %c0_809 = arith.constant 0 : index
    %2257 = vector.load %arg7[%c2_808, %2256, %c0_809] : memref<4x64x128xf32, #tpu.memory_space<vmem>>, vector<1x8x128xf32>
    %2258 = vector.shape_cast %2257 : vector<1x8x128xf32> to vector<8x128xf32>
    %2259 = vector.shape_cast %2255 : vector<8x128xf32> to vector<1x8x128xf32>
    tpu.vector_store %arg7[%c2_808, %2256, %c0_809], %2259 {strides = array<i32>} : memref<4x64x128xf32, #tpu.memory_space<vmem>>, vector<1x8x128xf32>,
    %c8_i32_810 = arith.constant 8 : i32
    %c0_i32_811 = arith.constant 0 : i32
    %c8_i32_812 = arith.constant 8 : i32
    %2260 = arith.muli %c0_i32_811, %c8_i32_812 : i32
    %2261 = tpu.assume_multiple %2260, 8 : i32
    %c3_i32_813 = arith.constant 3 : i32
    %2262 = arith.addi %0, %c3_i32_813 : i32
    %2263 = arith.addi %1, %2261 : i32
    %c0_i32_814 = arith.constant 0 : i32
    %2264 = arith.addi %2263, %c0_i32_814 : i32
    %2265 = arith.index_cast %2262 : i32 to index
    %2266 = arith.index_cast %2264 : i32 to index
    %2267 = memref.load %arg2[%2265, %2266] : memref<4x64xi32, #tpu.memory_space<smem>>
    %2268 = arith.index_cast %2267 : i32 to index
    %c0_815 = arith.constant 0 : index
    %2269 = vector.load %arg3[%2268, %c0_815] : memref<48x128xf32, #tpu.memory_space<vmem>>, vector<1x128xf32>
    %c3_i32_816 = arith.constant 3 : i32
    %2270 = arith.addi %0, %c3_i32_816 : i32
    %2271 = arith.addi %1, %2261 : i32
    %c1_i32_817 = arith.constant 1 : i32
    %2272 = arith.addi %2271, %c1_i32_817 : i32
    %2273 = arith.index_cast %2270 : i32 to index
    %2274 = arith.index_cast %2272 : i32 to index
    %2275 = memref.load %arg2[%2273, %2274] : memref<4x64xi32, #tpu.memory_space<smem>>
    %2276 = arith.index_cast %2275 : i32 to index
    %c0_818 = arith.constant 0 : index
    %2277 = vector.load %arg3[%2276, %c0_818] : memref<48x128xf32, #tpu.memory_space<vmem>>, vector<1x128xf32>
    %c3_i32_819 = arith.constant 3 : i32
    %2278 = arith.addi %0, %c3_i32_819 : i32
    %2279 = arith.addi %1, %2261 : i32
    %c2_i32_820 = arith.constant 2 : i32
    %2280 = arith.addi %2279, %c2_i32_820 : i32
    %2281 = arith.index_cast %2278 : i32 to index
    %2282 = arith.index_cast %2280 : i32 to index
    %2283 = memref.load %arg2[%2281, %2282] : memref<4x64xi32, #tpu.memory_space<smem>>
    %2284 = arith.index_cast %2283 : i32 to index
    %c0_821 = arith.constant 0 : index
    %2285 = vector.load %arg3[%2284, %c0_821] : memref<48x128xf32, #tpu.memory_space<vmem>>, vector<1x128xf32>
    %c3_i32_822 = arith.constant 3 : i32
    %2286 = arith.addi %0, %c3_i32_822 : i32
    %2287 = arith.addi %1, %2261 : i32
    %c3_i32_823 = arith.constant 3 : i32
    %2288 = arith.addi %2287, %c3_i32_823 : i32
    %2289 = arith.index_cast %2286 : i32 to index
    %2290 = arith.index_cast %2288 : i32 to index
    %2291 = memref.load %arg2[%2289, %2290] : memref<4x64xi32, #tpu.memory_space<smem>>
    %2292 = arith.index_cast %2291 : i32 to index
    %c0_824 = arith.constant 0 : index
    %2293 = vector.load %arg3[%2292, %c0_824] : memref<48x128xf32, #tpu.memory_space<vmem>>, vector<1x128xf32>
    %c3_i32_825 = arith.constant 3 : i32
    %2294 = arith.addi %0, %c3_i32_825 : i32
    %2295 = arith.addi %1, %2261 : i32
    %c4_i32_826 = arith.constant 4 : i32
    %2296 = arith.addi %2295, %c4_i32_826 : i32
    %2297 = arith.index_cast %2294 : i32 to index
    %2298 = arith.index_cast %2296 : i32 to index
    %2299 = memref.load %arg2[%2297, %2298] : memref<4x64xi32, #tpu.memory_space<smem>>
    %2300 = arith.index_cast %2299 : i32 to index
    %c0_827 = arith.constant 0 : index
    %2301 = vector.load %arg3[%2300, %c0_827] : memref<48x128xf32, #tpu.memory_space<vmem>>, vector<1x128xf32>
    %c3_i32_828 = arith.constant 3 : i32
    %2302 = arith.addi %0, %c3_i32_828 : i32
    %2303 = arith.addi %1, %2261 : i32
    %c5_i32_829 = arith.constant 5 : i32
    %2304 = arith.addi %2303, %c5_i32_829 : i32
    %2305 = arith.index_cast %2302 : i32 to index
    %2306 = arith.index_cast %2304 : i32 to index
    %2307 = memref.load %arg2[%2305, %2306] : memref<4x64xi32, #tpu.memory_space<smem>>
    %2308 = arith.index_cast %2307 : i32 to index
    %c0_830 = arith.constant 0 : index
    %2309 = vector.load %arg3[%2308, %c0_830] : memref<48x128xf32, #tpu.memory_space<vmem>>, vector<1x128xf32>
    %c3_i32_831 = arith.constant 3 : i32
    %2310 = arith.addi %0, %c3_i32_831 : i32
    %2311 = arith.addi %1, %2261 : i32
    %c6_i32_832 = arith.constant 6 : i32
    %2312 = arith.addi %2311, %c6_i32_832 : i32
    %2313 = arith.index_cast %2310 : i32 to index
    %2314 = arith.index_cast %2312 : i32 to index
    %2315 = memref.load %arg2[%2313, %2314] : memref<4x64xi32, #tpu.memory_space<smem>>
    %2316 = arith.index_cast %2315 : i32 to index
    %c0_833 = arith.constant 0 : index
    %2317 = vector.load %arg3[%2316, %c0_833] : memref<48x128xf32, #tpu.memory_space<vmem>>, vector<1x128xf32>
    %c3_i32_834 = arith.constant 3 : i32
    %2318 = arith.addi %0, %c3_i32_834 : i32
    %2319 = arith.addi %1, %2261 : i32
    %c7_i32_835 = arith.constant 7 : i32
    %2320 = arith.addi %2319, %c7_i32_835 : i32
    %2321 = arith.index_cast %2318 : i32 to index
    %2322 = arith.index_cast %2320 : i32 to index
    %2323 = memref.load %arg2[%2321, %2322] : memref<4x64xi32, #tpu.memory_space<smem>>
    %2324 = arith.index_cast %2323 : i32 to index
    %c0_836 = arith.constant 0 : index
    %2325 = vector.load %arg3[%2324, %c0_836] : memref<48x128xf32, #tpu.memory_space<vmem>>, vector<1x128xf32>
    %2326 = tpu.concatenate %2269, %2277, %2285, %2293, %2301, %2309, %2317, %2325 in 0 : vector<1x128xf32>, vector<1x128xf32>, vector<1x128xf32>, vector<1x128xf32>, vector<1x128xf32>, vector<1x128xf32>, vector<1x128xf32>, vector<1x128xf32> -> vector<8x128xf32>
    %2327 = arith.index_cast %2261 : i32 to index
    %c0_837 = arith.constant 0 : index
    %2328 = vector.load %arg4[%2327, %c0_837] : memref<64x128xf32, #tpu.memory_space<vmem>>, vector<8x128xf32>
    %2329 = arith.addf %2326, %2328 : vector<8x128xf32>
    %cst_838 = arith.constant dense<0.000000e+00> : vector<8xf32>
    %2330 = vector.multi_reduction <add>, %2329, %cst_838 [1] : vector<8x128xf32> to vector<8xf32>
    %2331 = vector.shape_cast %2330 : vector<8xf32> to vector<8x1xf32>
    %cst_839 = arith.constant 1.280000e+02 : f32
    %2332 = vector.broadcast %cst_839 : f32 to vector<8x1xf32>
    %2333 = arith.divf %2331, %2332 : vector<8x1xf32>
    %2334 = vector.broadcast %2333 : vector<8x1xf32> to vector<8x128xf32>
    %2335 = arith.subf %2329, %2334 : vector<8x128xf32>
    %2336 = arith.mulf %2335, %2335 : vector<8x128xf32>
    %cst_840 = arith.constant dense<0.000000e+00> : vector<8xf32>
    %2337 = vector.multi_reduction <add>, %2336, %cst_840 [1] : vector<8x128xf32> to vector<8xf32>
    %2338 = vector.shape_cast %2337 : vector<8xf32> to vector<8x1xf32>
    %cst_841 = arith.constant 1.280000e+02 : f32
    %2339 = vector.broadcast %cst_841 : f32 to vector<8x1xf32>
    %2340 = arith.divf %2338, %2339 : vector<8x1xf32>
    %cst_842 = arith.constant 9.99999974E-6 : f32
    %2341 = vector.broadcast %cst_842 : f32 to vector<8x1xf32>
    %2342 = arith.addf %2340, %2341 : vector<8x1xf32>
    %2343 = math.rsqrt %2342 : vector<8x1xf32>
    %2344 = vector.broadcast %2343 : vector<8x1xf32> to vector<8x128xf32>
    %2345 = arith.mulf %2335, %2344 : vector<8x128xf32>
    %2346 = vector.broadcast %2 : vector<1x128xf32> to vector<8x128xf32>
    %2347 = arith.mulf %2345, %2346 : vector<8x128xf32>
    %2348 = vector.broadcast %3 : vector<1x128xf32> to vector<8x128xf32>
    %2349 = arith.addf %2347, %2348 : vector<8x128xf32>
    %c3 = arith.constant 3 : index
    %2350 = arith.index_cast %2261 : i32 to index
    %c0_843 = arith.constant 0 : index
    %2351 = vector.load %arg7[%c3, %2350, %c0_843] : memref<4x64x128xf32, #tpu.memory_space<vmem>>, vector<1x8x128xf32>
    %2352 = vector.shape_cast %2351 : vector<1x8x128xf32> to vector<8x128xf32>
    %2353 = vector.shape_cast %2349 : vector<8x128xf32> to vector<1x8x128xf32>
    tpu.vector_store %arg7[%c3, %2350, %c0_843], %2353 {strides = array<i32>} : memref<4x64x128xf32, #tpu.memory_space<vmem>>, vector<1x8x128xf32>,
    %c1_i32_844 = arith.constant 1 : i32
    %c8_i32_845 = arith.constant 8 : i32
    %2354 = arith.muli %c1_i32_844, %c8_i32_845 : i32
    %2355 = tpu.assume_multiple %2354, 8 : i32
    %c3_i32_846 = arith.constant 3 : i32
    %2356 = arith.addi %0, %c3_i32_846 : i32
    %2357 = arith.addi %1, %2355 : i32
    %c0_i32_847 = arith.constant 0 : i32
    %2358 = arith.addi %2357, %c0_i32_847 : i32
    %2359 = arith.index_cast %2356 : i32 to index
    %2360 = arith.index_cast %2358 : i32 to index
    %2361 = memref.load %arg2[%2359, %2360] : memref<4x64xi32, #tpu.memory_space<smem>>
    %2362 = arith.index_cast %2361 : i32 to index
    %c0_848 = arith.constant 0 : index
    %2363 = vector.load %arg3[%2362, %c0_848] : memref<48x128xf32, #tpu.memory_space<vmem>>, vector<1x128xf32>
    %c3_i32_849 = arith.constant 3 : i32
    %2364 = arith.addi %0, %c3_i32_849 : i32
    %2365 = arith.addi %1, %2355 : i32
    %c1_i32_850 = arith.constant 1 : i32
    %2366 = arith.addi %2365, %c1_i32_850 : i32
    %2367 = arith.index_cast %2364 : i32 to index
    %2368 = arith.index_cast %2366 : i32 to index
    %2369 = memref.load %arg2[%2367, %2368] : memref<4x64xi32, #tpu.memory_space<smem>>
    %2370 = arith.index_cast %2369 : i32 to index
    %c0_851 = arith.constant 0 : index
    %2371 = vector.load %arg3[%2370, %c0_851] : memref<48x128xf32, #tpu.memory_space<vmem>>, vector<1x128xf32>
    %c3_i32_852 = arith.constant 3 : i32
    %2372 = arith.addi %0, %c3_i32_852 : i32
    %2373 = arith.addi %1, %2355 : i32
    %c2_i32_853 = arith.constant 2 : i32
    %2374 = arith.addi %2373, %c2_i32_853 : i32
    %2375 = arith.index_cast %2372 : i32 to index
    %2376 = arith.index_cast %2374 : i32 to index
    %2377 = memref.load %arg2[%2375, %2376] : memref<4x64xi32, #tpu.memory_space<smem>>
    %2378 = arith.index_cast %2377 : i32 to index
    %c0_854 = arith.constant 0 : index
    %2379 = vector.load %arg3[%2378, %c0_854] : memref<48x128xf32, #tpu.memory_space<vmem>>, vector<1x128xf32>
    %c3_i32_855 = arith.constant 3 : i32
    %2380 = arith.addi %0, %c3_i32_855 : i32
    %2381 = arith.addi %1, %2355 : i32
    %c3_i32_856 = arith.constant 3 : i32
    %2382 = arith.addi %2381, %c3_i32_856 : i32
    %2383 = arith.index_cast %2380 : i32 to index
    %2384 = arith.index_cast %2382 : i32 to index
    %2385 = memref.load %arg2[%2383, %2384] : memref<4x64xi32, #tpu.memory_space<smem>>
    %2386 = arith.index_cast %2385 : i32 to index
    %c0_857 = arith.constant 0 : index
    %2387 = vector.load %arg3[%2386, %c0_857] : memref<48x128xf32, #tpu.memory_space<vmem>>, vector<1x128xf32>
    %c3_i32_858 = arith.constant 3 : i32
    %2388 = arith.addi %0, %c3_i32_858 : i32
    %2389 = arith.addi %1, %2355 : i32
    %c4_i32_859 = arith.constant 4 : i32
    %2390 = arith.addi %2389, %c4_i32_859 : i32
    %2391 = arith.index_cast %2388 : i32 to index
    %2392 = arith.index_cast %2390 : i32 to index
    %2393 = memref.load %arg2[%2391, %2392] : memref<4x64xi32, #tpu.memory_space<smem>>
    %2394 = arith.index_cast %2393 : i32 to index
    %c0_860 = arith.constant 0 : index
    %2395 = vector.load %arg3[%2394, %c0_860] : memref<48x128xf32, #tpu.memory_space<vmem>>, vector<1x128xf32>
    %c3_i32_861 = arith.constant 3 : i32
    %2396 = arith.addi %0, %c3_i32_861 : i32
    %2397 = arith.addi %1, %2355 : i32
    %c5_i32_862 = arith.constant 5 : i32
    %2398 = arith.addi %2397, %c5_i32_862 : i32
    %2399 = arith.index_cast %2396 : i32 to index
    %2400 = arith.index_cast %2398 : i32 to index
    %2401 = memref.load %arg2[%2399, %2400] : memref<4x64xi32, #tpu.memory_space<smem>>
    %2402 = arith.index_cast %2401 : i32 to index
    %c0_863 = arith.constant 0 : index
    %2403 = vector.load %arg3[%2402, %c0_863] : memref<48x128xf32, #tpu.memory_space<vmem>>, vector<1x128xf32>
    %c3_i32_864 = arith.constant 3 : i32
    %2404 = arith.addi %0, %c3_i32_864 : i32
    %2405 = arith.addi %1, %2355 : i32
    %c6_i32_865 = arith.constant 6 : i32
    %2406 = arith.addi %2405, %c6_i32_865 : i32
    %2407 = arith.index_cast %2404 : i32 to index
    %2408 = arith.index_cast %2406 : i32 to index
    %2409 = memref.load %arg2[%2407, %2408] : memref<4x64xi32, #tpu.memory_space<smem>>
    %2410 = arith.index_cast %2409 : i32 to index
    %c0_866 = arith.constant 0 : index
    %2411 = vector.load %arg3[%2410, %c0_866] : memref<48x128xf32, #tpu.memory_space<vmem>>, vector<1x128xf32>
    %c3_i32_867 = arith.constant 3 : i32
    %2412 = arith.addi %0, %c3_i32_867 : i32
    %2413 = arith.addi %1, %2355 : i32
    %c7_i32_868 = arith.constant 7 : i32
    %2414 = arith.addi %2413, %c7_i32_868 : i32
    %2415 = arith.index_cast %2412 : i32 to index
    %2416 = arith.index_cast %2414 : i32 to index
    %2417 = memref.load %arg2[%2415, %2416] : memref<4x64xi32, #tpu.memory_space<smem>>
    %2418 = arith.index_cast %2417 : i32 to index
    %c0_869 = arith.constant 0 : index
    %2419 = vector.load %arg3[%2418, %c0_869] : memref<48x128xf32, #tpu.memory_space<vmem>>, vector<1x128xf32>
    %2420 = tpu.concatenate %2363, %2371, %2379, %2387, %2395, %2403, %2411, %2419 in 0 : vector<1x128xf32>, vector<1x128xf32>, vector<1x128xf32>, vector<1x128xf32>, vector<1x128xf32>, vector<1x128xf32>, vector<1x128xf32>, vector<1x128xf32> -> vector<8x128xf32>
    %2421 = arith.index_cast %2355 : i32 to index
    %c0_870 = arith.constant 0 : index
    %2422 = vector.load %arg4[%2421, %c0_870] : memref<64x128xf32, #tpu.memory_space<vmem>>, vector<8x128xf32>
    %2423 = arith.addf %2420, %2422 : vector<8x128xf32>
    %cst_871 = arith.constant dense<0.000000e+00> : vector<8xf32>
    %2424 = vector.multi_reduction <add>, %2423, %cst_871 [1] : vector<8x128xf32> to vector<8xf32>
    %2425 = vector.shape_cast %2424 : vector<8xf32> to vector<8x1xf32>
    %cst_872 = arith.constant 1.280000e+02 : f32
    %2426 = vector.broadcast %cst_872 : f32 to vector<8x1xf32>
    %2427 = arith.divf %2425, %2426 : vector<8x1xf32>
    %2428 = vector.broadcast %2427 : vector<8x1xf32> to vector<8x128xf32>
    %2429 = arith.subf %2423, %2428 : vector<8x128xf32>
    %2430 = arith.mulf %2429, %2429 : vector<8x128xf32>
    %cst_873 = arith.constant dense<0.000000e+00> : vector<8xf32>
    %2431 = vector.multi_reduction <add>, %2430, %cst_873 [1] : vector<8x128xf32> to vector<8xf32>
    %2432 = vector.shape_cast %2431 : vector<8xf32> to vector<8x1xf32>
    %cst_874 = arith.constant 1.280000e+02 : f32
    %2433 = vector.broadcast %cst_874 : f32 to vector<8x1xf32>
    %2434 = arith.divf %2432, %2433 : vector<8x1xf32>
    %cst_875 = arith.constant 9.99999974E-6 : f32
    %2435 = vector.broadcast %cst_875 : f32 to vector<8x1xf32>
    %2436 = arith.addf %2434, %2435 : vector<8x1xf32>
    %2437 = math.rsqrt %2436 : vector<8x1xf32>
    %2438 = vector.broadcast %2437 : vector<8x1xf32> to vector<8x128xf32>
    %2439 = arith.mulf %2429, %2438 : vector<8x128xf32>
    %2440 = vector.broadcast %2 : vector<1x128xf32> to vector<8x128xf32>
    %2441 = arith.mulf %2439, %2440 : vector<8x128xf32>
    %2442 = vector.broadcast %3 : vector<1x128xf32> to vector<8x128xf32>
    %2443 = arith.addf %2441, %2442 : vector<8x128xf32>
    %c3_876 = arith.constant 3 : index
    %2444 = arith.index_cast %2355 : i32 to index
    %c0_877 = arith.constant 0 : index
    %2445 = vector.load %arg7[%c3_876, %2444, %c0_877] : memref<4x64x128xf32, #tpu.memory_space<vmem>>, vector<1x8x128xf32>
    %2446 = vector.shape_cast %2445 : vector<1x8x128xf32> to vector<8x128xf32>
    %2447 = vector.shape_cast %2443 : vector<8x128xf32> to vector<1x8x128xf32>
    tpu.vector_store %arg7[%c3_876, %2444, %c0_877], %2447 {strides = array<i32>} : memref<4x64x128xf32, #tpu.memory_space<vmem>>, vector<1x8x128xf32>,
    %c2_i32_878 = arith.constant 2 : i32
    %c8_i32_879 = arith.constant 8 : i32
    %2448 = arith.muli %c2_i32_878, %c8_i32_879 : i32
    %2449 = tpu.assume_multiple %2448, 8 : i32
    %c3_i32_880 = arith.constant 3 : i32
    %2450 = arith.addi %0, %c3_i32_880 : i32
    %2451 = arith.addi %1, %2449 : i32
    %c0_i32_881 = arith.constant 0 : i32
    %2452 = arith.addi %2451, %c0_i32_881 : i32
    %2453 = arith.index_cast %2450 : i32 to index
    %2454 = arith.index_cast %2452 : i32 to index
    %2455 = memref.load %arg2[%2453, %2454] : memref<4x64xi32, #tpu.memory_space<smem>>
    %2456 = arith.index_cast %2455 : i32 to index
    %c0_882 = arith.constant 0 : index
    %2457 = vector.load %arg3[%2456, %c0_882] : memref<48x128xf32, #tpu.memory_space<vmem>>, vector<1x128xf32>
    %c3_i32_883 = arith.constant 3 : i32
    %2458 = arith.addi %0, %c3_i32_883 : i32
    %2459 = arith.addi %1, %2449 : i32
    %c1_i32_884 = arith.constant 1 : i32
    %2460 = arith.addi %2459, %c1_i32_884 : i32
    %2461 = arith.index_cast %2458 : i32 to index
    %2462 = arith.index_cast %2460 : i32 to index
    %2463 = memref.load %arg2[%2461, %2462] : memref<4x64xi32, #tpu.memory_space<smem>>
    %2464 = arith.index_cast %2463 : i32 to index
    %c0_885 = arith.constant 0 : index
    %2465 = vector.load %arg3[%2464, %c0_885] : memref<48x128xf32, #tpu.memory_space<vmem>>, vector<1x128xf32>
    %c3_i32_886 = arith.constant 3 : i32
    %2466 = arith.addi %0, %c3_i32_886 : i32
    %2467 = arith.addi %1, %2449 : i32
    %c2_i32_887 = arith.constant 2 : i32
    %2468 = arith.addi %2467, %c2_i32_887 : i32
    %2469 = arith.index_cast %2466 : i32 to index
    %2470 = arith.index_cast %2468 : i32 to index
    %2471 = memref.load %arg2[%2469, %2470] : memref<4x64xi32, #tpu.memory_space<smem>>
    %2472 = arith.index_cast %2471 : i32 to index
    %c0_888 = arith.constant 0 : index
    %2473 = vector.load %arg3[%2472, %c0_888] : memref<48x128xf32, #tpu.memory_space<vmem>>, vector<1x128xf32>
    %c3_i32_889 = arith.constant 3 : i32
    %2474 = arith.addi %0, %c3_i32_889 : i32
    %2475 = arith.addi %1, %2449 : i32
    %c3_i32_890 = arith.constant 3 : i32
    %2476 = arith.addi %2475, %c3_i32_890 : i32
    %2477 = arith.index_cast %2474 : i32 to index
    %2478 = arith.index_cast %2476 : i32 to index
    %2479 = memref.load %arg2[%2477, %2478] : memref<4x64xi32, #tpu.memory_space<smem>>
    %2480 = arith.index_cast %2479 : i32 to index
    %c0_891 = arith.constant 0 : index
    %2481 = vector.load %arg3[%2480, %c0_891] : memref<48x128xf32, #tpu.memory_space<vmem>>, vector<1x128xf32>
    %c3_i32_892 = arith.constant 3 : i32
    %2482 = arith.addi %0, %c3_i32_892 : i32
    %2483 = arith.addi %1, %2449 : i32
    %c4_i32_893 = arith.constant 4 : i32
    %2484 = arith.addi %2483, %c4_i32_893 : i32
    %2485 = arith.index_cast %2482 : i32 to index
    %2486 = arith.index_cast %2484 : i32 to index
    %2487 = memref.load %arg2[%2485, %2486] : memref<4x64xi32, #tpu.memory_space<smem>>
    %2488 = arith.index_cast %2487 : i32 to index
    %c0_894 = arith.constant 0 : index
    %2489 = vector.load %arg3[%2488, %c0_894] : memref<48x128xf32, #tpu.memory_space<vmem>>, vector<1x128xf32>
    %c3_i32_895 = arith.constant 3 : i32
    %2490 = arith.addi %0, %c3_i32_895 : i32
    %2491 = arith.addi %1, %2449 : i32
    %c5_i32_896 = arith.constant 5 : i32
    %2492 = arith.addi %2491, %c5_i32_896 : i32
    %2493 = arith.index_cast %2490 : i32 to index
    %2494 = arith.index_cast %2492 : i32 to index
    %2495 = memref.load %arg2[%2493, %2494] : memref<4x64xi32, #tpu.memory_space<smem>>
    %2496 = arith.index_cast %2495 : i32 to index
    %c0_897 = arith.constant 0 : index
    %2497 = vector.load %arg3[%2496, %c0_897] : memref<48x128xf32, #tpu.memory_space<vmem>>, vector<1x128xf32>
    %c3_i32_898 = arith.constant 3 : i32
    %2498 = arith.addi %0, %c3_i32_898 : i32
    %2499 = arith.addi %1, %2449 : i32
    %c6_i32_899 = arith.constant 6 : i32
    %2500 = arith.addi %2499, %c6_i32_899 : i32
    %2501 = arith.index_cast %2498 : i32 to index
    %2502 = arith.index_cast %2500 : i32 to index
    %2503 = memref.load %arg2[%2501, %2502] : memref<4x64xi32, #tpu.memory_space<smem>>
    %2504 = arith.index_cast %2503 : i32 to index
    %c0_900 = arith.constant 0 : index
    %2505 = vector.load %arg3[%2504, %c0_900] : memref<48x128xf32, #tpu.memory_space<vmem>>, vector<1x128xf32>
    %c3_i32_901 = arith.constant 3 : i32
    %2506 = arith.addi %0, %c3_i32_901 : i32
    %2507 = arith.addi %1, %2449 : i32
    %c7_i32_902 = arith.constant 7 : i32
    %2508 = arith.addi %2507, %c7_i32_902 : i32
    %2509 = arith.index_cast %2506 : i32 to index
    %2510 = arith.index_cast %2508 : i32 to index
    %2511 = memref.load %arg2[%2509, %2510] : memref<4x64xi32, #tpu.memory_space<smem>>
    %2512 = arith.index_cast %2511 : i32 to index
    %c0_903 = arith.constant 0 : index
    %2513 = vector.load %arg3[%2512, %c0_903] : memref<48x128xf32, #tpu.memory_space<vmem>>, vector<1x128xf32>
    %2514 = tpu.concatenate %2457, %2465, %2473, %2481, %2489, %2497, %2505, %2513 in 0 : vector<1x128xf32>, vector<1x128xf32>, vector<1x128xf32>, vector<1x128xf32>, vector<1x128xf32>, vector<1x128xf32>, vector<1x128xf32>, vector<1x128xf32> -> vector<8x128xf32>
    %2515 = arith.index_cast %2449 : i32 to index
    %c0_904 = arith.constant 0 : index
    %2516 = vector.load %arg4[%2515, %c0_904] : memref<64x128xf32, #tpu.memory_space<vmem>>, vector<8x128xf32>
    %2517 = arith.addf %2514, %2516 : vector<8x128xf32>
    %cst_905 = arith.constant dense<0.000000e+00> : vector<8xf32>
    %2518 = vector.multi_reduction <add>, %2517, %cst_905 [1] : vector<8x128xf32> to vector<8xf32>
    %2519 = vector.shape_cast %2518 : vector<8xf32> to vector<8x1xf32>
    %cst_906 = arith.constant 1.280000e+02 : f32
    %2520 = vector.broadcast %cst_906 : f32 to vector<8x1xf32>
    %2521 = arith.divf %2519, %2520 : vector<8x1xf32>
    %2522 = vector.broadcast %2521 : vector<8x1xf32> to vector<8x128xf32>
    %2523 = arith.subf %2517, %2522 : vector<8x128xf32>
    %2524 = arith.mulf %2523, %2523 : vector<8x128xf32>
    %cst_907 = arith.constant dense<0.000000e+00> : vector<8xf32>
    %2525 = vector.multi_reduction <add>, %2524, %cst_907 [1] : vector<8x128xf32> to vector<8xf32>
    %2526 = vector.shape_cast %2525 : vector<8xf32> to vector<8x1xf32>
    %cst_908 = arith.constant 1.280000e+02 : f32
    %2527 = vector.broadcast %cst_908 : f32 to vector<8x1xf32>
    %2528 = arith.divf %2526, %2527 : vector<8x1xf32>
    %cst_909 = arith.constant 9.99999974E-6 : f32
    %2529 = vector.broadcast %cst_909 : f32 to vector<8x1xf32>
    %2530 = arith.addf %2528, %2529 : vector<8x1xf32>
    %2531 = math.rsqrt %2530 : vector<8x1xf32>
    %2532 = vector.broadcast %2531 : vector<8x1xf32> to vector<8x128xf32>
    %2533 = arith.mulf %2523, %2532 : vector<8x128xf32>
    %2534 = vector.broadcast %2 : vector<1x128xf32> to vector<8x128xf32>
    %2535 = arith.mulf %2533, %2534 : vector<8x128xf32>
    %2536 = vector.broadcast %3 : vector<1x128xf32> to vector<8x128xf32>
    %2537 = arith.addf %2535, %2536 : vector<8x128xf32>
    %c3_910 = arith.constant 3 : index
    %2538 = arith.index_cast %2449 : i32 to index
    %c0_911 = arith.constant 0 : index
    %2539 = vector.load %arg7[%c3_910, %2538, %c0_911] : memref<4x64x128xf32, #tpu.memory_space<vmem>>, vector<1x8x128xf32>
    %2540 = vector.shape_cast %2539 : vector<1x8x128xf32> to vector<8x128xf32>
    %2541 = vector.shape_cast %2537 : vector<8x128xf32> to vector<1x8x128xf32>
    tpu.vector_store %arg7[%c3_910, %2538, %c0_911], %2541 {strides = array<i32>} : memref<4x64x128xf32, #tpu.memory_space<vmem>>, vector<1x8x128xf32>,
    %c3_i32_912 = arith.constant 3 : i32
    %c8_i32_913 = arith.constant 8 : i32
    %2542 = arith.muli %c3_i32_912, %c8_i32_913 : i32
    %2543 = tpu.assume_multiple %2542, 8 : i32
    %c3_i32_914 = arith.constant 3 : i32
    %2544 = arith.addi %0, %c3_i32_914 : i32
    %2545 = arith.addi %1, %2543 : i32
    %c0_i32_915 = arith.constant 0 : i32
    %2546 = arith.addi %2545, %c0_i32_915 : i32
    %2547 = arith.index_cast %2544 : i32 to index
    %2548 = arith.index_cast %2546 : i32 to index
    %2549 = memref.load %arg2[%2547, %2548] : memref<4x64xi32, #tpu.memory_space<smem>>
    %2550 = arith.index_cast %2549 : i32 to index
    %c0_916 = arith.constant 0 : index
    %2551 = vector.load %arg3[%2550, %c0_916] : memref<48x128xf32, #tpu.memory_space<vmem>>, vector<1x128xf32>
    %c3_i32_917 = arith.constant 3 : i32
    %2552 = arith.addi %0, %c3_i32_917 : i32
    %2553 = arith.addi %1, %2543 : i32
    %c1_i32_918 = arith.constant 1 : i32
    %2554 = arith.addi %2553, %c1_i32_918 : i32
    %2555 = arith.index_cast %2552 : i32 to index
    %2556 = arith.index_cast %2554 : i32 to index
    %2557 = memref.load %arg2[%2555, %2556] : memref<4x64xi32, #tpu.memory_space<smem>>
    %2558 = arith.index_cast %2557 : i32 to index
    %c0_919 = arith.constant 0 : index
    %2559 = vector.load %arg3[%2558, %c0_919] : memref<48x128xf32, #tpu.memory_space<vmem>>, vector<1x128xf32>
    %c3_i32_920 = arith.constant 3 : i32
    %2560 = arith.addi %0, %c3_i32_920 : i32
    %2561 = arith.addi %1, %2543 : i32
    %c2_i32_921 = arith.constant 2 : i32
    %2562 = arith.addi %2561, %c2_i32_921 : i32
    %2563 = arith.index_cast %2560 : i32 to index
    %2564 = arith.index_cast %2562 : i32 to index
    %2565 = memref.load %arg2[%2563, %2564] : memref<4x64xi32, #tpu.memory_space<smem>>
    %2566 = arith.index_cast %2565 : i32 to index
    %c0_922 = arith.constant 0 : index
    %2567 = vector.load %arg3[%2566, %c0_922] : memref<48x128xf32, #tpu.memory_space<vmem>>, vector<1x128xf32>
    %c3_i32_923 = arith.constant 3 : i32
    %2568 = arith.addi %0, %c3_i32_923 : i32
    %2569 = arith.addi %1, %2543 : i32
    %c3_i32_924 = arith.constant 3 : i32
    %2570 = arith.addi %2569, %c3_i32_924 : i32
    %2571 = arith.index_cast %2568 : i32 to index
    %2572 = arith.index_cast %2570 : i32 to index
    %2573 = memref.load %arg2[%2571, %2572] : memref<4x64xi32, #tpu.memory_space<smem>>
    %2574 = arith.index_cast %2573 : i32 to index
    %c0_925 = arith.constant 0 : index
    %2575 = vector.load %arg3[%2574, %c0_925] : memref<48x128xf32, #tpu.memory_space<vmem>>, vector<1x128xf32>
    %c3_i32_926 = arith.constant 3 : i32
    %2576 = arith.addi %0, %c3_i32_926 : i32
    %2577 = arith.addi %1, %2543 : i32
    %c4_i32_927 = arith.constant 4 : i32
    %2578 = arith.addi %2577, %c4_i32_927 : i32
    %2579 = arith.index_cast %2576 : i32 to index
    %2580 = arith.index_cast %2578 : i32 to index
    %2581 = memref.load %arg2[%2579, %2580] : memref<4x64xi32, #tpu.memory_space<smem>>
    %2582 = arith.index_cast %2581 : i32 to index
    %c0_928 = arith.constant 0 : index
    %2583 = vector.load %arg3[%2582, %c0_928] : memref<48x128xf32, #tpu.memory_space<vmem>>, vector<1x128xf32>
    %c3_i32_929 = arith.constant 3 : i32
    %2584 = arith.addi %0, %c3_i32_929 : i32
    %2585 = arith.addi %1, %2543 : i32
    %c5_i32_930 = arith.constant 5 : i32
    %2586 = arith.addi %2585, %c5_i32_930 : i32
    %2587 = arith.index_cast %2584 : i32 to index
    %2588 = arith.index_cast %2586 : i32 to index
    %2589 = memref.load %arg2[%2587, %2588] : memref<4x64xi32, #tpu.memory_space<smem>>
    %2590 = arith.index_cast %2589 : i32 to index
    %c0_931 = arith.constant 0 : index
    %2591 = vector.load %arg3[%2590, %c0_931] : memref<48x128xf32, #tpu.memory_space<vmem>>, vector<1x128xf32>
    %c3_i32_932 = arith.constant 3 : i32
    %2592 = arith.addi %0, %c3_i32_932 : i32
    %2593 = arith.addi %1, %2543 : i32
    %c6_i32_933 = arith.constant 6 : i32
    %2594 = arith.addi %2593, %c6_i32_933 : i32
    %2595 = arith.index_cast %2592 : i32 to index
    %2596 = arith.index_cast %2594 : i32 to index
    %2597 = memref.load %arg2[%2595, %2596] : memref<4x64xi32, #tpu.memory_space<smem>>
    %2598 = arith.index_cast %2597 : i32 to index
    %c0_934 = arith.constant 0 : index
    %2599 = vector.load %arg3[%2598, %c0_934] : memref<48x128xf32, #tpu.memory_space<vmem>>, vector<1x128xf32>
    %c3_i32_935 = arith.constant 3 : i32
    %2600 = arith.addi %0, %c3_i32_935 : i32
    %2601 = arith.addi %1, %2543 : i32
    %c7_i32_936 = arith.constant 7 : i32
    %2602 = arith.addi %2601, %c7_i32_936 : i32
    %2603 = arith.index_cast %2600 : i32 to index
    %2604 = arith.index_cast %2602 : i32 to index
    %2605 = memref.load %arg2[%2603, %2604] : memref<4x64xi32, #tpu.memory_space<smem>>
    %2606 = arith.index_cast %2605 : i32 to index
    %c0_937 = arith.constant 0 : index
    %2607 = vector.load %arg3[%2606, %c0_937] : memref<48x128xf32, #tpu.memory_space<vmem>>, vector<1x128xf32>
    %2608 = tpu.concatenate %2551, %2559, %2567, %2575, %2583, %2591, %2599, %2607 in 0 : vector<1x128xf32>, vector<1x128xf32>, vector<1x128xf32>, vector<1x128xf32>, vector<1x128xf32>, vector<1x128xf32>, vector<1x128xf32>, vector<1x128xf32> -> vector<8x128xf32>
    %2609 = arith.index_cast %2543 : i32 to index
    %c0_938 = arith.constant 0 : index
    %2610 = vector.load %arg4[%2609, %c0_938] : memref<64x128xf32, #tpu.memory_space<vmem>>, vector<8x128xf32>
    %2611 = arith.addf %2608, %2610 : vector<8x128xf32>
    %cst_939 = arith.constant dense<0.000000e+00> : vector<8xf32>
    %2612 = vector.multi_reduction <add>, %2611, %cst_939 [1] : vector<8x128xf32> to vector<8xf32>
    %2613 = vector.shape_cast %2612 : vector<8xf32> to vector<8x1xf32>
    %cst_940 = arith.constant 1.280000e+02 : f32
    %2614 = vector.broadcast %cst_940 : f32 to vector<8x1xf32>
    %2615 = arith.divf %2613, %2614 : vector<8x1xf32>
    %2616 = vector.broadcast %2615 : vector<8x1xf32> to vector<8x128xf32>
    %2617 = arith.subf %2611, %2616 : vector<8x128xf32>
    %2618 = arith.mulf %2617, %2617 : vector<8x128xf32>
    %cst_941 = arith.constant dense<0.000000e+00> : vector<8xf32>
    %2619 = vector.multi_reduction <add>, %2618, %cst_941 [1] : vector<8x128xf32> to vector<8xf32>
    %2620 = vector.shape_cast %2619 : vector<8xf32> to vector<8x1xf32>
    %cst_942 = arith.constant 1.280000e+02 : f32
    %2621 = vector.broadcast %cst_942 : f32 to vector<8x1xf32>
    %2622 = arith.divf %2620, %2621 : vector<8x1xf32>
    %cst_943 = arith.constant 9.99999974E-6 : f32
    %2623 = vector.broadcast %cst_943 : f32 to vector<8x1xf32>
    %2624 = arith.addf %2622, %2623 : vector<8x1xf32>
    %2625 = math.rsqrt %2624 : vector<8x1xf32>
    %2626 = vector.broadcast %2625 : vector<8x1xf32> to vector<8x128xf32>
    %2627 = arith.mulf %2617, %2626 : vector<8x128xf32>
    %2628 = vector.broadcast %2 : vector<1x128xf32> to vector<8x128xf32>
    %2629 = arith.mulf %2627, %2628 : vector<8x128xf32>
    %2630 = vector.broadcast %3 : vector<1x128xf32> to vector<8x128xf32>
    %2631 = arith.addf %2629, %2630 : vector<8x128xf32>
    %c3_944 = arith.constant 3 : index
    %2632 = arith.index_cast %2543 : i32 to index
    %c0_945 = arith.constant 0 : index
    %2633 = vector.load %arg7[%c3_944, %2632, %c0_945] : memref<4x64x128xf32, #tpu.memory_space<vmem>>, vector<1x8x128xf32>
    %2634 = vector.shape_cast %2633 : vector<1x8x128xf32> to vector<8x128xf32>
    %2635 = vector.shape_cast %2631 : vector<8x128xf32> to vector<1x8x128xf32>
    tpu.vector_store %arg7[%c3_944, %2632, %c0_945], %2635 {strides = array<i32>} : memref<4x64x128xf32, #tpu.memory_space<vmem>>, vector<1x8x128xf32>,
    %c4_i32_946 = arith.constant 4 : i32
    %c8_i32_947 = arith.constant 8 : i32
    %2636 = arith.muli %c4_i32_946, %c8_i32_947 : i32
    %2637 = tpu.assume_multiple %2636, 8 : i32
    %c3_i32_948 = arith.constant 3 : i32
    %2638 = arith.addi %0, %c3_i32_948 : i32
    %2639 = arith.addi %1, %2637 : i32
    %c0_i32_949 = arith.constant 0 : i32
    %2640 = arith.addi %2639, %c0_i32_949 : i32
    %2641 = arith.index_cast %2638 : i32 to index
    %2642 = arith.index_cast %2640 : i32 to index
    %2643 = memref.load %arg2[%2641, %2642] : memref<4x64xi32, #tpu.memory_space<smem>>
    %2644 = arith.index_cast %2643 : i32 to index
    %c0_950 = arith.constant 0 : index
    %2645 = vector.load %arg3[%2644, %c0_950] : memref<48x128xf32, #tpu.memory_space<vmem>>, vector<1x128xf32>
    %c3_i32_951 = arith.constant 3 : i32
    %2646 = arith.addi %0, %c3_i32_951 : i32
    %2647 = arith.addi %1, %2637 : i32
    %c1_i32_952 = arith.constant 1 : i32
    %2648 = arith.addi %2647, %c1_i32_952 : i32
    %2649 = arith.index_cast %2646 : i32 to index
    %2650 = arith.index_cast %2648 : i32 to index
    %2651 = memref.load %arg2[%2649, %2650] : memref<4x64xi32, #tpu.memory_space<smem>>
    %2652 = arith.index_cast %2651 : i32 to index
    %c0_953 = arith.constant 0 : index
    %2653 = vector.load %arg3[%2652, %c0_953] : memref<48x128xf32, #tpu.memory_space<vmem>>, vector<1x128xf32>
    %c3_i32_954 = arith.constant 3 : i32
    %2654 = arith.addi %0, %c3_i32_954 : i32
    %2655 = arith.addi %1, %2637 : i32
    %c2_i32_955 = arith.constant 2 : i32
    %2656 = arith.addi %2655, %c2_i32_955 : i32
    %2657 = arith.index_cast %2654 : i32 to index
    %2658 = arith.index_cast %2656 : i32 to index
    %2659 = memref.load %arg2[%2657, %2658] : memref<4x64xi32, #tpu.memory_space<smem>>
    %2660 = arith.index_cast %2659 : i32 to index
    %c0_956 = arith.constant 0 : index
    %2661 = vector.load %arg3[%2660, %c0_956] : memref<48x128xf32, #tpu.memory_space<vmem>>, vector<1x128xf32>
    %c3_i32_957 = arith.constant 3 : i32
    %2662 = arith.addi %0, %c3_i32_957 : i32
    %2663 = arith.addi %1, %2637 : i32
    %c3_i32_958 = arith.constant 3 : i32
    %2664 = arith.addi %2663, %c3_i32_958 : i32
    %2665 = arith.index_cast %2662 : i32 to index
    %2666 = arith.index_cast %2664 : i32 to index
    %2667 = memref.load %arg2[%2665, %2666] : memref<4x64xi32, #tpu.memory_space<smem>>
    %2668 = arith.index_cast %2667 : i32 to index
    %c0_959 = arith.constant 0 : index
    %2669 = vector.load %arg3[%2668, %c0_959] : memref<48x128xf32, #tpu.memory_space<vmem>>, vector<1x128xf32>
    %c3_i32_960 = arith.constant 3 : i32
    %2670 = arith.addi %0, %c3_i32_960 : i32
    %2671 = arith.addi %1, %2637 : i32
    %c4_i32_961 = arith.constant 4 : i32
    %2672 = arith.addi %2671, %c4_i32_961 : i32
    %2673 = arith.index_cast %2670 : i32 to index
    %2674 = arith.index_cast %2672 : i32 to index
    %2675 = memref.load %arg2[%2673, %2674] : memref<4x64xi32, #tpu.memory_space<smem>>
    %2676 = arith.index_cast %2675 : i32 to index
    %c0_962 = arith.constant 0 : index
    %2677 = vector.load %arg3[%2676, %c0_962] : memref<48x128xf32, #tpu.memory_space<vmem>>, vector<1x128xf32>
    %c3_i32_963 = arith.constant 3 : i32
    %2678 = arith.addi %0, %c3_i32_963 : i32
    %2679 = arith.addi %1, %2637 : i32
    %c5_i32_964 = arith.constant 5 : i32
    %2680 = arith.addi %2679, %c5_i32_964 : i32
    %2681 = arith.index_cast %2678 : i32 to index
    %2682 = arith.index_cast %2680 : i32 to index
    %2683 = memref.load %arg2[%2681, %2682] : memref<4x64xi32, #tpu.memory_space<smem>>
    %2684 = arith.index_cast %2683 : i32 to index
    %c0_965 = arith.constant 0 : index
    %2685 = vector.load %arg3[%2684, %c0_965] : memref<48x128xf32, #tpu.memory_space<vmem>>, vector<1x128xf32>
    %c3_i32_966 = arith.constant 3 : i32
    %2686 = arith.addi %0, %c3_i32_966 : i32
    %2687 = arith.addi %1, %2637 : i32
    %c6_i32_967 = arith.constant 6 : i32
    %2688 = arith.addi %2687, %c6_i32_967 : i32
    %2689 = arith.index_cast %2686 : i32 to index
    %2690 = arith.index_cast %2688 : i32 to index
    %2691 = memref.load %arg2[%2689, %2690] : memref<4x64xi32, #tpu.memory_space<smem>>
    %2692 = arith.index_cast %2691 : i32 to index
    %c0_968 = arith.constant 0 : index
    %2693 = vector.load %arg3[%2692, %c0_968] : memref<48x128xf32, #tpu.memory_space<vmem>>, vector<1x128xf32>
    %c3_i32_969 = arith.constant 3 : i32
    %2694 = arith.addi %0, %c3_i32_969 : i32
    %2695 = arith.addi %1, %2637 : i32
    %c7_i32_970 = arith.constant 7 : i32
    %2696 = arith.addi %2695, %c7_i32_970 : i32
    %2697 = arith.index_cast %2694 : i32 to index
    %2698 = arith.index_cast %2696 : i32 to index
    %2699 = memref.load %arg2[%2697, %2698] : memref<4x64xi32, #tpu.memory_space<smem>>
    %2700 = arith.index_cast %2699 : i32 to index
    %c0_971 = arith.constant 0 : index
    %2701 = vector.load %arg3[%2700, %c0_971] : memref<48x128xf32, #tpu.memory_space<vmem>>, vector<1x128xf32>
    %2702 = tpu.concatenate %2645, %2653, %2661, %2669, %2677, %2685, %2693, %2701 in 0 : vector<1x128xf32>, vector<1x128xf32>, vector<1x128xf32>, vector<1x128xf32>, vector<1x128xf32>, vector<1x128xf32>, vector<1x128xf32>, vector<1x128xf32> -> vector<8x128xf32>
    %2703 = arith.index_cast %2637 : i32 to index
    %c0_972 = arith.constant 0 : index
    %2704 = vector.load %arg4[%2703, %c0_972] : memref<64x128xf32, #tpu.memory_space<vmem>>, vector<8x128xf32>
    %2705 = arith.addf %2702, %2704 : vector<8x128xf32>
    %cst_973 = arith.constant dense<0.000000e+00> : vector<8xf32>
    %2706 = vector.multi_reduction <add>, %2705, %cst_973 [1] : vector<8x128xf32> to vector<8xf32>
    %2707 = vector.shape_cast %2706 : vector<8xf32> to vector<8x1xf32>
    %cst_974 = arith.constant 1.280000e+02 : f32
    %2708 = vector.broadcast %cst_974 : f32 to vector<8x1xf32>
    %2709 = arith.divf %2707, %2708 : vector<8x1xf32>
    %2710 = vector.broadcast %2709 : vector<8x1xf32> to vector<8x128xf32>
    %2711 = arith.subf %2705, %2710 : vector<8x128xf32>
    %2712 = arith.mulf %2711, %2711 : vector<8x128xf32>
    %cst_975 = arith.constant dense<0.000000e+00> : vector<8xf32>
    %2713 = vector.multi_reduction <add>, %2712, %cst_975 [1] : vector<8x128xf32> to vector<8xf32>
    %2714 = vector.shape_cast %2713 : vector<8xf32> to vector<8x1xf32>
    %cst_976 = arith.constant 1.280000e+02 : f32
    %2715 = vector.broadcast %cst_976 : f32 to vector<8x1xf32>
    %2716 = arith.divf %2714, %2715 : vector<8x1xf32>
    %cst_977 = arith.constant 9.99999974E-6 : f32
    %2717 = vector.broadcast %cst_977 : f32 to vector<8x1xf32>
    %2718 = arith.addf %2716, %2717 : vector<8x1xf32>
    %2719 = math.rsqrt %2718 : vector<8x1xf32>
    %2720 = vector.broadcast %2719 : vector<8x1xf32> to vector<8x128xf32>
    %2721 = arith.mulf %2711, %2720 : vector<8x128xf32>
    %2722 = vector.broadcast %2 : vector<1x128xf32> to vector<8x128xf32>
    %2723 = arith.mulf %2721, %2722 : vector<8x128xf32>
    %2724 = vector.broadcast %3 : vector<1x128xf32> to vector<8x128xf32>
    %2725 = arith.addf %2723, %2724 : vector<8x128xf32>
    %c3_978 = arith.constant 3 : index
    %2726 = arith.index_cast %2637 : i32 to index
    %c0_979 = arith.constant 0 : index
    %2727 = vector.load %arg7[%c3_978, %2726, %c0_979] : memref<4x64x128xf32, #tpu.memory_space<vmem>>, vector<1x8x128xf32>
    %2728 = vector.shape_cast %2727 : vector<1x8x128xf32> to vector<8x128xf32>
    %2729 = vector.shape_cast %2725 : vector<8x128xf32> to vector<1x8x128xf32>
    tpu.vector_store %arg7[%c3_978, %2726, %c0_979], %2729 {strides = array<i32>} : memref<4x64x128xf32, #tpu.memory_space<vmem>>, vector<1x8x128xf32>,
    %c5_i32_980 = arith.constant 5 : i32
    %c8_i32_981 = arith.constant 8 : i32
    %2730 = arith.muli %c5_i32_980, %c8_i32_981 : i32
    %2731 = tpu.assume_multiple %2730, 8 : i32
    %c3_i32_982 = arith.constant 3 : i32
    %2732 = arith.addi %0, %c3_i32_982 : i32
    %2733 = arith.addi %1, %2731 : i32
    %c0_i32_983 = arith.constant 0 : i32
    %2734 = arith.addi %2733, %c0_i32_983 : i32
    %2735 = arith.index_cast %2732 : i32 to index
    %2736 = arith.index_cast %2734 : i32 to index
    %2737 = memref.load %arg2[%2735, %2736] : memref<4x64xi32, #tpu.memory_space<smem>>
    %2738 = arith.index_cast %2737 : i32 to index
    %c0_984 = arith.constant 0 : index
    %2739 = vector.load %arg3[%2738, %c0_984] : memref<48x128xf32, #tpu.memory_space<vmem>>, vector<1x128xf32>
    %c3_i32_985 = arith.constant 3 : i32
    %2740 = arith.addi %0, %c3_i32_985 : i32
    %2741 = arith.addi %1, %2731 : i32
    %c1_i32_986 = arith.constant 1 : i32
    %2742 = arith.addi %2741, %c1_i32_986 : i32
    %2743 = arith.index_cast %2740 : i32 to index
    %2744 = arith.index_cast %2742 : i32 to index
    %2745 = memref.load %arg2[%2743, %2744] : memref<4x64xi32, #tpu.memory_space<smem>>
    %2746 = arith.index_cast %2745 : i32 to index
    %c0_987 = arith.constant 0 : index
    %2747 = vector.load %arg3[%2746, %c0_987] : memref<48x128xf32, #tpu.memory_space<vmem>>, vector<1x128xf32>
    %c3_i32_988 = arith.constant 3 : i32
    %2748 = arith.addi %0, %c3_i32_988 : i32
    %2749 = arith.addi %1, %2731 : i32
    %c2_i32_989 = arith.constant 2 : i32
    %2750 = arith.addi %2749, %c2_i32_989 : i32
    %2751 = arith.index_cast %2748 : i32 to index
    %2752 = arith.index_cast %2750 : i32 to index
    %2753 = memref.load %arg2[%2751, %2752] : memref<4x64xi32, #tpu.memory_space<smem>>
    %2754 = arith.index_cast %2753 : i32 to index
    %c0_990 = arith.constant 0 : index
    %2755 = vector.load %arg3[%2754, %c0_990] : memref<48x128xf32, #tpu.memory_space<vmem>>, vector<1x128xf32>
    %c3_i32_991 = arith.constant 3 : i32
    %2756 = arith.addi %0, %c3_i32_991 : i32
    %2757 = arith.addi %1, %2731 : i32
    %c3_i32_992 = arith.constant 3 : i32
    %2758 = arith.addi %2757, %c3_i32_992 : i32
    %2759 = arith.index_cast %2756 : i32 to index
    %2760 = arith.index_cast %2758 : i32 to index
    %2761 = memref.load %arg2[%2759, %2760] : memref<4x64xi32, #tpu.memory_space<smem>>
    %2762 = arith.index_cast %2761 : i32 to index
    %c0_993 = arith.constant 0 : index
    %2763 = vector.load %arg3[%2762, %c0_993] : memref<48x128xf32, #tpu.memory_space<vmem>>, vector<1x128xf32>
    %c3_i32_994 = arith.constant 3 : i32
    %2764 = arith.addi %0, %c3_i32_994 : i32
    %2765 = arith.addi %1, %2731 : i32
    %c4_i32_995 = arith.constant 4 : i32
    %2766 = arith.addi %2765, %c4_i32_995 : i32
    %2767 = arith.index_cast %2764 : i32 to index
    %2768 = arith.index_cast %2766 : i32 to index
    %2769 = memref.load %arg2[%2767, %2768] : memref<4x64xi32, #tpu.memory_space<smem>>
    %2770 = arith.index_cast %2769 : i32 to index
    %c0_996 = arith.constant 0 : index
    %2771 = vector.load %arg3[%2770, %c0_996] : memref<48x128xf32, #tpu.memory_space<vmem>>, vector<1x128xf32>
    %c3_i32_997 = arith.constant 3 : i32
    %2772 = arith.addi %0, %c3_i32_997 : i32
    %2773 = arith.addi %1, %2731 : i32
    %c5_i32_998 = arith.constant 5 : i32
    %2774 = arith.addi %2773, %c5_i32_998 : i32
    %2775 = arith.index_cast %2772 : i32 to index
    %2776 = arith.index_cast %2774 : i32 to index
    %2777 = memref.load %arg2[%2775, %2776] : memref<4x64xi32, #tpu.memory_space<smem>>
    %2778 = arith.index_cast %2777 : i32 to index
    %c0_999 = arith.constant 0 : index
    %2779 = vector.load %arg3[%2778, %c0_999] : memref<48x128xf32, #tpu.memory_space<vmem>>, vector<1x128xf32>
    %c3_i32_1000 = arith.constant 3 : i32
    %2780 = arith.addi %0, %c3_i32_1000 : i32
    %2781 = arith.addi %1, %2731 : i32
    %c6_i32_1001 = arith.constant 6 : i32
    %2782 = arith.addi %2781, %c6_i32_1001 : i32
    %2783 = arith.index_cast %2780 : i32 to index
    %2784 = arith.index_cast %2782 : i32 to index
    %2785 = memref.load %arg2[%2783, %2784] : memref<4x64xi32, #tpu.memory_space<smem>>
    %2786 = arith.index_cast %2785 : i32 to index
    %c0_1002 = arith.constant 0 : index
    %2787 = vector.load %arg3[%2786, %c0_1002] : memref<48x128xf32, #tpu.memory_space<vmem>>, vector<1x128xf32>
    %c3_i32_1003 = arith.constant 3 : i32
    %2788 = arith.addi %0, %c3_i32_1003 : i32
    %2789 = arith.addi %1, %2731 : i32
    %c7_i32_1004 = arith.constant 7 : i32
    %2790 = arith.addi %2789, %c7_i32_1004 : i32
    %2791 = arith.index_cast %2788 : i32 to index
    %2792 = arith.index_cast %2790 : i32 to index
    %2793 = memref.load %arg2[%2791, %2792] : memref<4x64xi32, #tpu.memory_space<smem>>
    %2794 = arith.index_cast %2793 : i32 to index
    %c0_1005 = arith.constant 0 : index
    %2795 = vector.load %arg3[%2794, %c0_1005] : memref<48x128xf32, #tpu.memory_space<vmem>>, vector<1x128xf32>
    %2796 = tpu.concatenate %2739, %2747, %2755, %2763, %2771, %2779, %2787, %2795 in 0 : vector<1x128xf32>, vector<1x128xf32>, vector<1x128xf32>, vector<1x128xf32>, vector<1x128xf32>, vector<1x128xf32>, vector<1x128xf32>, vector<1x128xf32> -> vector<8x128xf32>
    %2797 = arith.index_cast %2731 : i32 to index
    %c0_1006 = arith.constant 0 : index
    %2798 = vector.load %arg4[%2797, %c0_1006] : memref<64x128xf32, #tpu.memory_space<vmem>>, vector<8x128xf32>
    %2799 = arith.addf %2796, %2798 : vector<8x128xf32>
    %cst_1007 = arith.constant dense<0.000000e+00> : vector<8xf32>
    %2800 = vector.multi_reduction <add>, %2799, %cst_1007 [1] : vector<8x128xf32> to vector<8xf32>
    %2801 = vector.shape_cast %2800 : vector<8xf32> to vector<8x1xf32>
    %cst_1008 = arith.constant 1.280000e+02 : f32
    %2802 = vector.broadcast %cst_1008 : f32 to vector<8x1xf32>
    %2803 = arith.divf %2801, %2802 : vector<8x1xf32>
    %2804 = vector.broadcast %2803 : vector<8x1xf32> to vector<8x128xf32>
    %2805 = arith.subf %2799, %2804 : vector<8x128xf32>
    %2806 = arith.mulf %2805, %2805 : vector<8x128xf32>
    %cst_1009 = arith.constant dense<0.000000e+00> : vector<8xf32>
    %2807 = vector.multi_reduction <add>, %2806, %cst_1009 [1] : vector<8x128xf32> to vector<8xf32>
    %2808 = vector.shape_cast %2807 : vector<8xf32> to vector<8x1xf32>
    %cst_1010 = arith.constant 1.280000e+02 : f32
    %2809 = vector.broadcast %cst_1010 : f32 to vector<8x1xf32>
    %2810 = arith.divf %2808, %2809 : vector<8x1xf32>
    %cst_1011 = arith.constant 9.99999974E-6 : f32
    %2811 = vector.broadcast %cst_1011 : f32 to vector<8x1xf32>
    %2812 = arith.addf %2810, %2811 : vector<8x1xf32>
    %2813 = math.rsqrt %2812 : vector<8x1xf32>
    %2814 = vector.broadcast %2813 : vector<8x1xf32> to vector<8x128xf32>
    %2815 = arith.mulf %2805, %2814 : vector<8x128xf32>
    %2816 = vector.broadcast %2 : vector<1x128xf32> to vector<8x128xf32>
    %2817 = arith.mulf %2815, %2816 : vector<8x128xf32>
    %2818 = vector.broadcast %3 : vector<1x128xf32> to vector<8x128xf32>
    %2819 = arith.addf %2817, %2818 : vector<8x128xf32>
    %c3_1012 = arith.constant 3 : index
    %2820 = arith.index_cast %2731 : i32 to index
    %c0_1013 = arith.constant 0 : index
    %2821 = vector.load %arg7[%c3_1012, %2820, %c0_1013] : memref<4x64x128xf32, #tpu.memory_space<vmem>>, vector<1x8x128xf32>
    %2822 = vector.shape_cast %2821 : vector<1x8x128xf32> to vector<8x128xf32>
    %2823 = vector.shape_cast %2819 : vector<8x128xf32> to vector<1x8x128xf32>
    tpu.vector_store %arg7[%c3_1012, %2820, %c0_1013], %2823 {strides = array<i32>} : memref<4x64x128xf32, #tpu.memory_space<vmem>>, vector<1x8x128xf32>,
    %c6_i32_1014 = arith.constant 6 : i32
    %c8_i32_1015 = arith.constant 8 : i32
    %2824 = arith.muli %c6_i32_1014, %c8_i32_1015 : i32
    %2825 = tpu.assume_multiple %2824, 8 : i32
    %c3_i32_1016 = arith.constant 3 : i32
    %2826 = arith.addi %0, %c3_i32_1016 : i32
    %2827 = arith.addi %1, %2825 : i32
    %c0_i32_1017 = arith.constant 0 : i32
    %2828 = arith.addi %2827, %c0_i32_1017 : i32
    %2829 = arith.index_cast %2826 : i32 to index
    %2830 = arith.index_cast %2828 : i32 to index
    %2831 = memref.load %arg2[%2829, %2830] : memref<4x64xi32, #tpu.memory_space<smem>>
    %2832 = arith.index_cast %2831 : i32 to index
    %c0_1018 = arith.constant 0 : index
    %2833 = vector.load %arg3[%2832, %c0_1018] : memref<48x128xf32, #tpu.memory_space<vmem>>, vector<1x128xf32>
    %c3_i32_1019 = arith.constant 3 : i32
    %2834 = arith.addi %0, %c3_i32_1019 : i32
    %2835 = arith.addi %1, %2825 : i32
    %c1_i32_1020 = arith.constant 1 : i32
    %2836 = arith.addi %2835, %c1_i32_1020 : i32
    %2837 = arith.index_cast %2834 : i32 to index
    %2838 = arith.index_cast %2836 : i32 to index
    %2839 = memref.load %arg2[%2837, %2838] : memref<4x64xi32, #tpu.memory_space<smem>>
    %2840 = arith.index_cast %2839 : i32 to index
    %c0_1021 = arith.constant 0 : index
    %2841 = vector.load %arg3[%2840, %c0_1021] : memref<48x128xf32, #tpu.memory_space<vmem>>, vector<1x128xf32>
    %c3_i32_1022 = arith.constant 3 : i32
    %2842 = arith.addi %0, %c3_i32_1022 : i32
    %2843 = arith.addi %1, %2825 : i32
    %c2_i32_1023 = arith.constant 2 : i32
    %2844 = arith.addi %2843, %c2_i32_1023 : i32
    %2845 = arith.index_cast %2842 : i32 to index
    %2846 = arith.index_cast %2844 : i32 to index
    %2847 = memref.load %arg2[%2845, %2846] : memref<4x64xi32, #tpu.memory_space<smem>>
    %2848 = arith.index_cast %2847 : i32 to index
    %c0_1024 = arith.constant 0 : index
    %2849 = vector.load %arg3[%2848, %c0_1024] : memref<48x128xf32, #tpu.memory_space<vmem>>, vector<1x128xf32>
    %c3_i32_1025 = arith.constant 3 : i32
    %2850 = arith.addi %0, %c3_i32_1025 : i32
    %2851 = arith.addi %1, %2825 : i32
    %c3_i32_1026 = arith.constant 3 : i32
    %2852 = arith.addi %2851, %c3_i32_1026 : i32
    %2853 = arith.index_cast %2850 : i32 to index
    %2854 = arith.index_cast %2852 : i32 to index
    %2855 = memref.load %arg2[%2853, %2854] : memref<4x64xi32, #tpu.memory_space<smem>>
    %2856 = arith.index_cast %2855 : i32 to index
    %c0_1027 = arith.constant 0 : index
    %2857 = vector.load %arg3[%2856, %c0_1027] : memref<48x128xf32, #tpu.memory_space<vmem>>, vector<1x128xf32>
    %c3_i32_1028 = arith.constant 3 : i32
    %2858 = arith.addi %0, %c3_i32_1028 : i32
    %2859 = arith.addi %1, %2825 : i32
    %c4_i32_1029 = arith.constant 4 : i32
    %2860 = arith.addi %2859, %c4_i32_1029 : i32
    %2861 = arith.index_cast %2858 : i32 to index
    %2862 = arith.index_cast %2860 : i32 to index
    %2863 = memref.load %arg2[%2861, %2862] : memref<4x64xi32, #tpu.memory_space<smem>>
    %2864 = arith.index_cast %2863 : i32 to index
    %c0_1030 = arith.constant 0 : index
    %2865 = vector.load %arg3[%2864, %c0_1030] : memref<48x128xf32, #tpu.memory_space<vmem>>, vector<1x128xf32>
    %c3_i32_1031 = arith.constant 3 : i32
    %2866 = arith.addi %0, %c3_i32_1031 : i32
    %2867 = arith.addi %1, %2825 : i32
    %c5_i32_1032 = arith.constant 5 : i32
    %2868 = arith.addi %2867, %c5_i32_1032 : i32
    %2869 = arith.index_cast %2866 : i32 to index
    %2870 = arith.index_cast %2868 : i32 to index
    %2871 = memref.load %arg2[%2869, %2870] : memref<4x64xi32, #tpu.memory_space<smem>>
    %2872 = arith.index_cast %2871 : i32 to index
    %c0_1033 = arith.constant 0 : index
    %2873 = vector.load %arg3[%2872, %c0_1033] : memref<48x128xf32, #tpu.memory_space<vmem>>, vector<1x128xf32>
    %c3_i32_1034 = arith.constant 3 : i32
    %2874 = arith.addi %0, %c3_i32_1034 : i32
    %2875 = arith.addi %1, %2825 : i32
    %c6_i32_1035 = arith.constant 6 : i32
    %2876 = arith.addi %2875, %c6_i32_1035 : i32
    %2877 = arith.index_cast %2874 : i32 to index
    %2878 = arith.index_cast %2876 : i32 to index
    %2879 = memref.load %arg2[%2877, %2878] : memref<4x64xi32, #tpu.memory_space<smem>>
    %2880 = arith.index_cast %2879 : i32 to index
    %c0_1036 = arith.constant 0 : index
    %2881 = vector.load %arg3[%2880, %c0_1036] : memref<48x128xf32, #tpu.memory_space<vmem>>, vector<1x128xf32>
    %c3_i32_1037 = arith.constant 3 : i32
    %2882 = arith.addi %0, %c3_i32_1037 : i32
    %2883 = arith.addi %1, %2825 : i32
    %c7_i32_1038 = arith.constant 7 : i32
    %2884 = arith.addi %2883, %c7_i32_1038 : i32
    %2885 = arith.index_cast %2882 : i32 to index
    %2886 = arith.index_cast %2884 : i32 to index
    %2887 = memref.load %arg2[%2885, %2886] : memref<4x64xi32, #tpu.memory_space<smem>>
    %2888 = arith.index_cast %2887 : i32 to index
    %c0_1039 = arith.constant 0 : index
    %2889 = vector.load %arg3[%2888, %c0_1039] : memref<48x128xf32, #tpu.memory_space<vmem>>, vector<1x128xf32>
    %2890 = tpu.concatenate %2833, %2841, %2849, %2857, %2865, %2873, %2881, %2889 in 0 : vector<1x128xf32>, vector<1x128xf32>, vector<1x128xf32>, vector<1x128xf32>, vector<1x128xf32>, vector<1x128xf32>, vector<1x128xf32>, vector<1x128xf32> -> vector<8x128xf32>
    %2891 = arith.index_cast %2825 : i32 to index
    %c0_1040 = arith.constant 0 : index
    %2892 = vector.load %arg4[%2891, %c0_1040] : memref<64x128xf32, #tpu.memory_space<vmem>>, vector<8x128xf32>
    %2893 = arith.addf %2890, %2892 : vector<8x128xf32>
    %cst_1041 = arith.constant dense<0.000000e+00> : vector<8xf32>
    %2894 = vector.multi_reduction <add>, %2893, %cst_1041 [1] : vector<8x128xf32> to vector<8xf32>
    %2895 = vector.shape_cast %2894 : vector<8xf32> to vector<8x1xf32>
    %cst_1042 = arith.constant 1.280000e+02 : f32
    %2896 = vector.broadcast %cst_1042 : f32 to vector<8x1xf32>
    %2897 = arith.divf %2895, %2896 : vector<8x1xf32>
    %2898 = vector.broadcast %2897 : vector<8x1xf32> to vector<8x128xf32>
    %2899 = arith.subf %2893, %2898 : vector<8x128xf32>
    %2900 = arith.mulf %2899, %2899 : vector<8x128xf32>
    %cst_1043 = arith.constant dense<0.000000e+00> : vector<8xf32>
    %2901 = vector.multi_reduction <add>, %2900, %cst_1043 [1] : vector<8x128xf32> to vector<8xf32>
    %2902 = vector.shape_cast %2901 : vector<8xf32> to vector<8x1xf32>
    %cst_1044 = arith.constant 1.280000e+02 : f32
    %2903 = vector.broadcast %cst_1044 : f32 to vector<8x1xf32>
    %2904 = arith.divf %2902, %2903 : vector<8x1xf32>
    %cst_1045 = arith.constant 9.99999974E-6 : f32
    %2905 = vector.broadcast %cst_1045 : f32 to vector<8x1xf32>
    %2906 = arith.addf %2904, %2905 : vector<8x1xf32>
    %2907 = math.rsqrt %2906 : vector<8x1xf32>
    %2908 = vector.broadcast %2907 : vector<8x1xf32> to vector<8x128xf32>
    %2909 = arith.mulf %2899, %2908 : vector<8x128xf32>
    %2910 = vector.broadcast %2 : vector<1x128xf32> to vector<8x128xf32>
    %2911 = arith.mulf %2909, %2910 : vector<8x128xf32>
    %2912 = vector.broadcast %3 : vector<1x128xf32> to vector<8x128xf32>
    %2913 = arith.addf %2911, %2912 : vector<8x128xf32>
    %c3_1046 = arith.constant 3 : index
    %2914 = arith.index_cast %2825 : i32 to index
    %c0_1047 = arith.constant 0 : index
    %2915 = vector.load %arg7[%c3_1046, %2914, %c0_1047] : memref<4x64x128xf32, #tpu.memory_space<vmem>>, vector<1x8x128xf32>
    %2916 = vector.shape_cast %2915 : vector<1x8x128xf32> to vector<8x128xf32>
    %2917 = vector.shape_cast %2913 : vector<8x128xf32> to vector<1x8x128xf32>
    tpu.vector_store %arg7[%c3_1046, %2914, %c0_1047], %2917 {strides = array<i32>} : memref<4x64x128xf32, #tpu.memory_space<vmem>>, vector<1x8x128xf32>,
    %c7_i32_1048 = arith.constant 7 : i32
    %c8_i32_1049 = arith.constant 8 : i32
    %2918 = arith.muli %c7_i32_1048, %c8_i32_1049 : i32
    %2919 = tpu.assume_multiple %2918, 8 : i32
    %c3_i32_1050 = arith.constant 3 : i32
    %2920 = arith.addi %0, %c3_i32_1050 : i32
    %2921 = arith.addi %1, %2919 : i32
    %c0_i32_1051 = arith.constant 0 : i32
    %2922 = arith.addi %2921, %c0_i32_1051 : i32
    %2923 = arith.index_cast %2920 : i32 to index
    %2924 = arith.index_cast %2922 : i32 to index
    %2925 = memref.load %arg2[%2923, %2924] : memref<4x64xi32, #tpu.memory_space<smem>>
    %2926 = arith.index_cast %2925 : i32 to index
    %c0_1052 = arith.constant 0 : index
    %2927 = vector.load %arg3[%2926, %c0_1052] : memref<48x128xf32, #tpu.memory_space<vmem>>, vector<1x128xf32>
    %c3_i32_1053 = arith.constant 3 : i32
    %2928 = arith.addi %0, %c3_i32_1053 : i32
    %2929 = arith.addi %1, %2919 : i32
    %c1_i32_1054 = arith.constant 1 : i32
    %2930 = arith.addi %2929, %c1_i32_1054 : i32
    %2931 = arith.index_cast %2928 : i32 to index
    %2932 = arith.index_cast %2930 : i32 to index
    %2933 = memref.load %arg2[%2931, %2932] : memref<4x64xi32, #tpu.memory_space<smem>>
    %2934 = arith.index_cast %2933 : i32 to index
    %c0_1055 = arith.constant 0 : index
    %2935 = vector.load %arg3[%2934, %c0_1055] : memref<48x128xf32, #tpu.memory_space<vmem>>, vector<1x128xf32>
    %c3_i32_1056 = arith.constant 3 : i32
    %2936 = arith.addi %0, %c3_i32_1056 : i32
    %2937 = arith.addi %1, %2919 : i32
    %c2_i32_1057 = arith.constant 2 : i32
    %2938 = arith.addi %2937, %c2_i32_1057 : i32
    %2939 = arith.index_cast %2936 : i32 to index
    %2940 = arith.index_cast %2938 : i32 to index
    %2941 = memref.load %arg2[%2939, %2940] : memref<4x64xi32, #tpu.memory_space<smem>>
    %2942 = arith.index_cast %2941 : i32 to index
    %c0_1058 = arith.constant 0 : index
    %2943 = vector.load %arg3[%2942, %c0_1058] : memref<48x128xf32, #tpu.memory_space<vmem>>, vector<1x128xf32>
    %c3_i32_1059 = arith.constant 3 : i32
    %2944 = arith.addi %0, %c3_i32_1059 : i32
    %2945 = arith.addi %1, %2919 : i32
    %c3_i32_1060 = arith.constant 3 : i32
    %2946 = arith.addi %2945, %c3_i32_1060 : i32
    %2947 = arith.index_cast %2944 : i32 to index
    %2948 = arith.index_cast %2946 : i32 to index
    %2949 = memref.load %arg2[%2947, %2948] : memref<4x64xi32, #tpu.memory_space<smem>>
    %2950 = arith.index_cast %2949 : i32 to index
    %c0_1061 = arith.constant 0 : index
    %2951 = vector.load %arg3[%2950, %c0_1061] : memref<48x128xf32, #tpu.memory_space<vmem>>, vector<1x128xf32>
    %c3_i32_1062 = arith.constant 3 : i32
    %2952 = arith.addi %0, %c3_i32_1062 : i32
    %2953 = arith.addi %1, %2919 : i32
    %c4_i32_1063 = arith.constant 4 : i32
    %2954 = arith.addi %2953, %c4_i32_1063 : i32
    %2955 = arith.index_cast %2952 : i32 to index
    %2956 = arith.index_cast %2954 : i32 to index
    %2957 = memref.load %arg2[%2955, %2956] : memref<4x64xi32, #tpu.memory_space<smem>>
    %2958 = arith.index_cast %2957 : i32 to index
    %c0_1064 = arith.constant 0 : index
    %2959 = vector.load %arg3[%2958, %c0_1064] : memref<48x128xf32, #tpu.memory_space<vmem>>, vector<1x128xf32>
    %c3_i32_1065 = arith.constant 3 : i32
    %2960 = arith.addi %0, %c3_i32_1065 : i32
    %2961 = arith.addi %1, %2919 : i32
    %c5_i32_1066 = arith.constant 5 : i32
    %2962 = arith.addi %2961, %c5_i32_1066 : i32
    %2963 = arith.index_cast %2960 : i32 to index
    %2964 = arith.index_cast %2962 : i32 to index
    %2965 = memref.load %arg2[%2963, %2964] : memref<4x64xi32, #tpu.memory_space<smem>>
    %2966 = arith.index_cast %2965 : i32 to index
    %c0_1067 = arith.constant 0 : index
    %2967 = vector.load %arg3[%2966, %c0_1067] : memref<48x128xf32, #tpu.memory_space<vmem>>, vector<1x128xf32>
    %c3_i32_1068 = arith.constant 3 : i32
    %2968 = arith.addi %0, %c3_i32_1068 : i32
    %2969 = arith.addi %1, %2919 : i32
    %c6_i32_1069 = arith.constant 6 : i32
    %2970 = arith.addi %2969, %c6_i32_1069 : i32
    %2971 = arith.index_cast %2968 : i32 to index
    %2972 = arith.index_cast %2970 : i32 to index
    %2973 = memref.load %arg2[%2971, %2972] : memref<4x64xi32, #tpu.memory_space<smem>>
    %2974 = arith.index_cast %2973 : i32 to index
    %c0_1070 = arith.constant 0 : index
    %2975 = vector.load %arg3[%2974, %c0_1070] : memref<48x128xf32, #tpu.memory_space<vmem>>, vector<1x128xf32>
    %c3_i32_1071 = arith.constant 3 : i32
    %2976 = arith.addi %0, %c3_i32_1071 : i32
    %2977 = arith.addi %1, %2919 : i32
    %c7_i32_1072 = arith.constant 7 : i32
    %2978 = arith.addi %2977, %c7_i32_1072 : i32
    %2979 = arith.index_cast %2976 : i32 to index
    %2980 = arith.index_cast %2978 : i32 to index
    %2981 = memref.load %arg2[%2979, %2980] : memref<4x64xi32, #tpu.memory_space<smem>>
    %2982 = arith.index_cast %2981 : i32 to index
    %c0_1073 = arith.constant 0 : index
    %2983 = vector.load %arg3[%2982, %c0_1073] : memref<48x128xf32, #tpu.memory_space<vmem>>, vector<1x128xf32>
    %2984 = tpu.concatenate %2927, %2935, %2943, %2951, %2959, %2967, %2975, %2983 in 0 : vector<1x128xf32>, vector<1x128xf32>, vector<1x128xf32>, vector<1x128xf32>, vector<1x128xf32>, vector<1x128xf32>, vector<1x128xf32>, vector<1x128xf32> -> vector<8x128xf32>
    %2985 = arith.index_cast %2919 : i32 to index
    %c0_1074 = arith.constant 0 : index
    %2986 = vector.load %arg4[%2985, %c0_1074] : memref<64x128xf32, #tpu.memory_space<vmem>>, vector<8x128xf32>
    %2987 = arith.addf %2984, %2986 : vector<8x128xf32>
    %cst_1075 = arith.constant dense<0.000000e+00> : vector<8xf32>
    %2988 = vector.multi_reduction <add>, %2987, %cst_1075 [1] : vector<8x128xf32> to vector<8xf32>
    %2989 = vector.shape_cast %2988 : vector<8xf32> to vector<8x1xf32>
    %cst_1076 = arith.constant 1.280000e+02 : f32
    %2990 = vector.broadcast %cst_1076 : f32 to vector<8x1xf32>
    %2991 = arith.divf %2989, %2990 : vector<8x1xf32>
    %2992 = vector.broadcast %2991 : vector<8x1xf32> to vector<8x128xf32>
    %2993 = arith.subf %2987, %2992 : vector<8x128xf32>
    %2994 = arith.mulf %2993, %2993 : vector<8x128xf32>
    %cst_1077 = arith.constant dense<0.000000e+00> : vector<8xf32>
    %2995 = vector.multi_reduction <add>, %2994, %cst_1077 [1] : vector<8x128xf32> to vector<8xf32>
    %2996 = vector.shape_cast %2995 : vector<8xf32> to vector<8x1xf32>
    %cst_1078 = arith.constant 1.280000e+02 : f32
    %2997 = vector.broadcast %cst_1078 : f32 to vector<8x1xf32>
    %2998 = arith.divf %2996, %2997 : vector<8x1xf32>
    %cst_1079 = arith.constant 9.99999974E-6 : f32
    %2999 = vector.broadcast %cst_1079 : f32 to vector<8x1xf32>
    %3000 = arith.addf %2998, %2999 : vector<8x1xf32>
    %3001 = math.rsqrt %3000 : vector<8x1xf32>
    %3002 = vector.broadcast %3001 : vector<8x1xf32> to vector<8x128xf32>
    %3003 = arith.mulf %2993, %3002 : vector<8x128xf32>
    %3004 = vector.broadcast %2 : vector<1x128xf32> to vector<8x128xf32>
    %3005 = arith.mulf %3003, %3004 : vector<8x128xf32>
    %3006 = vector.broadcast %3 : vector<1x128xf32> to vector<8x128xf32>
    %3007 = arith.addf %3005, %3006 : vector<8x128xf32>
    %c3_1080 = arith.constant 3 : index
    %3008 = arith.index_cast %2919 : i32 to index
    %c0_1081 = arith.constant 0 : index
    %3009 = vector.load %arg7[%c3_1080, %3008, %c0_1081] : memref<4x64x128xf32, #tpu.memory_space<vmem>>, vector<1x8x128xf32>
    %3010 = vector.shape_cast %3009 : vector<1x8x128xf32> to vector<8x128xf32>
    %3011 = vector.shape_cast %3007 : vector<8x128xf32> to vector<1x8x128xf32>
    tpu.vector_store %arg7[%c3_1080, %3008, %c0_1081], %3011 {strides = array<i32>} : memref<4x64x128xf32, #tpu.memory_space<vmem>>, vector<1x8x128xf32>,
    %c8_i32_1082 = arith.constant 8 : i32
    return
  }
  func.func @transform_0(%arg0: i32, %arg1: i32, %arg2: memref<4x64xi32, #tpu.memory_space<smem>>) -> (i32, i32) {
    %c0_i32 = arith.constant 0 : i32
    %c0_i32_0 = arith.constant 0 : i32
    %c0_i32_1 = arith.constant 0 : i32
    return %c0_i32, %c0_i32_0 : i32, i32
  }
  func.func @transform_1(%arg0: i32, %arg1: i32, %arg2: memref<4x64xi32, #tpu.memory_space<smem>>) -> (i32, i32) {
    %c0_i32 = arith.constant 0 : i32
    %c0_i32_0 = arith.constant 0 : i32
    return %arg1, %c0_i32 : i32, i32
  }
  func.func @transform_2(%arg0: i32, %arg1: i32, %arg2: memref<4x64xi32, #tpu.memory_space<smem>>) -> (i32, i32) {
    %c0_i32 = arith.constant 0 : i32
    %c0_i32_0 = arith.constant 0 : i32
    %c0_i32_1 = arith.constant 0 : i32
    return %c0_i32, %c0_i32_0 : i32, i32
  }
  func.func @transform_3(%arg0: i32, %arg1: i32, %arg2: memref<4x64xi32, #tpu.memory_space<smem>>) -> (i32, i32) {
    %c0_i32 = arith.constant 0 : i32
    %c0_i32_0 = arith.constant 0 : i32
    %c0_i32_1 = arith.constant 0 : i32
    return %c0_i32, %c0_i32_0 : i32, i32
  }
  func.func @transform_4(%arg0: i32, %arg1: i32, %arg2: memref<4x64xi32, #tpu.memory_space<smem>>) -> (i32, i32, i32) {
    %c0_i32 = arith.constant 0 : i32
    %c0_i32_0 = arith.constant 0 : i32
    return %arg0, %arg1, %c0_i32 : i32, i32, i32
  }
}

</mosaic_0001>

<llo_original>
// kernel: tpu_custom_call.1
$region0: #{tpu_custom_call.1}
  #allocation0 [shape = 'u32[]', space=smem, size = 0x4, offset = 0x4, fixed_abs, tag = 'smem constant byte address 0x4 - core index']
  #allocation1 [shape = 'u32[144,128]{1,0:T(1,128)}', space=vmem, size = 0x12000, scoped, tag = 'internal scratch']
  #allocation2 [shape = 's32[1]{0}', space=sflag, size = 0x4, scoped, tag = 'scoped memory for tpu_custom_call.1']
  #allocation3 [shape = 'u8[2048]{0}', space=smem, size = 0x800, scoped, tag = 'prefetched SMEM operand 0']
  %s0 = inlined_call_operand.hbm [shape: s32[4,64], index: 0, kind: input, shape index: {}]
  %s1 = inlined_call_operand.hbm [shape: f32[48,128], index: 1, kind: input, shape index: {}]
  %s2 = inlined_call_operand.hbm [shape: f32[64,128], index: 2, kind: input, shape index: {}]
  %s3 = inlined_call_operand.vmem [shape: f32[1,128], index: 3, kind: input, shape index: {}]
  %s4 = inlined_call_operand.vmem [shape: f32[1,128], index: 4, kind: input, shape index: {}]
  %s5 = inlined_call_operand.hbm [shape: f32[4,64,128], index: 5, kind: output, shape index: {}]
  %s6 = sld [smem:[#allocation0]]
  $region34: #{tpu_custom_call.1} parent=0
    _
  %s8 = ssub.s32 1, %s6
  %s9 = scalar_select 0, %s8, %s6
  %11 = dma.hbm_to_smem %s0, 64, [#allocation3], [#allocation2]
  %12 = dma.done [#allocation2], 64
  %13 = sfence
  $region1: #{tpu_custom_call.1} parent=0
    #allocation4 [shape = 'u8[24576]{0}', space=vmem, size = 0x6000, scoped, tag = 'input window, operand 1, single buffered']
    #allocation5 [shape = 's32[1]{0}', space=sflag, size = 0x4, scoped, tag = 'scoped memory for tpu_custom_call.1']
    #allocation6 [shape = 's32[1]{0}', space=sflag, size = 0x4, scoped, tag = 'scoped memory for tpu_custom_call.1']
    #allocation7 [shape = 'u8[32768]{0}', space=vmem, size = 0x8000, scoped, tag = 'input window, operand 2, single buffered']
    #allocation8 [shape = 's32[1]{0}', space=sflag, size = 0x4, scoped, tag = 'scoped memory for tpu_custom_call.1']
    #allocation9 [shape = 'u8[131072]{0}', space=vmem, size = 0x20000, scoped, tag = 'output window, operand 0, single buffered']
    %14 = vsyncpa [#allocation5], 0
    %15 = vsyncpa [#allocation8], 0
    %16 = vsyncpa [#allocation6], 0
    // Predicated region
    $region2: #{tpu_custom_call.1} parent=1 // pred_check
      _
    $region3: #{tpu_custom_call.1} parent=1 // pred_check_branch
      %18 = sbr.rel (0) target = $region5
    $region4: #{tpu_custom_call.1} parent=1 // pred_region
      %s20 = ssub.s32 768, 768
      %21 = vsyncadd [#allocation5], %s20
      %s22 = sshll.u32 [#allocation4], 4
      %s23 = int_to_ptr.vmem [resolvable:$true] %s22
      %28 = dma.hbm_to_vmem [thread:$0]  %s1, 768, %s23, [#allocation5], 128, 128, 8
    $region5: #{tpu_custom_call.1} parent=1 // pred_fallthru
      _
    // Predicated region
    $region6: #{tpu_custom_call.1} parent=1 // pred_check
      _
    $region7: #{tpu_custom_call.1} parent=1 // pred_check_branch
      %30 = sbr.rel (0) target = $region9
    $region8: #{tpu_custom_call.1} parent=1 // pred_region
      %s32 = ssub.s32 1024, 1024
      %33 = vsyncadd [#allocation8], %s32
      %s34 = sshll.u32 [#allocation7], 4
      %s35 = int_to_ptr.vmem [resolvable:$true] %s34
      %40 = dma.hbm_to_vmem [thread:$0]  %s2, 1024, %s35, [#allocation8], 128, 128, 8
    $region9: #{tpu_custom_call.1} parent=1 // pred_fallthru
      _
    // Predicated region
    $region10: #{tpu_custom_call.1} parent=1 // pred_check
      _
    $region11: #{tpu_custom_call.1} parent=1 // pred_check_branch
      %42 = sbr.rel (0) target = $region13
    $region12: #{tpu_custom_call.1} parent=1 // pred_region
      _
    $region13: #{tpu_custom_call.1} parent=1 // pred_fallthru
      _
    // Predicated region
    $region14: #{tpu_custom_call.1} parent=1 // pred_check
      _
    $region15: #{tpu_custom_call.1} parent=1 // pred_check_branch
      %44 = sbr.rel (0) target = $region17
    $region16: #{tpu_custom_call.1} parent=1 // pred_region
      _
    $region17: #{tpu_custom_call.1} parent=1 // pred_fallthru
      _
    // Predicated region
    $region18: #{tpu_custom_call.1} parent=1 // pred_check
      _
    $region19: #{tpu_custom_call.1} parent=1 // pred_check_branch
      %46 = sbr.rel (0) target = $region21
    $region20: #{tpu_custom_call.1} parent=1 // pred_region
      %47 = dma.done [#allocation5], 768
    $region21: #{tpu_custom_call.1} parent=1 // pred_fallthru
      _
    // Predicated region
    $region22: #{tpu_custom_call.1} parent=1 // pred_check
      _
    $region23: #{tpu_custom_call.1} parent=1 // pred_check_branch
      %49 = sbr.rel (0) target = $region25
    $region24: #{tpu_custom_call.1} parent=1 // pred_region
      %50 = dma.done [#allocation8], 1024
    $region25: #{tpu_custom_call.1} parent=1 // pred_fallthru
      _
    %s51 = smul.u32 0, 4
    %s52 = smul.u32 0, 64
    %v53 = vld [vmem:[%s3] sm:$0x1]
    %v54 = vld [vmem:[%s4] sm:$0x1]
    %s55 = sadd.s32 %s52, 0
    %s56 = sshra.s32 %s55, 7
    %s57 = sand.u32 %s55, 127
    %s58 = sadd.s32 %s56, %s51
    %s59 = smul.u32 %s58, 128
    %s60 = sshra.s32 %s55, 7
    %s61 = sand.u32 %s55, 127
    %s62 = sadd.s32 %s59, %s61
    %s63 = sld [smem:[#allocation3 + %s62]]
    %s64 = scalar_lea.vmem [#allocation4], %s63
    %v65 = vld [vmem:[%s64] sm:$0x1]
    %s66 = sadd.s32 %s55, 1
    %s67 = sshra.s32 %s66, 7
    %s68 = sand.u32 %s66, 127
    %s69 = sadd.s32 %s67, %s51
    %s70 = smul.u32 %s69, 128
    %s71 = sshra.s32 %s66, 7
    %s72 = sand.u32 %s66, 127
    %s73 = sadd.s32 %s70, %s72
    %s74 = sld [smem:[#allocation3 + %s73]]
    %s75 = scalar_lea.vmem [#allocation4], %s74
    %v76 = vld [vmem:[%s75] sm:$0x1]
    %s77 = sadd.s32 %s55, 2
    %s78 = sshra.s32 %s77, 7
    %s79 = sand.u32 %s77, 127
    %s80 = sadd.s32 %s78, %s51
    %s81 = smul.u32 %s80, 128
    %s82 = sshra.s32 %s77, 7
    %s83 = sand.u32 %s77, 127
    %s84 = sadd.s32 %s81, %s83
    %s85 = sld [smem:[#allocation3 + %s84]]
    %s86 = scalar_lea.vmem [#allocation4], %s85
    %v87 = vld [vmem:[%s86] sm:$0x1]
    %s88 = sadd.s32 %s55, 3
    %s89 = sshra.s32 %s88, 7
    %s90 = sand.u32 %s88, 127
    %s91 = sadd.s32 %s89, %s51
    %s92 = smul.u32 %s91, 128
    %s93 = sshra.s32 %s88, 7
    %s94 = sand.u32 %s88, 127
    %s95 = sadd.s32 %s92, %s94
    %s96 = sld [smem:[#allocation3 + %s95]]
    %s97 = scalar_lea.vmem [#allocation4], %s96
    %v98 = vld [vmem:[%s97] sm:$0x1]
    %s99 = sadd.s32 %s55, 4
    %s100 = sshra.s32 %s99, 7
    %s101 = sand.u32 %s99, 127
    %s102 = sadd.s32 %s100, %s51
    %s103 = smul.u32 %s102, 128
    %s104 = sshra.s32 %s99, 7
    %s105 = sand.u32 %s99, 127
    %s106 = sadd.s32 %s103, %s105
    %s107 = sld [smem:[#allocation3 + %s106]]
    %s108 = scalar_lea.vmem [#allocation4], %s107
    %v109 = vld [vmem:[%s108] sm:$0x1]
    %s110 = sadd.s32 %s55, 5
    %s111 = sshra.s32 %s110, 7
    %s112 = sand.u32 %s110, 127
    %s113 = sadd.s32 %s111, %s51
    %s114 = smul.u32 %s113, 128
    %s115 = sshra.s32 %s110, 7
    %s116 = sand.u32 %s110, 127
    %s117 = sadd.s32 %s114, %s116
    %s118 = sld [smem:[#allocation3 + %s117]]
    %s119 = scalar_lea.vmem [#allocation4], %s118
    %v120 = vld [vmem:[%s119] sm:$0x1]
    %s121 = sadd.s32 %s55, 6
    %s122 = sshra.s32 %s121, 7
    %s123 = sand.u32 %s121, 127
    %s124 = sadd.s32 %s122, %s51
    %s125 = smul.u32 %s124, 128
    %s126 = sshra.s32 %s121, 7
    %s127 = sand.u32 %s121, 127
    %s128 = sadd.s32 %s125, %s127
    %s129 = sld [smem:[#allocation3 + %s128]]
    %s130 = scalar_lea.vmem [#allocation4], %s129
    %v131 = vld [vmem:[%s130] sm:$0x1]
    %s132 = sadd.s32 %s55, 7
    %s133 = sshra.s32 %s132, 7
    %s134 = sand.u32 %s132, 127
    %s135 = sadd.s32 %s133, %s51
    %s136 = smul.u32 %s135, 128
    %s137 = sshra.s32 %s132, 7
    %s138 = sand.u32 %s132, 127
    %s139 = sadd.s32 %s136, %s138
    %s140 = sld [smem:[#allocation3 + %s139]]
    %s141 = scalar_lea.vmem [#allocation4], %s140
    %v142 = vld [vmem:[%s141] sm:$0x1]
    %v144 = vrot.slane %v76, 7
    %v147 = vrot.slane %v87, 6
    %v150 = vrot.slane %v98, 5
    %v153 = vrot.slane %v109, 4
    %v156 = vrot.slane %v120, 3
    %v159 = vrot.slane %v131, 2
    %v162 = vrot.slane %v142, 1
    %vm164 = vcmask 1040384
    %v165 = vsel %vm164, %v65, %v144
    %vm166 = vcmask 1041408
    %v167 = vsel %vm166, %v165, %v147
    %vm168 = vcmask 1042432
    %v169 = vsel %vm168, %v167, %v150
    %vm170 = vcmask 1043456
    %v171 = vsel %vm170, %v169, %v153
    %vm172 = vcmask 1044480
    %v173 = vsel %vm172, %v171, %v156
    %vm174 = vcmask 1045504
    %v175 = vsel %vm174, %v173, %v159
    %vm176 = vcmask 1046528
    %v177 = vsel %vm176, %v175, %v162
    %v178 = vld [vmem:[#allocation7] sm:$0xff]
    %v179 = vadd.f32 %v177, %v178
    %180 = vadd.xlane.f32.xlu0 %v179
    %v181 = vpop.xlane.xlu0 %180
    %v182 = vrcp.pop 128.0
    %v183 = vmul.f32 %v181, %v182
    %v184 = vsub.f32 %v179, %v183
    %v185 = vmul.f32 %v184, %v184
    %186 = vadd.xlane.f32.xlu0 %v185
    %v187 = vpop.xlane.xlu0 %186
    %v188 = vmul.f32 %v187, %v182
    %v189 = vadd.f32 %v188, 1e-05
    %v190 = vrsqrt.pop %v189
    %v191 = vmul.f32 %v184, %v190
    %v193 = vlaneseq
    %v194 = vshrl.u32 %v193, 7
    %v195 = vsub.s32 0, %v194
    %v196 = vrot.slane %v53, %v195
    %v198 = vmul.f32 %v191, %v196
    %v200 = vlaneseq
    %v201 = vshrl.u32 %v200, 7
    %v202 = vsub.s32 0, %v201
    %v203 = vrot.slane %v54, %v202
    %v205 = vadd.f32 %v198, %v203
    %206 = vst [vmem:[#allocation9] sm:$0xff] %v205
    %s207 = sadd.s32 %s52, 8
    %s208 = sshra.s32 %s207, 7
    %s209 = sand.u32 %s207, 127
    %s210 = sadd.s32 %s208, %s51
    %s211 = smul.u32 %s210, 128
    %s212 = sshra.s32 %s207, 7
    %s213 = sand.u32 %s207, 127
    %s214 = sadd.s32 %s211, %s213
    %s215 = sld [smem:[#allocation3 + %s214]]
    %s216 = scalar_lea.vmem [#allocation4], %s215
    %v217 = vld [vmem:[%s216] sm:$0x1]
    %s218 = sadd.s32 %s207, 1
    %s219 = sshra.s32 %s218, 7
    %s220 = sand.u32 %s218, 127
    %s221 = sadd.s32 %s219, %s51
    %s222 = smul.u32 %s221, 128
    %s223 = sshra.s32 %s218, 7
    %s224 = sand.u32 %s218, 127
    %s225 = sadd.s32 %s222, %s224
    %s226 = sld [smem:[#allocation3 + %s225]]
    %s227 = scalar_lea.vmem [#allocation4], %s226
    %v228 = vld [vmem:[%s227] sm:$0x1]
    %s229 = sadd.s32 %s207, 2
    %s230 = sshra.s32 %s229, 7
    %s231 = sand.u32 %s229, 127
    %s232 = sadd.s32 %s230, %s51
    %s233 = smul.u32 %s232, 128
    %s234 = sshra.s32 %s229, 7
    %s235 = sand.u32 %s229, 127
    %s236 = sadd.s32 %s233, %s235
    %s237 = sld [smem:[#allocation3 + %s236]]
    %s238 = scalar_lea.vmem [#allocation4], %s237
    %v239 = vld [vmem:[%s238] sm:$0x1]
    %s240 = sadd.s32 %s207, 3
    %s241 = sshra.s32 %s240, 7
    %s242 = sand.u32 %s240, 127
    %s243 = sadd.s32 %s241, %s51
    %s244 = smul.u32 %s243, 128
    %s245 = sshra.s32 %s240, 7
    %s246 = sand.u32 %s240, 127
    %s247 = sadd.s32 %s244, %s246
    %s248 = sld [smem:[#allocation3 + %s247]]
    %s249 = scalar_lea.vmem [#allocation4], %s248
    %v250 = vld [vmem:[%s249] sm:$0x1]
    %s251 = sadd.s32 %s207, 4
    %s252 = sshra.s32 %s251, 7
    %s253 = sand.u32 %s251, 127
    %s254 = sadd.s32 %s252, %s51
    %s255 = smul.u32 %s254, 128
    %s256 = sshra.s32 %s251, 7
    %s257 = sand.u32 %s251, 127
    %s258 = sadd.s32 %s255, %s257
    %s259 = sld [smem:[#allocation3 + %s258]]
    %s260 = scalar_lea.vmem [#allocation4], %s259
    %v261 = vld [vmem:[%s260] sm:$0x1]
    %s262 = sadd.s32 %s207, 5
    %s263 = sshra.s32 %s262, 7
    %s264 = sand.u32 %s262, 127
    %s265 = sadd.s32 %s263, %s51
    %s266 = smul.u32 %s265, 128
    %s267 = sshra.s32 %s262, 7
    %s268 = sand.u32 %s262, 127
    %s269 = sadd.s32 %s266, %s268
    %s270 = sld [smem:[#allocation3 + %s269]]
    %s271 = scalar_lea.vmem [#allocation4], %s270
    %v272 = vld [vmem:[%s271] sm:$0x1]
    %s273 = sadd.s32 %s207, 6
    %s274 = sshra.s32 %s273, 7
    %s275 = sand.u32 %s273, 127
    %s276 = sadd.s32 %s274, %s51
    %s277 = smul.u32 %s276, 128
    %s278 = sshra.s32 %s273, 7
    %s279 = sand.u32 %s273, 127
    %s280 = sadd.s32 %s277, %s279
    %s281 = sld [smem:[#allocation3 + %s280]]
    %s282 = scalar_lea.vmem [#allocation4], %s281
    %v283 = vld [vmem:[%s282] sm:$0x1]
    %s284 = sadd.s32 %s207, 7
    %s285 = sshra.s32 %s284, 7
    %s286 = sand.u32 %s284, 127
    %s287 = sadd.s32 %s285, %s51
    %s288 = smul.u32 %s287, 128
    %s289 = sshra.s32 %s284, 7
    %s290 = sand.u32 %s284, 127
    %s291 = sadd.s32 %s288, %s290
    %s292 = sld [smem:[#allocation3 + %s291]]
    %s293 = scalar_lea.vmem [#allocation4], %s292
    %v294 = vld [vmem:[%s293] sm:$0x1]
    %v296 = vrot.slane %v228, 7
    %v299 = vrot.slane %v239, 6
    %v302 = vrot.slane %v250, 5
    %v305 = vrot.slane %v261, 4
    %v308 = vrot.slane %v272, 3
    %v311 = vrot.slane %v283, 2
    %v314 = vrot.slane %v294, 1
    %v316 = vsel %vm164, %v217, %v296
    %v317 = vsel %vm166, %v316, %v299
    %v318 = vsel %vm168, %v317, %v302
    %v319 = vsel %vm170, %v318, %v305
    %v320 = vsel %vm172, %v319, %v308
    %v321 = vsel %vm174, %v320, %v311
    %v322 = vsel %vm176, %v321, %v314
    %s323 = scalar_lea.vmem [#allocation7], 8
    %v324 = vld [vmem:[%s323] sm:$0xff]
    %v325 = vadd.f32 %v322, %v324
    %326 = vadd.xlane.f32.xlu0 %v325
    %v327 = vpop.xlane.xlu0 %326
    %v328 = vmul.f32 %v327, %v182
    %v329 = vsub.f32 %v325, %v328
    %v330 = vmul.f32 %v329, %v329
    %331 = vadd.xlane.f32.xlu0 %v330
    %v332 = vpop.xlane.xlu0 %331
    %v333 = vmul.f32 %v332, %v182
    %v334 = vadd.f32 %v333, 1e-05
    %v335 = vrsqrt.pop %v334
    %v336 = vmul.f32 %v329, %v335
    %v337 = vmul.f32 %v336, %v196
    %v338 = vadd.f32 %v337, %v203
    %s339 = scalar_lea.vmem [#allocation9], 8
    %340 = vst [vmem:[%s339] sm:$0xff] %v338
    %s341 = sadd.s32 %s52, 16
    %s342 = sshra.s32 %s341, 7
    %s343 = sand.u32 %s341, 127
    %s344 = sadd.s32 %s342, %s51
    %s345 = smul.u32 %s344, 128
    %s346 = sshra.s32 %s341, 7
    %s347 = sand.u32 %s341, 127
    %s348 = sadd.s32 %s345, %s347
    %s349 = sld [smem:[#allocation3 + %s348]]
    %s350 = scalar_lea.vmem [#allocation4], %s349
    %v351 = vld [vmem:[%s350] sm:$0x1]
    %s352 = sadd.s32 %s341, 1
    %s353 = sshra.s32 %s352, 7
    %s354 = sand.u32 %s352, 127
    %s355 = sadd.s32 %s353, %s51
    %s356 = smul.u32 %s355, 128
    %s357 = sshra.s32 %s352, 7
    %s358 = sand.u32 %s352, 127
    %s359 = sadd.s32 %s356, %s358
    %s360 = sld [smem:[#allocation3 + %s359]]
    %s361 = scalar_lea.vmem [#allocation4], %s360
    %v362 = vld [vmem:[%s361] sm:$0x1]
    %s363 = sadd.s32 %s341, 2
    %s364 = sshra.s32 %s363, 7
    %s365 = sand.u32 %s363, 127
    %s366 = sadd.s32 %s364, %s51
    %s367 = smul.u32 %s366, 128
    %s368 = sshra.s32 %s363, 7
    %s369 = sand.u32 %s363, 127
    %s370 = sadd.s32 %s367, %s369
    %s371 = sld [smem:[#allocation3 + %s370]]
    %s372 = scalar_lea.vmem [#allocation4], %s371
    %v373 = vld [vmem:[%s372] sm:$0x1]
    %s374 = sadd.s32 %s341, 3
    %s375 = sshra.s32 %s374, 7
    %s376 = sand.u32 %s374, 127
    %s377 = sadd.s32 %s375, %s51
    %s378 = smul.u32 %s377, 128
    %s379 = sshra.s32 %s374, 7
    %s380 = sand.u32 %s374, 127
    %s381 = sadd.s32 %s378, %s380
    %s382 = sld [smem:[#allocation3 + %s381]]
    %s383 = scalar_lea.vmem [#allocation4], %s382
    %v384 = vld [vmem:[%s383] sm:$0x1]
    %s385 = sadd.s32 %s341, 4
    %s386 = sshra.s32 %s385, 7
    %s387 = sand.u32 %s385, 127
    %s388 = sadd.s32 %s386, %s51
    %s389 = smul.u32 %s388, 128
    %s390 = sshra.s32 %s385, 7
    %s391 = sand.u32 %s385, 127
    %s392 = sadd.s32 %s389, %s391
    %s393 = sld [smem:[#allocation3 + %s392]]
    %s394 = scalar_lea.vmem [#allocation4], %s393
    %v395 = vld [vmem:[%s394] sm:$0x1]
    %s396 = sadd.s32 %s341, 5
    %s397 = sshra.s32 %s396, 7
    %s398 = sand.u32 %s396, 127
    %s399 = sadd.s32 %s397, %s51
    %s400 = smul.u32 %s399, 128
    %s401 = sshra.s32 %s396, 7
    %s402 = sand.u32 %s396, 127
    %s403 = sadd.s32 %s400, %s402
    %s404 = sld [smem:[#allocation3 + %s403]]
    %s405 = scalar_lea.vmem [#allocation4], %s404
    %v406 = vld [vmem:[%s405] sm:$0x1]
    %s407 = sadd.s32 %s341, 6
    %s408 = sshra.s32 %s407, 7
    %s409 = sand.u32 %s407, 127
    %s410 = sadd.s32 %s408, %s51
    %s411 = smul.u32 %s410, 128
    %s412 = sshra.s32 %s407, 7
    %s413 = sand.u32 %s407, 127
    %s414 = sadd.s32 %s411, %s413
    %s415 = sld [smem:[#allocation3 + %s414]]
    %s416 = scalar_lea.vmem [#allocation4], %s415
    %v417 = vld [vmem:[%s416] sm:$0x1]
    %s418 = sadd.s32 %s341, 7
    %s419 = sshra.s32 %s418, 7
    %s420 = sand.u32 %s418, 127
    %s421 = sadd.s32 %s419, %s51
    %s422 = smul.u32 %s421, 128
    %s423 = sshra.s32 %s418, 7
    %s424 = sand.u32 %s418, 127
    %s425 = sadd.s32 %s422, %s424
    %s426 = sld [smem:[#allocation3 + %s425]]
    %s427 = scalar_lea.vmem [#allocation4], %s426
    %v428 = vld [vmem:[%s427] sm:$0x1]
    %v430 = vrot.slane %v362, 7
    %v433 = vrot.slane %v373, 6
    %v436 = vrot.slane %v384, 5
    %v439 = vrot.slane %v395, 4
    %v442 = vrot.slane %v406, 3
    %v445 = vrot.slane %v417, 2
    %v448 = vrot.slane %v428, 1
    %v450 = vsel %vm164, %v351, %v430
    %v451 = vsel %vm166, %v450, %v433
    %v452 = vsel %vm168, %v451, %v436
    %v453 = vsel %vm170, %v452, %v439
    %v454 = vsel %vm172, %v453, %v442
    %v455 = vsel %vm174, %v454, %v445
    %v456 = vsel %vm176, %v455, %v448
    %s457 = scalar_lea.vmem [#allocation7], 16
    %v458 = vld [vmem:[%s457] sm:$0xff]
    %v459 = vadd.f32 %v456, %v458
    %460 = vadd.xlane.f32.xlu0 %v459
    %v461 = vpop.xlane.xlu0 %460
    %v462 = vmul.f32 %v461, %v182
    %v463 = vsub.f32 %v459, %v462
    %v464 = vmul.f32 %v463, %v463
    %465 = vadd.xlane.f32.xlu0 %v464
    %v466 = vpop.xlane.xlu0 %465
    %v467 = vmul.f32 %v466, %v182
    %v468 = vadd.f32 %v467, 1e-05
    %v469 = vrsqrt.pop %v468
    %v470 = vmul.f32 %v463, %v469
    %v471 = vmul.f32 %v470, %v196
    %v472 = vadd.f32 %v471, %v203
    %s473 = scalar_lea.vmem [#allocation9], 16
    %474 = vst [vmem:[%s473] sm:$0xff] %v472
    %s475 = sadd.s32 %s52, 24
    %s476 = sshra.s32 %s475, 7
    %s477 = sand.u32 %s475, 127
    %s478 = sadd.s32 %s476, %s51
    %s479 = smul.u32 %s478, 128
    %s480 = sshra.s32 %s475, 7
    %s481 = sand.u32 %s475, 127
    %s482 = sadd.s32 %s479, %s481
    %s483 = sld [smem:[#allocation3 + %s482]]
    %s484 = scalar_lea.vmem [#allocation4], %s483
    %v485 = vld [vmem:[%s484] sm:$0x1]
    %s486 = sadd.s32 %s475, 1
    %s487 = sshra.s32 %s486, 7
    %s488 = sand.u32 %s486, 127
    %s489 = sadd.s32 %s487, %s51
    %s490 = smul.u32 %s489, 128
    %s491 = sshra.s32 %s486, 7
    %s492 = sand.u32 %s486, 127
    %s493 = sadd.s32 %s490, %s492
    %s494 = sld [smem:[#allocation3 + %s493]]
    %s495 = scalar_lea.vmem [#allocation4], %s494
    %v496 = vld [vmem:[%s495] sm:$0x1]
    %s497 = sadd.s32 %s475, 2
    %s498 = sshra.s32 %s497, 7
    %s499 = sand.u32 %s497, 127
    %s500 = sadd.s32 %s498, %s51
    %s501 = smul.u32 %s500, 128
    %s502 = sshra.s32 %s497, 7
    %s503 = sand.u32 %s497, 127
    %s504 = sadd.s32 %s501, %s503
    %s505 = sld [smem:[#allocation3 + %s504]]
    %s506 = scalar_lea.vmem [#allocation4], %s505
    %v507 = vld [vmem:[%s506] sm:$0x1]
    %s508 = sadd.s32 %s475, 3
    %s509 = sshra.s32 %s508, 7
    %s510 = sand.u32 %s508, 127
    %s511 = sadd.s32 %s509, %s51
    %s512 = smul.u32 %s511, 128
    %s513 = sshra.s32 %s508, 7
    %s514 = sand.u32 %s508, 127
    %s515 = sadd.s32 %s512, %s514
    %s516 = sld [smem:[#allocation3 + %s515]]
    %s517 = scalar_lea.vmem [#allocation4], %s516
    %v518 = vld [vmem:[%s517] sm:$0x1]
    %s519 = sadd.s32 %s475, 4
    %s520 = sshra.s32 %s519, 7
    %s521 = sand.u32 %s519, 127
    %s522 = sadd.s32 %s520, %s51
    %s523 = smul.u32 %s522, 128
    %s524 = sshra.s32 %s519, 7
    %s525 = sand.u32 %s519, 127
    %s526 = sadd.s32 %s523, %s525
    %s527 = sld [smem:[#allocation3 + %s526]]
    %s528 = scalar_lea.vmem [#allocation4], %s527
    %v529 = vld [vmem:[%s528] sm:$0x1]
    %s530 = sadd.s32 %s475, 5
    %s531 = sshra.s32 %s530, 7
    %s532 = sand.u32 %s530, 127
    %s533 = sadd.s32 %s531, %s51
    %s534 = smul.u32 %s533, 128
    %s535 = sshra.s32 %s530, 7
    %s536 = sand.u32 %s530, 127
    %s537 = sadd.s32 %s534, %s536
    %s538 = sld [smem:[#allocation3 + %s537]]
    %s539 = scalar_lea.vmem [#allocation4], %s538
    %v540 = vld [vmem:[%s539] sm:$0x1]
    %s541 = sadd.s32 %s475, 6
    %s542 = sshra.s32 %s541, 7
    %s543 = sand.u32 %s541, 127
    %s544 = sadd.s32 %s542, %s51
    %s545 = smul.u32 %s544, 128
    %s546 = sshra.s32 %s541, 7
    %s547 = sand.u32 %s541, 127
    %s548 = sadd.s32 %s545, %s547
    %s549 = sld [smem:[#allocation3 + %s548]]
    %s550 = scalar_lea.vmem [#allocation4], %s549
    %v551 = vld [vmem:[%s550] sm:$0x1]
    %s552 = sadd.s32 %s475, 7
    %s553 = sshra.s32 %s552, 7
    %s554 = sand.u32 %s552, 127
    %s555 = sadd.s32 %s553, %s51
    %s556 = smul.u32 %s555, 128
    %s557 = sshra.s32 %s552, 7
    %s558 = sand.u32 %s552, 127
    %s559 = sadd.s32 %s556, %s558
    %s560 = sld [smem:[#allocation3 + %s559]]
    %s561 = scalar_lea.vmem [#allocation4], %s560
    %v562 = vld [vmem:[%s561] sm:$0x1]
    %v564 = vrot.slane %v496, 7
    %v567 = vrot.slane %v507, 6
    %v570 = vrot.slane %v518, 5
    %v573 = vrot.slane %v529, 4
    %v576 = vrot.slane %v540, 3
    %v579 = vrot.slane %v551, 2
    %v582 = vrot.slane %v562, 1
    %v584 = vsel %vm164, %v485, %v564
    %v585 = vsel %vm166, %v584, %v567
    %v586 = vsel %vm168, %v585, %v570
    %v587 = vsel %vm170, %v586, %v573
    %v588 = vsel %vm172, %v587, %v576
    %v589 = vsel %vm174, %v588, %v579
    %v590 = vsel %vm176, %v589, %v582
    %s591 = scalar_lea.vmem [#allocation7], 24
    %v592 = vld [vmem:[%s591] sm:$0xff]
    %v593 = vadd.f32 %v590, %v592
    %594 = vadd.xlane.f32.xlu0 %v593
    %v595 = vpop.xlane.xlu0 %594
    %v596 = vmul.f32 %v595, %v182
    %v597 = vsub.f32 %v593, %v596
    %v598 = vmul.f32 %v597, %v597
    %599 = vadd.xlane.f32.xlu0 %v598
    %v600 = vpop.xlane.xlu0 %599
    %v601 = vmul.f32 %v600, %v182
    %v602 = vadd.f32 %v601, 1e-05
    %v603 = vrsqrt.pop %v602
    %v604 = vmul.f32 %v597, %v603
    %v605 = vmul.f32 %v604, %v196
    %v606 = vadd.f32 %v605, %v203
    %s607 = scalar_lea.vmem [#allocation9], 24
    %608 = vst [vmem:[%s607] sm:$0xff] %v606
    %s609 = sadd.s32 %s52, 32
    %s610 = sshra.s32 %s609, 7
    %s611 = sand.u32 %s609, 127
    %s612 = sadd.s32 %s610, %s51
    %s613 = smul.u32 %s612, 128
    %s614 = sshra.s32 %s609, 7
    %s615 = sand.u32 %s609, 127
    %s616 = sadd.s32 %s613, %s615
    %s617 = sld [smem:[#allocation3 + %s616]]
    %s618 = scalar_lea.vmem [#allocation4], %s617
    %v619 = vld [vmem:[%s618] sm:$0x1]
    %s620 = sadd.s32 %s609, 1
    %s621 = sshra.s32 %s620, 7
    %s622 = sand.u32 %s620, 127
    %s623 = sadd.s32 %s621, %s51
    %s624 = smul.u32 %s623, 128
    %s625 = sshra.s32 %s620, 7
    %s626 = sand.u32 %s620, 127
    %s627 = sadd.s32 %s624, %s626
    %s628 = sld [smem:[#allocation3 + %s627]]
    %s629 = scalar_lea.vmem [#allocation4], %s628
    %v630 = vld [vmem:[%s629] sm:$0x1]
    %s631 = sadd.s32 %s609, 2
    %s632 = sshra.s32 %s631, 7
    %s633 = sand.u32 %s631, 127
    %s634 = sadd.s32 %s632, %s51
    %s635 = smul.u32 %s634, 128
    %s636 = sshra.s32 %s631, 7
    %s637 = sand.u32 %s631, 127
    %s638 = sadd.s32 %s635, %s637
    %s639 = sld [smem:[#allocation3 + %s638]]
    %s640 = scalar_lea.vmem [#allocation4], %s639
    %v641 = vld [vmem:[%s640] sm:$0x1]
    %s642 = sadd.s32 %s609, 3
    %s643 = sshra.s32 %s642, 7
    %s644 = sand.u32 %s642, 127
    %s645 = sadd.s32 %s643, %s51
    %s646 = smul.u32 %s645, 128
    %s647 = sshra.s32 %s642, 7
    %s648 = sand.u32 %s642, 127
    %s649 = sadd.s32 %s646, %s648
    %s650 = sld [smem:[#allocation3 + %s649]]
    %s651 = scalar_lea.vmem [#allocation4], %s650
    %v652 = vld [vmem:[%s651] sm:$0x1]
    %s653 = sadd.s32 %s609, 4
    %s654 = sshra.s32 %s653, 7
    %s655 = sand.u32 %s653, 127
    %s656 = sadd.s32 %s654, %s51
    %s657 = smul.u32 %s656, 128
    %s658 = sshra.s32 %s653, 7
    %s659 = sand.u32 %s653, 127
    %s660 = sadd.s32 %s657, %s659
    %s661 = sld [smem:[#allocation3 + %s660]]
    %s662 = scalar_lea.vmem [#allocation4], %s661
    %v663 = vld [vmem:[%s662] sm:$0x1]
    %s664 = sadd.s32 %s609, 5
    %s665 = sshra.s32 %s664, 7
    %s666 = sand.u32 %s664, 127
    %s667 = sadd.s32 %s665, %s51
    %s668 = smul.u32 %s667, 128
    %s669 = sshra.s32 %s664, 7
    %s670 = sand.u32 %s664, 127
    %s671 = sadd.s32 %s668, %s670
    %s672 = sld [smem:[#allocation3 + %s671]]
    %s673 = scalar_lea.vmem [#allocation4], %s672
    %v674 = vld [vmem:[%s673] sm:$0x1]
    %s675 = sadd.s32 %s609, 6
    %s676 = sshra.s32 %s675, 7
    %s677 = sand.u32 %s675, 127
    %s678 = sadd.s32 %s676, %s51
    %s679 = smul.u32 %s678, 128
    %s680 = sshra.s32 %s675, 7
    %s681 = sand.u32 %s675, 127
    %s682 = sadd.s32 %s679, %s681
    %s683 = sld [smem:[#allocation3 + %s682]]
    %s684 = scalar_lea.vmem [#allocation4], %s683
    %v685 = vld [vmem:[%s684] sm:$0x1]
    %s686 = sadd.s32 %s609, 7
    %s687 = sshra.s32 %s686, 7
    %s688 = sand.u32 %s686, 127
    %s689 = sadd.s32 %s687, %s51
    %s690 = smul.u32 %s689, 128
    %s691 = sshra.s32 %s686, 7
    %s692 = sand.u32 %s686, 127
    %s693 = sadd.s32 %s690, %s692
    %s694 = sld [smem:[#allocation3 + %s693]]
    %s695 = scalar_lea.vmem [#allocation4], %s694
    %v696 = vld [vmem:[%s695] sm:$0x1]
    %v698 = vrot.slane %v630, 7
    %v701 = vrot.slane %v641, 6
    %v704 = vrot.slane %v652, 5
    %v707 = vrot.slane %v663, 4
    %v710 = vrot.slane %v674, 3
    %v713 = vrot.slane %v685, 2
    %v716 = vrot.slane %v696, 1
    %v718 = vsel %vm164, %v619, %v698
    %v719 = vsel %vm166, %v718, %v701
    %v720 = vsel %vm168, %v719, %v704
    %v721 = vsel %vm170, %v720, %v707
    %v722 = vsel %vm172, %v721, %v710
    %v723 = vsel %vm174, %v722, %v713
    %v724 = vsel %vm176, %v723, %v716
    %s725 = scalar_lea.vmem [#allocation7], 32
    %v726 = vld [vmem:[%s725] sm:$0xff]
    %v727 = vadd.f32 %v724, %v726
    %728 = vadd.xlane.f32.xlu0 %v727
    %v729 = vpop.xlane.xlu0 %728
    %v730 = vmul.f32 %v729, %v182
    %v731 = vsub.f32 %v727, %v730
    %v732 = vmul.f32 %v731, %v731
    %733 = vadd.xlane.f32.xlu0 %v732
    %v734 = vpop.xlane.xlu0 %733
    %v735 = vmul.f32 %v734, %v182
    %v736 = vadd.f32 %v735, 1e-05
    %v737 = vrsqrt.pop %v736
    %v738 = vmul.f32 %v731, %v737
    %v739 = vmul.f32 %v738, %v196
    %v740 = vadd.f32 %v739, %v203
    %s741 = scalar_lea.vmem [#allocation9], 32
    %742 = vst [vmem:[%s741] sm:$0xff] %v740
    %s743 = sadd.s32 %s52, 40
    %s744 = sshra.s32 %s743, 7
    %s745 = sand.u32 %s743, 127
    %s746 = sadd.s32 %s744, %s51
    %s747 = smul.u32 %s746, 128
    %s748 = sshra.s32 %s743, 7
    %s749 = sand.u32 %s743, 127
    %s750 = sadd.s32 %s747, %s749
    %s751 = sld [smem:[#allocation3 + %s750]]
    %s752 = scalar_lea.vmem [#allocation4], %s751
    %v753 = vld [vmem:[%s752] sm:$0x1]
    %s754 = sadd.s32 %s743, 1
    %s755 = sshra.s32 %s754, 7
    %s756 = sand.u32 %s754, 127
    %s757 = sadd.s32 %s755, %s51
    %s758 = smul.u32 %s757, 128
    %s759 = sshra.s32 %s754, 7
    %s760 = sand.u32 %s754, 127
    %s761 = sadd.s32 %s758, %s760
    %s762 = sld [smem:[#allocation3 + %s761]]
    %s763 = scalar_lea.vmem [#allocation4], %s762
    %v764 = vld [vmem:[%s763] sm:$0x1]
    %s765 = sadd.s32 %s743, 2
    %s766 = sshra.s32 %s765, 7
    %s767 = sand.u32 %s765, 127
    %s768 = sadd.s32 %s766, %s51
    %s769 = smul.u32 %s768, 128
    %s770 = sshra.s32 %s765, 7
    %s771 = sand.u32 %s765, 127
    %s772 = sadd.s32 %s769, %s771
    %s773 = sld [smem:[#allocation3 + %s772]]
    %s774 = scalar_lea.vmem [#allocation4], %s773
    %v775 = vld [vmem:[%s774] sm:$0x1]
    %s776 = sadd.s32 %s743, 3
    %s777 = sshra.s32 %s776, 7
    %s778 = sand.u32 %s776, 127
    %s779 = sadd.s32 %s777, %s51
    %s780 = smul.u32 %s779, 128
    %s781 = sshra.s32 %s776, 7
    %s782 = sand.u32 %s776, 127
    %s783 = sadd.s32 %s780, %s782
    %s784 = sld [smem:[#allocation3 + %s783]]
    %s785 = scalar_lea.vmem [#allocation4], %s784
    %v786 = vld [vmem:[%s785] sm:$0x1]
    %s787 = sadd.s32 %s743, 4
    %s788 = sshra.s32 %s787, 7
    %s789 = sand.u32 %s787, 127
    %s790 = sadd.s32 %s788, %s51
    %s791 = smul.u32 %s790, 128
    %s792 = sshra.s32 %s787, 7
    %s793 = sand.u32 %s787, 127
    %s794 = sadd.s32 %s791, %s793
    %s795 = sld [smem:[#allocation3 + %s794]]
    %s796 = scalar_lea.vmem [#allocation4], %s795
    %v797 = vld [vmem:[%s796] sm:$0x1]
    %s798 = sadd.s32 %s743, 5
    %s799 = sshra.s32 %s798, 7
    %s800 = sand.u32 %s798, 127
    %s801 = sadd.s32 %s799, %s51
    %s802 = smul.u32 %s801, 128
    %s803 = sshra.s32 %s798, 7
    %s804 = sand.u32 %s798, 127
    %s805 = sadd.s32 %s802, %s804
    %s806 = sld [smem:[#allocation3 + %s805]]
    %s807 = scalar_lea.vmem [#allocation4], %s806
    %v808 = vld [vmem:[%s807] sm:$0x1]
    %s809 = sadd.s32 %s743, 6
    %s810 = sshra.s32 %s809, 7
    %s811 = sand.u32 %s809, 127
    %s812 = sadd.s32 %s810, %s51
    %s813 = smul.u32 %s812, 128
    %s814 = sshra.s32 %s809, 7
    %s815 = sand.u32 %s809, 127
    %s816 = sadd.s32 %s813, %s815
    %s817 = sld [smem:[#allocation3 + %s816]]
    %s818 = scalar_lea.vmem [#allocation4], %s817
    %v819 = vld [vmem:[%s818] sm:$0x1]
    %s820 = sadd.s32 %s743, 7
    %s821 = sshra.s32 %s820, 7
    %s822 = sand.u32 %s820, 127
    %s823 = sadd.s32 %s821, %s51
    %s824 = smul.u32 %s823, 128
    %s825 = sshra.s32 %s820, 7
    %s826 = sand.u32 %s820, 127
    %s827 = sadd.s32 %s824, %s826
    %s828 = sld [smem:[#allocation3 + %s827]]
    %s829 = scalar_lea.vmem [#allocation4], %s828
    %v830 = vld [vmem:[%s829] sm:$0x1]
    %v832 = vrot.slane %v764, 7
    %v835 = vrot.slane %v775, 6
    %v838 = vrot.slane %v786, 5
    %v841 = vrot.slane %v797, 4
    %v844 = vrot.slane %v808, 3
    %v847 = vrot.slane %v819, 2
    %v850 = vrot.slane %v830, 1
    %v852 = vsel %vm164, %v753, %v832
    %v853 = vsel %vm166, %v852, %v835
    %v854 = vsel %vm168, %v853, %v838
    %v855 = vsel %vm170, %v854, %v841
    %v856 = vsel %vm172, %v855, %v844
    %v857 = vsel %vm174, %v856, %v847
    %v858 = vsel %vm176, %v857, %v850
    %s859 = scalar_lea.vmem [#allocation7], 40
    %v860 = vld [vmem:[%s859] sm:$0xff]
    %v861 = vadd.f32 %v858, %v860
    %862 = vadd.xlane.f32.xlu0 %v861
    %v863 = vpop.xlane.xlu0 %862
    %v864 = vmul.f32 %v863, %v182
    %v865 = vsub.f32 %v861, %v864
    %v866 = vmul.f32 %v865, %v865
    %867 = vadd.xlane.f32.xlu0 %v866
    %v868 = vpop.xlane.xlu0 %867
    %v869 = vmul.f32 %v868, %v182
    %v870 = vadd.f32 %v869, 1e-05
    %v871 = vrsqrt.pop %v870
    %v872 = vmul.f32 %v865, %v871
    %v873 = vmul.f32 %v872, %v196
    %v874 = vadd.f32 %v873, %v203
    %s875 = scalar_lea.vmem [#allocation9], 40
    %876 = vst [vmem:[%s875] sm:$0xff] %v874
    %s877 = sadd.s32 %s52, 48
    %s878 = sshra.s32 %s877, 7
    %s879 = sand.u32 %s877, 127
    %s880 = sadd.s32 %s878, %s51
    %s881 = smul.u32 %s880, 128
    %s882 = sshra.s32 %s877, 7
    %s883 = sand.u32 %s877, 127
    %s884 = sadd.s32 %s881, %s883
    %s885 = sld [smem:[#allocation3 + %s884]]
    %s886 = scalar_lea.vmem [#allocation4], %s885
    %v887 = vld [vmem:[%s886] sm:$0x1]
    %s888 = sadd.s32 %s877, 1
    %s889 = sshra.s32 %s888, 7
    %s890 = sand.u32 %s888, 127
    %s891 = sadd.s32 %s889, %s51
    %s892 = smul.u32 %s891, 128
    %s893 = sshra.s32 %s888, 7
    %s894 = sand.u32 %s888, 127
    %s895 = sadd.s32 %s892, %s894
    %s896 = sld [smem:[#allocation3 + %s895]]
    %s897 = scalar_lea.vmem [#allocation4], %s896
    %v898 = vld [vmem:[%s897] sm:$0x1]
    %s899 = sadd.s32 %s877, 2
    %s900 = sshra.s32 %s899, 7
    %s901 = sand.u32 %s899, 127
    %s902 = sadd.s32 %s900, %s51
    %s903 = smul.u32 %s902, 128
    %s904 = sshra.s32 %s899, 7
    %s905 = sand.u32 %s899, 127
    %s906 = sadd.s32 %s903, %s905
    %s907 = sld [smem:[#allocation3 + %s906]]
    %s908 = scalar_lea.vmem [#allocation4], %s907
    %v909 = vld [vmem:[%s908] sm:$0x1]
    %s910 = sadd.s32 %s877, 3
    %s911 = sshra.s32 %s910, 7
    %s912 = sand.u32 %s910, 127
    %s913 = sadd.s32 %s911, %s51
    %s914 = smul.u32 %s913, 128
    %s915 = sshra.s32 %s910, 7
    %s916 = sand.u32 %s910, 127
    %s917 = sadd.s32 %s914, %s916
    %s918 = sld [smem:[#allocation3 + %s917]]
    %s919 = scalar_lea.vmem [#allocation4], %s918
    %v920 = vld [vmem:[%s919] sm:$0x1]
    %s921 = sadd.s32 %s877, 4
    %s922 = sshra.s32 %s921, 7
    %s923 = sand.u32 %s921, 127
    %s924 = sadd.s32 %s922, %s51
    %s925 = smul.u32 %s924, 128
    %s926 = sshra.s32 %s921, 7
    %s927 = sand.u32 %s921, 127
    %s928 = sadd.s32 %s925, %s927
    %s929 = sld [smem:[#allocation3 + %s928]]
    %s930 = scalar_lea.vmem [#allocation4], %s929
    %v931 = vld [vmem:[%s930] sm:$0x1]
    %s932 = sadd.s32 %s877, 5
    %s933 = sshra.s32 %s932, 7
    %s934 = sand.u32 %s932, 127
    %s935 = sadd.s32 %s933, %s51
    %s936 = smul.u32 %s935, 128
    %s937 = sshra.s32 %s932, 7
    %s938 = sand.u32 %s932, 127
    %s939 = sadd.s32 %s936, %s938
    %s940 = sld [smem:[#allocation3 + %s939]]
    %s941 = scalar_lea.vmem [#allocation4], %s940
    %v942 = vld [vmem:[%s941] sm:$0x1]
    %s943 = sadd.s32 %s877, 6
    %s944 = sshra.s32 %s943, 7
    %s945 = sand.u32 %s943, 127
    %s946 = sadd.s32 %s944, %s51
    %s947 = smul.u32 %s946, 128
    %s948 = sshra.s32 %s943, 7
    %s949 = sand.u32 %s943, 127
    %s950 = sadd.s32 %s947, %s949
    %s951 = sld [smem:[#allocation3 + %s950]]
    %s952 = scalar_lea.vmem [#allocation4], %s951
    %v953 = vld [vmem:[%s952] sm:$0x1]
    %s954 = sadd.s32 %s877, 7
    %s955 = sshra.s32 %s954, 7
    %s956 = sand.u32 %s954, 127
    %s957 = sadd.s32 %s955, %s51
    %s958 = smul.u32 %s957, 128
    %s959 = sshra.s32 %s954, 7
    %s960 = sand.u32 %s954, 127
    %s961 = sadd.s32 %s958, %s960
    %s962 = sld [smem:[#allocation3 + %s961]]
    %s963 = scalar_lea.vmem [#allocation4], %s962
    %v964 = vld [vmem:[%s963] sm:$0x1]
    %v966 = vrot.slane %v898, 7
    %v969 = vrot.slane %v909, 6
    %v972 = vrot.slane %v920, 5
    %v975 = vrot.slane %v931, 4
    %v978 = vrot.slane %v942, 3
    %v981 = vrot.slane %v953, 2
    %v984 = vrot.slane %v964, 1
    %v986 = vsel %vm164, %v887, %v966
    %v987 = vsel %vm166, %v986, %v969
    %v988 = vsel %vm168, %v987, %v972
    %v989 = vsel %vm170, %v988, %v975
    %v990 = vsel %vm172, %v989, %v978
    %v991 = vsel %vm174, %v990, %v981
    %v992 = vsel %vm176, %v991, %v984
    %s993 = scalar_lea.vmem [#allocation7], 48
    %v994 = vld [vmem:[%s993] sm:$0xff]
    %v995 = vadd.f32 %v992, %v994
    %996 = vadd.xlane.f32.xlu0 %v995
    %v997 = vpop.xlane.xlu0 %996
    %v998 = vmul.f32 %v997, %v182
    %v999 = vsub.f32 %v995, %v998
    %v1000 = vmul.f32 %v999, %v999
    %1001 = vadd.xlane.f32.xlu0 %v1000
    %v1002 = vpop.xlane.xlu0 %1001
    %v1003 = vmul.f32 %v1002, %v182
    %v1004 = vadd.f32 %v1003, 1e-05
    %v1005 = vrsqrt.pop %v1004
    %v1006 = vmul.f32 %v999, %v1005
    %v1007 = vmul.f32 %v1006, %v196
    %v1008 = vadd.f32 %v1007, %v203
    %s1009 = scalar_lea.vmem [#allocation9], 48
    %1010 = vst [vmem:[%s1009] sm:$0xff] %v1008
    %s1011 = sadd.s32 %s52, 56
    %s1012 = sshra.s32 %s1011, 7
    %s1013 = sand.u32 %s1011, 127
    %s1014 = sadd.s32 %s1012, %s51
    %s1015 = smul.u32 %s1014, 128
    %s1016 = sshra.s32 %s1011, 7
    %s1017 = sand.u32 %s1011, 127
    %s1018 = sadd.s32 %s1015, %s1017
    %s1019 = sld [smem:[#allocation3 + %s1018]]
    %s1020 = scalar_lea.vmem [#allocation4], %s1019
    %v1021 = vld [vmem:[%s1020] sm:$0x1]
    %s1022 = sadd.s32 %s1011, 1
    %s1023 = sshra.s32 %s1022, 7
    %s1024 = sand.u32 %s1022, 127
    %s1025 = sadd.s32 %s1023, %s51
    %s1026 = smul.u32 %s1025, 128
    %s1027 = sshra.s32 %s1022, 7
    %s1028 = sand.u32 %s1022, 127
    %s1029 = sadd.s32 %s1026, %s1028
    %s1030 = sld [smem:[#allocation3 + %s1029]]
    %s1031 = scalar_lea.vmem [#allocation4], %s1030
    %v1032 = vld [vmem:[%s1031] sm:$0x1]
    %s1033 = sadd.s32 %s1011, 2
    %s1034 = sshra.s32 %s1033, 7
    %s1035 = sand.u32 %s1033, 127
    %s1036 = sadd.s32 %s1034, %s51
    %s1037 = smul.u32 %s1036, 128
    %s1038 = sshra.s32 %s1033, 7
    %s1039 = sand.u32 %s1033, 127
    %s1040 = sadd.s32 %s1037, %s1039
    %s1041 = sld [smem:[#allocation3 + %s1040]]
    %s1042 = scalar_lea.vmem [#allocation4], %s1041
    %v1043 = vld [vmem:[%s1042] sm:$0x1]
    %s1044 = sadd.s32 %s1011, 3
    %s1045 = sshra.s32 %s1044, 7
    %s1046 = sand.u32 %s1044, 127
    %s1047 = sadd.s32 %s1045, %s51
    %s1048 = smul.u32 %s1047, 128
    %s1049 = sshra.s32 %s1044, 7
    %s1050 = sand.u32 %s1044, 127
    %s1051 = sadd.s32 %s1048, %s1050
    %s1052 = sld [smem:[#allocation3 + %s1051]]
    %s1053 = scalar_lea.vmem [#allocation4], %s1052
    %v1054 = vld [vmem:[%s1053] sm:$0x1]
    %s1055 = sadd.s32 %s1011, 4
    %s1056 = sshra.s32 %s1055, 7
    %s1057 = sand.u32 %s1055, 127
    %s1058 = sadd.s32 %s1056, %s51
    %s1059 = smul.u32 %s1058, 128
    %s1060 = sshra.s32 %s1055, 7
    %s1061 = sand.u32 %s1055, 127
    %s1062 = sadd.s32 %s1059, %s1061
    %s1063 = sld [smem:[#allocation3 + %s1062]]
    %s1064 = scalar_lea.vmem [#allocation4], %s1063
    %v1065 = vld [vmem:[%s1064] sm:$0x1]
    %s1066 = sadd.s32 %s1011, 5
    %s1067 = sshra.s32 %s1066, 7
    %s1068 = sand.u32 %s1066, 127
    %s1069 = sadd.s32 %s1067, %s51
    %s1070 = smul.u32 %s1069, 128
    %s1071 = sshra.s32 %s1066, 7
    %s1072 = sand.u32 %s1066, 127
    %s1073 = sadd.s32 %s1070, %s1072
    %s1074 = sld [smem:[#allocation3 + %s1073]]
    %s1075 = scalar_lea.vmem [#allocation4], %s1074
    %v1076 = vld [vmem:[%s1075] sm:$0x1]
    %s1077 = sadd.s32 %s1011, 6
    %s1078 = sshra.s32 %s1077, 7
    %s1079 = sand.u32 %s1077, 127
    %s1080 = sadd.s32 %s1078, %s51
    %s1081 = smul.u32 %s1080, 128
    %s1082 = sshra.s32 %s1077, 7
    %s1083 = sand.u32 %s1077, 127
    %s1084 = sadd.s32 %s1081, %s1083
    %s1085 = sld [smem:[#allocation3 + %s1084]]
    %s1086 = scalar_lea.vmem [#allocation4], %s1085
    %v1087 = vld [vmem:[%s1086] sm:$0x1]
    %s1088 = sadd.s32 %s1011, 7
    %s1089 = sshra.s32 %s1088, 7
    %s1090 = sand.u32 %s1088, 127
    %s1091 = sadd.s32 %s1089, %s51
    %s1092 = smul.u32 %s1091, 128
    %s1093 = sshra.s32 %s1088, 7
    %s1094 = sand.u32 %s1088, 127
    %s1095 = sadd.s32 %s1092, %s1094
    %s1096 = sld [smem:[#allocation3 + %s1095]]
    %s1097 = scalar_lea.vmem [#allocation4], %s1096
    %v1098 = vld [vmem:[%s1097] sm:$0x1]
    %v1100 = vrot.slane %v1032, 7
    %v1103 = vrot.slane %v1043, 6
    %v1106 = vrot.slane %v1054, 5
    %v1109 = vrot.slane %v1065, 4
    %v1112 = vrot.slane %v1076, 3
    %v1115 = vrot.slane %v1087, 2
    %v1118 = vrot.slane %v1098, 1
    %v1120 = vsel %vm164, %v1021, %v1100
    %v1121 = vsel %vm166, %v1120, %v1103
    %v1122 = vsel %vm168, %v1121, %v1106
    %v1123 = vsel %vm170, %v1122, %v1109
    %v1124 = vsel %vm172, %v1123, %v1112
    %v1125 = vsel %vm174, %v1124, %v1115
    %v1126 = vsel %vm176, %v1125, %v1118
    %s1127 = scalar_lea.vmem [#allocation7], 56
    %v1128 = vld [vmem:[%s1127] sm:$0xff]
    %v1129 = vadd.f32 %v1126, %v1128
    %1130 = vadd.xlane.f32.xlu0 %v1129
    %v1131 = vpop.xlane.xlu0 %1130
    %v1132 = vmul.f32 %v1131, %v182
    %v1133 = vsub.f32 %v1129, %v1132
    %v1134 = vmul.f32 %v1133, %v1133
    %1135 = vadd.xlane.f32.xlu0 %v1134
    %v1136 = vpop.xlane.xlu0 %1135
    %v1137 = vmul.f32 %v1136, %v182
    %v1138 = vadd.f32 %v1137, 1e-05
    %v1139 = vrsqrt.pop %v1138
    %v1140 = vmul.f32 %v1133, %v1139
    %v1141 = vmul.f32 %v1140, %v196
    %v1142 = vadd.f32 %v1141, %v203
    %s1143 = scalar_lea.vmem [#allocation9], 56
    %1144 = vst [vmem:[%s1143] sm:$0xff] %v1142
    %s1145 = sadd.s32 %s51, 1
    %s1146 = sadd.s32 %s56, %s1145
    %s1147 = smul.u32 %s1146, 128
    %s1148 = sadd.s32 %s1147, %s61
    %s1149 = sld [smem:[#allocation3 + %s1148]]
    %s1150 = scalar_lea.vmem [#allocation4], %s1149
    %v1151 = vld [vmem:[%s1150] sm:$0x1]
    %s1152 = sadd.s32 %s67, %s1145
    %s1153 = smul.u32 %s1152, 128
    %s1154 = sadd.s32 %s1153, %s72
    %s1155 = sld [smem:[#allocation3 + %s1154]]
    %s1156 = scalar_lea.vmem [#allocation4], %s1155
    %v1157 = vld [vmem:[%s1156] sm:$0x1]
    %s1158 = sadd.s32 %s78, %s1145
    %s1159 = smul.u32 %s1158, 128
    %s1160 = sadd.s32 %s1159, %s83
    %s1161 = sld [smem:[#allocation3 + %s1160]]
    %s1162 = scalar_lea.vmem [#allocation4], %s1161
    %v1163 = vld [vmem:[%s1162] sm:$0x1]
    %s1164 = sadd.s32 %s89, %s1145
    %s1165 = smul.u32 %s1164, 128
    %s1166 = sadd.s32 %s1165, %s94
    %s1167 = sld [smem:[#allocation3 + %s1166]]
    %s1168 = scalar_lea.vmem [#allocation4], %s1167
    %v1169 = vld [vmem:[%s1168] sm:$0x1]
    %s1170 = sadd.s32 %s100, %s1145
    %s1171 = smul.u32 %s1170, 128
    %s1172 = sadd.s32 %s1171, %s105
    %s1173 = sld [smem:[#allocation3 + %s1172]]
    %s1174 = scalar_lea.vmem [#allocation4], %s1173
    %v1175 = vld [vmem:[%s1174] sm:$0x1]
    %s1176 = sadd.s32 %s111, %s1145
    %s1177 = smul.u32 %s1176, 128
    %s1178 = sadd.s32 %s1177, %s116
    %s1179 = sld [smem:[#allocation3 + %s1178]]
    %s1180 = scalar_lea.vmem [#allocation4], %s1179
    %v1181 = vld [vmem:[%s1180] sm:$0x1]
    %s1182 = sadd.s32 %s122, %s1145
    %s1183 = smul.u32 %s1182, 128
    %s1184 = sadd.s32 %s1183, %s127
    %s1185 = sld [smem:[#allocation3 + %s1184]]
    %s1186 = scalar_lea.vmem [#allocation4], %s1185
    %v1187 = vld [vmem:[%s1186] sm:$0x1]
    %s1188 = sadd.s32 %s133, %s1145
    %s1189 = smul.u32 %s1188, 128
    %s1190 = sadd.s32 %s1189, %s138
    %s1191 = sld [smem:[#allocation3 + %s1190]]
    %s1192 = scalar_lea.vmem [#allocation4], %s1191
    %v1193 = vld [vmem:[%s1192] sm:$0x1]
    %v1195 = vrot.slane %v1157, 7
    %v1198 = vrot.slane %v1163, 6
    %v1201 = vrot.slane %v1169, 5
    %v1204 = vrot.slane %v1175, 4
    %v1207 = vrot.slane %v1181, 3
    %v1210 = vrot.slane %v1187, 2
    %v1213 = vrot.slane %v1193, 1
    %v1215 = vsel %vm164, %v1151, %v1195
    %v1216 = vsel %vm166, %v1215, %v1198
    %v1217 = vsel %vm168, %v1216, %v1201
    %v1218 = vsel %vm170, %v1217, %v1204
    %v1219 = vsel %vm172, %v1218, %v1207
    %v1220 = vsel %vm174, %v1219, %v1210
    %v1221 = vsel %vm176, %v1220, %v1213
    %v1222 = vld [vmem:[#allocation7] sm:$0xff]
    %v1223 = vadd.f32 %v1221, %v1222
    %1224 = vadd.xlane.f32.xlu0 %v1223
    %v1225 = vpop.xlane.xlu0 %1224
    %v1226 = vmul.f32 %v1225, %v182
    %v1227 = vsub.f32 %v1223, %v1226
    %v1228 = vmul.f32 %v1227, %v1227
    %1229 = vadd.xlane.f32.xlu0 %v1228
    %v1230 = vpop.xlane.xlu0 %1229
    %v1231 = vmul.f32 %v1230, %v182
    %v1232 = vadd.f32 %v1231, 1e-05
    %v1233 = vrsqrt.pop %v1232
    %v1234 = vmul.f32 %v1227, %v1233
    %v1235 = vmul.f32 %v1234, %v196
    %v1236 = vadd.f32 %v1235, %v203
    %s1237 = sadd.s32 0, 64
    %s1238 = scalar_lea.vmem [#allocation9], %s1237
    %1239 = vst [vmem:[%s1238] sm:$0xff] %v1236
    %s1240 = sadd.s32 %s208, %s1145
    %s1241 = smul.u32 %s1240, 128
    %s1242 = sadd.s32 %s1241, %s213
    %s1243 = sld [smem:[#allocation3 + %s1242]]
    %s1244 = scalar_lea.vmem [#allocation4], %s1243
    %v1245 = vld [vmem:[%s1244] sm:$0x1]
    %s1246 = sadd.s32 %s219, %s1145
    %s1247 = smul.u32 %s1246, 128
    %s1248 = sadd.s32 %s1247, %s224
    %s1249 = sld [smem:[#allocation3 + %s1248]]
    %s1250 = scalar_lea.vmem [#allocation4], %s1249
    %v1251 = vld [vmem:[%s1250] sm:$0x1]
    %s1252 = sadd.s32 %s230, %s1145
    %s1253 = smul.u32 %s1252, 128
    %s1254 = sadd.s32 %s1253, %s235
    %s1255 = sld [smem:[#allocation3 + %s1254]]
    %s1256 = scalar_lea.vmem [#allocation4], %s1255
    %v1257 = vld [vmem:[%s1256] sm:$0x1]
    %s1258 = sadd.s32 %s241, %s1145
    %s1259 = smul.u32 %s1258, 128
    %s1260 = sadd.s32 %s1259, %s246
    %s1261 = sld [smem:[#allocation3 + %s1260]]
    %s1262 = scalar_lea.vmem [#allocation4], %s1261
    %v1263 = vld [vmem:[%s1262] sm:$0x1]
    %s1264 = sadd.s32 %s252, %s1145
    %s1265 = smul.u32 %s1264, 128
    %s1266 = sadd.s32 %s1265, %s257
    %s1267 = sld [smem:[#allocation3 + %s1266]]
    %s1268 = scalar_lea.vmem [#allocation4], %s1267
    %v1269 = vld [vmem:[%s1268] sm:$0x1]
    %s1270 = sadd.s32 %s263, %s1145
    %s1271 = smul.u32 %s1270, 128
    %s1272 = sadd.s32 %s1271, %s268
    %s1273 = sld [smem:[#allocation3 + %s1272]]
    %s1274 = scalar_lea.vmem [#allocation4], %s1273
    %v1275 = vld [vmem:[%s1274] sm:$0x1]
    %s1276 = sadd.s32 %s274, %s1145
    %s1277 = smul.u32 %s1276, 128
    %s1278 = sadd.s32 %s1277, %s279
    %s1279 = sld [smem:[#allocation3 + %s1278]]
    %s1280 = scalar_lea.vmem [#allocation4], %s1279
    %v1281 = vld [vmem:[%s1280] sm:$0x1]
    %s1282 = sadd.s32 %s285, %s1145
    %s1283 = smul.u32 %s1282, 128
    %s1284 = sadd.s32 %s1283, %s290
    %s1285 = sld [smem:[#allocation3 + %s1284]]
    %s1286 = scalar_lea.vmem [#allocation4], %s1285
    %v1287 = vld [vmem:[%s1286] sm:$0x1]
    %v1289 = vrot.slane %v1251, 7
    %v1292 = vrot.slane %v1257, 6
    %v1295 = vrot.slane %v1263, 5
    %v1298 = vrot.slane %v1269, 4
    %v1301 = vrot.slane %v1275, 3
    %v1304 = vrot.slane %v1281, 2
    %v1307 = vrot.slane %v1287, 1
    %v1309 = vsel %vm164, %v1245, %v1289
    %v1310 = vsel %vm166, %v1309, %v1292
    %v1311 = vsel %vm168, %v1310, %v1295
    %v1312 = vsel %vm170, %v1311, %v1298
    %v1313 = vsel %vm172, %v1312, %v1301
    %v1314 = vsel %vm174, %v1313, %v1304
    %v1315 = vsel %vm176, %v1314, %v1307
    %v1316 = vld [vmem:[%s323] sm:$0xff]
    %v1317 = vadd.f32 %v1315, %v1316
    %1318 = vadd.xlane.f32.xlu0 %v1317
    %v1319 = vpop.xlane.xlu0 %1318
    %v1320 = vmul.f32 %v1319, %v182
    %v1321 = vsub.f32 %v1317, %v1320
    %v1322 = vmul.f32 %v1321, %v1321
    %1323 = vadd.xlane.f32.xlu0 %v1322
    %v1324 = vpop.xlane.xlu0 %1323
    %v1325 = vmul.f32 %v1324, %v182
    %v1326 = vadd.f32 %v1325, 1e-05
    %v1327 = vrsqrt.pop %v1326
    %v1328 = vmul.f32 %v1321, %v1327
    %v1329 = vmul.f32 %v1328, %v196
    %v1330 = vadd.f32 %v1329, %v203
    %s1331 = sadd.s32 8, 64
    %s1332 = scalar_lea.vmem [#allocation9], %s1331
    %1333 = vst [vmem:[%s1332] sm:$0xff] %v1330
    %s1334 = sadd.s32 %s342, %s1145
    %s1335 = smul.u32 %s1334, 128
    %s1336 = sadd.s32 %s1335, %s347
    %s1337 = sld [smem:[#allocation3 + %s1336]]
    %s1338 = scalar_lea.vmem [#allocation4], %s1337
    %v1339 = vld [vmem:[%s1338] sm:$0x1]
    %s1340 = sadd.s32 %s353, %s1145
    %s1341 = smul.u32 %s1340, 128
    %s1342 = sadd.s32 %s1341, %s358
    %s1343 = sld [smem:[#allocation3 + %s1342]]
    %s1344 = scalar_lea.vmem [#allocation4], %s1343
    %v1345 = vld [vmem:[%s1344] sm:$0x1]
    %s1346 = sadd.s32 %s364, %s1145
    %s1347 = smul.u32 %s1346, 128
    %s1348 = sadd.s32 %s1347, %s369
    %s1349 = sld [smem:[#allocation3 + %s1348]]
    %s1350 = scalar_lea.vmem [#allocation4], %s1349
    %v1351 = vld [vmem:[%s1350] sm:$0x1]
    %s1352 = sadd.s32 %s375, %s1145
    %s1353 = smul.u32 %s1352, 128
    %s1354 = sadd.s32 %s1353, %s380
    %s1355 = sld [smem:[#allocation3 + %s1354]]
    %s1356 = scalar_lea.vmem [#allocation4], %s1355
    %v1357 = vld [vmem:[%s1356] sm:$0x1]
    %s1358 = sadd.s32 %s386, %s1145
    %s1359 = smul.u32 %s1358, 128
    %s1360 = sadd.s32 %s1359, %s391
    %s1361 = sld [smem:[#allocation3 + %s1360]]
    %s1362 = scalar_lea.vmem [#allocation4], %s1361
    %v1363 = vld [vmem:[%s1362] sm:$0x1]
    %s1364 = sadd.s32 %s397, %s1145
    %s1365 = smul.u32 %s1364, 128
    %s1366 = sadd.s32 %s1365, %s402
    %s1367 = sld [smem:[#allocation3 + %s1366]]
    %s1368 = scalar_lea.vmem [#allocation4], %s1367
    %v1369 = vld [vmem:[%s1368] sm:$0x1]
    %s1370 = sadd.s32 %s408, %s1145
    %s1371 = smul.u32 %s1370, 128
    %s1372 = sadd.s32 %s1371, %s413
    %s1373 = sld [smem:[#allocation3 + %s1372]]
    %s1374 = scalar_lea.vmem [#allocation4], %s1373
    %v1375 = vld [vmem:[%s1374] sm:$0x1]
    %s1376 = sadd.s32 %s419, %s1145
    %s1377 = smul.u32 %s1376, 128
    %s1378 = sadd.s32 %s1377, %s424
    %s1379 = sld [smem:[#allocation3 + %s1378]]
    %s1380 = scalar_lea.vmem [#allocation4], %s1379
    %v1381 = vld [vmem:[%s1380] sm:$0x1]
    %v1383 = vrot.slane %v1345, 7
    %v1386 = vrot.slane %v1351, 6
    %v1389 = vrot.slane %v1357, 5
    %v1392 = vrot.slane %v1363, 4
    %v1395 = vrot.slane %v1369, 3
    %v1398 = vrot.slane %v1375, 2
    %v1401 = vrot.slane %v1381, 1
    %v1403 = vsel %vm164, %v1339, %v1383
    %v1404 = vsel %vm166, %v1403, %v1386
    %v1405 = vsel %vm168, %v1404, %v1389
    %v1406 = vsel %vm170, %v1405, %v1392
    %v1407 = vsel %vm172, %v1406, %v1395
    %v1408 = vsel %vm174, %v1407, %v1398
    %v1409 = vsel %vm176, %v1408, %v1401
    %v1410 = vld [vmem:[%s457] sm:$0xff]
    %v1411 = vadd.f32 %v1409, %v1410
    %1412 = vadd.xlane.f32.xlu0 %v1411
    %v1413 = vpop.xlane.xlu0 %1412
    %v1414 = vmul.f32 %v1413, %v182
    %v1415 = vsub.f32 %v1411, %v1414
    %v1416 = vmul.f32 %v1415, %v1415
    %1417 = vadd.xlane.f32.xlu0 %v1416
    %v1418 = vpop.xlane.xlu0 %1417
    %v1419 = vmul.f32 %v1418, %v182
    %v1420 = vadd.f32 %v1419, 1e-05
    %v1421 = vrsqrt.pop %v1420
    %v1422 = vmul.f32 %v1415, %v1421
    %v1423 = vmul.f32 %v1422, %v196
    %v1424 = vadd.f32 %v1423, %v203
    %s1425 = sadd.s32 16, 64
    %s1426 = scalar_lea.vmem [#allocation9], %s1425
    %1427 = vst [vmem:[%s1426] sm:$0xff] %v1424
    %s1428 = sadd.s32 %s476, %s1145
    %s1429 = smul.u32 %s1428, 128
    %s1430 = sadd.s32 %s1429, %s481
    %s1431 = sld [smem:[#allocation3 + %s1430]]
    %s1432 = scalar_lea.vmem [#allocation4], %s1431
    %v1433 = vld [vmem:[%s1432] sm:$0x1]
    %s1434 = sadd.s32 %s487, %s1145
    %s1435 = smul.u32 %s1434, 128
    %s1436 = sadd.s32 %s1435, %s492
    %s1437 = sld [smem:[#allocation3 + %s1436]]
    %s1438 = scalar_lea.vmem [#allocation4], %s1437
    %v1439 = vld [vmem:[%s1438] sm:$0x1]
    %s1440 = sadd.s32 %s498, %s1145
    %s1441 = smul.u32 %s1440, 128
    %s1442 = sadd.s32 %s1441, %s503
    %s1443 = sld [smem:[#allocation3 + %s1442]]
    %s1444 = scalar_lea.vmem [#allocation4], %s1443
    %v1445 = vld [vmem:[%s1444] sm:$0x1]
    %s1446 = sadd.s32 %s509, %s1145
    %s1447 = smul.u32 %s1446, 128
    %s1448 = sadd.s32 %s1447, %s514
    %s1449 = sld [smem:[#allocation3 + %s1448]]
    %s1450 = scalar_lea.vmem [#allocation4], %s1449
    %v1451 = vld [vmem:[%s1450] sm:$0x1]
    %s1452 = sadd.s32 %s520, %s1145
    %s1453 = smul.u32 %s1452, 128
    %s1454 = sadd.s32 %s1453, %s525
    %s1455 = sld [smem:[#allocation3 + %s1454]]
    %s1456 = scalar_lea.vmem [#allocation4], %s1455
    %v1457 = vld [vmem:[%s1456] sm:$0x1]
    %s1458 = sadd.s32 %s531, %s1145
    %s1459 = smul.u32 %s1458, 128
    %s1460 = sadd.s32 %s1459, %s536
    %s1461 = sld [smem:[#allocation3 + %s1460]]
    %s1462 = scalar_lea.vmem [#allocation4], %s1461
    %v1463 = vld [vmem:[%s1462] sm:$0x1]
    %s1464 = sadd.s32 %s542, %s1145
    %s1465 = smul.u32 %s1464, 128
    %s1466 = sadd.s32 %s1465, %s547
    %s1467 = sld [smem:[#allocation3 + %s1466]]
    %s1468 = scalar_lea.vmem [#allocation4], %s1467
    %v1469 = vld [vmem:[%s1468] sm:$0x1]
    %s1470 = sadd.s32 %s553, %s1145
    %s1471 = smul.u32 %s1470, 128
    %s1472 = sadd.s32 %s1471, %s558
    %s1473 = sld [smem:[#allocation3 + %s1472]]
    %s1474 = scalar_lea.vmem [#allocation4], %s1473
    %v1475 = vld [vmem:[%s1474] sm:$0x1]
    %v1477 = vrot.slane %v1439, 7
    %v1480 = vrot.slane %v1445, 6
    %v1483 = vrot.slane %v1451, 5
    %v1486 = vrot.slane %v1457, 4
    %v1489 = vrot.slane %v1463, 3
    %v1492 = vrot.slane %v1469, 2
    %v1495 = vrot.slane %v1475, 1
    %v1497 = vsel %vm164, %v1433, %v1477
    %v1498 = vsel %vm166, %v1497, %v1480
    %v1499 = vsel %vm168, %v1498, %v1483
    %v1500 = vsel %vm170, %v1499, %v1486
    %v1501 = vsel %vm172, %v1500, %v1489
    %v1502 = vsel %vm174, %v1501, %v1492
    %v1503 = vsel %vm176, %v1502, %v1495
    %v1504 = vld [vmem:[%s591] sm:$0xff]
    %v1505 = vadd.f32 %v1503, %v1504
    %1506 = vadd.xlane.f32.xlu0 %v1505
    %v1507 = vpop.xlane.xlu0 %1506
    %v1508 = vmul.f32 %v1507, %v182
    %v1509 = vsub.f32 %v1505, %v1508
    %v1510 = vmul.f32 %v1509, %v1509
    %1511 = vadd.xlane.f32.xlu0 %v1510
    %v1512 = vpop.xlane.xlu0 %1511
    %v1513 = vmul.f32 %v1512, %v182
    %v1514 = vadd.f32 %v1513, 1e-05
    %v1515 = vrsqrt.pop %v1514
    %v1516 = vmul.f32 %v1509, %v1515
    %v1517 = vmul.f32 %v1516, %v196
    %v1518 = vadd.f32 %v1517, %v203
    %s1519 = sadd.s32 24, 64
    %s1520 = scalar_lea.vmem [#allocation9], %s1519
    %1521 = vst [vmem:[%s1520] sm:$0xff] %v1518
    %s1522 = sadd.s32 %s610, %s1145
    %s1523 = smul.u32 %s1522, 128
    %s1524 = sadd.s32 %s1523, %s615
    %s1525 = sld [smem:[#allocation3 + %s1524]]
    %s1526 = scalar_lea.vmem [#allocation4], %s1525
    %v1527 = vld [vmem:[%s1526] sm:$0x1]
    %s1528 = sadd.s32 %s621, %s1145
    %s1529 = smul.u32 %s1528, 128
    %s1530 = sadd.s32 %s1529, %s626
    %s1531 = sld [smem:[#allocation3 + %s1530]]
    %s1532 = scalar_lea.vmem [#allocation4], %s1531
    %v1533 = vld [vmem:[%s1532] sm:$0x1]
    %s1534 = sadd.s32 %s632, %s1145
    %s1535 = smul.u32 %s1534, 128
    %s1536 = sadd.s32 %s1535, %s637
    %s1537 = sld [smem:[#allocation3 + %s1536]]
    %s1538 = scalar_lea.vmem [#allocation4], %s1537
    %v1539 = vld [vmem:[%s1538] sm:$0x1]
    %s1540 = sadd.s32 %s643, %s1145
    %s1541 = smul.u32 %s1540, 128
    %s1542 = sadd.s32 %s1541, %s648
    %s1543 = sld [smem:[#allocation3 + %s1542]]
    %s1544 = scalar_lea.vmem [#allocation4], %s1543
    %v1545 = vld [vmem:[%s1544] sm:$0x1]
    %s1546 = sadd.s32 %s654, %s1145
    %s1547 = smul.u32 %s1546, 128
    %s1548 = sadd.s32 %s1547, %s659
    %s1549 = sld [smem:[#allocation3 + %s1548]]
    %s1550 = scalar_lea.vmem [#allocation4], %s1549
    %v1551 = vld [vmem:[%s1550] sm:$0x1]
    %s1552 = sadd.s32 %s665, %s1145
    %s1553 = smul.u32 %s1552, 128
    %s1554 = sadd.s32 %s1553, %s670
    %s1555 = sld [smem:[#allocation3 + %s1554]]
    %s1556 = scalar_lea.vmem [#allocation4], %s1555
    %v1557 = vld [vmem:[%s1556] sm:$0x1]
    %s1558 = sadd.s32 %s676, %s1145
    %s1559 = smul.u32 %s1558, 128
    %s1560 = sadd.s32 %s1559, %s681
    %s1561 = sld [smem:[#allocation3 + %s1560]]
    %s1562 = scalar_lea.vmem [#allocation4], %s1561
    %v1563 = vld [vmem:[%s1562] sm:$0x1]
    %s1564 = sadd.s32 %s687, %s1145
    %s1565 = smul.u32 %s1564, 128
    %s1566 = sadd.s32 %s1565, %s692
    %s1567 = sld [smem:[#allocation3 + %s1566]]
    %s1568 = scalar_lea.vmem [#allocation4], %s1567
    %v1569 = vld [vmem:[%s1568] sm:$0x1]
    %v1571 = vrot.slane %v1533, 7
    %v1574 = vrot.slane %v1539, 6
    %v1577 = vrot.slane %v1545, 5
    %v1580 = vrot.slane %v1551, 4
    %v1583 = vrot.slane %v1557, 3
    %v1586 = vrot.slane %v1563, 2
    %v1589 = vrot.slane %v1569, 1
    %v1591 = vsel %vm164, %v1527, %v1571
    %v1592 = vsel %vm166, %v1591, %v1574
    %v1593 = vsel %vm168, %v1592, %v1577
    %v1594 = vsel %vm170, %v1593, %v1580
    %v1595 = vsel %vm172, %v1594, %v1583
    %v1596 = vsel %vm174, %v1595, %v1586
    %v1597 = vsel %vm176, %v1596, %v1589
    %v1598 = vld [vmem:[%s725] sm:$0xff]
    %v1599 = vadd.f32 %v1597, %v1598
    %1600 = vadd.xlane.f32.xlu0 %v1599
    %v1601 = vpop.xlane.xlu0 %1600
    %v1602 = vmul.f32 %v1601, %v182
    %v1603 = vsub.f32 %v1599, %v1602
    %v1604 = vmul.f32 %v1603, %v1603
    %1605 = vadd.xlane.f32.xlu0 %v1604
    %v1606 = vpop.xlane.xlu0 %1605
    %v1607 = vmul.f32 %v1606, %v182
    %v1608 = vadd.f32 %v1607, 1e-05
    %v1609 = vrsqrt.pop %v1608
    %v1610 = vmul.f32 %v1603, %v1609
    %v1611 = vmul.f32 %v1610, %v196
    %v1612 = vadd.f32 %v1611, %v203
    %s1613 = sadd.s32 32, 64
    %s1614 = scalar_lea.vmem [#allocation9], %s1613
    %1615 = vst [vmem:[%s1614] sm:$0xff] %v1612
    %s1616 = sadd.s32 %s744, %s1145
    %s1617 = smul.u32 %s1616, 128
    %s1618 = sadd.s32 %s1617, %s749
    %s1619 = sld [smem:[#allocation3 + %s1618]]
    %s1620 = scalar_lea.vmem [#allocation4], %s1619
    %v1621 = vld [vmem:[%s1620] sm:$0x1]
    %s1622 = sadd.s32 %s755, %s1145
    %s1623 = smul.u32 %s1622, 128
    %s1624 = sadd.s32 %s1623, %s760
    %s1625 = sld [smem:[#allocation3 + %s1624]]
    %s1626 = scalar_lea.vmem [#allocation4], %s1625
    %v1627 = vld [vmem:[%s1626] sm:$0x1]
    %s1628 = sadd.s32 %s766, %s1145
    %s1629 = smul.u32 %s1628, 128
    %s1630 = sadd.s32 %s1629, %s771
    %s1631 = sld [smem:[#allocation3 + %s1630]]
    %s1632 = scalar_lea.vmem [#allocation4], %s1631
    %v1633 = vld [vmem:[%s1632] sm:$0x1]
    %s1634 = sadd.s32 %s777, %s1145
    %s1635 = smul.u32 %s1634, 128
    %s1636 = sadd.s32 %s1635, %s782
    %s1637 = sld [smem:[#allocation3 + %s1636]]
    %s1638 = scalar_lea.vmem [#allocation4], %s1637
    %v1639 = vld [vmem:[%s1638] sm:$0x1]
    %s1640 = sadd.s32 %s788, %s1145
    %s1641 = smul.u32 %s1640, 128
    %s1642 = sadd.s32 %s1641, %s793
    %s1643 = sld [smem:[#allocation3 + %s1642]]
    %s1644 = scalar_lea.vmem [#allocation4], %s1643
    %v1645 = vld [vmem:[%s1644] sm:$0x1]
    %s1646 = sadd.s32 %s799, %s1145
    %s1647 = smul.u32 %s1646, 128
    %s1648 = sadd.s32 %s1647, %s804
    %s1649 = sld [smem:[#allocation3 + %s1648]]
    %s1650 = scalar_lea.vmem [#allocation4], %s1649
    %v1651 = vld [vmem:[%s1650] sm:$0x1]
    %s1652 = sadd.s32 %s810, %s1145
    %s1653 = smul.u32 %s1652, 128
    %s1654 = sadd.s32 %s1653, %s815
    %s1655 = sld [smem:[#allocation3 + %s1654]]
    %s1656 = scalar_lea.vmem [#allocation4], %s1655
    %v1657 = vld [vmem:[%s1656] sm:$0x1]
    %s1658 = sadd.s32 %s821, %s1145
    %s1659 = smul.u32 %s1658, 128
    %s1660 = sadd.s32 %s1659, %s826
    %s1661 = sld [smem:[#allocation3 + %s1660]]
    %s1662 = scalar_lea.vmem [#allocation4], %s1661
    %v1663 = vld [vmem:[%s1662] sm:$0x1]
    %v1665 = vrot.slane %v1627, 7
    %v1668 = vrot.slane %v1633, 6
    %v1671 = vrot.slane %v1639, 5
    %v1674 = vrot.slane %v1645, 4
    %v1677 = vrot.slane %v1651, 3
    %v1680 = vrot.slane %v1657, 2
    %v1683 = vrot.slane %v1663, 1
    %v1685 = vsel %vm164, %v1621, %v1665
    %v1686 = vsel %vm166, %v1685, %v1668
    %v1687 = vsel %vm168, %v1686, %v1671
    %v1688 = vsel %vm170, %v1687, %v1674
    %v1689 = vsel %vm172, %v1688, %v1677
    %v1690 = vsel %vm174, %v1689, %v1680
    %v1691 = vsel %vm176, %v1690, %v1683
    %v1692 = vld [vmem:[%s859] sm:$0xff]
    %v1693 = vadd.f32 %v1691, %v1692
    %1694 = vadd.xlane.f32.xlu0 %v1693
    %v1695 = vpop.xlane.xlu0 %1694
    %v1696 = vmul.f32 %v1695, %v182
    %v1697 = vsub.f32 %v1693, %v1696
    %v1698 = vmul.f32 %v1697, %v1697
    %1699 = vadd.xlane.f32.xlu0 %v1698
    %v1700 = vpop.xlane.xlu0 %1699
    %v1701 = vmul.f32 %v1700, %v182
    %v1702 = vadd.f32 %v1701, 1e-05
    %v1703 = vrsqrt.pop %v1702
    %v1704 = vmul.f32 %v1697, %v1703
    %v1705 = vmul.f32 %v1704, %v196
    %v1706 = vadd.f32 %v1705, %v203
    %s1707 = sadd.s32 40, 64
    %s1708 = scalar_lea.vmem [#allocation9], %s1707
    %1709 = vst [vmem:[%s1708] sm:$0xff] %v1706
    %s1710 = sadd.s32 %s878, %s1145
    %s1711 = smul.u32 %s1710, 128
    %s1712 = sadd.s32 %s1711, %s883
    %s1713 = sld [smem:[#allocation3 + %s1712]]
    %s1714 = scalar_lea.vmem [#allocation4], %s1713
    %v1715 = vld [vmem:[%s1714] sm:$0x1]
    %s1716 = sadd.s32 %s889, %s1145
    %s1717 = smul.u32 %s1716, 128
    %s1718 = sadd.s32 %s1717, %s894
    %s1719 = sld [smem:[#allocation3 + %s1718]]
    %s1720 = scalar_lea.vmem [#allocation4], %s1719
    %v1721 = vld [vmem:[%s1720] sm:$0x1]
    %s1722 = sadd.s32 %s900, %s1145
    %s1723 = smul.u32 %s1722, 128
    %s1724 = sadd.s32 %s1723, %s905
    %s1725 = sld [smem:[#allocation3 + %s1724]]
    %s1726 = scalar_lea.vmem [#allocation4], %s1725
    %v1727 = vld [vmem:[%s1726] sm:$0x1]
    %s1728 = sadd.s32 %s911, %s1145
    %s1729 = smul.u32 %s1728, 128
    %s1730 = sadd.s32 %s1729, %s916
    %s1731 = sld [smem:[#allocation3 + %s1730]]
    %s1732 = scalar_lea.vmem [#allocation4], %s1731
    %v1733 = vld [vmem:[%s1732] sm:$0x1]
    %s1734 = sadd.s32 %s922, %s1145
    %s1735 = smul.u32 %s1734, 128
    %s1736 = sadd.s32 %s1735, %s927
    %s1737 = sld [smem:[#allocation3 + %s1736]]
    %s1738 = scalar_lea.vmem [#allocation4], %s1737
    %v1739 = vld [vmem:[%s1738] sm:$0x1]
    %s1740 = sadd.s32 %s933, %s1145
    %s1741 = smul.u32 %s1740, 128
    %s1742 = sadd.s32 %s1741, %s938
    %s1743 = sld [smem:[#allocation3 + %s1742]]
    %s1744 = scalar_lea.vmem [#allocation4], %s1743
    %v1745 = vld [vmem:[%s1744] sm:$0x1]
    %s1746 = sadd.s32 %s944, %s1145
    %s1747 = smul.u32 %s1746, 128
    %s1748 = sadd.s32 %s1747, %s949
    %s1749 = sld [smem:[#allocation3 + %s1748]]
    %s1750 = scalar_lea.vmem [#allocation4], %s1749
    %v1751 = vld [vmem:[%s1750] sm:$0x1]
    %s1752 = sadd.s32 %s955, %s1145
    %s1753 = smul.u32 %s1752, 128
    %s1754 = sadd.s32 %s1753, %s960
    %s1755 = sld [smem:[#allocation3 + %s1754]]
    %s1756 = scalar_lea.vmem [#allocation4], %s1755
    %v1757 = vld [vmem:[%s1756] sm:$0x1]
    %v1759 = vrot.slane %v1721, 7
    %v1762 = vrot.slane %v1727, 6
    %v1765 = vrot.slane %v1733, 5
    %v1768 = vrot.slane %v1739, 4
    %v1771 = vrot.slane %v1745, 3
    %v1774 = vrot.slane %v1751, 2
    %v1777 = vrot.slane %v1757, 1
    %v1779 = vsel %vm164, %v1715, %v1759
    %v1780 = vsel %vm166, %v1779, %v1762
    %v1781 = vsel %vm168, %v1780, %v1765
    %v1782 = vsel %vm170, %v1781, %v1768
    %v1783 = vsel %vm172, %v1782, %v1771
    %v1784 = vsel %vm174, %v1783, %v1774
    %v1785 = vsel %vm176, %v1784, %v1777
    %v1786 = vld [vmem:[%s993] sm:$0xff]
    %v1787 = vadd.f32 %v1785, %v1786
    %1788 = vadd.xlane.f32.xlu0 %v1787
    %v1789 = vpop.xlane.xlu0 %1788
    %v1790 = vmul.f32 %v1789, %v182
    %v1791 = vsub.f32 %v1787, %v1790
    %v1792 = vmul.f32 %v1791, %v1791
    %1793 = vadd.xlane.f32.xlu0 %v1792
    %v1794 = vpop.xlane.xlu0 %1793
    %v1795 = vmul.f32 %v1794, %v182
    %v1796 = vadd.f32 %v1795, 1e-05
    %v1797 = vrsqrt.pop %v1796
    %v1798 = vmul.f32 %v1791, %v1797
    %v1799 = vmul.f32 %v1798, %v196
    %v1800 = vadd.f32 %v1799, %v203
    %s1801 = sadd.s32 48, 64
    %s1802 = scalar_lea.vmem [#allocation9], %s1801
    %1803 = vst [vmem:[%s1802] sm:$0xff] %v1800
    %s1804 = sadd.s32 %s1012, %s1145
    %s1805 = smul.u32 %s1804, 128
    %s1806 = sadd.s32 %s1805, %s1017
    %s1807 = sld [smem:[#allocation3 + %s1806]]
    %s1808 = scalar_lea.vmem [#allocation4], %s1807
    %v1809 = vld [vmem:[%s1808] sm:$0x1]
    %s1810 = sadd.s32 %s1023, %s1145
    %s1811 = smul.u32 %s1810, 128
    %s1812 = sadd.s32 %s1811, %s1028
    %s1813 = sld [smem:[#allocation3 + %s1812]]
    %s1814 = scalar_lea.vmem [#allocation4], %s1813
    %v1815 = vld [vmem:[%s1814] sm:$0x1]
    %s1816 = sadd.s32 %s1034, %s1145
    %s1817 = smul.u32 %s1816, 128
    %s1818 = sadd.s32 %s1817, %s1039
    %s1819 = sld [smem:[#allocation3 + %s1818]]
    %s1820 = scalar_lea.vmem [#allocation4], %s1819
    %v1821 = vld [vmem:[%s1820] sm:$0x1]
    %s1822 = sadd.s32 %s1045, %s1145
    %s1823 = smul.u32 %s1822, 128
    %s1824 = sadd.s32 %s1823, %s1050
    %s1825 = sld [smem:[#allocation3 + %s1824]]
    %s1826 = scalar_lea.vmem [#allocation4], %s1825
    %v1827 = vld [vmem:[%s1826] sm:$0x1]
    %s1828 = sadd.s32 %s1056, %s1145
    %s1829 = smul.u32 %s1828, 128
    %s1830 = sadd.s32 %s1829, %s1061
    %s1831 = sld [smem:[#allocation3 + %s1830]]
    %s1832 = scalar_lea.vmem [#allocation4], %s1831
    %v1833 = vld [vmem:[%s1832] sm:$0x1]
    %s1834 = sadd.s32 %s1067, %s1145
    %s1835 = smul.u32 %s1834, 128
    %s1836 = sadd.s32 %s1835, %s1072
    %s1837 = sld [smem:[#allocation3 + %s1836]]
    %s1838 = scalar_lea.vmem [#allocation4], %s1837
    %v1839 = vld [vmem:[%s1838] sm:$0x1]
    %s1840 = sadd.s32 %s1078, %s1145
    %s1841 = smul.u32 %s1840, 128
    %s1842 = sadd.s32 %s1841, %s1083
    %s1843 = sld [smem:[#allocation3 + %s1842]]
    %s1844 = scalar_lea.vmem [#allocation4], %s1843
    %v1845 = vld [vmem:[%s1844] sm:$0x1]
    %s1846 = sadd.s32 %s1089, %s1145
    %s1847 = smul.u32 %s1846, 128
    %s1848 = sadd.s32 %s1847, %s1094
    %s1849 = sld [smem:[#allocation3 + %s1848]]
    %s1850 = scalar_lea.vmem [#allocation4], %s1849
    %v1851 = vld [vmem:[%s1850] sm:$0x1]
    %v1853 = vrot.slane %v1815, 7
    %v1856 = vrot.slane %v1821, 6
    %v1859 = vrot.slane %v1827, 5
    %v1862 = vrot.slane %v1833, 4
    %v1865 = vrot.slane %v1839, 3
    %v1868 = vrot.slane %v1845, 2
    %v1871 = vrot.slane %v1851, 1
    %v1873 = vsel %vm164, %v1809, %v1853
    %v1874 = vsel %vm166, %v1873, %v1856
    %v1875 = vsel %vm168, %v1874, %v1859
    %v1876 = vsel %vm170, %v1875, %v1862
    %v1877 = vsel %vm172, %v1876, %v1865
    %v1878 = vsel %vm174, %v1877, %v1868
    %v1879 = vsel %vm176, %v1878, %v1871
    %v1880 = vld [vmem:[%s1127] sm:$0xff]
    %v1881 = vadd.f32 %v1879, %v1880
    %1882 = vadd.xlane.f32.xlu0 %v1881
    %v1883 = vpop.xlane.xlu0 %1882
    %v1884 = vmul.f32 %v1883, %v182
    %v1885 = vsub.f32 %v1881, %v1884
    %v1886 = vmul.f32 %v1885, %v1885
    %1887 = vadd.xlane.f32.xlu0 %v1886
    %v1888 = vpop.xlane.xlu0 %1887
    %v1889 = vmul.f32 %v1888, %v182
    %v1890 = vadd.f32 %v1889, 1e-05
    %v1891 = vrsqrt.pop %v1890
    %v1892 = vmul.f32 %v1885, %v1891
    %v1893 = vmul.f32 %v1892, %v196
    %v1894 = vadd.f32 %v1893, %v203
    %s1895 = sadd.s32 56, 64
    %s1896 = scalar_lea.vmem [#allocation9], %s1895
    %1897 = vst [vmem:[%s1896] sm:$0xff] %v1894
    %s1898 = sadd.s32 %s51, 2
    %s1899 = sadd.s32 %s56, %s1898
    %s1900 = smul.u32 %s1899, 128
    %s1901 = sadd.s32 %s1900, %s61
    %s1902 = sld [smem:[#allocation3 + %s1901]]
    %s1903 = scalar_lea.vmem [#allocation4], %s1902
    %v1904 = vld [vmem:[%s1903] sm:$0x1]
    %s1905 = sadd.s32 %s67, %s1898
    %s1906 = smul.u32 %s1905, 128
    %s1907 = sadd.s32 %s1906, %s72
    %s1908 = sld [smem:[#allocation3 + %s1907]]
    %s1909 = scalar_lea.vmem [#allocation4], %s1908
    %v1910 = vld [vmem:[%s1909] sm:$0x1]
    %s1911 = sadd.s32 %s78, %s1898
    %s1912 = smul.u32 %s1911, 128
    %s1913 = sadd.s32 %s1912, %s83
    %s1914 = sld [smem:[#allocation3 + %s1913]]
    %s1915 = scalar_lea.vmem [#allocation4], %s1914
    %v1916 = vld [vmem:[%s1915] sm:$0x1]
    %s1917 = sadd.s32 %s89, %s1898
    %s1918 = smul.u32 %s1917, 128
    %s1919 = sadd.s32 %s1918, %s94
    %s1920 = sld [smem:[#allocation3 + %s1919]]
    %s1921 = scalar_lea.vmem [#allocation4], %s1920
    %v1922 = vld [vmem:[%s1921] sm:$0x1]
    %s1923 = sadd.s32 %s100, %s1898
    %s1924 = smul.u32 %s1923, 128
    %s1925 = sadd.s32 %s1924, %s105
    %s1926 = sld [smem:[#allocation3 + %s1925]]
    %s1927 = scalar_lea.vmem [#allocation4], %s1926
    %v1928 = vld [vmem:[%s1927] sm:$0x1]
    %s1929 = sadd.s32 %s111, %s1898
    %s1930 = smul.u32 %s1929, 128
    %s1931 = sadd.s32 %s1930, %s116
    %s1932 = sld [smem:[#allocation3 + %s1931]]
    %s1933 = scalar_lea.vmem [#allocation4], %s1932
    %v1934 = vld [vmem:[%s1933] sm:$0x1]
    %s1935 = sadd.s32 %s122, %s1898
    %s1936 = smul.u32 %s1935, 128
    %s1937 = sadd.s32 %s1936, %s127
    %s1938 = sld [smem:[#allocation3 + %s1937]]
    %s1939 = scalar_lea.vmem [#allocation4], %s1938
    %v1940 = vld [vmem:[%s1939] sm:$0x1]
    %s1941 = sadd.s32 %s133, %s1898
    %s1942 = smul.u32 %s1941, 128
    %s1943 = sadd.s32 %s1942, %s138
    %s1944 = sld [smem:[#allocation3 + %s1943]]
    %s1945 = scalar_lea.vmem [#allocation4], %s1944
    %v1946 = vld [vmem:[%s1945] sm:$0x1]
    %v1948 = vrot.slane %v1910, 7
    %v1951 = vrot.slane %v1916, 6
    %v1954 = vrot.slane %v1922, 5
    %v1957 = vrot.slane %v1928, 4
    %v1960 = vrot.slane %v1934, 3
    %v1963 = vrot.slane %v1940, 2
    %v1966 = vrot.slane %v1946, 1
    %v1968 = vsel %vm164, %v1904, %v1948
    %v1969 = vsel %vm166, %v1968, %v1951
    %v1970 = vsel %vm168, %v1969, %v1954
    %v1971 = vsel %vm170, %v1970, %v1957
    %v1972 = vsel %vm172, %v1971, %v1960
    %v1973 = vsel %vm174, %v1972, %v1963
    %v1974 = vsel %vm176, %v1973, %v1966
    %v1975 = vld [vmem:[#allocation7] sm:$0xff]
    %v1976 = vadd.f32 %v1974, %v1975
    %1977 = vadd.xlane.f32.xlu0 %v1976
    %v1978 = vpop.xlane.xlu0 %1977
    %v1979 = vmul.f32 %v1978, %v182
    %v1980 = vsub.f32 %v1976, %v1979
    %v1981 = vmul.f32 %v1980, %v1980
    %1982 = vadd.xlane.f32.xlu0 %v1981
    %v1983 = vpop.xlane.xlu0 %1982
    %v1984 = vmul.f32 %v1983, %v182
    %v1985 = vadd.f32 %v1984, 1e-05
    %v1986 = vrsqrt.pop %v1985
    %v1987 = vmul.f32 %v1980, %v1986
    %v1988 = vmul.f32 %v1987, %v196
    %v1989 = vadd.f32 %v1988, %v203
    %s1990 = sadd.s32 0, 128
    %s1991 = scalar_lea.vmem [#allocation9], %s1990
    %1992 = vst [vmem:[%s1991] sm:$0xff] %v1989
    %s1993 = sadd.s32 %s208, %s1898
    %s1994 = smul.u32 %s1993, 128
    %s1995 = sadd.s32 %s1994, %s213
    %s1996 = sld [smem:[#allocation3 + %s1995]]
    %s1997 = scalar_lea.vmem [#allocation4], %s1996
    %v1998 = vld [vmem:[%s1997] sm:$0x1]
    %s1999 = sadd.s32 %s219, %s1898
    %s2000 = smul.u32 %s1999, 128
    %s2001 = sadd.s32 %s2000, %s224
    %s2002 = sld [smem:[#allocation3 + %s2001]]
    %s2003 = scalar_lea.vmem [#allocation4], %s2002
    %v2004 = vld [vmem:[%s2003] sm:$0x1]
    %s2005 = sadd.s32 %s230, %s1898
    %s2006 = smul.u32 %s2005, 128
    %s2007 = sadd.s32 %s2006, %s235
    %s2008 = sld [smem:[#allocation3 + %s2007]]
    %s2009 = scalar_lea.vmem [#allocation4], %s2008
    %v2010 = vld [vmem:[%s2009] sm:$0x1]
    %s2011 = sadd.s32 %s241, %s1898
    %s2012 = smul.u32 %s2011, 128
    %s2013 = sadd.s32 %s2012, %s246
    %s2014 = sld [smem:[#allocation3 + %s2013]]
    %s2015 = scalar_lea.vmem [#allocation4], %s2014
    %v2016 = vld [vmem:[%s2015] sm:$0x1]
    %s2017 = sadd.s32 %s252, %s1898
    %s2018 = smul.u32 %s2017, 128
    %s2019 = sadd.s32 %s2018, %s257
    %s2020 = sld [smem:[#allocation3 + %s2019]]
    %s2021 = scalar_lea.vmem [#allocation4], %s2020
    %v2022 = vld [vmem:[%s2021] sm:$0x1]
    %s2023 = sadd.s32 %s263, %s1898
    %s2024 = smul.u32 %s2023, 128
    %s2025 = sadd.s32 %s2024, %s268
    %s2026 = sld [smem:[#allocation3 + %s2025]]
    %s2027 = scalar_lea.vmem [#allocation4], %s2026
    %v2028 = vld [vmem:[%s2027] sm:$0x1]
    %s2029 = sadd.s32 %s274, %s1898
    %s2030 = smul.u32 %s2029, 128
    %s2031 = sadd.s32 %s2030, %s279
    %s2032 = sld [smem:[#allocation3 + %s2031]]
    %s2033 = scalar_lea.vmem [#allocation4], %s2032
    %v2034 = vld [vmem:[%s2033] sm:$0x1]
    %s2035 = sadd.s32 %s285, %s1898
    %s2036 = smul.u32 %s2035, 128
    %s2037 = sadd.s32 %s2036, %s290
    %s2038 = sld [smem:[#allocation3 + %s2037]]
    %s2039 = scalar_lea.vmem [#allocation4], %s2038
    %v2040 = vld [vmem:[%s2039] sm:$0x1]
    %v2042 = vrot.slane %v2004, 7
    %v2045 = vrot.slane %v2010, 6
    %v2048 = vrot.slane %v2016, 5
    %v2051 = vrot.slane %v2022, 4
    %v2054 = vrot.slane %v2028, 3
    %v2057 = vrot.slane %v2034, 2
    %v2060 = vrot.slane %v2040, 1
    %v2062 = vsel %vm164, %v1998, %v2042
    %v2063 = vsel %vm166, %v2062, %v2045
    %v2064 = vsel %vm168, %v2063, %v2048
    %v2065 = vsel %vm170, %v2064, %v2051
    %v2066 = vsel %vm172, %v2065, %v2054
    %v2067 = vsel %vm174, %v2066, %v2057
    %v2068 = vsel %vm176, %v2067, %v2060
    %v2069 = vld [vmem:[%s323] sm:$0xff]
    %v2070 = vadd.f32 %v2068, %v2069
    %2071 = vadd.xlane.f32.xlu0 %v2070
    %v2072 = vpop.xlane.xlu0 %2071
    %v2073 = vmul.f32 %v2072, %v182
    %v2074 = vsub.f32 %v2070, %v2073
    %v2075 = vmul.f32 %v2074, %v2074
    %2076 = vadd.xlane.f32.xlu0 %v2075
    %v2077 = vpop.xlane.xlu0 %2076
    %v2078 = vmul.f32 %v2077, %v182
    %v2079 = vadd.f32 %v2078, 1e-05
    %v2080 = vrsqrt.pop %v2079
    %v2081 = vmul.f32 %v2074, %v2080
    %v2082 = vmul.f32 %v2081, %v196
    %v2083 = vadd.f32 %v2082, %v203
    %s2084 = sadd.s32 8, 128
    %s2085 = scalar_lea.vmem [#allocation9], %s2084
    %2086 = vst [vmem:[%s2085] sm:$0xff] %v2083
    %s2087 = sadd.s32 %s342, %s1898
    %s2088 = smul.u32 %s2087, 128
    %s2089 = sadd.s32 %s2088, %s347
    %s2090 = sld [smem:[#allocation3 + %s2089]]
    %s2091 = scalar_lea.vmem [#allocation4], %s2090
    %v2092 = vld [vmem:[%s2091] sm:$0x1]
    %s2093 = sadd.s32 %s353, %s1898
    %s2094 = smul.u32 %s2093, 128
    %s2095 = sadd.s32 %s2094, %s358
    %s2096 = sld [smem:[#allocation3 + %s2095]]
    %s2097 = scalar_lea.vmem [#allocation4], %s2096
    %v2098 = vld [vmem:[%s2097] sm:$0x1]
    %s2099 = sadd.s32 %s364, %s1898
    %s2100 = smul.u32 %s2099, 128
    %s2101 = sadd.s32 %s2100, %s369
    %s2102 = sld [smem:[#allocation3 + %s2101]]
    %s2103 = scalar_lea.vmem [#allocation4], %s2102
    %v2104 = vld [vmem:[%s2103] sm:$0x1]
    %s2105 = sadd.s32 %s375, %s1898
    %s2106 = smul.u32 %s2105, 128
    %s2107 = sadd.s32 %s2106, %s380
    %s2108 = sld [smem:[#allocation3 + %s2107]]
    %s2109 = scalar_lea.vmem [#allocation4], %s2108
    %v2110 = vld [vmem:[%s2109] sm:$0x1]
    %s2111 = sadd.s32 %s386, %s1898
    %s2112 = smul.u32 %s2111, 128
    %s2113 = sadd.s32 %s2112, %s391
    %s2114 = sld [smem:[#allocation3 + %s2113]]
    %s2115 = scalar_lea.vmem [#allocation4], %s2114
    %v2116 = vld [vmem:[%s2115] sm:$0x1]
    %s2117 = sadd.s32 %s397, %s1898
    %s2118 = smul.u32 %s2117, 128
    %s2119 = sadd.s32 %s2118, %s402
    %s2120 = sld [smem:[#allocation3 + %s2119]]
    %s2121 = scalar_lea.vmem [#allocation4], %s2120
    %v2122 = vld [vmem:[%s2121] sm:$0x1]
    %s2123 = sadd.s32 %s408, %s1898
    %s2124 = smul.u32 %s2123, 128
    %s2125 = sadd.s32 %s2124, %s413
    %s2126 = sld [smem:[#allocation3 + %s2125]]
    %s2127 = scalar_lea.vmem [#allocation4], %s2126
    %v2128 = vld [vmem:[%s2127] sm:$0x1]
    %s2129 = sadd.s32 %s419, %s1898
    %s2130 = smul.u32 %s2129, 128
    %s2131 = sadd.s32 %s2130, %s424
    %s2132 = sld [smem:[#allocation3 + %s2131]]
    %s2133 = scalar_lea.vmem [#allocation4], %s2132
    %v2134 = vld [vmem:[%s2133] sm:$0x1]
    %v2136 = vrot.slane %v2098, 7
    %v2139 = vrot.slane %v2104, 6
    %v2142 = vrot.slane %v2110, 5
    %v2145 = vrot.slane %v2116, 4
    %v2148 = vrot.slane %v2122, 3
    %v2151 = vrot.slane %v2128, 2
    %v2154 = vrot.slane %v2134, 1
    %v2156 = vsel %vm164, %v2092, %v2136
    %v2157 = vsel %vm166, %v2156, %v2139
    %v2158 = vsel %vm168, %v2157, %v2142
    %v2159 = vsel %vm170, %v2158, %v2145
    %v2160 = vsel %vm172, %v2159, %v2148
    %v2161 = vsel %vm174, %v2160, %v2151
    %v2162 = vsel %vm176, %v2161, %v2154
    %v2163 = vld [vmem:[%s457] sm:$0xff]
    %v2164 = vadd.f32 %v2162, %v2163
    %2165 = vadd.xlane.f32.xlu0 %v2164
    %v2166 = vpop.xlane.xlu0 %2165
    %v2167 = vmul.f32 %v2166, %v182
    %v2168 = vsub.f32 %v2164, %v2167
    %v2169 = vmul.f32 %v2168, %v2168
    %2170 = vadd.xlane.f32.xlu0 %v2169
    %v2171 = vpop.xlane.xlu0 %2170
    %v2172 = vmul.f32 %v2171, %v182
    %v2173 = vadd.f32 %v2172, 1e-05
    %v2174 = vrsqrt.pop %v2173
    %v2175 = vmul.f32 %v2168, %v2174
    %v2176 = vmul.f32 %v2175, %v196
    %v2177 = vadd.f32 %v2176, %v203
    %s2178 = sadd.s32 16, 128
    %s2179 = scalar_lea.vmem [#allocation9], %s2178
    %2180 = vst [vmem:[%s2179] sm:$0xff] %v2177
    %s2181 = sadd.s32 %s476, %s1898
    %s2182 = smul.u32 %s2181, 128
    %s2183 = sadd.s32 %s2182, %s481
    %s2184 = sld [smem:[#allocation3 + %s2183]]
    %s2185 = scalar_lea.vmem [#allocation4], %s2184
    %v2186 = vld [vmem:[%s2185] sm:$0x1]
    %s2187 = sadd.s32 %s487, %s1898
    %s2188 = smul.u32 %s2187, 128
    %s2189 = sadd.s32 %s2188, %s492
    %s2190 = sld [smem:[#allocation3 + %s2189]]
    %s2191 = scalar_lea.vmem [#allocation4], %s2190
    %v2192 = vld [vmem:[%s2191] sm:$0x1]
    %s2193 = sadd.s32 %s498, %s1898
    %s2194 = smul.u32 %s2193, 128
    %s2195 = sadd.s32 %s2194, %s503
    %s2196 = sld [smem:[#allocation3 + %s2195]]
    %s2197 = scalar_lea.vmem [#allocation4], %s2196
    %v2198 = vld [vmem:[%s2197] sm:$0x1]
    %s2199 = sadd.s32 %s509, %s1898
    %s2200 = smul.u32 %s2199, 128
    %s2201 = sadd.s32 %s2200, %s514
    %s2202 = sld [smem:[#allocation3 + %s2201]]
    %s2203 = scalar_lea.vmem [#allocation4], %s2202
    %v2204 = vld [vmem:[%s2203] sm:$0x1]
    %s2205 = sadd.s32 %s520, %s1898
    %s2206 = smul.u32 %s2205, 128
    %s2207 = sadd.s32 %s2206, %s525
    %s2208 = sld [smem:[#allocation3 + %s2207]]
    %s2209 = scalar_lea.vmem [#allocation4], %s2208
    %v2210 = vld [vmem:[%s2209] sm:$0x1]
    %s2211 = sadd.s32 %s531, %s1898
    %s2212 = smul.u32 %s2211, 128
    %s2213 = sadd.s32 %s2212, %s536
    %s2214 = sld [smem:[#allocation3 + %s2213]]
    %s2215 = scalar_lea.vmem [#allocation4], %s2214
    %v2216 = vld [vmem:[%s2215] sm:$0x1]
    %s2217 = sadd.s32 %s542, %s1898
    %s2218 = smul.u32 %s2217, 128
    %s2219 = sadd.s32 %s2218, %s547
    %s2220 = sld [smem:[#allocation3 + %s2219]]
    %s2221 = scalar_lea.vmem [#allocation4], %s2220
    %v2222 = vld [vmem:[%s2221] sm:$0x1]
    %s2223 = sadd.s32 %s553, %s1898
    %s2224 = smul.u32 %s2223, 128
    %s2225 = sadd.s32 %s2224, %s558
    %s2226 = sld [smem:[#allocation3 + %s2225]]
    %s2227 = scalar_lea.vmem [#allocation4], %s2226
    %v2228 = vld [vmem:[%s2227] sm:$0x1]
    %v2230 = vrot.slane %v2192, 7
    %v2233 = vrot.slane %v2198, 6
    %v2236 = vrot.slane %v2204, 5
    %v2239 = vrot.slane %v2210, 4
    %v2242 = vrot.slane %v2216, 3
    %v2245 = vrot.slane %v2222, 2
    %v2248 = vrot.slane %v2228, 1
    %v2250 = vsel %vm164, %v2186, %v2230
    %v2251 = vsel %vm166, %v2250, %v2233
    %v2252 = vsel %vm168, %v2251, %v2236
    %v2253 = vsel %vm170, %v2252, %v2239
    %v2254 = vsel %vm172, %v2253, %v2242
    %v2255 = vsel %vm174, %v2254, %v2245
    %v2256 = vsel %vm176, %v2255, %v2248
    %v2257 = vld [vmem:[%s591] sm:$0xff]
    %v2258 = vadd.f32 %v2256, %v2257
    %2259 = vadd.xlane.f32.xlu0 %v2258
    %v2260 = vpop.xlane.xlu0 %2259
    %v2261 = vmul.f32 %v2260, %v182
    %v2262 = vsub.f32 %v2258, %v2261
    %v2263 = vmul.f32 %v2262, %v2262
    %2264 = vadd.xlane.f32.xlu0 %v2263
    %v2265 = vpop.xlane.xlu0 %2264
    %v2266 = vmul.f32 %v2265, %v182
    %v2267 = vadd.f32 %v2266, 1e-05
    %v2268 = vrsqrt.pop %v2267
    %v2269 = vmul.f32 %v2262, %v2268
    %v2270 = vmul.f32 %v2269, %v196
    %v2271 = vadd.f32 %v2270, %v203
    %s2272 = sadd.s32 24, 128
    %s2273 = scalar_lea.vmem [#allocation9], %s2272
    %2274 = vst [vmem:[%s2273] sm:$0xff] %v2271
    %s2275 = sadd.s32 %s610, %s1898
    %s2276 = smul.u32 %s2275, 128
    %s2277 = sadd.s32 %s2276, %s615
    %s2278 = sld [smem:[#allocation3 + %s2277]]
    %s2279 = scalar_lea.vmem [#allocation4], %s2278
    %v2280 = vld [vmem:[%s2279] sm:$0x1]
    %s2281 = sadd.s32 %s621, %s1898
    %s2282 = smul.u32 %s2281, 128
    %s2283 = sadd.s32 %s2282, %s626
    %s2284 = sld [smem:[#allocation3 + %s2283]]
    %s2285 = scalar_lea.vmem [#allocation4], %s2284
    %v2286 = vld [vmem:[%s2285] sm:$0x1]
    %s2287 = sadd.s32 %s632, %s1898
    %s2288 = smul.u32 %s2287, 128
    %s2289 = sadd.s32 %s2288, %s637
    %s2290 = sld [smem:[#allocation3 + %s2289]]
    %s2291 = scalar_lea.vmem [#allocation4], %s2290
    %v2292 = vld [vmem:[%s2291] sm:$0x1]
    %s2293 = sadd.s32 %s643, %s1898
    %s2294 = smul.u32 %s2293, 128
    %s2295 = sadd.s32 %s2294, %s648
    %s2296 = sld [smem:[#allocation3 + %s2295]]
    %s2297 = scalar_lea.vmem [#allocation4], %s2296
    %v2298 = vld [vmem:[%s2297] sm:$0x1]
    %s2299 = sadd.s32 %s654, %s1898
    %s2300 = smul.u32 %s2299, 128
    %s2301 = sadd.s32 %s2300, %s659
    %s2302 = sld [smem:[#allocation3 + %s2301]]
    %s2303 = scalar_lea.vmem [#allocation4], %s2302
    %v2304 = vld [vmem:[%s2303] sm:$0x1]
    %s2305 = sadd.s32 %s665, %s1898
    %s2306 = smul.u32 %s2305, 128
    %s2307 = sadd.s32 %s2306, %s670
    %s2308 = sld [smem:[#allocation3 + %s2307]]
    %s2309 = scalar_lea.vmem [#allocation4], %s2308
    %v2310 = vld [vmem:[%s2309] sm:$0x1]
    %s2311 = sadd.s32 %s676, %s1898
    %s2312 = smul.u32 %s2311, 128
    %s2313 = sadd.s32 %s2312, %s681
    %s2314 = sld [smem:[#allocation3 + %s2313]]
    %s2315 = scalar_lea.vmem [#allocation4], %s2314
    %v2316 = vld [vmem:[%s2315] sm:$0x1]
    %s2317 = sadd.s32 %s687, %s1898
    %s2318 = smul.u32 %s2317, 128
    %s2319 = sadd.s32 %s2318, %s692
    %s2320 = sld [smem:[#allocation3 + %s2319]]
    %s2321 = scalar_lea.vmem [#allocation4], %s2320
    %v2322 = vld [vmem:[%s2321] sm:$0x1]
    %v2324 = vrot.slane %v2286, 7
    %v2327 = vrot.slane %v2292, 6
    %v2330 = vrot.slane %v2298, 5
    %v2333 = vrot.slane %v2304, 4
    %v2336 = vrot.slane %v2310, 3
    %v2339 = vrot.slane %v2316, 2
    %v2342 = vrot.slane %v2322, 1
    %v2344 = vsel %vm164, %v2280, %v2324
    %v2345 = vsel %vm166, %v2344, %v2327
    %v2346 = vsel %vm168, %v2345, %v2330
    %v2347 = vsel %vm170, %v2346, %v2333
    %v2348 = vsel %vm172, %v2347, %v2336
    %v2349 = vsel %vm174, %v2348, %v2339
    %v2350 = vsel %vm176, %v2349, %v2342
    %v2351 = vld [vmem:[%s725] sm:$0xff]
    %v2352 = vadd.f32 %v2350, %v2351
    %2353 = vadd.xlane.f32.xlu0 %v2352
    %v2354 = vpop.xlane.xlu0 %2353
    %v2355 = vmul.f32 %v2354, %v182
    %v2356 = vsub.f32 %v2352, %v2355
    %v2357 = vmul.f32 %v2356, %v2356
    %2358 = vadd.xlane.f32.xlu0 %v2357
    %v2359 = vpop.xlane.xlu0 %2358
    %v2360 = vmul.f32 %v2359, %v182
    %v2361 = vadd.f32 %v2360, 1e-05
    %v2362 = vrsqrt.pop %v2361
    %v2363 = vmul.f32 %v2356, %v2362
    %v2364 = vmul.f32 %v2363, %v196
    %v2365 = vadd.f32 %v2364, %v203
    %s2366 = sadd.s32 32, 128
    %s2367 = scalar_lea.vmem [#allocation9], %s2366
    %2368 = vst [vmem:[%s2367] sm:$0xff] %v2365
    %s2369 = sadd.s32 %s744, %s1898
    %s2370 = smul.u32 %s2369, 128
    %s2371 = sadd.s32 %s2370, %s749
    %s2372 = sld [smem:[#allocation3 + %s2371]]
    %s2373 = scalar_lea.vmem [#allocation4], %s2372
    %v2374 = vld [vmem:[%s2373] sm:$0x1]
    %s2375 = sadd.s32 %s755, %s1898
    %s2376 = smul.u32 %s2375, 128
    %s2377 = sadd.s32 %s2376, %s760
    %s2378 = sld [smem:[#allocation3 + %s2377]]
    %s2379 = scalar_lea.vmem [#allocation4], %s2378
    %v2380 = vld [vmem:[%s2379] sm:$0x1]
    %s2381 = sadd.s32 %s766, %s1898
    %s2382 = smul.u32 %s2381, 128
    %s2383 = sadd.s32 %s2382, %s771
    %s2384 = sld [smem:[#allocation3 + %s2383]]
    %s2385 = scalar_lea.vmem [#allocation4], %s2384
    %v2386 = vld [vmem:[%s2385] sm:$0x1]
    %s2387 = sadd.s32 %s777, %s1898
    %s2388 = smul.u32 %s2387, 128
    %s2389 = sadd.s32 %s2388, %s782
    %s2390 = sld [smem:[#allocation3 + %s2389]]
    %s2391 = scalar_lea.vmem [#allocation4], %s2390
    %v2392 = vld [vmem:[%s2391] sm:$0x1]
    %s2393 = sadd.s32 %s788, %s1898
    %s2394 = smul.u32 %s2393, 128
    %s2395 = sadd.s32 %s2394, %s793
    %s2396 = sld [smem:[#allocation3 + %s2395]]
    %s2397 = scalar_lea.vmem [#allocation4], %s2396
    %v2398 = vld [vmem:[%s2397] sm:$0x1]
    %s2399 = sadd.s32 %s799, %s1898
    %s2400 = smul.u32 %s2399, 128
    %s2401 = sadd.s32 %s2400, %s804
    %s2402 = sld [smem:[#allocation3 + %s2401]]
    %s2403 = scalar_lea.vmem [#allocation4], %s2402
    %v2404 = vld [vmem:[%s2403] sm:$0x1]
    %s2405 = sadd.s32 %s810, %s1898
    %s2406 = smul.u32 %s2405, 128
    %s2407 = sadd.s32 %s2406, %s815
    %s2408 = sld [smem:[#allocation3 + %s2407]]
    %s2409 = scalar_lea.vmem [#allocation4], %s2408
    %v2410 = vld [vmem:[%s2409] sm:$0x1]
    %s2411 = sadd.s32 %s821, %s1898
    %s2412 = smul.u32 %s2411, 128
    %s2413 = sadd.s32 %s2412, %s826
    %s2414 = sld [smem:[#allocation3 + %s2413]]
    %s2415 = scalar_lea.vmem [#allocation4], %s2414
    %v2416 = vld [vmem:[%s2415] sm:$0x1]
    %v2418 = vrot.slane %v2380, 7
    %v2421 = vrot.slane %v2386, 6
    %v2424 = vrot.slane %v2392, 5
    %v2427 = vrot.slane %v2398, 4
    %v2430 = vrot.slane %v2404, 3
    %v2433 = vrot.slane %v2410, 2
    %v2436 = vrot.slane %v2416, 1
    %v2438 = vsel %vm164, %v2374, %v2418
    %v2439 = vsel %vm166, %v2438, %v2421
    %v2440 = vsel %vm168, %v2439, %v2424
    %v2441 = vsel %vm170, %v2440, %v2427
    %v2442 = vsel %vm172, %v2441, %v2430
    %v2443 = vsel %vm174, %v2442, %v2433
    %v2444 = vsel %vm176, %v2443, %v2436
    %v2445 = vld [vmem:[%s859] sm:$0xff]
    %v2446 = vadd.f32 %v2444, %v2445
    %2447 = vadd.xlane.f32.xlu0 %v2446
    %v2448 = vpop.xlane.xlu0 %2447
    %v2449 = vmul.f32 %v2448, %v182
    %v2450 = vsub.f32 %v2446, %v2449
    %v2451 = vmul.f32 %v2450, %v2450
    %2452 = vadd.xlane.f32.xlu0 %v2451
    %v2453 = vpop.xlane.xlu0 %2452
    %v2454 = vmul.f32 %v2453, %v182
    %v2455 = vadd.f32 %v2454, 1e-05
    %v2456 = vrsqrt.pop %v2455
    %v2457 = vmul.f32 %v2450, %v2456
    %v2458 = vmul.f32 %v2457, %v196
    %v2459 = vadd.f32 %v2458, %v203
    %s2460 = sadd.s32 40, 128
    %s2461 = scalar_lea.vmem [#allocation9], %s2460
    %2462 = vst [vmem:[%s2461] sm:$0xff] %v2459
    %s2463 = sadd.s32 %s878, %s1898
    %s2464 = smul.u32 %s2463, 128
    %s2465 = sadd.s32 %s2464, %s883
    %s2466 = sld [smem:[#allocation3 + %s2465]]
    %s2467 = scalar_lea.vmem [#allocation4], %s2466
    %v2468 = vld [vmem:[%s2467] sm:$0x1]
    %s2469 = sadd.s32 %s889, %s1898
    %s2470 = smul.u32 %s2469, 128
    %s2471 = sadd.s32 %s2470, %s894
    %s2472 = sld [smem:[#allocation3 + %s2471]]
    %s2473 = scalar_lea.vmem [#allocation4], %s2472
    %v2474 = vld [vmem:[%s2473] sm:$0x1]
    %s2475 = sadd.s32 %s900, %s1898
    %s2476 = smul.u32 %s2475, 128
    %s2477 = sadd.s32 %s2476, %s905
    %s2478 = sld [smem:[#allocation3 + %s2477]]
    %s2479 = scalar_lea.vmem [#allocation4], %s2478
    %v2480 = vld [vmem:[%s2479] sm:$0x1]
    %s2481 = sadd.s32 %s911, %s1898
    %s2482 = smul.u32 %s2481, 128
    %s2483 = sadd.s32 %s2482, %s916
    %s2484 = sld [smem:[#allocation3 + %s2483]]
    %s2485 = scalar_lea.vmem [#allocation4], %s2484
    %v2486 = vld [vmem:[%s2485] sm:$0x1]
    %s2487 = sadd.s32 %s922, %s1898
    %s2488 = smul.u32 %s2487, 128
    %s2489 = sadd.s32 %s2488, %s927
    %s2490 = sld [smem:[#allocation3 + %s2489]]
    %s2491 = scalar_lea.vmem [#allocation4], %s2490
    %v2492 = vld [vmem:[%s2491] sm:$0x1]
    %s2493 = sadd.s32 %s933, %s1898
    %s2494 = smul.u32 %s2493, 128
    %s2495 = sadd.s32 %s2494, %s938
    %s2496 = sld [smem:[#allocation3 + %s2495]]
    %s2497 = scalar_lea.vmem [#allocation4], %s2496
    %v2498 = vld [vmem:[%s2497] sm:$0x1]
    %s2499 = sadd.s32 %s944, %s1898
    %s2500 = smul.u32 %s2499, 128
    %s2501 = sadd.s32 %s2500, %s949
    %s2502 = sld [smem:[#allocation3 + %s2501]]
    %s2503 = scalar_lea.vmem [#allocation4], %s2502
    %v2504 = vld [vmem:[%s2503] sm:$0x1]
    %s2505 = sadd.s32 %s955, %s1898
    %s2506 = smul.u32 %s2505, 128
    %s2507 = sadd.s32 %s2506, %s960
    %s2508 = sld [smem:[#allocation3 + %s2507]]
    %s2509 = scalar_lea.vmem [#allocation4], %s2508
    %v2510 = vld [vmem:[%s2509] sm:$0x1]
    %v2512 = vrot.slane %v2474, 7
    %v2515 = vrot.slane %v2480, 6
    %v2518 = vrot.slane %v2486, 5
    %v2521 = vrot.slane %v2492, 4
    %v2524 = vrot.slane %v2498, 3
    %v2527 = vrot.slane %v2504, 2
    %v2530 = vrot.slane %v2510, 1
    %v2532 = vsel %vm164, %v2468, %v2512
    %v2533 = vsel %vm166, %v2532, %v2515
    %v2534 = vsel %vm168, %v2533, %v2518
    %v2535 = vsel %vm170, %v2534, %v2521
    %v2536 = vsel %vm172, %v2535, %v2524
    %v2537 = vsel %vm174, %v2536, %v2527
    %v2538 = vsel %vm176, %v2537, %v2530
    %v2539 = vld [vmem:[%s993] sm:$0xff]
    %v2540 = vadd.f32 %v2538, %v2539
    %2541 = vadd.xlane.f32.xlu0 %v2540
    %v2542 = vpop.xlane.xlu0 %2541
    %v2543 = vmul.f32 %v2542, %v182
    %v2544 = vsub.f32 %v2540, %v2543
    %v2545 = vmul.f32 %v2544, %v2544
    %2546 = vadd.xlane.f32.xlu0 %v2545
    %v2547 = vpop.xlane.xlu0 %2546
    %v2548 = vmul.f32 %v2547, %v182
    %v2549 = vadd.f32 %v2548, 1e-05
    %v2550 = vrsqrt.pop %v2549
    %v2551 = vmul.f32 %v2544, %v2550
    %v2552 = vmul.f32 %v2551, %v196
    %v2553 = vadd.f32 %v2552, %v203
    %s2554 = sadd.s32 48, 128
    %s2555 = scalar_lea.vmem [#allocation9], %s2554
    %2556 = vst [vmem:[%s2555] sm:$0xff] %v2553
    %s2557 = sadd.s32 %s1012, %s1898
    %s2558 = smul.u32 %s2557, 128
    %s2559 = sadd.s32 %s2558, %s1017
    %s2560 = sld [smem:[#allocation3 + %s2559]]
    %s2561 = scalar_lea.vmem [#allocation4], %s2560
    %v2562 = vld [vmem:[%s2561] sm:$0x1]
    %s2563 = sadd.s32 %s1023, %s1898
    %s2564 = smul.u32 %s2563, 128
    %s2565 = sadd.s32 %s2564, %s1028
    %s2566 = sld [smem:[#allocation3 + %s2565]]
    %s2567 = scalar_lea.vmem [#allocation4], %s2566
    %v2568 = vld [vmem:[%s2567] sm:$0x1]
    %s2569 = sadd.s32 %s1034, %s1898
    %s2570 = smul.u32 %s2569, 128
    %s2571 = sadd.s32 %s2570, %s1039
    %s2572 = sld [smem:[#allocation3 + %s2571]]
    %s2573 = scalar_lea.vmem [#allocation4], %s2572
    %v2574 = vld [vmem:[%s2573] sm:$0x1]
    %s2575 = sadd.s32 %s1045, %s1898
    %s2576 = smul.u32 %s2575, 128
    %s2577 = sadd.s32 %s2576, %s1050
    %s2578 = sld [smem:[#allocation3 + %s2577]]
    %s2579 = scalar_lea.vmem [#allocation4], %s2578
    %v2580 = vld [vmem:[%s2579] sm:$0x1]
    %s2581 = sadd.s32 %s1056, %s1898
    %s2582 = smul.u32 %s2581, 128
    %s2583 = sadd.s32 %s2582, %s1061
    %s2584 = sld [smem:[#allocation3 + %s2583]]
    %s2585 = scalar_lea.vmem [#allocation4], %s2584
    %v2586 = vld [vmem:[%s2585] sm:$0x1]
    %s2587 = sadd.s32 %s1067, %s1898
    %s2588 = smul.u32 %s2587, 128
    %s2589 = sadd.s32 %s2588, %s1072
    %s2590 = sld [smem:[#allocation3 + %s2589]]
    %s2591 = scalar_lea.vmem [#allocation4], %s2590
    %v2592 = vld [vmem:[%s2591] sm:$0x1]
    %s2593 = sadd.s32 %s1078, %s1898
    %s2594 = smul.u32 %s2593, 128
    %s2595 = sadd.s32 %s2594, %s1083
    %s2596 = sld [smem:[#allocation3 + %s2595]]
    %s2597 = scalar_lea.vmem [#allocation4], %s2596
    %v2598 = vld [vmem:[%s2597] sm:$0x1]
    %s2599 = sadd.s32 %s1089, %s1898
    %s2600 = smul.u32 %s2599, 128
    %s2601 = sadd.s32 %s2600, %s1094
    %s2602 = sld [smem:[#allocation3 + %s2601]]
    %s2603 = scalar_lea.vmem [#allocation4], %s2602
    %v2604 = vld [vmem:[%s2603] sm:$0x1]
    %v2606 = vrot.slane %v2568, 7
    %v2609 = vrot.slane %v2574, 6
    %v2612 = vrot.slane %v2580, 5
    %v2615 = vrot.slane %v2586, 4
    %v2618 = vrot.slane %v2592, 3
    %v2621 = vrot.slane %v2598, 2
    %v2624 = vrot.slane %v2604, 1
    %v2626 = vsel %vm164, %v2562, %v2606
    %v2627 = vsel %vm166, %v2626, %v2609
    %v2628 = vsel %vm168, %v2627, %v2612
    %v2629 = vsel %vm170, %v2628, %v2615
    %v2630 = vsel %vm172, %v2629, %v2618
    %v2631 = vsel %vm174, %v2630, %v2621
    %v2632 = vsel %vm176, %v2631, %v2624
    %v2633 = vld [vmem:[%s1127] sm:$0xff]
    %v2634 = vadd.f32 %v2632, %v2633
    %2635 = vadd.xlane.f32.xlu0 %v2634
    %v2636 = vpop.xlane.xlu0 %2635
    %v2637 = vmul.f32 %v2636, %v182
    %v2638 = vsub.f32 %v2634, %v2637
    %v2639 = vmul.f32 %v2638, %v2638
    %2640 = vadd.xlane.f32.xlu0 %v2639
    %v2641 = vpop.xlane.xlu0 %2640
    %v2642 = vmul.f32 %v2641, %v182
    %v2643 = vadd.f32 %v2642, 1e-05
    %v2644 = vrsqrt.pop %v2643
    %v2645 = vmul.f32 %v2638, %v2644
    %v2646 = vmul.f32 %v2645, %v196
    %v2647 = vadd.f32 %v2646, %v203
    %s2648 = sadd.s32 56, 128
    %s2649 = scalar_lea.vmem [#allocation9], %s2648
    %2650 = vst [vmem:[%s2649] sm:$0xff] %v2647
    %s2651 = sadd.s32 %s51, 3
    %s2652 = sadd.s32 %s56, %s2651
    %s2653 = smul.u32 %s2652, 128
    %s2654 = sadd.s32 %s2653, %s61
    %s2655 = sld [smem:[#allocation3 + %s2654]]
    %s2656 = scalar_lea.vmem [#allocation4], %s2655
    %v2657 = vld [vmem:[%s2656] sm:$0x1]
    %s2658 = sadd.s32 %s67, %s2651
    %s2659 = smul.u32 %s2658, 128
    %s2660 = sadd.s32 %s2659, %s72
    %s2661 = sld [smem:[#allocation3 + %s2660]]
    %s2662 = scalar_lea.vmem [#allocation4], %s2661
    %v2663 = vld [vmem:[%s2662] sm:$0x1]
    %s2664 = sadd.s32 %s78, %s2651
    %s2665 = smul.u32 %s2664, 128
    %s2666 = sadd.s32 %s2665, %s83
    %s2667 = sld [smem:[#allocation3 + %s2666]]
    %s2668 = scalar_lea.vmem [#allocation4], %s2667
    %v2669 = vld [vmem:[%s2668] sm:$0x1]
    %s2670 = sadd.s32 %s89, %s2651
    %s2671 = smul.u32 %s2670, 128
    %s2672 = sadd.s32 %s2671, %s94
    %s2673 = sld [smem:[#allocation3 + %s2672]]
    %s2674 = scalar_lea.vmem [#allocation4], %s2673
    %v2675 = vld [vmem:[%s2674] sm:$0x1]
    %s2676 = sadd.s32 %s100, %s2651
    %s2677 = smul.u32 %s2676, 128
    %s2678 = sadd.s32 %s2677, %s105
    %s2679 = sld [smem:[#allocation3 + %s2678]]
    %s2680 = scalar_lea.vmem [#allocation4], %s2679
    %v2681 = vld [vmem:[%s2680] sm:$0x1]
    %s2682 = sadd.s32 %s111, %s2651
    %s2683 = smul.u32 %s2682, 128
    %s2684 = sadd.s32 %s2683, %s116
    %s2685 = sld [smem:[#allocation3 + %s2684]]
    %s2686 = scalar_lea.vmem [#allocation4], %s2685
    %v2687 = vld [vmem:[%s2686] sm:$0x1]
    %s2688 = sadd.s32 %s122, %s2651
    %s2689 = smul.u32 %s2688, 128
    %s2690 = sadd.s32 %s2689, %s127
    %s2691 = sld [smem:[#allocation3 + %s2690]]
    %s2692 = scalar_lea.vmem [#allocation4], %s2691
    %v2693 = vld [vmem:[%s2692] sm:$0x1]
    %s2694 = sadd.s32 %s133, %s2651
    %s2695 = smul.u32 %s2694, 128
    %s2696 = sadd.s32 %s2695, %s138
    %s2697 = sld [smem:[#allocation3 + %s2696]]
    %s2698 = scalar_lea.vmem [#allocation4], %s2697
    %v2699 = vld [vmem:[%s2698] sm:$0x1]
    %v2701 = vrot.slane %v2663, 7
    %v2704 = vrot.slane %v2669, 6
    %v2707 = vrot.slane %v2675, 5
    %v2710 = vrot.slane %v2681, 4
    %v2713 = vrot.slane %v2687, 3
    %v2716 = vrot.slane %v2693, 2
    %v2719 = vrot.slane %v2699, 1
    %v2721 = vsel %vm164, %v2657, %v2701
    %v2722 = vsel %vm166, %v2721, %v2704
    %v2723 = vsel %vm168, %v2722, %v2707
    %v2724 = vsel %vm170, %v2723, %v2710
    %v2725 = vsel %vm172, %v2724, %v2713
    %v2726 = vsel %vm174, %v2725, %v2716
    %v2727 = vsel %vm176, %v2726, %v2719
    %v2728 = vld [vmem:[#allocation7] sm:$0xff]
    %v2729 = vadd.f32 %v2727, %v2728
    %2730 = vadd.xlane.f32.xlu0 %v2729
    %v2731 = vpop.xlane.xlu0 %2730
    %v2732 = vmul.f32 %v2731, %v182
    %v2733 = vsub.f32 %v2729, %v2732
    %v2734 = vmul.f32 %v2733, %v2733
    %2735 = vadd.xlane.f32.xlu0 %v2734
    %v2736 = vpop.xlane.xlu0 %2735
    %v2737 = vmul.f32 %v2736, %v182
    %v2738 = vadd.f32 %v2737, 1e-05
    %v2739 = vrsqrt.pop %v2738
    %v2740 = vmul.f32 %v2733, %v2739
    %v2741 = vmul.f32 %v2740, %v196
    %v2742 = vadd.f32 %v2741, %v203
    %s2743 = sadd.s32 0, 192
    %s2744 = scalar_lea.vmem [#allocation9], %s2743
    %2745 = vst [vmem:[%s2744] sm:$0xff] %v2742
    %s2746 = sadd.s32 %s208, %s2651
    %s2747 = smul.u32 %s2746, 128
    %s2748 = sadd.s32 %s2747, %s213
    %s2749 = sld [smem:[#allocation3 + %s2748]]
    %s2750 = scalar_lea.vmem [#allocation4], %s2749
    %v2751 = vld [vmem:[%s2750] sm:$0x1]
    %s2752 = sadd.s32 %s219, %s2651
    %s2753 = smul.u32 %s2752, 128
    %s2754 = sadd.s32 %s2753, %s224
    %s2755 = sld [smem:[#allocation3 + %s2754]]
    %s2756 = scalar_lea.vmem [#allocation4], %s2755
    %v2757 = vld [vmem:[%s2756] sm:$0x1]
    %s2758 = sadd.s32 %s230, %s2651
    %s2759 = smul.u32 %s2758, 128
    %s2760 = sadd.s32 %s2759, %s235
    %s2761 = sld [smem:[#allocation3 + %s2760]]
    %s2762 = scalar_lea.vmem [#allocation4], %s2761
    %v2763 = vld [vmem:[%s2762] sm:$0x1]
    %s2764 = sadd.s32 %s241, %s2651
    %s2765 = smul.u32 %s2764, 128
    %s2766 = sadd.s32 %s2765, %s246
    %s2767 = sld [smem:[#allocation3 + %s2766]]
    %s2768 = scalar_lea.vmem [#allocation4], %s2767
    %v2769 = vld [vmem:[%s2768] sm:$0x1]
    %s2770 = sadd.s32 %s252, %s2651
    %s2771 = smul.u32 %s2770, 128
    %s2772 = sadd.s32 %s2771, %s257
    %s2773 = sld [smem:[#allocation3 + %s2772]]
    %s2774 = scalar_lea.vmem [#allocation4], %s2773
    %v2775 = vld [vmem:[%s2774] sm:$0x1]
    %s2776 = sadd.s32 %s263, %s2651
    %s2777 = smul.u32 %s2776, 128
    %s2778 = sadd.s32 %s2777, %s268
    %s2779 = sld [smem:[#allocation3 + %s2778]]
    %s2780 = scalar_lea.vmem [#allocation4], %s2779
    %v2781 = vld [vmem:[%s2780] sm:$0x1]
    %s2782 = sadd.s32 %s274, %s2651
    %s2783 = smul.u32 %s2782, 128
    %s2784 = sadd.s32 %s2783, %s279
    %s2785 = sld [smem:[#allocation3 + %s2784]]
    %s2786 = scalar_lea.vmem [#allocation4], %s2785
    %v2787 = vld [vmem:[%s2786] sm:$0x1]
    %s2788 = sadd.s32 %s285, %s2651
    %s2789 = smul.u32 %s2788, 128
    %s2790 = sadd.s32 %s2789, %s290
    %s2791 = sld [smem:[#allocation3 + %s2790]]
    %s2792 = scalar_lea.vmem [#allocation4], %s2791
    %v2793 = vld [vmem:[%s2792] sm:$0x1]
    %v2795 = vrot.slane %v2757, 7
    %v2798 = vrot.slane %v2763, 6
    %v2801 = vrot.slane %v2769, 5
    %v2804 = vrot.slane %v2775, 4
    %v2807 = vrot.slane %v2781, 3
    %v2810 = vrot.slane %v2787, 2
    %v2813 = vrot.slane %v2793, 1
    %v2815 = vsel %vm164, %v2751, %v2795
    %v2816 = vsel %vm166, %v2815, %v2798
    %v2817 = vsel %vm168, %v2816, %v2801
    %v2818 = vsel %vm170, %v2817, %v2804
    %v2819 = vsel %vm172, %v2818, %v2807
    %v2820 = vsel %vm174, %v2819, %v2810
    %v2821 = vsel %vm176, %v2820, %v2813
    %v2822 = vld [vmem:[%s323] sm:$0xff]
    %v2823 = vadd.f32 %v2821, %v2822
    %2824 = vadd.xlane.f32.xlu0 %v2823
    %v2825 = vpop.xlane.xlu0 %2824
    %v2826 = vmul.f32 %v2825, %v182
    %v2827 = vsub.f32 %v2823, %v2826
    %v2828 = vmul.f32 %v2827, %v2827
    %2829 = vadd.xlane.f32.xlu0 %v2828
    %v2830 = vpop.xlane.xlu0 %2829
    %v2831 = vmul.f32 %v2830, %v182
    %v2832 = vadd.f32 %v2831, 1e-05
    %v2833 = vrsqrt.pop %v2832
    %v2834 = vmul.f32 %v2827, %v2833
    %v2835 = vmul.f32 %v2834, %v196
    %v2836 = vadd.f32 %v2835, %v203
    %s2837 = sadd.s32 8, 192
    %s2838 = scalar_lea.vmem [#allocation9], %s2837
    %2839 = vst [vmem:[%s2838] sm:$0xff] %v2836
    %s2840 = sadd.s32 %s342, %s2651
    %s2841 = smul.u32 %s2840, 128
    %s2842 = sadd.s32 %s2841, %s347
    %s2843 = sld [smem:[#allocation3 + %s2842]]
    %s2844 = scalar_lea.vmem [#allocation4], %s2843
    %v2845 = vld [vmem:[%s2844] sm:$0x1]
    %s2846 = sadd.s32 %s353, %s2651
    %s2847 = smul.u32 %s2846, 128
    %s2848 = sadd.s32 %s2847, %s358
    %s2849 = sld [smem:[#allocation3 + %s2848]]
    %s2850 = scalar_lea.vmem [#allocation4], %s2849
    %v2851 = vld [vmem:[%s2850] sm:$0x1]
    %s2852 = sadd.s32 %s364, %s2651
    %s2853 = smul.u32 %s2852, 128
    %s2854 = sadd.s32 %s2853, %s369
    %s2855 = sld [smem:[#allocation3 + %s2854]]
    %s2856 = scalar_lea.vmem [#allocation4], %s2855
    %v2857 = vld [vmem:[%s2856] sm:$0x1]
    %s2858 = sadd.s32 %s375, %s2651
    %s2859 = smul.u32 %s2858, 128
    %s2860 = sadd.s32 %s2859, %s380
    %s2861 = sld [smem:[#allocation3 + %s2860]]
    %s2862 = scalar_lea.vmem [#allocation4], %s2861
    %v2863 = vld [vmem:[%s2862] sm:$0x1]
    %s2864 = sadd.s32 %s386, %s2651
    %s2865 = smul.u32 %s2864, 128
    %s2866 = sadd.s32 %s2865, %s391
    %s2867 = sld [smem:[#allocation3 + %s2866]]
    %s2868 = scalar_lea.vmem [#allocation4], %s2867
    %v2869 = vld [vmem:[%s2868] sm:$0x1]
    %s2870 = sadd.s32 %s397, %s2651
    %s2871 = smul.u32 %s2870, 128
    %s2872 = sadd.s32 %s2871, %s402
    %s2873 = sld [smem:[#allocation3 + %s2872]]
    %s2874 = scalar_lea.vmem [#allocation4], %s2873
    %v2875 = vld [vmem:[%s2874] sm:$0x1]
    %s2876 = sadd.s32 %s408, %s2651
    %s2877 = smul.u32 %s2876, 128
    %s2878 = sadd.s32 %s2877, %s413
    %s2879 = sld [smem:[#allocation3 + %s2878]]
    %s2880 = scalar_lea.vmem [#allocation4], %s2879
    %v2881 = vld [vmem:[%s2880] sm:$0x1]
    %s2882 = sadd.s32 %s419, %s2651
    %s2883 = smul.u32 %s2882, 128
    %s2884 = sadd.s32 %s2883, %s424
    %s2885 = sld [smem:[#allocation3 + %s2884]]
    %s2886 = scalar_lea.vmem [#allocation4], %s2885
    %v2887 = vld [vmem:[%s2886] sm:$0x1]
    %v2889 = vrot.slane %v2851, 7
    %v2892 = vrot.slane %v2857, 6
    %v2895 = vrot.slane %v2863, 5
    %v2898 = vrot.slane %v2869, 4
    %v2901 = vrot.slane %v2875, 3
    %v2904 = vrot.slane %v2881, 2
    %v2907 = vrot.slane %v2887, 1
    %v2909 = vsel %vm164, %v2845, %v2889
    %v2910 = vsel %vm166, %v2909, %v2892
    %v2911 = vsel %vm168, %v2910, %v2895
    %v2912 = vsel %vm170, %v2911, %v2898
    %v2913 = vsel %vm172, %v2912, %v2901
    %v2914 = vsel %vm174, %v2913, %v2904
    %v2915 = vsel %vm176, %v2914, %v2907
    %v2916 = vld [vmem:[%s457] sm:$0xff]
    %v2917 = vadd.f32 %v2915, %v2916
    %2918 = vadd.xlane.f32.xlu0 %v2917
    %v2919 = vpop.xlane.xlu0 %2918
    %v2920 = vmul.f32 %v2919, %v182
    %v2921 = vsub.f32 %v2917, %v2920
    %v2922 = vmul.f32 %v2921, %v2921
    %2923 = vadd.xlane.f32.xlu0 %v2922
    %v2924 = vpop.xlane.xlu0 %2923
    %v2925 = vmul.f32 %v2924, %v182
    %v2926 = vadd.f32 %v2925, 1e-05
    %v2927 = vrsqrt.pop %v2926
    %v2928 = vmul.f32 %v2921, %v2927
    %v2929 = vmul.f32 %v2928, %v196
    %v2930 = vadd.f32 %v2929, %v203
    %s2931 = sadd.s32 16, 192
    %s2932 = scalar_lea.vmem [#allocation9], %s2931
    %2933 = vst [vmem:[%s2932] sm:$0xff] %v2930
    %s2934 = sadd.s32 %s476, %s2651
    %s2935 = smul.u32 %s2934, 128
    %s2936 = sadd.s32 %s2935, %s481
    %s2937 = sld [smem:[#allocation3 + %s2936]]
    %s2938 = scalar_lea.vmem [#allocation4], %s2937
    %v2939 = vld [vmem:[%s2938] sm:$0x1]
    %s2940 = sadd.s32 %s487, %s2651
    %s2941 = smul.u32 %s2940, 128
    %s2942 = sadd.s32 %s2941, %s492
    %s2943 = sld [smem:[#allocation3 + %s2942]]
    %s2944 = scalar_lea.vmem [#allocation4], %s2943
    %v2945 = vld [vmem:[%s2944] sm:$0x1]
    %s2946 = sadd.s32 %s498, %s2651
    %s2947 = smul.u32 %s2946, 128
    %s2948 = sadd.s32 %s2947, %s503
    %s2949 = sld [smem:[#allocation3 + %s2948]]
    %s2950 = scalar_lea.vmem [#allocation4], %s2949
    %v2951 = vld [vmem:[%s2950] sm:$0x1]
    %s2952 = sadd.s32 %s509, %s2651
    %s2953 = smul.u32 %s2952, 128
    %s2954 = sadd.s32 %s2953, %s514
    %s2955 = sld [smem:[#allocation3 + %s2954]]
    %s2956 = scalar_lea.vmem [#allocation4], %s2955
    %v2957 = vld [vmem:[%s2956] sm:$0x1]
    %s2958 = sadd.s32 %s520, %s2651
    %s2959 = smul.u32 %s2958, 128
    %s2960 = sadd.s32 %s2959, %s525
    %s2961 = sld [smem:[#allocation3 + %s2960]]
    %s2962 = scalar_lea.vmem [#allocation4], %s2961
    %v2963 = vld [vmem:[%s2962] sm:$0x1]
    %s2964 = sadd.s32 %s531, %s2651
    %s2965 = smul.u32 %s2964, 128
    %s2966 = sadd.s32 %s2965, %s536
    %s2967 = sld [smem:[#allocation3 + %s2966]]
    %s2968 = scalar_lea.vmem [#allocation4], %s2967
    %v2969 = vld [vmem:[%s2968] sm:$0x1]
    %s2970 = sadd.s32 %s542, %s2651
    %s2971 = smul.u32 %s2970, 128
    %s2972 = sadd.s32 %s2971, %s547
    %s2973 = sld [smem:[#allocation3 + %s2972]]
    %s2974 = scalar_lea.vmem [#allocation4], %s2973
    %v2975 = vld [vmem:[%s2974] sm:$0x1]
    %s2976 = sadd.s32 %s553, %s2651
    %s2977 = smul.u32 %s2976, 128
    %s2978 = sadd.s32 %s2977, %s558
    %s2979 = sld [smem:[#allocation3 + %s2978]]
    %s2980 = scalar_lea.vmem [#allocation4], %s2979
    %v2981 = vld [vmem:[%s2980] sm:$0x1]
    %v2983 = vrot.slane %v2945, 7
    %v2986 = vrot.slane %v2951, 6
    %v2989 = vrot.slane %v2957, 5
    %v2992 = vrot.slane %v2963, 4
    %v2995 = vrot.slane %v2969, 3
    %v2998 = vrot.slane %v2975, 2
    %v3001 = vrot.slane %v2981, 1
    %v3003 = vsel %vm164, %v2939, %v2983
    %v3004 = vsel %vm166, %v3003, %v2986
    %v3005 = vsel %vm168, %v3004, %v2989
    %v3006 = vsel %vm170, %v3005, %v2992
    %v3007 = vsel %vm172, %v3006, %v2995
    %v3008 = vsel %vm174, %v3007, %v2998
    %v3009 = vsel %vm176, %v3008, %v3001
    %v3010 = vld [vmem:[%s591] sm:$0xff]
    %v3011 = vadd.f32 %v3009, %v3010
    %3012 = vadd.xlane.f32.xlu0 %v3011
    %v3013 = vpop.xlane.xlu0 %3012
    %v3014 = vmul.f32 %v3013, %v182
    %v3015 = vsub.f32 %v3011, %v3014
    %v3016 = vmul.f32 %v3015, %v3015
    %3017 = vadd.xlane.f32.xlu0 %v3016
    %v3018 = vpop.xlane.xlu0 %3017
    %v3019 = vmul.f32 %v3018, %v182
    %v3020 = vadd.f32 %v3019, 1e-05
    %v3021 = vrsqrt.pop %v3020
    %v3022 = vmul.f32 %v3015, %v3021
    %v3023 = vmul.f32 %v3022, %v196
    %v3024 = vadd.f32 %v3023, %v203
    %s3025 = sadd.s32 24, 192
    %s3026 = scalar_lea.vmem [#allocation9], %s3025
    %3027 = vst [vmem:[%s3026] sm:$0xff] %v3024
    %s3028 = sadd.s32 %s610, %s2651
    %s3029 = smul.u32 %s3028, 128
    %s3030 = sadd.s32 %s3029, %s615
    %s3031 = sld [smem:[#allocation3 + %s3030]]
    %s3032 = scalar_lea.vmem [#allocation4], %s3031
    %v3033 = vld [vmem:[%s3032] sm:$0x1]
    %s3034 = sadd.s32 %s621, %s2651
    %s3035 = smul.u32 %s3034, 128
    %s3036 = sadd.s32 %s3035, %s626
    %s3037 = sld [smem:[#allocation3 + %s3036]]
    %s3038 = scalar_lea.vmem [#allocation4], %s3037
    %v3039 = vld [vmem:[%s3038] sm:$0x1]
    %s3040 = sadd.s32 %s632, %s2651
    %s3041 = smul.u32 %s3040, 128
    %s3042 = sadd.s32 %s3041, %s637
    %s3043 = sld [smem:[#allocation3 + %s3042]]
    %s3044 = scalar_lea.vmem [#allocation4], %s3043
    %v3045 = vld [vmem:[%s3044] sm:$0x1]
    %s3046 = sadd.s32 %s643, %s2651
    %s3047 = smul.u32 %s3046, 128
    %s3048 = sadd.s32 %s3047, %s648
    %s3049 = sld [smem:[#allocation3 + %s3048]]
    %s3050 = scalar_lea.vmem [#allocation4], %s3049
    %v3051 = vld [vmem:[%s3050] sm:$0x1]
    %s3052 = sadd.s32 %s654, %s2651
    %s3053 = smul.u32 %s3052, 128
    %s3054 = sadd.s32 %s3053, %s659
    %s3055 = sld [smem:[#allocation3 + %s3054]]
    %s3056 = scalar_lea.vmem [#allocation4], %s3055
    %v3057 = vld [vmem:[%s3056] sm:$0x1]
    %s3058 = sadd.s32 %s665, %s2651
    %s3059 = smul.u32 %s3058, 128
    %s3060 = sadd.s32 %s3059, %s670
    %s3061 = sld [smem:[#allocation3 + %s3060]]
    %s3062 = scalar_lea.vmem [#allocation4], %s3061
    %v3063 = vld [vmem:[%s3062] sm:$0x1]
    %s3064 = sadd.s32 %s676, %s2651
    %s3065 = smul.u32 %s3064, 128
    %s3066 = sadd.s32 %s3065, %s681
    %s3067 = sld [smem:[#allocation3 + %s3066]]
    %s3068 = scalar_lea.vmem [#allocation4], %s3067
    %v3069 = vld [vmem:[%s3068] sm:$0x1]
    %s3070 = sadd.s32 %s687, %s2651
    %s3071 = smul.u32 %s3070, 128
    %s3072 = sadd.s32 %s3071, %s692
    %s3073 = sld [smem:[#allocation3 + %s3072]]
    %s3074 = scalar_lea.vmem [#allocation4], %s3073
    %v3075 = vld [vmem:[%s3074] sm:$0x1]
    %v3077 = vrot.slane %v3039, 7
    %v3080 = vrot.slane %v3045, 6
    %v3083 = vrot.slane %v3051, 5
    %v3086 = vrot.slane %v3057, 4
    %v3089 = vrot.slane %v3063, 3
    %v3092 = vrot.slane %v3069, 2
    %v3095 = vrot.slane %v3075, 1
    %v3097 = vsel %vm164, %v3033, %v3077
    %v3098 = vsel %vm166, %v3097, %v3080
    %v3099 = vsel %vm168, %v3098, %v3083
    %v3100 = vsel %vm170, %v3099, %v3086
    %v3101 = vsel %vm172, %v3100, %v3089
    %v3102 = vsel %vm174, %v3101, %v3092
    %v3103 = vsel %vm176, %v3102, %v3095
    %v3104 = vld [vmem:[%s725] sm:$0xff]
    %v3105 = vadd.f32 %v3103, %v3104
    %3106 = vadd.xlane.f32.xlu0 %v3105
    %v3107 = vpop.xlane.xlu0 %3106
    %v3108 = vmul.f32 %v3107, %v182
    %v3109 = vsub.f32 %v3105, %v3108
    %v3110 = vmul.f32 %v3109, %v3109
    %3111 = vadd.xlane.f32.xlu0 %v3110
    %v3112 = vpop.xlane.xlu0 %3111
    %v3113 = vmul.f32 %v3112, %v182
    %v3114 = vadd.f32 %v3113, 1e-05
    %v3115 = vrsqrt.pop %v3114
    %v3116 = vmul.f32 %v3109, %v3115
    %v3117 = vmul.f32 %v3116, %v196
    %v3118 = vadd.f32 %v3117, %v203
    %s3119 = sadd.s32 32, 192
    %s3120 = scalar_lea.vmem [#allocation9], %s3119
    %3121 = vst [vmem:[%s3120] sm:$0xff] %v3118
    %s3122 = sadd.s32 %s744, %s2651
    %s3123 = smul.u32 %s3122, 128
    %s3124 = sadd.s32 %s3123, %s749
    %s3125 = sld [smem:[#allocation3 + %s3124]]
    %s3126 = scalar_lea.vmem [#allocation4], %s3125
    %v3127 = vld [vmem:[%s3126] sm:$0x1]
    %s3128 = sadd.s32 %s755, %s2651
    %s3129 = smul.u32 %s3128, 128
    %s3130 = sadd.s32 %s3129, %s760
    %s3131 = sld [smem:[#allocation3 + %s3130]]
    %s3132 = scalar_lea.vmem [#allocation4], %s3131
    %v3133 = vld [vmem:[%s3132] sm:$0x1]
    %s3134 = sadd.s32 %s766, %s2651
    %s3135 = smul.u32 %s3134, 128
    %s3136 = sadd.s32 %s3135, %s771
    %s3137 = sld [smem:[#allocation3 + %s3136]]
    %s3138 = scalar_lea.vmem [#allocation4], %s3137
    %v3139 = vld [vmem:[%s3138] sm:$0x1]
    %s3140 = sadd.s32 %s777, %s2651
    %s3141 = smul.u32 %s3140, 128
    %s3142 = sadd.s32 %s3141, %s782
    %s3143 = sld [smem:[#allocation3 + %s3142]]
    %s3144 = scalar_lea.vmem [#allocation4], %s3143
    %v3145 = vld [vmem:[%s3144] sm:$0x1]
    %s3146 = sadd.s32 %s788, %s2651
    %s3147 = smul.u32 %s3146, 128
    %s3148 = sadd.s32 %s3147, %s793
    %s3149 = sld [smem:[#allocation3 + %s3148]]
    %s3150 = scalar_lea.vmem [#allocation4], %s3149
    %v3151 = vld [vmem:[%s3150] sm:$0x1]
    %s3152 = sadd.s32 %s799, %s2651
    %s3153 = smul.u32 %s3152, 128
    %s3154 = sadd.s32 %s3153, %s804
    %s3155 = sld [smem:[#allocation3 + %s3154]]
    %s3156 = scalar_lea.vmem [#allocation4], %s3155
    %v3157 = vld [vmem:[%s3156] sm:$0x1]
    %s3158 = sadd.s32 %s810, %s2651
    %s3159 = smul.u32 %s3158, 128
    %s3160 = sadd.s32 %s3159, %s815
    %s3161 = sld [smem:[#allocation3 + %s3160]]
    %s3162 = scalar_lea.vmem [#allocation4], %s3161
    %v3163 = vld [vmem:[%s3162] sm:$0x1]
    %s3164 = sadd.s32 %s821, %s2651
    %s3165 = smul.u32 %s3164, 128
    %s3166 = sadd.s32 %s3165, %s826
    %s3167 = sld [smem:[#allocation3 + %s3166]]
    %s3168 = scalar_lea.vmem [#allocation4], %s3167
    %v3169 = vld [vmem:[%s3168] sm:$0x1]
    %v3171 = vrot.slane %v3133, 7
    %v3174 = vrot.slane %v3139, 6
    %v3177 = vrot.slane %v3145, 5
    %v3180 = vrot.slane %v3151, 4
    %v3183 = vrot.slane %v3157, 3
    %v3186 = vrot.slane %v3163, 2
    %v3189 = vrot.slane %v3169, 1
    %v3191 = vsel %vm164, %v3127, %v3171
    %v3192 = vsel %vm166, %v3191, %v3174
    %v3193 = vsel %vm168, %v3192, %v3177
    %v3194 = vsel %vm170, %v3193, %v3180
    %v3195 = vsel %vm172, %v3194, %v3183
    %v3196 = vsel %vm174, %v3195, %v3186
    %v3197 = vsel %vm176, %v3196, %v3189
    %v3198 = vld [vmem:[%s859] sm:$0xff]
    %v3199 = vadd.f32 %v3197, %v3198
    %3200 = vadd.xlane.f32.xlu0 %v3199
    %v3201 = vpop.xlane.xlu0 %3200
    %v3202 = vmul.f32 %v3201, %v182
    %v3203 = vsub.f32 %v3199, %v3202
    %v3204 = vmul.f32 %v3203, %v3203
    %3205 = vadd.xlane.f32.xlu0 %v3204
    %v3206 = vpop.xlane.xlu0 %3205
    %v3207 = vmul.f32 %v3206, %v182
    %v3208 = vadd.f32 %v3207, 1e-05
    %v3209 = vrsqrt.pop %v3208
    %v3210 = vmul.f32 %v3203, %v3209
    %v3211 = vmul.f32 %v3210, %v196
    %v3212 = vadd.f32 %v3211, %v203
    %s3213 = sadd.s32 40, 192
    %s3214 = scalar_lea.vmem [#allocation9], %s3213
    %3215 = vst [vmem:[%s3214] sm:$0xff] %v3212
    %s3216 = sadd.s32 %s878, %s2651
    %s3217 = smul.u32 %s3216, 128
    %s3218 = sadd.s32 %s3217, %s883
    %s3219 = sld [smem:[#allocation3 + %s3218]]
    %s3220 = scalar_lea.vmem [#allocation4], %s3219
    %v3221 = vld [vmem:[%s3220] sm:$0x1]
    %s3222 = sadd.s32 %s889, %s2651
    %s3223 = smul.u32 %s3222, 128
    %s3224 = sadd.s32 %s3223, %s894
    %s3225 = sld [smem:[#allocation3 + %s3224]]
    %s3226 = scalar_lea.vmem [#allocation4], %s3225
    %v3227 = vld [vmem:[%s3226] sm:$0x1]
    %s3228 = sadd.s32 %s900, %s2651
    %s3229 = smul.u32 %s3228, 128
    %s3230 = sadd.s32 %s3229, %s905
    %s3231 = sld [smem:[#allocation3 + %s3230]]
    %s3232 = scalar_lea.vmem [#allocation4], %s3231
    %v3233 = vld [vmem:[%s3232] sm:$0x1]
    %s3234 = sadd.s32 %s911, %s2651
    %s3235 = smul.u32 %s3234, 128
    %s3236 = sadd.s32 %s3235, %s916
    %s3237 = sld [smem:[#allocation3 + %s3236]]
    %s3238 = scalar_lea.vmem [#allocation4], %s3237
    %v3239 = vld [vmem:[%s3238] sm:$0x1]
    %s3240 = sadd.s32 %s922, %s2651
    %s3241 = smul.u32 %s3240, 128
    %s3242 = sadd.s32 %s3241, %s927
    %s3243 = sld [smem:[#allocation3 + %s3242]]
    %s3244 = scalar_lea.vmem [#allocation4], %s3243
    %v3245 = vld [vmem:[%s3244] sm:$0x1]
    %s3246 = sadd.s32 %s933, %s2651
    %s3247 = smul.u32 %s3246, 128
    %s3248 = sadd.s32 %s3247, %s938
    %s3249 = sld [smem:[#allocation3 + %s3248]]
    %s3250 = scalar_lea.vmem [#allocation4], %s3249
    %v3251 = vld [vmem:[%s3250] sm:$0x1]
    %s3252 = sadd.s32 %s944, %s2651
    %s3253 = smul.u32 %s3252, 128
    %s3254 = sadd.s32 %s3253, %s949
    %s3255 = sld [smem:[#allocation3 + %s3254]]
    %s3256 = scalar_lea.vmem [#allocation4], %s3255
    %v3257 = vld [vmem:[%s3256] sm:$0x1]
    %s3258 = sadd.s32 %s955, %s2651
    %s3259 = smul.u32 %s3258, 128
    %s3260 = sadd.s32 %s3259, %s960
    %s3261 = sld [smem:[#allocation3 + %s3260]]
    %s3262 = scalar_lea.vmem [#allocation4], %s3261
    %v3263 = vld [vmem:[%s3262] sm:$0x1]
    %v3265 = vrot.slane %v3227, 7
    %v3268 = vrot.slane %v3233, 6
    %v3271 = vrot.slane %v3239, 5
    %v3274 = vrot.slane %v3245, 4
    %v3277 = vrot.slane %v3251, 3
    %v3280 = vrot.slane %v3257, 2
    %v3283 = vrot.slane %v3263, 1
    %v3285 = vsel %vm164, %v3221, %v3265
    %v3286 = vsel %vm166, %v3285, %v3268
    %v3287 = vsel %vm168, %v3286, %v3271
    %v3288 = vsel %vm170, %v3287, %v3274
    %v3289 = vsel %vm172, %v3288, %v3277
    %v3290 = vsel %vm174, %v3289, %v3280
    %v3291 = vsel %vm176, %v3290, %v3283
    %v3292 = vld [vmem:[%s993] sm:$0xff]
    %v3293 = vadd.f32 %v3291, %v3292
    %3294 = vadd.xlane.f32.xlu0 %v3293
    %v3295 = vpop.xlane.xlu0 %3294
    %v3296 = vmul.f32 %v3295, %v182
    %v3297 = vsub.f32 %v3293, %v3296
    %v3298 = vmul.f32 %v3297, %v3297
    %3299 = vadd.xlane.f32.xlu0 %v3298
    %v3300 = vpop.xlane.xlu0 %3299
    %v3301 = vmul.f32 %v3300, %v182
    %v3302 = vadd.f32 %v3301, 1e-05
    %v3303 = vrsqrt.pop %v3302
    %v3304 = vmul.f32 %v3297, %v3303
    %v3305 = vmul.f32 %v3304, %v196
    %v3306 = vadd.f32 %v3305, %v203
    %s3307 = sadd.s32 48, 192
    %s3308 = scalar_lea.vmem [#allocation9], %s3307
    %3309 = vst [vmem:[%s3308] sm:$0xff] %v3306
    %s3310 = sadd.s32 %s1012, %s2651
    %s3311 = smul.u32 %s3310, 128
    %s3312 = sadd.s32 %s3311, %s1017
    %s3313 = sld [smem:[#allocation3 + %s3312]]
    %s3314 = scalar_lea.vmem [#allocation4], %s3313
    %v3315 = vld [vmem:[%s3314] sm:$0x1]
    %s3316 = sadd.s32 %s1023, %s2651
    %s3317 = smul.u32 %s3316, 128
    %s3318 = sadd.s32 %s3317, %s1028
    %s3319 = sld [smem:[#allocation3 + %s3318]]
    %s3320 = scalar_lea.vmem [#allocation4], %s3319
    %v3321 = vld [vmem:[%s3320] sm:$0x1]
    %s3322 = sadd.s32 %s1034, %s2651
    %s3323 = smul.u32 %s3322, 128
    %s3324 = sadd.s32 %s3323, %s1039
    %s3325 = sld [smem:[#allocation3 + %s3324]]
    %s3326 = scalar_lea.vmem [#allocation4], %s3325
    %v3327 = vld [vmem:[%s3326] sm:$0x1]
    %s3328 = sadd.s32 %s1045, %s2651
    %s3329 = smul.u32 %s3328, 128
    %s3330 = sadd.s32 %s3329, %s1050
    %s3331 = sld [smem:[#allocation3 + %s3330]]
    %s3332 = scalar_lea.vmem [#allocation4], %s3331
    %v3333 = vld [vmem:[%s3332] sm:$0x1]
    %s3334 = sadd.s32 %s1056, %s2651
    %s3335 = smul.u32 %s3334, 128
    %s3336 = sadd.s32 %s3335, %s1061
    %s3337 = sld [smem:[#allocation3 + %s3336]]
    %s3338 = scalar_lea.vmem [#allocation4], %s3337
    %v3339 = vld [vmem:[%s3338] sm:$0x1]
    %s3340 = sadd.s32 %s1067, %s2651
    %s3341 = smul.u32 %s3340, 128
    %s3342 = sadd.s32 %s3341, %s1072
    %s3343 = sld [smem:[#allocation3 + %s3342]]
    %s3344 = scalar_lea.vmem [#allocation4], %s3343
    %v3345 = vld [vmem:[%s3344] sm:$0x1]
    %s3346 = sadd.s32 %s1078, %s2651
    %s3347 = smul.u32 %s3346, 128
    %s3348 = sadd.s32 %s3347, %s1083
    %s3349 = sld [smem:[#allocation3 + %s3348]]
    %s3350 = scalar_lea.vmem [#allocation4], %s3349
    %v3351 = vld [vmem:[%s3350] sm:$0x1]
    %s3352 = sadd.s32 %s1089, %s2651
    %s3353 = smul.u32 %s3352, 128
    %s3354 = sadd.s32 %s3353, %s1094
    %s3355 = sld [smem:[#allocation3 + %s3354]]
    %s3356 = scalar_lea.vmem [#allocation4], %s3355
    %v3357 = vld [vmem:[%s3356] sm:$0x1]
    %v3359 = vrot.slane %v3321, 7
    %v3362 = vrot.slane %v3327, 6
    %v3365 = vrot.slane %v3333, 5
    %v3368 = vrot.slane %v3339, 4
    %v3371 = vrot.slane %v3345, 3
    %v3374 = vrot.slane %v3351, 2
    %v3377 = vrot.slane %v3357, 1
    %v3379 = vsel %vm164, %v3315, %v3359
    %v3380 = vsel %vm166, %v3379, %v3362
    %v3381 = vsel %vm168, %v3380, %v3365
    %v3382 = vsel %vm170, %v3381, %v3368
    %v3383 = vsel %vm172, %v3382, %v3371
    %v3384 = vsel %vm174, %v3383, %v3374
    %v3385 = vsel %vm176, %v3384, %v3377
    %v3386 = vld [vmem:[%s1127] sm:$0xff]
    %v3387 = vadd.f32 %v3385, %v3386
    %3388 = vadd.xlane.f32.xlu0 %v3387
    %v3389 = vpop.xlane.xlu0 %3388
    %v3390 = vmul.f32 %v3389, %v182
    %v3391 = vsub.f32 %v3387, %v3390
    %v3392 = vmul.f32 %v3391, %v3391
    %3393 = vadd.xlane.f32.xlu0 %v3392
    %v3394 = vpop.xlane.xlu0 %3393
    %v3395 = vmul.f32 %v3394, %v182
    %v3396 = vadd.f32 %v3395, 1e-05
    %v3397 = vrsqrt.pop %v3396
    %v3398 = vmul.f32 %v3391, %v3397
    %v3399 = vmul.f32 %v3398, %v196
    %v3400 = vadd.f32 %v3399, %v203
    %s3401 = sadd.s32 56, 192
    %s3402 = scalar_lea.vmem [#allocation9], %s3401
    %3403 = vst [vmem:[%s3402] sm:$0xff] %v3400
    // Predicated region
    $region26: #{tpu_custom_call.1} parent=1 // pred_check
      _
    $region27: #{tpu_custom_call.1} parent=1 // pred_check_branch
      %3405 = sbr.rel (0) target = $region29
    $region28: #{tpu_custom_call.1} parent=1 // pred_region
      %s3407 = ssub.s32 4096, 4096
      %3408 = vsyncadd [#allocation6], %s3407
      %s3409 = sshll.u32 [#allocation9], 4
      %s3410 = int_to_ptr.vmem [resolvable:$true] %s3409
      %3415 = dma.vmem_to_hbm [thread:$0]  %s3410, 4096, %s5, [#allocation6], 128, 128, 8
    $region29: #{tpu_custom_call.1} parent=1 // pred_fallthru
      _
    // Predicated region
    $region30: #{tpu_custom_call.1} parent=1 // pred_check
      _
    $region31: #{tpu_custom_call.1} parent=1 // pred_check_branch
      %3417 = sbr.rel (0) target = $region33
    $region32: #{tpu_custom_call.1} parent=1 // pred_region
      %3418 = dma.done [#allocation6], 4096
    $region33: #{tpu_custom_call.1} parent=1 // pred_fallthru
      _
    %3419 = vsyncpa [#allocation5], 1
    %3420 = vsyncpa [#allocation8], 1
    %3421 = vsyncpa [#allocation6], 1

</llo_original>
